<compile_context>
chip_gen: v7x
topology: tpu7x:2x2x1
jax: 0.10.0
libtpu: 0.0.40
codegen_flags: <defaults>
</compile_context>

<pallas_src>
import math

import jax
import jax.numpy as jnp
import numpy as np
from jax.experimental import pallas as pl
from jax.experimental.pallas import tpu as pltpu

_LANES = 128
_VMEM_LIMIT = 32 * 1024 * 1024


# ---------------------------------------------------------------------------
# Fused whole-network kernel (one batch tile per grid step)
# ---------------------------------------------------------------------------
def _fused_digit_kernel(x_ref, t1_ref, b1_ref, t2_ref, b2_ref, wfc_ref, bfc_ref,
                        o_ref):
    """conv1 -> pool -> conv2 -> pool -> fc for one tile of TB images.

    x_ref  : (28, TB, 28) bf16   input tile, dims (H, batch, W)
    t1_ref : (10, 28, 192) bf16  conv1 Toeplitz, [dx*5+kh, w, px*16+c]
    b1_ref : (1, 192)  f32       conv1 bias tiled over px
    t2_ref : (6, 192, 80) bf16   conv2 Toeplitz, [dx*3+kh, px*16+c, px2*16+c2]
    b2_ref : (1, 80)   f32       conv2 bias tiled over px2
    wfc_ref: (5, 80, 128) bf16   FC weight per conv2 output row h, [(w*16+c2), d]
    bfc_ref: (1, 128)  f32
    o_ref  : (TB, 128) f32       logits (lane-padded; host slices [:, :10])
    """
    tb = x_ref.shape[1]
    f32 = jnp.float32

    # Split H by parity so the pooled-row selection (row = 2*py + dy + kh) is a
    # plain contiguous slice on a leading dim (no strided slicing anywhere).
    x = x_ref[...].reshape(14, 2, tb, 28)                 # (q, parity, n, w)

    # ---- conv1 (5x5, 1->16) + 2x2 max-pool ---------------------------------
    y1 = []
    for dy in range(2):
        for dx in range(2):
            acc = None
            for kh in range(5):
                s = dy + kh                               # input row = 2*py + s
                lhs = x[s // 2:s // 2 + 12, s % 2].reshape(12 * tb, 28)
                term = jnp.dot(lhs, t1_ref[dx * 5 + kh],
                               preferred_element_type=f32)  # (12*TB, 192)
                acc = term if acc is None else acc + term
            y1.append(acc)
    a1 = jnp.maximum(jnp.maximum(y1[0], y1[1]), jnp.maximum(y1[2], y1[3]))
    a1 = jnp.maximum(a1 + b1_ref[...], 0.0).astype(jnp.bfloat16)  # (12*TB, 192)
    a1 = a1.reshape(6, 2, tb, 192)                        # (q, parity, n, px*16+c)

    # ---- conv2 (3x3, 16->16) + 2x2 max-pool --------------------------------
    y2 = []
    for dy in range(2):
        for dx in range(2):
            acc = None
            for kh in range(3):
                s = dy + kh
                lhs = a1[s // 2:s // 2 + 5, s % 2].reshape(5 * tb, 192)
                term = jnp.dot(lhs, t2_ref[dx * 3 + kh],
                               preferred_element_type=f32)  # (5*TB, 80)
                acc = term if acc is None else acc + term
            y2.append(acc)
    a2 = jnp.maximum(jnp.maximum(y2[0], y2[1]), jnp.maximum(y2[2], y2[3]))
    a2 = jnp.maximum(a2 + b2_ref[...], 0.0).astype(jnp.bfloat16)  # (5*TB, 80)

    # ---- fc1: Linear(400, 10), accumulated over the 5 conv2 output rows ----
    logits = None
    for h in range(5):
        term = jnp.dot(a2[h * tb:(h + 1) * tb, :], wfc_ref[h],
                       preferred_element_type=f32)        # (TB, 128)
        logits = term if logits is None else logits + term
    o_ref[...] = logits + bfc_ref[...]


# ---------------------------------------------------------------------------
# Host-side wrapper
# ---------------------------------------------------------------------------
def _pick_tile_b(n):
    # Multiple of 16 (bf16 sublane pack) so all in-kernel reshapes are aligned.
    # Grows with batch to amortize per-step overhead while keeping >= 2 grid
    # steps for v7x's two TensorCores once there is real work to split.
    if n <= 512:
        return 16
    if n <= 2048:
        return 32
    return 64


def digit_classifier_forward_fn(prep, x):
    """x: (N, 1, 28, 28) f32 NCHW (torch layout) -> logits (N, 10) f32."""
    n = x.shape[0]
    assert x.shape[1:] == (1, 28, 28)
    tb = _pick_tile_b(n)
    blocks = (n + tb - 1) // tb
    npad = blocks * tb

    xs = x.reshape(n, 28, 28)                              # Cin == 1
    if npad != n:
        xs = jnp.pad(xs, ((0, npad - n), (0, 0), (0, 0)))
    xs = jnp.transpose(xs, (1, 0, 2)).astype(jnp.bfloat16)  # (28, Npad, 28)

    out = pl.pallas_call(
        _fused_digit_kernel,
        out_shape=jax.ShapeDtypeStruct((npad, _LANES), jnp.float32),
        grid_spec=pltpu.PrefetchScalarGridSpec(
            num_scalar_prefetch=0,
            grid=(blocks,),
            in_specs=[
                pl.BlockSpec((28, tb, 28), lambda i: (0, i, 0)),       # input tile
                pl.BlockSpec((10, 28, 192), lambda i: (0, 0, 0)),      # resident t1
                pl.BlockSpec((1, 192), lambda i: (0, 0)),              # resident b1
                pl.BlockSpec((6, 192, 80), lambda i: (0, 0, 0)),       # resident t2
                pl.BlockSpec((1, 80), lambda i: (0, 0)),               # resident b2
                pl.BlockSpec((5, 80, _LANES), lambda i: (0, 0, 0)),    # resident wfc
                pl.BlockSpec((1, _LANES), lambda i: (0, 0)),           # resident bfc
            ],
            out_specs=pl.BlockSpec((tb, _LANES), lambda i: (i, 0)),
        ),
        compiler_params=pltpu.CompilerParams(
            dimension_semantics=("parallel",),
            vmem_limit_bytes=_VMEM_LIMIT,
        ),
    )(xs, prep["t1"], prep["b1"], prep["t2"], prep["b2"],
      prep["wfc"], prep["bfc"])

    return out[:n, :10]


digit_classifier_forward = jax.jit(digit_classifier_forward_fn)


# ---------------------------------------------------------------------------
# Parameters: torch-style init + one-time resident-weight construction
# ---------------------------------------------------------------------------
def init_params(key):
    """Deterministic PyTorch-style uniform(-1/sqrt(fan_in)) init (torch layouts)."""
    ks = jax.random.split(key, 6)

    def u(k, shape, fan_in):
        bound = 1.0 / math.sqrt(fan_in)
        return jax.random.uniform(k, shape, jnp.float32, -bound, bound)

    return {
        "w1": u(ks[0], (16, 1, 5, 5), 1 * 5 * 5),
        "b1": u(ks[1], (16,), 1 * 5 * 5),
        "w2": u(ks[2], (16, 16, 3, 3), 16 * 3 * 3),
        "b2": u(ks[3], (16,), 16 * 3 * 3),
        "wfc": u(ks[4], (10, 400), 400),
        "bfc": u(ks[5], (10,), 400),
    }


def prepare_params(params):
    """One-time host-side construction of the resident Toeplitz/FC weights."""
    w1 = np.asarray(params["w1"], np.float32)    # (16, 1, 5, 5)  (cout, cin, kh, kw)
    b1 = np.asarray(params["b1"], np.float32)
    w2 = np.asarray(params["w2"], np.float32)    # (16, 16, 3, 3)
    b2 = np.asarray(params["b2"], np.float32)
    wfc = np.asarray(params["wfc"], np.float32)  # (10, 400), feature = c2*25+h*5+w
    bfc = np.asarray(params["bfc"], np.float32)

    c1, c2, dout = 16, 16, 10

    # conv1: t1[dx*5+kh, w, px*16+c] = W1[c, 0, kh, w - 2*px - dx]
    t1 = np.zeros((2, 5, 28, 12 * c1), np.float32)
    for dx in range(2):
        for kh in range(5):
            for px in range(12):
                for kw in range(5):
                    w = 2 * px + dx + kw
                    t1[dx, kh, w, px * c1:(px + 1) * c1] = w1[:, 0, kh, kw]
    t1 = t1.reshape(10, 28, 12 * c1)

    # conv2: t2[dx*3+kh, px*16+c, px2*16+c2] = W2[c2, c, kh, px - 2*px2 - dx]
    t2 = np.zeros((2, 3, 12 * c1, 5 * c2), np.float32)
    for dx in range(2):
        for kh in range(3):
            for px2 in range(5):
                for kw in range(3):
                    px = 2 * px2 + dx + kw
                    t2[dx, kh, px * c1:(px + 1) * c1,
                       px2 * c2:(px2 + 1) * c2] = w2[:, :, kh, kw].T
    t2 = t2.reshape(6, 12 * c1, 5 * c2)

    # FC split by conv2 output row h: wfc_h[h, w*16+c2, d] = Wfc[d, c2*25+h*5+w]
    wfc_r = wfc.reshape(dout, c2, 5, 5)
    wfc_h = np.zeros((5, 5 * c2, _LANES), np.float32)
    for h in range(5):
        for w in range(5):
            wfc_h[h, w * c2:(w + 1) * c2, :dout] = wfc_r[:, :, h, w].T

    b1t = np.tile(b1, 12)[None, :]                         # (1, 192)
    b2t = np.tile(b2, 5)[None, :]                          # (1, 80)
    bfct = np.zeros((1, _LANES), np.float32)
    bfct[0, :dout] = bfc

    return {
        "t1": jnp.asarray(t1, dtype=jnp.bfloat16),
        "b1": jnp.asarray(b1t, dtype=jnp.float32),
        "t2": jnp.asarray(t2, dtype=jnp.bfloat16),
        "b2": jnp.asarray(b2t, dtype=jnp.float32),
        "wfc": jnp.asarray(wfc_h, dtype=jnp.bfloat16),
        "bfc": jnp.asarray(bfct, dtype=jnp.float32),
    }


# Pure-JAX f32 reference for the correctness sanity check.
def _reference_forward(params, x):
    def block(x, w, b):
        y = jax.lax.conv_general_dilated(
            x, w, (1, 1), "VALID", dimension_numbers=("NCHW", "OIHW", "NCHW"))
        y = jnp.maximum(y + b[None, :, None, None], 0.0)
        return jax.lax.reduce_window(
            y, -jnp.inf, jax.lax.max, (1, 1, 2, 2), (1, 1, 2, 2), "VALID")

    x = block(x, params["w1"], params["b1"])
    x = block(x, params["w2"], params["b2"])
    x = x.reshape(x.shape[0], -1)
    return x @ params["wfc"].T + params["bfc"]


if __name__ == "__main__":
    key = jax.random.PRNGKey(0)
    k_params, k_x = jax.random.split(key)
    params = init_params(k_params)
    prep = prepare_params(params)

    # MNIST-shaped input (Linear(400, 10) forces 28x28); batch = 2.
    x = jax.random.normal(k_x, (2, 1, 28, 28), dtype=jnp.float32)

    out = digit_classifier_forward(prep, x)
    out = jax.block_until_ready(out)
    assert out.shape == (2, 10) and out.dtype == jnp.float32

    ref = _reference_forward(params, x)
    assert jnp.allclose(out, ref, rtol=2e-2, atol=2e-2), (out, ref)

    print("KERNEL_OK")
</pallas_src>

<mosaic_0001>
module attributes {stable_mosaic.version = 11 : i64} {
  func.func @_fused_digit_kernel(%arg0: i32, %arg1: memref<28x16x28xbf16, #tpu.memory_space<vmem>>, %arg2: memref<10x28x192xbf16, #tpu.memory_space<vmem>>, %arg3: memref<1x192xf32, #tpu.memory_space<vmem>>, %arg4: memref<6x192x80xbf16, #tpu.memory_space<vmem>>, %arg5: memref<1x80xf32, #tpu.memory_space<vmem>>, %arg6: memref<5x80x128xbf16, #tpu.memory_space<vmem>>, %arg7: memref<1x128xf32, #tpu.memory_space<vmem>>, %arg8: memref<16x128xf32, #tpu.memory_space<vmem>>) attributes {dimension_semantics = [#tpu.dimension_semantics<parallel>], iteration_bounds = array<i64: 1>, scalar_prefetch = 0 : i64, scratch_operands = 0 : i64, tpu.core_type = #tpu.core_type<tc>, window_params = [{transform_indices = @transform_0, window_bounds = array<i64: 28, 16, 28>}, {pipeline_mode = #tpu.pipeline_mode<synchronous>, transform_indices = @transform_1, window_bounds = array<i64: 10, 28, 192>}, {pipeline_mode = #tpu.pipeline_mode<synchronous>, transform_indices = @transform_2, window_bounds = array<i64: 1, 192>}, {pipeline_mode = #tpu.pipeline_mode<synchronous>, transform_indices = @transform_3, window_bounds = array<i64: 6, 192, 80>}, {pipeline_mode = #tpu.pipeline_mode<synchronous>, transform_indices = @transform_4, window_bounds = array<i64: 1, 80>}, {pipeline_mode = #tpu.pipeline_mode<synchronous>, transform_indices = @transform_5, window_bounds = array<i64: 5, 80, 128>}, {pipeline_mode = #tpu.pipeline_mode<synchronous>, transform_indices = @transform_6, window_bounds = array<i64: 1, 128>}, {transform_indices = @transform_7, window_bounds = array<i64: 16, 128>}]} {
    %c0 = arith.constant 0 : index
    %c0_0 = arith.constant 0 : index
    %c0_1 = arith.constant 0 : index
    %0 = vector.load %arg1[%c0, %c0_0, %c0_1] : memref<28x16x28xbf16, #tpu.memory_space<vmem>>, vector<28x16x28xbf16>
    %1 = vector.shape_cast %0 : vector<28x16x28xbf16> to vector<14x2x16x28xbf16>
    %2 = vector.extract_strided_slice %1 {offsets = [0, 0, 0, 0], sizes = [12, 1, 16, 28], strides = [1, 1, 1, 1]} : vector<14x2x16x28xbf16> to vector<12x1x16x28xbf16>
    %3 = vector.shape_cast %2 : vector<12x1x16x28xbf16> to vector<12x16x28xbf16>
    %4 = vector.shape_cast %3 : vector<12x16x28xbf16> to vector<192x28xbf16>
    %c0_2 = arith.constant 0 : index
    %c0_3 = arith.constant 0 : index
    %c0_4 = arith.constant 0 : index
    %5 = vector.load %arg2[%c0_2, %c0_3, %c0_4] : memref<10x28x192xbf16, #tpu.memory_space<vmem>>, vector<1x28x192xbf16>
    %6 = vector.shape_cast %5 : vector<1x28x192xbf16> to vector<28x192xbf16>
    %cst = arith.constant dense<0.000000e+00> : vector<192x192xf32>
    %7 = tpu.matmul %4, %6, %cst {dimension_numbers = #tpu.dot_dimension_numbers<[1], [0], [0], [1], [0, 0, 1, 1], [], []>} : vector<192x28xbf16>, vector<28x192xbf16>, vector<192x192xf32> -> vector<192x192xf32>
    %8 = vector.extract_strided_slice %1 {offsets = [0, 1, 0, 0], sizes = [12, 1, 16, 28], strides = [1, 1, 1, 1]} : vector<14x2x16x28xbf16> to vector<12x1x16x28xbf16>
    %9 = vector.shape_cast %8 : vector<12x1x16x28xbf16> to vector<12x16x28xbf16>
    %10 = vector.shape_cast %9 : vector<12x16x28xbf16> to vector<192x28xbf16>
    %c1 = arith.constant 1 : index
    %c0_5 = arith.constant 0 : index
    %c0_6 = arith.constant 0 : index
    %11 = vector.load %arg2[%c1, %c0_5, %c0_6] : memref<10x28x192xbf16, #tpu.memory_space<vmem>>, vector<1x28x192xbf16>
    %12 = vector.shape_cast %11 : vector<1x28x192xbf16> to vector<28x192xbf16>
    %cst_7 = arith.constant dense<0.000000e+00> : vector<192x192xf32>
    %13 = tpu.matmul %10, %12, %cst_7 {dimension_numbers = #tpu.dot_dimension_numbers<[1], [0], [0], [1], [0, 0, 1, 1], [], []>} : vector<192x28xbf16>, vector<28x192xbf16>, vector<192x192xf32> -> vector<192x192xf32>
    %14 = arith.addf %7, %13 : vector<192x192xf32>
    %15 = vector.extract_strided_slice %1 {offsets = [1, 0, 0, 0], sizes = [12, 1, 16, 28], strides = [1, 1, 1, 1]} : vector<14x2x16x28xbf16> to vector<12x1x16x28xbf16>
    %16 = vector.shape_cast %15 : vector<12x1x16x28xbf16> to vector<12x16x28xbf16>
    %17 = vector.shape_cast %16 : vector<12x16x28xbf16> to vector<192x28xbf16>
    %c2 = arith.constant 2 : index
    %c0_8 = arith.constant 0 : index
    %c0_9 = arith.constant 0 : index
    %18 = vector.load %arg2[%c2, %c0_8, %c0_9] : memref<10x28x192xbf16, #tpu.memory_space<vmem>>, vector<1x28x192xbf16>
    %19 = vector.shape_cast %18 : vector<1x28x192xbf16> to vector<28x192xbf16>
    %cst_10 = arith.constant dense<0.000000e+00> : vector<192x192xf32>
    %20 = tpu.matmul %17, %19, %cst_10 {dimension_numbers = #tpu.dot_dimension_numbers<[1], [0], [0], [1], [0, 0, 1, 1], [], []>} : vector<192x28xbf16>, vector<28x192xbf16>, vector<192x192xf32> -> vector<192x192xf32>
    %21 = arith.addf %14, %20 : vector<192x192xf32>
    %22 = vector.extract_strided_slice %1 {offsets = [1, 1, 0, 0], sizes = [12, 1, 16, 28], strides = [1, 1, 1, 1]} : vector<14x2x16x28xbf16> to vector<12x1x16x28xbf16>
    %23 = vector.shape_cast %22 : vector<12x1x16x28xbf16> to vector<12x16x28xbf16>
    %24 = vector.shape_cast %23 : vector<12x16x28xbf16> to vector<192x28xbf16>
    %c3 = arith.constant 3 : index
    %c0_11 = arith.constant 0 : index
    %c0_12 = arith.constant 0 : index
    %25 = vector.load %arg2[%c3, %c0_11, %c0_12] : memref<10x28x192xbf16, #tpu.memory_space<vmem>>, vector<1x28x192xbf16>
    %26 = vector.shape_cast %25 : vector<1x28x192xbf16> to vector<28x192xbf16>
    %cst_13 = arith.constant dense<0.000000e+00> : vector<192x192xf32>
    %27 = tpu.matmul %24, %26, %cst_13 {dimension_numbers = #tpu.dot_dimension_numbers<[1], [0], [0], [1], [0, 0, 1, 1], [], []>} : vector<192x28xbf16>, vector<28x192xbf16>, vector<192x192xf32> -> vector<192x192xf32>
    %28 = arith.addf %21, %27 : vector<192x192xf32>
    %29 = vector.extract_strided_slice %1 {offsets = [2, 0, 0, 0], sizes = [12, 1, 16, 28], strides = [1, 1, 1, 1]} : vector<14x2x16x28xbf16> to vector<12x1x16x28xbf16>
    %30 = vector.shape_cast %29 : vector<12x1x16x28xbf16> to vector<12x16x28xbf16>
    %31 = vector.shape_cast %30 : vector<12x16x28xbf16> to vector<192x28xbf16>
    %c4 = arith.constant 4 : index
    %c0_14 = arith.constant 0 : index
    %c0_15 = arith.constant 0 : index
    %32 = vector.load %arg2[%c4, %c0_14, %c0_15] : memref<10x28x192xbf16, #tpu.memory_space<vmem>>, vector<1x28x192xbf16>
    %33 = vector.shape_cast %32 : vector<1x28x192xbf16> to vector<28x192xbf16>
    %cst_16 = arith.constant dense<0.000000e+00> : vector<192x192xf32>
    %34 = tpu.matmul %31, %33, %cst_16 {dimension_numbers = #tpu.dot_dimension_numbers<[1], [0], [0], [1], [0, 0, 1, 1], [], []>} : vector<192x28xbf16>, vector<28x192xbf16>, vector<192x192xf32> -> vector<192x192xf32>
    %35 = arith.addf %28, %34 : vector<192x192xf32>
    %36 = vector.extract_strided_slice %1 {offsets = [0, 0, 0, 0], sizes = [12, 1, 16, 28], strides = [1, 1, 1, 1]} : vector<14x2x16x28xbf16> to vector<12x1x16x28xbf16>
    %37 = vector.shape_cast %36 : vector<12x1x16x28xbf16> to vector<12x16x28xbf16>
    %38 = vector.shape_cast %37 : vector<12x16x28xbf16> to vector<192x28xbf16>
    %c5 = arith.constant 5 : index
    %c0_17 = arith.constant 0 : index
    %c0_18 = arith.constant 0 : index
    %39 = vector.load %arg2[%c5, %c0_17, %c0_18] : memref<10x28x192xbf16, #tpu.memory_space<vmem>>, vector<1x28x192xbf16>
    %40 = vector.shape_cast %39 : vector<1x28x192xbf16> to vector<28x192xbf16>
    %cst_19 = arith.constant dense<0.000000e+00> : vector<192x192xf32>
    %41 = tpu.matmul %38, %40, %cst_19 {dimension_numbers = #tpu.dot_dimension_numbers<[1], [0], [0], [1], [0, 0, 1, 1], [], []>} : vector<192x28xbf16>, vector<28x192xbf16>, vector<192x192xf32> -> vector<192x192xf32>
    %42 = vector.extract_strided_slice %1 {offsets = [0, 1, 0, 0], sizes = [12, 1, 16, 28], strides = [1, 1, 1, 1]} : vector<14x2x16x28xbf16> to vector<12x1x16x28xbf16>
    %43 = vector.shape_cast %42 : vector<12x1x16x28xbf16> to vector<12x16x28xbf16>
    %44 = vector.shape_cast %43 : vector<12x16x28xbf16> to vector<192x28xbf16>
    %c6 = arith.constant 6 : index
    %c0_20 = arith.constant 0 : index
    %c0_21 = arith.constant 0 : index
    %45 = vector.load %arg2[%c6, %c0_20, %c0_21] : memref<10x28x192xbf16, #tpu.memory_space<vmem>>, vector<1x28x192xbf16>
    %46 = vector.shape_cast %45 : vector<1x28x192xbf16> to vector<28x192xbf16>
    %cst_22 = arith.constant dense<0.000000e+00> : vector<192x192xf32>
    %47 = tpu.matmul %44, %46, %cst_22 {dimension_numbers = #tpu.dot_dimension_numbers<[1], [0], [0], [1], [0, 0, 1, 1], [], []>} : vector<192x28xbf16>, vector<28x192xbf16>, vector<192x192xf32> -> vector<192x192xf32>
    %48 = arith.addf %41, %47 : vector<192x192xf32>
    %49 = vector.extract_strided_slice %1 {offsets = [1, 0, 0, 0], sizes = [12, 1, 16, 28], strides = [1, 1, 1, 1]} : vector<14x2x16x28xbf16> to vector<12x1x16x28xbf16>
    %50 = vector.shape_cast %49 : vector<12x1x16x28xbf16> to vector<12x16x28xbf16>
    %51 = vector.shape_cast %50 : vector<12x16x28xbf16> to vector<192x28xbf16>
    %c7 = arith.constant 7 : index
    %c0_23 = arith.constant 0 : index
    %c0_24 = arith.constant 0 : index
    %52 = vector.load %arg2[%c7, %c0_23, %c0_24] : memref<10x28x192xbf16, #tpu.memory_space<vmem>>, vector<1x28x192xbf16>
    %53 = vector.shape_cast %52 : vector<1x28x192xbf16> to vector<28x192xbf16>
    %cst_25 = arith.constant dense<0.000000e+00> : vector<192x192xf32>
    %54 = tpu.matmul %51, %53, %cst_25 {dimension_numbers = #tpu.dot_dimension_numbers<[1], [0], [0], [1], [0, 0, 1, 1], [], []>} : vector<192x28xbf16>, vector<28x192xbf16>, vector<192x192xf32> -> vector<192x192xf32>
    %55 = arith.addf %48, %54 : vector<192x192xf32>
    %56 = vector.extract_strided_slice %1 {offsets = [1, 1, 0, 0], sizes = [12, 1, 16, 28], strides = [1, 1, 1, 1]} : vector<14x2x16x28xbf16> to vector<12x1x16x28xbf16>
    %57 = vector.shape_cast %56 : vector<12x1x16x28xbf16> to vector<12x16x28xbf16>
    %58 = vector.shape_cast %57 : vector<12x16x28xbf16> to vector<192x28xbf16>
    %c8 = arith.constant 8 : index
    %c0_26 = arith.constant 0 : index
    %c0_27 = arith.constant 0 : index
    %59 = vector.load %arg2[%c8, %c0_26, %c0_27] : memref<10x28x192xbf16, #tpu.memory_space<vmem>>, vector<1x28x192xbf16>
    %60 = vector.shape_cast %59 : vector<1x28x192xbf16> to vector<28x192xbf16>
    %cst_28 = arith.constant dense<0.000000e+00> : vector<192x192xf32>
    %61 = tpu.matmul %58, %60, %cst_28 {dimension_numbers = #tpu.dot_dimension_numbers<[1], [0], [0], [1], [0, 0, 1, 1], [], []>} : vector<192x28xbf16>, vector<28x192xbf16>, vector<192x192xf32> -> vector<192x192xf32>
    %62 = arith.addf %55, %61 : vector<192x192xf32>
    %63 = vector.extract_strided_slice %1 {offsets = [2, 0, 0, 0], sizes = [12, 1, 16, 28], strides = [1, 1, 1, 1]} : vector<14x2x16x28xbf16> to vector<12x1x16x28xbf16>
    %64 = vector.shape_cast %63 : vector<12x1x16x28xbf16> to vector<12x16x28xbf16>
    %65 = vector.shape_cast %64 : vector<12x16x28xbf16> to vector<192x28xbf16>
    %c9 = arith.constant 9 : index
    %c0_29 = arith.constant 0 : index
    %c0_30 = arith.constant 0 : index
    %66 = vector.load %arg2[%c9, %c0_29, %c0_30] : memref<10x28x192xbf16, #tpu.memory_space<vmem>>, vector<1x28x192xbf16>
    %67 = vector.shape_cast %66 : vector<1x28x192xbf16> to vector<28x192xbf16>
    %cst_31 = arith.constant dense<0.000000e+00> : vector<192x192xf32>
    %68 = tpu.matmul %65, %67, %cst_31 {dimension_numbers = #tpu.dot_dimension_numbers<[1], [0], [0], [1], [0, 0, 1, 1], [], []>} : vector<192x28xbf16>, vector<28x192xbf16>, vector<192x192xf32> -> vector<192x192xf32>
    %69 = arith.addf %62, %68 : vector<192x192xf32>
    %70 = vector.extract_strided_slice %1 {offsets = [0, 1, 0, 0], sizes = [12, 1, 16, 28], strides = [1, 1, 1, 1]} : vector<14x2x16x28xbf16> to vector<12x1x16x28xbf16>
    %71 = vector.shape_cast %70 : vector<12x1x16x28xbf16> to vector<12x16x28xbf16>
    %72 = vector.shape_cast %71 : vector<12x16x28xbf16> to vector<192x28xbf16>
    %c0_32 = arith.constant 0 : index
    %c0_33 = arith.constant 0 : index
    %c0_34 = arith.constant 0 : index
    %73 = vector.load %arg2[%c0_32, %c0_33, %c0_34] : memref<10x28x192xbf16, #tpu.memory_space<vmem>>, vector<1x28x192xbf16>
    %74 = vector.shape_cast %73 : vector<1x28x192xbf16> to vector<28x192xbf16>
    %cst_35 = arith.constant dense<0.000000e+00> : vector<192x192xf32>
    %75 = tpu.matmul %72, %74, %cst_35 {dimension_numbers = #tpu.dot_dimension_numbers<[1], [0], [0], [1], [0, 0, 1, 1], [], []>} : vector<192x28xbf16>, vector<28x192xbf16>, vector<192x192xf32> -> vector<192x192xf32>
    %76 = vector.extract_strided_slice %1 {offsets = [1, 0, 0, 0], sizes = [12, 1, 16, 28], strides = [1, 1, 1, 1]} : vector<14x2x16x28xbf16> to vector<12x1x16x28xbf16>
    %77 = vector.shape_cast %76 : vector<12x1x16x28xbf16> to vector<12x16x28xbf16>
    %78 = vector.shape_cast %77 : vector<12x16x28xbf16> to vector<192x28xbf16>
    %c1_36 = arith.constant 1 : index
    %c0_37 = arith.constant 0 : index
    %c0_38 = arith.constant 0 : index
    %79 = vector.load %arg2[%c1_36, %c0_37, %c0_38] : memref<10x28x192xbf16, #tpu.memory_space<vmem>>, vector<1x28x192xbf16>
    %80 = vector.shape_cast %79 : vector<1x28x192xbf16> to vector<28x192xbf16>
    %cst_39 = arith.constant dense<0.000000e+00> : vector<192x192xf32>
    %81 = tpu.matmul %78, %80, %cst_39 {dimension_numbers = #tpu.dot_dimension_numbers<[1], [0], [0], [1], [0, 0, 1, 1], [], []>} : vector<192x28xbf16>, vector<28x192xbf16>, vector<192x192xf32> -> vector<192x192xf32>
    %82 = arith.addf %75, %81 : vector<192x192xf32>
    %83 = vector.extract_strided_slice %1 {offsets = [1, 1, 0, 0], sizes = [12, 1, 16, 28], strides = [1, 1, 1, 1]} : vector<14x2x16x28xbf16> to vector<12x1x16x28xbf16>
    %84 = vector.shape_cast %83 : vector<12x1x16x28xbf16> to vector<12x16x28xbf16>
    %85 = vector.shape_cast %84 : vector<12x16x28xbf16> to vector<192x28xbf16>
    %c2_40 = arith.constant 2 : index
    %c0_41 = arith.constant 0 : index
    %c0_42 = arith.constant 0 : index
    %86 = vector.load %arg2[%c2_40, %c0_41, %c0_42] : memref<10x28x192xbf16, #tpu.memory_space<vmem>>, vector<1x28x192xbf16>
    %87 = vector.shape_cast %86 : vector<1x28x192xbf16> to vector<28x192xbf16>
    %cst_43 = arith.constant dense<0.000000e+00> : vector<192x192xf32>
    %88 = tpu.matmul %85, %87, %cst_43 {dimension_numbers = #tpu.dot_dimension_numbers<[1], [0], [0], [1], [0, 0, 1, 1], [], []>} : vector<192x28xbf16>, vector<28x192xbf16>, vector<192x192xf32> -> vector<192x192xf32>
    %89 = arith.addf %82, %88 : vector<192x192xf32>
    %90 = vector.extract_strided_slice %1 {offsets = [2, 0, 0, 0], sizes = [12, 1, 16, 28], strides = [1, 1, 1, 1]} : vector<14x2x16x28xbf16> to vector<12x1x16x28xbf16>
    %91 = vector.shape_cast %90 : vector<12x1x16x28xbf16> to vector<12x16x28xbf16>
    %92 = vector.shape_cast %91 : vector<12x16x28xbf16> to vector<192x28xbf16>
    %c3_44 = arith.constant 3 : index
    %c0_45 = arith.constant 0 : index
    %c0_46 = arith.constant 0 : index
    %93 = vector.load %arg2[%c3_44, %c0_45, %c0_46] : memref<10x28x192xbf16, #tpu.memory_space<vmem>>, vector<1x28x192xbf16>
    %94 = vector.shape_cast %93 : vector<1x28x192xbf16> to vector<28x192xbf16>
    %cst_47 = arith.constant dense<0.000000e+00> : vector<192x192xf32>
    %95 = tpu.matmul %92, %94, %cst_47 {dimension_numbers = #tpu.dot_dimension_numbers<[1], [0], [0], [1], [0, 0, 1, 1], [], []>} : vector<192x28xbf16>, vector<28x192xbf16>, vector<192x192xf32> -> vector<192x192xf32>
    %96 = arith.addf %89, %95 : vector<192x192xf32>
    %97 = vector.extract_strided_slice %1 {offsets = [2, 1, 0, 0], sizes = [12, 1, 16, 28], strides = [1, 1, 1, 1]} : vector<14x2x16x28xbf16> to vector<12x1x16x28xbf16>
    %98 = vector.shape_cast %97 : vector<12x1x16x28xbf16> to vector<12x16x28xbf16>
    %99 = vector.shape_cast %98 : vector<12x16x28xbf16> to vector<192x28xbf16>
    %c4_48 = arith.constant 4 : index
    %c0_49 = arith.constant 0 : index
    %c0_50 = arith.constant 0 : index
    %100 = vector.load %arg2[%c4_48, %c0_49, %c0_50] : memref<10x28x192xbf16, #tpu.memory_space<vmem>>, vector<1x28x192xbf16>
    %101 = vector.shape_cast %100 : vector<1x28x192xbf16> to vector<28x192xbf16>
    %cst_51 = arith.constant dense<0.000000e+00> : vector<192x192xf32>
    %102 = tpu.matmul %99, %101, %cst_51 {dimension_numbers = #tpu.dot_dimension_numbers<[1], [0], [0], [1], [0, 0, 1, 1], [], []>} : vector<192x28xbf16>, vector<28x192xbf16>, vector<192x192xf32> -> vector<192x192xf32>
    %103 = arith.addf %96, %102 : vector<192x192xf32>
    %104 = vector.extract_strided_slice %1 {offsets = [0, 1, 0, 0], sizes = [12, 1, 16, 28], strides = [1, 1, 1, 1]} : vector<14x2x16x28xbf16> to vector<12x1x16x28xbf16>
    %105 = vector.shape_cast %104 : vector<12x1x16x28xbf16> to vector<12x16x28xbf16>
    %106 = vector.shape_cast %105 : vector<12x16x28xbf16> to vector<192x28xbf16>
    %c5_52 = arith.constant 5 : index
    %c0_53 = arith.constant 0 : index
    %c0_54 = arith.constant 0 : index
    %107 = vector.load %arg2[%c5_52, %c0_53, %c0_54] : memref<10x28x192xbf16, #tpu.memory_space<vmem>>, vector<1x28x192xbf16>
    %108 = vector.shape_cast %107 : vector<1x28x192xbf16> to vector<28x192xbf16>
    %cst_55 = arith.constant dense<0.000000e+00> : vector<192x192xf32>
    %109 = tpu.matmul %106, %108, %cst_55 {dimension_numbers = #tpu.dot_dimension_numbers<[1], [0], [0], [1], [0, 0, 1, 1], [], []>} : vector<192x28xbf16>, vector<28x192xbf16>, vector<192x192xf32> -> vector<192x192xf32>
    %110 = vector.extract_strided_slice %1 {offsets = [1, 0, 0, 0], sizes = [12, 1, 16, 28], strides = [1, 1, 1, 1]} : vector<14x2x16x28xbf16> to vector<12x1x16x28xbf16>
    %111 = vector.shape_cast %110 : vector<12x1x16x28xbf16> to vector<12x16x28xbf16>
    %112 = vector.shape_cast %111 : vector<12x16x28xbf16> to vector<192x28xbf16>
    %c6_56 = arith.constant 6 : index
    %c0_57 = arith.constant 0 : index
    %c0_58 = arith.constant 0 : index
    %113 = vector.load %arg2[%c6_56, %c0_57, %c0_58] : memref<10x28x192xbf16, #tpu.memory_space<vmem>>, vector<1x28x192xbf16>
    %114 = vector.shape_cast %113 : vector<1x28x192xbf16> to vector<28x192xbf16>
    %cst_59 = arith.constant dense<0.000000e+00> : vector<192x192xf32>
    %115 = tpu.matmul %112, %114, %cst_59 {dimension_numbers = #tpu.dot_dimension_numbers<[1], [0], [0], [1], [0, 0, 1, 1], [], []>} : vector<192x28xbf16>, vector<28x192xbf16>, vector<192x192xf32> -> vector<192x192xf32>
    %116 = arith.addf %109, %115 : vector<192x192xf32>
    %117 = vector.extract_strided_slice %1 {offsets = [1, 1, 0, 0], sizes = [12, 1, 16, 28], strides = [1, 1, 1, 1]} : vector<14x2x16x28xbf16> to vector<12x1x16x28xbf16>
    %118 = vector.shape_cast %117 : vector<12x1x16x28xbf16> to vector<12x16x28xbf16>
    %119 = vector.shape_cast %118 : vector<12x16x28xbf16> to vector<192x28xbf16>
    %c7_60 = arith.constant 7 : index
    %c0_61 = arith.constant 0 : index
    %c0_62 = arith.constant 0 : index
    %120 = vector.load %arg2[%c7_60, %c0_61, %c0_62] : memref<10x28x192xbf16, #tpu.memory_space<vmem>>, vector<1x28x192xbf16>
    %121 = vector.shape_cast %120 : vector<1x28x192xbf16> to vector<28x192xbf16>
    %cst_63 = arith.constant dense<0.000000e+00> : vector<192x192xf32>
    %122 = tpu.matmul %119, %121, %cst_63 {dimension_numbers = #tpu.dot_dimension_numbers<[1], [0], [0], [1], [0, 0, 1, 1], [], []>} : vector<192x28xbf16>, vector<28x192xbf16>, vector<192x192xf32> -> vector<192x192xf32>
    %123 = arith.addf %116, %122 : vector<192x192xf32>
    %124 = vector.extract_strided_slice %1 {offsets = [2, 0, 0, 0], sizes = [12, 1, 16, 28], strides = [1, 1, 1, 1]} : vector<14x2x16x28xbf16> to vector<12x1x16x28xbf16>
    %125 = vector.shape_cast %124 : vector<12x1x16x28xbf16> to vector<12x16x28xbf16>
    %126 = vector.shape_cast %125 : vector<12x16x28xbf16> to vector<192x28xbf16>
    %c8_64 = arith.constant 8 : index
    %c0_65 = arith.constant 0 : index
    %c0_66 = arith.constant 0 : index
    %127 = vector.load %arg2[%c8_64, %c0_65, %c0_66] : memref<10x28x192xbf16, #tpu.memory_space<vmem>>, vector<1x28x192xbf16>
    %128 = vector.shape_cast %127 : vector<1x28x192xbf16> to vector<28x192xbf16>
    %cst_67 = arith.constant dense<0.000000e+00> : vector<192x192xf32>
    %129 = tpu.matmul %126, %128, %cst_67 {dimension_numbers = #tpu.dot_dimension_numbers<[1], [0], [0], [1], [0, 0, 1, 1], [], []>} : vector<192x28xbf16>, vector<28x192xbf16>, vector<192x192xf32> -> vector<192x192xf32>
    %130 = arith.addf %123, %129 : vector<192x192xf32>
    %131 = vector.extract_strided_slice %1 {offsets = [2, 1, 0, 0], sizes = [12, 1, 16, 28], strides = [1, 1, 1, 1]} : vector<14x2x16x28xbf16> to vector<12x1x16x28xbf16>
    %132 = vector.shape_cast %131 : vector<12x1x16x28xbf16> to vector<12x16x28xbf16>
    %133 = vector.shape_cast %132 : vector<12x16x28xbf16> to vector<192x28xbf16>
    %c9_68 = arith.constant 9 : index
    %c0_69 = arith.constant 0 : index
    %c0_70 = arith.constant 0 : index
    %134 = vector.load %arg2[%c9_68, %c0_69, %c0_70] : memref<10x28x192xbf16, #tpu.memory_space<vmem>>, vector<1x28x192xbf16>
    %135 = vector.shape_cast %134 : vector<1x28x192xbf16> to vector<28x192xbf16>
    %cst_71 = arith.constant dense<0.000000e+00> : vector<192x192xf32>
    %136 = tpu.matmul %133, %135, %cst_71 {dimension_numbers = #tpu.dot_dimension_numbers<[1], [0], [0], [1], [0, 0, 1, 1], [], []>} : vector<192x28xbf16>, vector<28x192xbf16>, vector<192x192xf32> -> vector<192x192xf32>
    %137 = arith.addf %130, %136 : vector<192x192xf32>
    %138 = arith.maximumf %35, %69 : vector<192x192xf32>
    %139 = arith.maximumf %103, %137 : vector<192x192xf32>
    %140 = arith.maximumf %138, %139 : vector<192x192xf32>
    %c0_72 = arith.constant 0 : index
    %c0_73 = arith.constant 0 : index
    %141 = vector.load %arg3[%c0_72, %c0_73] : memref<1x192xf32, #tpu.memory_space<vmem>>, vector<1x192xf32>
    %142 = vector.broadcast %141 : vector<1x192xf32> to vector<192x192xf32>
    %143 = arith.addf %140, %142 : vector<192x192xf32>
    %cst_74 = arith.constant 0.000000e+00 : f32
    %144 = vector.broadcast %cst_74 : f32 to vector<192x192xf32>
    %145 = arith.maximumf %143, %144 : vector<192x192xf32>
    %146 = arith.truncf %145 : vector<192x192xf32> to vector<192x192xbf16>
    %147 = vector.shape_cast %146 : vector<192x192xbf16> to vector<6x2x16x192xbf16>
    %148 = vector.extract_strided_slice %147 {offsets = [0, 0, 0, 0], sizes = [5, 1, 16, 192], strides = [1, 1, 1, 1]} : vector<6x2x16x192xbf16> to vector<5x1x16x192xbf16>
    %149 = vector.shape_cast %148 : vector<5x1x16x192xbf16> to vector<5x16x192xbf16>
    %150 = vector.shape_cast %149 : vector<5x16x192xbf16> to vector<80x192xbf16>
    %c0_75 = arith.constant 0 : index
    %c0_76 = arith.constant 0 : index
    %c0_77 = arith.constant 0 : index
    %151 = vector.load %arg4[%c0_75, %c0_76, %c0_77] : memref<6x192x80xbf16, #tpu.memory_space<vmem>>, vector<1x192x80xbf16>
    %152 = vector.shape_cast %151 : vector<1x192x80xbf16> to vector<192x80xbf16>
    %cst_78 = arith.constant dense<0.000000e+00> : vector<80x80xf32>
    %153 = tpu.matmul %150, %152, %cst_78 {dimension_numbers = #tpu.dot_dimension_numbers<[1], [0], [0], [1], [0, 0, 1, 1], [], []>} : vector<80x192xbf16>, vector<192x80xbf16>, vector<80x80xf32> -> vector<80x80xf32>
    %154 = vector.extract_strided_slice %147 {offsets = [0, 1, 0, 0], sizes = [5, 1, 16, 192], strides = [1, 1, 1, 1]} : vector<6x2x16x192xbf16> to vector<5x1x16x192xbf16>
    %155 = vector.shape_cast %154 : vector<5x1x16x192xbf16> to vector<5x16x192xbf16>
    %156 = vector.shape_cast %155 : vector<5x16x192xbf16> to vector<80x192xbf16>
    %c1_79 = arith.constant 1 : index
    %c0_80 = arith.constant 0 : index
    %c0_81 = arith.constant 0 : index
    %157 = vector.load %arg4[%c1_79, %c0_80, %c0_81] : memref<6x192x80xbf16, #tpu.memory_space<vmem>>, vector<1x192x80xbf16>
    %158 = vector.shape_cast %157 : vector<1x192x80xbf16> to vector<192x80xbf16>
    %cst_82 = arith.constant dense<0.000000e+00> : vector<80x80xf32>
    %159 = tpu.matmul %156, %158, %cst_82 {dimension_numbers = #tpu.dot_dimension_numbers<[1], [0], [0], [1], [0, 0, 1, 1], [], []>} : vector<80x192xbf16>, vector<192x80xbf16>, vector<80x80xf32> -> vector<80x80xf32>
    %160 = arith.addf %153, %159 : vector<80x80xf32>
    %161 = vector.extract_strided_slice %147 {offsets = [1, 0, 0, 0], sizes = [5, 1, 16, 192], strides = [1, 1, 1, 1]} : vector<6x2x16x192xbf16> to vector<5x1x16x192xbf16>
    %162 = vector.shape_cast %161 : vector<5x1x16x192xbf16> to vector<5x16x192xbf16>
    %163 = vector.shape_cast %162 : vector<5x16x192xbf16> to vector<80x192xbf16>
    %c2_83 = arith.constant 2 : index
    %c0_84 = arith.constant 0 : index
    %c0_85 = arith.constant 0 : index
    %164 = vector.load %arg4[%c2_83, %c0_84, %c0_85] : memref<6x192x80xbf16, #tpu.memory_space<vmem>>, vector<1x192x80xbf16>
    %165 = vector.shape_cast %164 : vector<1x192x80xbf16> to vector<192x80xbf16>
    %cst_86 = arith.constant dense<0.000000e+00> : vector<80x80xf32>
    %166 = tpu.matmul %163, %165, %cst_86 {dimension_numbers = #tpu.dot_dimension_numbers<[1], [0], [0], [1], [0, 0, 1, 1], [], []>} : vector<80x192xbf16>, vector<192x80xbf16>, vector<80x80xf32> -> vector<80x80xf32>
    %167 = arith.addf %160, %166 : vector<80x80xf32>
    %168 = vector.extract_strided_slice %147 {offsets = [0, 0, 0, 0], sizes = [5, 1, 16, 192], strides = [1, 1, 1, 1]} : vector<6x2x16x192xbf16> to vector<5x1x16x192xbf16>
    %169 = vector.shape_cast %168 : vector<5x1x16x192xbf16> to vector<5x16x192xbf16>
    %170 = vector.shape_cast %169 : vector<5x16x192xbf16> to vector<80x192xbf16>
    %c3_87 = arith.constant 3 : index
    %c0_88 = arith.constant 0 : index
    %c0_89 = arith.constant 0 : index
    %171 = vector.load %arg4[%c3_87, %c0_88, %c0_89] : memref<6x192x80xbf16, #tpu.memory_space<vmem>>, vector<1x192x80xbf16>
    %172 = vector.shape_cast %171 : vector<1x192x80xbf16> to vector<192x80xbf16>
    %cst_90 = arith.constant dense<0.000000e+00> : vector<80x80xf32>
    %173 = tpu.matmul %170, %172, %cst_90 {dimension_numbers = #tpu.dot_dimension_numbers<[1], [0], [0], [1], [0, 0, 1, 1], [], []>} : vector<80x192xbf16>, vector<192x80xbf16>, vector<80x80xf32> -> vector<80x80xf32>
    %174 = vector.extract_strided_slice %147 {offsets = [0, 1, 0, 0], sizes = [5, 1, 16, 192], strides = [1, 1, 1, 1]} : vector<6x2x16x192xbf16> to vector<5x1x16x192xbf16>
    %175 = vector.shape_cast %174 : vector<5x1x16x192xbf16> to vector<5x16x192xbf16>
    %176 = vector.shape_cast %175 : vector<5x16x192xbf16> to vector<80x192xbf16>
    %c4_91 = arith.constant 4 : index
    %c0_92 = arith.constant 0 : index
    %c0_93 = arith.constant 0 : index
    %177 = vector.load %arg4[%c4_91, %c0_92, %c0_93] : memref<6x192x80xbf16, #tpu.memory_space<vmem>>, vector<1x192x80xbf16>
    %178 = vector.shape_cast %177 : vector<1x192x80xbf16> to vector<192x80xbf16>
    %cst_94 = arith.constant dense<0.000000e+00> : vector<80x80xf32>
    %179 = tpu.matmul %176, %178, %cst_94 {dimension_numbers = #tpu.dot_dimension_numbers<[1], [0], [0], [1], [0, 0, 1, 1], [], []>} : vector<80x192xbf16>, vector<192x80xbf16>, vector<80x80xf32> -> vector<80x80xf32>
    %180 = arith.addf %173, %179 : vector<80x80xf32>
    %181 = vector.extract_strided_slice %147 {offsets = [1, 0, 0, 0], sizes = [5, 1, 16, 192], strides = [1, 1, 1, 1]} : vector<6x2x16x192xbf16> to vector<5x1x16x192xbf16>
    %182 = vector.shape_cast %181 : vector<5x1x16x192xbf16> to vector<5x16x192xbf16>
    %183 = vector.shape_cast %182 : vector<5x16x192xbf16> to vector<80x192xbf16>
    %c5_95 = arith.constant 5 : index
    %c0_96 = arith.constant 0 : index
    %c0_97 = arith.constant 0 : index
    %184 = vector.load %arg4[%c5_95, %c0_96, %c0_97] : memref<6x192x80xbf16, #tpu.memory_space<vmem>>, vector<1x192x80xbf16>
    %185 = vector.shape_cast %184 : vector<1x192x80xbf16> to vector<192x80xbf16>
    %cst_98 = arith.constant dense<0.000000e+00> : vector<80x80xf32>
    %186 = tpu.matmul %183, %185, %cst_98 {dimension_numbers = #tpu.dot_dimension_numbers<[1], [0], [0], [1], [0, 0, 1, 1], [], []>} : vector<80x192xbf16>, vector<192x80xbf16>, vector<80x80xf32> -> vector<80x80xf32>
    %187 = arith.addf %180, %186 : vector<80x80xf32>
    %188 = vector.extract_strided_slice %147 {offsets = [0, 1, 0, 0], sizes = [5, 1, 16, 192], strides = [1, 1, 1, 1]} : vector<6x2x16x192xbf16> to vector<5x1x16x192xbf16>
    %189 = vector.shape_cast %188 : vector<5x1x16x192xbf16> to vector<5x16x192xbf16>
    %190 = vector.shape_cast %189 : vector<5x16x192xbf16> to vector<80x192xbf16>
    %c0_99 = arith.constant 0 : index
    %c0_100 = arith.constant 0 : index
    %c0_101 = arith.constant 0 : index
    %191 = vector.load %arg4[%c0_99, %c0_100, %c0_101] : memref<6x192x80xbf16, #tpu.memory_space<vmem>>, vector<1x192x80xbf16>
    %192 = vector.shape_cast %191 : vector<1x192x80xbf16> to vector<192x80xbf16>
    %cst_102 = arith.constant dense<0.000000e+00> : vector<80x80xf32>
    %193 = tpu.matmul %190, %192, %cst_102 {dimension_numbers = #tpu.dot_dimension_numbers<[1], [0], [0], [1], [0, 0, 1, 1], [], []>} : vector<80x192xbf16>, vector<192x80xbf16>, vector<80x80xf32> -> vector<80x80xf32>
    %194 = vector.extract_strided_slice %147 {offsets = [1, 0, 0, 0], sizes = [5, 1, 16, 192], strides = [1, 1, 1, 1]} : vector<6x2x16x192xbf16> to vector<5x1x16x192xbf16>
    %195 = vector.shape_cast %194 : vector<5x1x16x192xbf16> to vector<5x16x192xbf16>
    %196 = vector.shape_cast %195 : vector<5x16x192xbf16> to vector<80x192xbf16>
    %c1_103 = arith.constant 1 : index
    %c0_104 = arith.constant 0 : index
    %c0_105 = arith.constant 0 : index
    %197 = vector.load %arg4[%c1_103, %c0_104, %c0_105] : memref<6x192x80xbf16, #tpu.memory_space<vmem>>, vector<1x192x80xbf16>
    %198 = vector.shape_cast %197 : vector<1x192x80xbf16> to vector<192x80xbf16>
    %cst_106 = arith.constant dense<0.000000e+00> : vector<80x80xf32>
    %199 = tpu.matmul %196, %198, %cst_106 {dimension_numbers = #tpu.dot_dimension_numbers<[1], [0], [0], [1], [0, 0, 1, 1], [], []>} : vector<80x192xbf16>, vector<192x80xbf16>, vector<80x80xf32> -> vector<80x80xf32>
    %200 = arith.addf %193, %199 : vector<80x80xf32>
    %201 = vector.extract_strided_slice %147 {offsets = [1, 1, 0, 0], sizes = [5, 1, 16, 192], strides = [1, 1, 1, 1]} : vector<6x2x16x192xbf16> to vector<5x1x16x192xbf16>
    %202 = vector.shape_cast %201 : vector<5x1x16x192xbf16> to vector<5x16x192xbf16>
    %203 = vector.shape_cast %202 : vector<5x16x192xbf16> to vector<80x192xbf16>
    %c2_107 = arith.constant 2 : index
    %c0_108 = arith.constant 0 : index
    %c0_109 = arith.constant 0 : index
    %204 = vector.load %arg4[%c2_107, %c0_108, %c0_109] : memref<6x192x80xbf16, #tpu.memory_space<vmem>>, vector<1x192x80xbf16>
    %205 = vector.shape_cast %204 : vector<1x192x80xbf16> to vector<192x80xbf16>
    %cst_110 = arith.constant dense<0.000000e+00> : vector<80x80xf32>
    %206 = tpu.matmul %203, %205, %cst_110 {dimension_numbers = #tpu.dot_dimension_numbers<[1], [0], [0], [1], [0, 0, 1, 1], [], []>} : vector<80x192xbf16>, vector<192x80xbf16>, vector<80x80xf32> -> vector<80x80xf32>
    %207 = arith.addf %200, %206 : vector<80x80xf32>
    %208 = vector.extract_strided_slice %147 {offsets = [0, 1, 0, 0], sizes = [5, 1, 16, 192], strides = [1, 1, 1, 1]} : vector<6x2x16x192xbf16> to vector<5x1x16x192xbf16>
    %209 = vector.shape_cast %208 : vector<5x1x16x192xbf16> to vector<5x16x192xbf16>
    %210 = vector.shape_cast %209 : vector<5x16x192xbf16> to vector<80x192xbf16>
    %c3_111 = arith.constant 3 : index
    %c0_112 = arith.constant 0 : index
    %c0_113 = arith.constant 0 : index
    %211 = vector.load %arg4[%c3_111, %c0_112, %c0_113] : memref<6x192x80xbf16, #tpu.memory_space<vmem>>, vector<1x192x80xbf16>
    %212 = vector.shape_cast %211 : vector<1x192x80xbf16> to vector<192x80xbf16>
    %cst_114 = arith.constant dense<0.000000e+00> : vector<80x80xf32>
    %213 = tpu.matmul %210, %212, %cst_114 {dimension_numbers = #tpu.dot_dimension_numbers<[1], [0], [0], [1], [0, 0, 1, 1], [], []>} : vector<80x192xbf16>, vector<192x80xbf16>, vector<80x80xf32> -> vector<80x80xf32>
    %214 = vector.extract_strided_slice %147 {offsets = [1, 0, 0, 0], sizes = [5, 1, 16, 192], strides = [1, 1, 1, 1]} : vector<6x2x16x192xbf16> to vector<5x1x16x192xbf16>
    %215 = vector.shape_cast %214 : vector<5x1x16x192xbf16> to vector<5x16x192xbf16>
    %216 = vector.shape_cast %215 : vector<5x16x192xbf16> to vector<80x192xbf16>
    %c4_115 = arith.constant 4 : index
    %c0_116 = arith.constant 0 : index
    %c0_117 = arith.constant 0 : index
    %217 = vector.load %arg4[%c4_115, %c0_116, %c0_117] : memref<6x192x80xbf16, #tpu.memory_space<vmem>>, vector<1x192x80xbf16>
    %218 = vector.shape_cast %217 : vector<1x192x80xbf16> to vector<192x80xbf16>
    %cst_118 = arith.constant dense<0.000000e+00> : vector<80x80xf32>
    %219 = tpu.matmul %216, %218, %cst_118 {dimension_numbers = #tpu.dot_dimension_numbers<[1], [0], [0], [1], [0, 0, 1, 1], [], []>} : vector<80x192xbf16>, vector<192x80xbf16>, vector<80x80xf32> -> vector<80x80xf32>
    %220 = arith.addf %213, %219 : vector<80x80xf32>
    %221 = vector.extract_strided_slice %147 {offsets = [1, 1, 0, 0], sizes = [5, 1, 16, 192], strides = [1, 1, 1, 1]} : vector<6x2x16x192xbf16> to vector<5x1x16x192xbf16>
    %222 = vector.shape_cast %221 : vector<5x1x16x192xbf16> to vector<5x16x192xbf16>
    %223 = vector.shape_cast %222 : vector<5x16x192xbf16> to vector<80x192xbf16>
    %c5_119 = arith.constant 5 : index
    %c0_120 = arith.constant 0 : index
    %c0_121 = arith.constant 0 : index
    %224 = vector.load %arg4[%c5_119, %c0_120, %c0_121] : memref<6x192x80xbf16, #tpu.memory_space<vmem>>, vector<1x192x80xbf16>
    %225 = vector.shape_cast %224 : vector<1x192x80xbf16> to vector<192x80xbf16>
    %cst_122 = arith.constant dense<0.000000e+00> : vector<80x80xf32>
    %226 = tpu.matmul %223, %225, %cst_122 {dimension_numbers = #tpu.dot_dimension_numbers<[1], [0], [0], [1], [0, 0, 1, 1], [], []>} : vector<80x192xbf16>, vector<192x80xbf16>, vector<80x80xf32> -> vector<80x80xf32>
    %227 = arith.addf %220, %226 : vector<80x80xf32>
    %228 = arith.maximumf %167, %187 : vector<80x80xf32>
    %229 = arith.maximumf %207, %227 : vector<80x80xf32>
    %230 = arith.maximumf %228, %229 : vector<80x80xf32>
    %c0_123 = arith.constant 0 : index
    %c0_124 = arith.constant 0 : index
    %231 = vector.load %arg5[%c0_123, %c0_124] : memref<1x80xf32, #tpu.memory_space<vmem>>, vector<1x80xf32>
    %232 = vector.broadcast %231 : vector<1x80xf32> to vector<80x80xf32>
    %233 = arith.addf %230, %232 : vector<80x80xf32>
    %cst_125 = arith.constant 0.000000e+00 : f32
    %234 = vector.broadcast %cst_125 : f32 to vector<80x80xf32>
    %235 = arith.maximumf %233, %234 : vector<80x80xf32>
    %236 = arith.truncf %235 : vector<80x80xf32> to vector<80x80xbf16>
    %237 = vector.extract_strided_slice %236 {offsets = [0, 0], sizes = [16, 80], strides = [1, 1]} : vector<80x80xbf16> to vector<16x80xbf16>
    %c0_126 = arith.constant 0 : index
    %c0_127 = arith.constant 0 : index
    %c0_128 = arith.constant 0 : index
    %238 = vector.load %arg6[%c0_126, %c0_127, %c0_128] : memref<5x80x128xbf16, #tpu.memory_space<vmem>>, vector<1x80x128xbf16>
    %239 = vector.shape_cast %238 : vector<1x80x128xbf16> to vector<80x128xbf16>
    %cst_129 = arith.constant dense<0.000000e+00> : vector<16x128xf32>
    %240 = tpu.matmul %237, %239, %cst_129 {dimension_numbers = #tpu.dot_dimension_numbers<[1], [0], [0], [1], [0, 0, 1, 1], [], []>} : vector<16x80xbf16>, vector<80x128xbf16>, vector<16x128xf32> -> vector<16x128xf32>
    %241 = vector.extract_strided_slice %236 {offsets = [16, 0], sizes = [16, 80], strides = [1, 1]} : vector<80x80xbf16> to vector<16x80xbf16>
    %c1_130 = arith.constant 1 : index
    %c0_131 = arith.constant 0 : index
    %c0_132 = arith.constant 0 : index
    %242 = vector.load %arg6[%c1_130, %c0_131, %c0_132] : memref<5x80x128xbf16, #tpu.memory_space<vmem>>, vector<1x80x128xbf16>
    %243 = vector.shape_cast %242 : vector<1x80x128xbf16> to vector<80x128xbf16>
    %cst_133 = arith.constant dense<0.000000e+00> : vector<16x128xf32>
    %244 = tpu.matmul %241, %243, %cst_133 {dimension_numbers = #tpu.dot_dimension_numbers<[1], [0], [0], [1], [0, 0, 1, 1], [], []>} : vector<16x80xbf16>, vector<80x128xbf16>, vector<16x128xf32> -> vector<16x128xf32>
    %245 = arith.addf %240, %244 : vector<16x128xf32>
    %246 = vector.extract_strided_slice %236 {offsets = [32, 0], sizes = [16, 80], strides = [1, 1]} : vector<80x80xbf16> to vector<16x80xbf16>
    %c2_134 = arith.constant 2 : index
    %c0_135 = arith.constant 0 : index
    %c0_136 = arith.constant 0 : index
    %247 = vector.load %arg6[%c2_134, %c0_135, %c0_136] : memref<5x80x128xbf16, #tpu.memory_space<vmem>>, vector<1x80x128xbf16>
    %248 = vector.shape_cast %247 : vector<1x80x128xbf16> to vector<80x128xbf16>
    %cst_137 = arith.constant dense<0.000000e+00> : vector<16x128xf32>
    %249 = tpu.matmul %246, %248, %cst_137 {dimension_numbers = #tpu.dot_dimension_numbers<[1], [0], [0], [1], [0, 0, 1, 1], [], []>} : vector<16x80xbf16>, vector<80x128xbf16>, vector<16x128xf32> -> vector<16x128xf32>
    %250 = arith.addf %245, %249 : vector<16x128xf32>
    %251 = vector.extract_strided_slice %236 {offsets = [48, 0], sizes = [16, 80], strides = [1, 1]} : vector<80x80xbf16> to vector<16x80xbf16>
    %c3_138 = arith.constant 3 : index
    %c0_139 = arith.constant 0 : index
    %c0_140 = arith.constant 0 : index
    %252 = vector.load %arg6[%c3_138, %c0_139, %c0_140] : memref<5x80x128xbf16, #tpu.memory_space<vmem>>, vector<1x80x128xbf16>
    %253 = vector.shape_cast %252 : vector<1x80x128xbf16> to vector<80x128xbf16>
    %cst_141 = arith.constant dense<0.000000e+00> : vector<16x128xf32>
    %254 = tpu.matmul %251, %253, %cst_141 {dimension_numbers = #tpu.dot_dimension_numbers<[1], [0], [0], [1], [0, 0, 1, 1], [], []>} : vector<16x80xbf16>, vector<80x128xbf16>, vector<16x128xf32> -> vector<16x128xf32>
    %255 = arith.addf %250, %254 : vector<16x128xf32>
    %256 = vector.extract_strided_slice %236 {offsets = [64, 0], sizes = [16, 80], strides = [1, 1]} : vector<80x80xbf16> to vector<16x80xbf16>
    %c4_142 = arith.constant 4 : index
    %c0_143 = arith.constant 0 : index
    %c0_144 = arith.constant 0 : index
    %257 = vector.load %arg6[%c4_142, %c0_143, %c0_144] : memref<5x80x128xbf16, #tpu.memory_space<vmem>>, vector<1x80x128xbf16>
    %258 = vector.shape_cast %257 : vector<1x80x128xbf16> to vector<80x128xbf16>
    %cst_145 = arith.constant dense<0.000000e+00> : vector<16x128xf32>
    %259 = tpu.matmul %256, %258, %cst_145 {dimension_numbers = #tpu.dot_dimension_numbers<[1], [0], [0], [1], [0, 0, 1, 1], [], []>} : vector<16x80xbf16>, vector<80x128xbf16>, vector<16x128xf32> -> vector<16x128xf32>
    %260 = arith.addf %255, %259 : vector<16x128xf32>
    %c0_146 = arith.constant 0 : index
    %c0_147 = arith.constant 0 : index
    %261 = vector.load %arg7[%c0_146, %c0_147] : memref<1x128xf32, #tpu.memory_space<vmem>>, vector<1x128xf32>
    %262 = vector.broadcast %261 : vector<1x128xf32> to vector<16x128xf32>
    %263 = arith.addf %260, %262 : vector<16x128xf32>
    %c0_148 = arith.constant 0 : index
    %c0_149 = arith.constant 0 : index
    %264 = vector.load %arg8[%c0_148, %c0_149] : memref<16x128xf32, #tpu.memory_space<vmem>>, vector<16x128xf32>
    tpu.vector_store %arg8[%c0_148, %c0_149], %263 {strides = array<i32>} : memref<16x128xf32, #tpu.memory_space<vmem>>, vector<16x128xf32>,
    return
  }
  func.func @transform_0(%arg0: i32) -> (i32, i32, i32) {
    %c0_i32 = arith.constant 0 : i32
    %c0_i32_0 = arith.constant 0 : i32
    %c0_i32_1 = arith.constant 0 : i32
    return %c0_i32, %arg0, %c0_i32_0 : i32, i32, i32
  }
  func.func @transform_1(%arg0: i32) -> (i32, i32, i32) {
    %c0_i32 = arith.constant 0 : i32
    %c0_i32_0 = arith.constant 0 : i32
    %c0_i32_1 = arith.constant 0 : i32
    %c0_i32_2 = arith.constant 0 : i32
    return %c0_i32, %c0_i32_0, %c0_i32_1 : i32, i32, i32
  }
  func.func @transform_2(%arg0: i32) -> (i32, i32) {
    %c0_i32 = arith.constant 0 : i32
    %c0_i32_0 = arith.constant 0 : i32
    %c0_i32_1 = arith.constant 0 : i32
    return %c0_i32, %c0_i32_0 : i32, i32
  }
  func.func @transform_3(%arg0: i32) -> (i32, i32, i32) {
    %c0_i32 = arith.constant 0 : i32
    %c0_i32_0 = arith.constant 0 : i32
    %c0_i32_1 = arith.constant 0 : i32
    %c0_i32_2 = arith.constant 0 : i32
    return %c0_i32, %c0_i32_0, %c0_i32_1 : i32, i32, i32
  }
  func.func @transform_4(%arg0: i32) -> (i32, i32) {
    %c0_i32 = arith.constant 0 : i32
    %c0_i32_0 = arith.constant 0 : i32
    %c0_i32_1 = arith.constant 0 : i32
    return %c0_i32, %c0_i32_0 : i32, i32
  }
  func.func @transform_5(%arg0: i32) -> (i32, i32, i32) {
    %c0_i32 = arith.constant 0 : i32
    %c0_i32_0 = arith.constant 0 : i32
    %c0_i32_1 = arith.constant 0 : i32
    %c0_i32_2 = arith.constant 0 : i32
    return %c0_i32, %c0_i32_0, %c0_i32_1 : i32, i32, i32
  }
  func.func @transform_6(%arg0: i32) -> (i32, i32) {
    %c0_i32 = arith.constant 0 : i32
    %c0_i32_0 = arith.constant 0 : i32
    %c0_i32_1 = arith.constant 0 : i32
    return %c0_i32, %c0_i32_0 : i32, i32
  }
  func.func @transform_7(%arg0: i32) -> (i32, i32) {
    %c0_i32 = arith.constant 0 : i32
    %c0_i32_0 = arith.constant 0 : i32
    return %arg0, %c0_i32 : i32, i32
  }
}

</mosaic_0001>

<llo_original>
// kernel: digit_classifier_forward_fn.1
$region0: #{digit_classifier_forward_fn.1}
  #allocation0 [shape = 'u32[]', space=smem, size = 0x4, offset = 0x4, fixed_abs, tag = 'smem constant byte address 0x4 - core index']
  #allocation1 [shape = 'u32[144,128]{1,0:T(1,128)}', space=vmem, size = 0x12000, scoped, tag = 'internal scratch']
  %s0 = inlined_call_operand.vmem [shape: bf16[28,16,28], index: 0, kind: input, shape index: {}]
  %s1 = inlined_call_operand.vmem [shape: bf16[10,28,192], index: 1, kind: input, shape index: {}]
  %s2 = inlined_call_operand.vmem [shape: f32[1,192], index: 2, kind: input, shape index: {}]
  %s3 = inlined_call_operand.vmem [shape: bf16[6,192,80], index: 3, kind: input, shape index: {}]
  %s4 = inlined_call_operand.vmem [shape: f32[1,80], index: 4, kind: input, shape index: {}]
  %s5 = inlined_call_operand.vmem [shape: bf16[5,80,128], index: 5, kind: input, shape index: {}]
  %s6 = inlined_call_operand.vmem [shape: f32[1,128], index: 6, kind: input, shape index: {}]
  %s7 = inlined_call_operand.vmem [shape: f32[16,128], index: 7, kind: output, shape index: {}]
  %s8 = sld [smem:[#allocation0]]
  $region38: #{digit_classifier_forward_fn.1} parent=0
    _
  %s10 = ssub.s32 1, %s8
  %s11 = scalar_select 0, %s10, %s8
  // Predicated region
  $region2: #{digit_classifier_forward_fn.1} parent=0 // pred_check
    _
  $region3: #{digit_classifier_forward_fn.1} parent=0 // pred_check_branch
    %13 = sbr.rel (0) target = $region5
  $region4: #{digit_classifier_forward_fn.1} parent=0 // pred_region
    _
  $region5: #{digit_classifier_forward_fn.1} parent=0 // pred_fallthru
    _
  // Predicated region
  $region6: #{digit_classifier_forward_fn.1} parent=0 // pred_check
    _
  $region7: #{digit_classifier_forward_fn.1} parent=0 // pred_check_branch
    %15 = sbr.rel (0) target = $region9
  $region8: #{digit_classifier_forward_fn.1} parent=0 // pred_region
    _
  $region9: #{digit_classifier_forward_fn.1} parent=0 // pred_fallthru
    _
  // Predicated region
  $region10: #{digit_classifier_forward_fn.1} parent=0 // pred_check
    _
  $region11: #{digit_classifier_forward_fn.1} parent=0 // pred_check_branch
    %17 = sbr.rel (0) target = $region13
  $region12: #{digit_classifier_forward_fn.1} parent=0 // pred_region
    _
  $region13: #{digit_classifier_forward_fn.1} parent=0 // pred_fallthru
    _
  // Predicated region
  $region14: #{digit_classifier_forward_fn.1} parent=0 // pred_check
    _
  $region15: #{digit_classifier_forward_fn.1} parent=0 // pred_check_branch
    %19 = sbr.rel (0) target = $region17
  $region16: #{digit_classifier_forward_fn.1} parent=0 // pred_region
    _
  $region17: #{digit_classifier_forward_fn.1} parent=0 // pred_fallthru
    _
  // Predicated region
  $region18: #{digit_classifier_forward_fn.1} parent=0 // pred_check
    _
  $region19: #{digit_classifier_forward_fn.1} parent=0 // pred_check_branch
    %21 = sbr.rel (0) target = $region21
  $region20: #{digit_classifier_forward_fn.1} parent=0 // pred_region
    _
  $region21: #{digit_classifier_forward_fn.1} parent=0 // pred_fallthru
    _
  // Predicated region
  $region22: #{digit_classifier_forward_fn.1} parent=0 // pred_check
    _
  $region23: #{digit_classifier_forward_fn.1} parent=0 // pred_check_branch
    %23 = sbr.rel (0) target = $region25
  $region24: #{digit_classifier_forward_fn.1} parent=0 // pred_region
    _
  $region25: #{digit_classifier_forward_fn.1} parent=0 // pred_fallthru
    _
  // Predicated region
  $region26: #{digit_classifier_forward_fn.1} parent=0 // pred_check
    _
  $region27: #{digit_classifier_forward_fn.1} parent=0 // pred_check_branch
    %25 = sbr.rel (0) target = $region29
  $region28: #{digit_classifier_forward_fn.1} parent=0 // pred_region
    _
  $region29: #{digit_classifier_forward_fn.1} parent=0 // pred_fallthru
    _
  %v27 = vld [vmem:[%s0] sm:$0xf]
  %v28 = vld [vmem:[%s0 + $0x4] sm:$0xf]
  %v29 = vld [vmem:[%s0 + $0x8] sm:$0xf]
  %v30 = vld [vmem:[%s0 + $0xc] sm:$0xf]
  %v31 = vld [vmem:[%s0 + $0x10] sm:$0xf]
  %v32 = vld [vmem:[%s0 + $0x14] sm:$0xf]
  %v33 = vld [vmem:[%s0 + $0x18] sm:$0xf]
  %v34 = vld [vmem:[%s0 + $0x1c] sm:$0xf]
  %v35 = vld [vmem:[%s0 + $0x20] sm:$0xf]
  %v36 = vld [vmem:[%s0 + $0x24] sm:$0xf]
  %v37 = vld [vmem:[%s0 + $0x28] sm:$0xf]
  %v38 = vld [vmem:[%s0 + $0x2c] sm:$0xf]
  %v39 = vld [vmem:[%s0 + $0x30] sm:$0xf]
  %v40 = vld [vmem:[%s0 + $0x34] sm:$0xf]
  %v41 = vld [vmem:[%s0 + $0x38] sm:$0xf]
  %v42 = vld [vmem:[%s0 + $0x3c] sm:$0xf]
  %v43 = vld [vmem:[%s0 + $0x40] sm:$0xf]
  %v44 = vld [vmem:[%s0 + $0x44] sm:$0xf]
  %v45 = vld [vmem:[%s0 + $0x48] sm:$0xf]
  %v46 = vld [vmem:[%s0 + $0x4c] sm:$0xf]
  %v47 = vld [vmem:[%s0 + $0x50] sm:$0xf]
  %v48 = vld [vmem:[%s0 + $0x54] sm:$0xf]
  %v49 = vld [vmem:[%s0 + $0x58] sm:$0xf]
  %v50 = vld [vmem:[%s0 + $0x5c] sm:$0xf]
  %v51 = vld [vmem:[%s0 + $0x60] sm:$0xf]
  %v52 = vld [vmem:[%s0 + $0x64] sm:$0xf]
  %v53 = vld [vmem:[%s0 + $0x68] sm:$0xf]
  %v54 = vld [vmem:[%s0 + $0x6c] sm:$0xf]
  %v55 = vld [vmem:[%s0 + $0x70] sm:$0xf]
  %v56 = vld [vmem:[%s0 + $0x74] sm:$0xf]
  %v57 = vld [vmem:[%s0 + $0x78] sm:$0xf]
  %v58 = vld [vmem:[%s0 + $0x7c] sm:$0xf]
  %v59 = vld [vmem:[%s0 + $0x80] sm:$0xf]
  %v60 = vld [vmem:[%s0 + $0x84] sm:$0xf]
  %v61 = vld [vmem:[%s0 + $0x88] sm:$0xf]
  %v62 = vld [vmem:[%s0 + $0x8c] sm:$0xf]
  %v63 = vld [vmem:[%s0 + $0x90] sm:$0xf]
  %v64 = vld [vmem:[%s0 + $0x94] sm:$0xf]
  %v65 = vld [vmem:[%s0 + $0x98] sm:$0xf]
  %v66 = vld [vmem:[%s0 + $0x9c] sm:$0xf]
  %v67 = vld [vmem:[%s0 + $0xa0] sm:$0xf]
  %v68 = vld [vmem:[%s0 + $0xa4] sm:$0xf]
  %v69 = vld [vmem:[%s0 + $0xa8] sm:$0xf]
  %v70 = vld [vmem:[%s0 + $0xac] sm:$0xf]
  %v71 = vld [vmem:[%s0 + $0xb0] sm:$0xf]
  %v72 = vld [vmem:[%s0 + $0xb4] sm:$0xf]
  %v73 = vld [vmem:[%s0 + $0xb8] sm:$0xf]
  %v74 = vld [vmem:[%s0 + $0xbc] sm:$0xf]
  %v75 = vld [vmem:[%s0 + $0xc0] sm:$0xf]
  %v76 = vld [vmem:[%s0 + $0xc4] sm:$0xf]
  %v77 = vld [vmem:[%s0 + $0xc8] sm:$0xf]
  %v78 = vld [vmem:[%s0 + $0xcc] sm:$0xf]
  %v79 = vld [vmem:[%s0 + $0xd0] sm:$0xf]
  %v80 = vld [vmem:[%s0 + $0xd4] sm:$0xf]
  %v81 = vld [vmem:[%s0 + $0xd8] sm:$0xf]
  %v82 = vld [vmem:[%s0 + $0xdc] sm:$0xf]
  %v83 = vld [vmem:[%s1] sm:$0xff]
  %v84 = vld [vmem:[%s1 + $0x8] sm:$0xff]
  %v85 = vld [vmem:[%s1 + $0x10] sm:$0xff]
  %v86 = vld [vmem:[%s1 + $0x18] sm:$0x33]
  %s87 = scalar_lea.vmem %s1, 32
  %v88 = vld [vmem:[%s87] sm:$0xff]
  %v89 = vld [vmem:[%s87 + $0x8] sm:$0xff]
  %v90 = vld [vmem:[%s87 + $0x10] sm:$0xff]
  %v91 = vld [vmem:[%s87 + $0x18] sm:$0x33]
  %v116 = vunpack.c.l.b16 %v29
  %v117 = vunpack.c.l.b16 %v30
  %v118 = vunpack.c.l.b16 %v33
  %v119 = vunpack.c.l.b16 %v34
  %v120 = vunpack.c.l.b16 %v37
  %v121 = vunpack.c.l.b16 %v38
  %v122 = vunpack.c.l.b16 %v41
  %v123 = vunpack.c.l.b16 %v42
  %v124 = vunpack.c.l.b16 %v45
  %v125 = vunpack.c.l.b16 %v46
  %v126 = vunpack.c.l.b16 %v49
  %v127 = vunpack.c.l.b16 %v50
  %v128 = vunpack.c.l.b16 %v53
  %v129 = vunpack.c.l.b16 %v54
  %v130 = vunpack.c.l.b16 %v57
  %v131 = vunpack.c.l.b16 %v58
  %v132 = vunpack.c.l.b16 %v61
  %v133 = vunpack.c.l.b16 %v62
  %v134 = vunpack.c.l.b16 %v65
  %v135 = vunpack.c.l.b16 %v66
  %v136 = vunpack.c.l.b16 %v69
  %v137 = vunpack.c.l.b16 %v70
  %v138 = vunpack.c.l.b16 %v73
  %v139 = vunpack.c.l.b16 %v74
  %v140 = vpack.c.b16 %v117, %v116
  %v141 = vpack.c.b16 %v119, %v118
  %v142 = vpack.c.b16 %v121, %v120
  %v143 = vpack.c.b16 %v123, %v122
  %v144 = vpack.c.b16 %v125, %v124
  %v145 = vpack.c.b16 %v127, %v126
  %v146 = vpack.c.b16 %v129, %v128
  %v147 = vpack.c.b16 %v131, %v130
  %v148 = vpack.c.b16 %v133, %v132
  %v149 = vpack.c.b16 %v135, %v134
  %v150 = vpack.c.b16 %v137, %v136
  %v151 = vpack.c.b16 %v139, %v138
  %v156 = vunpack.c.l.b16 %v88
  %v157 = vunpack.c.h.b16 %v88
  %v158 = vunpack.c.l.b16 %v89
  %v159 = vunpack.c.h.b16 %v89
  %v160 = vunpack.c.l.b16 %v90
  %v161 = vunpack.c.h.b16 %v90
  %v162 = vunpack.c.l.b16 %v91
  %v163 = vunpack.c.h.b16 %v91
  %v164 = vpack.c.b16 %v158, %v156
  %v165 = vpack.c.b16 %v159, %v157
  %v166 = vpack.c.b16 %v162, %v160
  %v167 = vpack.c.b16 %v163, %v161
  %vm170 = vcmask 228352
  %v172 = vsel %vm170, %v140, 0
  %v175 = vsel %vm170, %v141, 0
  %v178 = vsel %vm170, %v142, 0
  %v181 = vsel %vm170, %v143, 0
  %v184 = vsel %vm170, %v144, 0
  %v187 = vsel %vm170, %v145, 0
  %v190 = vsel %vm170, %v146, 0
  %v193 = vsel %vm170, %v147, 0
  %v196 = vsel %vm170, %v148, 0
  %v199 = vsel %vm170, %v149, 0
  %v202 = vsel %vm170, %v150, 0
  %v205 = vsel %vm170, %v151, 0
  %vm207 = vcmask 1045504
  %v209 = vsel %vm207, %v166, 0
  %v212 = vsel %vm207, %v167, 0
  %214 = vmatprep.subr.bf16.mxu0 %v165
  %215 = vmatpush1.bf16.msra.mxu0 %v164
  %216 = vmatprep.subr.bf16.mxu0 %v212
  %217 = vmatpush1.bf16.msra.mxu0 %v209
  %218 = vmatprep.subr.bf16.mxu0 0
  %219 = vmatpush1.bf16.msra.mxu0 0
  %220 = vmatprep.subr.bf16.mxu0 0
  %221 = vmatpush1.bf16.msra.mxu0 0
  %222 = vmatprep.subr.bf16.mxu0 0
  %223 = vmatpush1.bf16.msra.mxu0 0
  %224 = vmatprep.subr.bf16.mxu0 0
  %225 = vmatpush1.bf16.msra.mxu0 0
  %226 = vmatprep.subr.bf16.mxu0 0
  %227 = vmatpush1.bf16.msra.mxu0 0
  %228 = vmatprep.subr.bf16.mxu0 0
  %229 = vmatpush1.bf16.msra.mxu0 0
  %230 = vmatprep.subr.bf16.mxu0 0
  %231 = vmatpush1.bf16.msra.mxu0 0
  %232 = vmatprep.subr.bf16.mxu0 0
  %233 = vmatpush1.bf16.msra.mxu0 0
  %234 = vmatprep.subr.bf16.mxu0 0
  %235 = vmatpush1.bf16.msra.mxu0 0
  %236 = vmatprep.subr.bf16.mxu0 0
  %237 = vmatpush1.bf16.msra.mxu0 0
  %238 = vmatprep.subr.bf16.mxu0 0
  %239 = vmatpush1.bf16.msra.mxu0 0
  %240 = vmatprep.subr.bf16.mxu0 0
  %241 = vmatpush1.bf16.msra.mxu0 0
  %242 = vmatprep.subr.bf16.mxu0 0
  %243 = vmatpush1.bf16.msra.mxu0 0
  %244 = vmatprep.subr.bf16.mxu0 0
  %245 = vmatpush1.bf16.msra.mxu0 0
  %246 = vmatprep.mubr.bf16.mxu0 0
  %247 = vmatmul.mubr.bf16.gmra.mrb[0].mxu0 %v172
  %v248 = vpop.f32.mrb[0].mxu0
  %v249 = vadd.f32 0.0, %v248
  %v250 = vpop.f32.mrb[0].mxu0
  %v251 = vadd.f32 0.0, %v250
  %v252 = vpop.f32.mrb[0].mxu0
  %v253 = vadd.f32 0.0, %v252
  %v254 = vpop.f32.mrb[0].mxu0
  %v255 = vadd.f32 0.0, %v254
  %256 = vmatprep.mubr.bf16.mxu0 0
  %257 = vmatmul.mubr.bf16.gmra.mrb[0].mxu0 %v175
  %v258 = vpop.f32.mrb[0].mxu0
  %v259 = vadd.f32 0.0, %v258
  %v260 = vpop.f32.mrb[0].mxu0
  %v261 = vadd.f32 0.0, %v260
  %v262 = vpop.f32.mrb[0].mxu0
  %v263 = vadd.f32 0.0, %v262
  %v264 = vpop.f32.mrb[0].mxu0
  %v265 = vadd.f32 0.0, %v264
  %266 = vmatprep.mubr.bf16.mxu0 0
  %267 = vmatmul.mubr.bf16.gmra.mrb[0].mxu0 %v178
  %v268 = vpop.f32.mrb[0].mxu0
  %v269 = vadd.f32 0.0, %v268
  %v270 = vpop.f32.mrb[0].mxu0
  %v271 = vadd.f32 0.0, %v270
  %v272 = vpop.f32.mrb[0].mxu0
  %v273 = vadd.f32 0.0, %v272
  %v274 = vpop.f32.mrb[0].mxu0
  %v275 = vadd.f32 0.0, %v274
  %276 = vmatprep.mubr.bf16.mxu0 0
  %277 = vmatmul.mubr.bf16.gmra.mrb[0].mxu0 %v181
  %v278 = vpop.f32.mrb[0].mxu0
  %v279 = vadd.f32 0.0, %v278
  %v280 = vpop.f32.mrb[0].mxu0
  %v281 = vadd.f32 0.0, %v280
  %v282 = vpop.f32.mrb[0].mxu0
  %v283 = vadd.f32 0.0, %v282
  %v284 = vpop.f32.mrb[0].mxu0
  %v285 = vadd.f32 0.0, %v284
  %286 = vmatprep.mubr.bf16.mxu0 0
  %287 = vmatmul.mubr.bf16.gmra.mrb[0].mxu0 %v184
  %v288 = vpop.f32.mrb[0].mxu0
  %v289 = vadd.f32 0.0, %v288
  %v290 = vpop.f32.mrb[0].mxu0
  %v291 = vadd.f32 0.0, %v290
  %v292 = vpop.f32.mrb[0].mxu0
  %v293 = vadd.f32 0.0, %v292
  %v294 = vpop.f32.mrb[0].mxu0
  %v295 = vadd.f32 0.0, %v294
  %296 = vmatprep.mubr.bf16.mxu0 0
  %297 = vmatmul.mubr.bf16.gmra.mrb[0].mxu0 %v187
  %v298 = vpop.f32.mrb[0].mxu0
  %v299 = vadd.f32 0.0, %v298
  %v300 = vpop.f32.mrb[0].mxu0
  %v301 = vadd.f32 0.0, %v300
  %v302 = vpop.f32.mrb[0].mxu0
  %v303 = vadd.f32 0.0, %v302
  %v304 = vpop.f32.mrb[0].mxu0
  %v305 = vadd.f32 0.0, %v304
  %306 = vmatprep.mubr.bf16.mxu0 0
  %307 = vmatmul.mubr.bf16.gmra.mrb[0].mxu0 %v190
  %v308 = vpop.f32.mrb[0].mxu0
  %v309 = vadd.f32 0.0, %v308
  %v310 = vpop.f32.mrb[0].mxu0
  %v311 = vadd.f32 0.0, %v310
  %v312 = vpop.f32.mrb[0].mxu0
  %v313 = vadd.f32 0.0, %v312
  %v314 = vpop.f32.mrb[0].mxu0
  %v315 = vadd.f32 0.0, %v314
  %316 = vmatprep.mubr.bf16.mxu0 0
  %317 = vmatmul.mubr.bf16.gmra.mrb[0].mxu0 %v193
  %v318 = vpop.f32.mrb[0].mxu0
  %v319 = vadd.f32 0.0, %v318
  %v320 = vpop.f32.mrb[0].mxu0
  %v321 = vadd.f32 0.0, %v320
  %v322 = vpop.f32.mrb[0].mxu0
  %v323 = vadd.f32 0.0, %v322
  %v324 = vpop.f32.mrb[0].mxu0
  %v325 = vadd.f32 0.0, %v324
  %326 = vmatprep.mubr.bf16.mxu0 0
  %327 = vmatmul.mubr.bf16.gmra.mrb[0].mxu0 %v196
  %v328 = vpop.f32.mrb[0].mxu0
  %v329 = vadd.f32 0.0, %v328
  %v330 = vpop.f32.mrb[0].mxu0
  %v331 = vadd.f32 0.0, %v330
  %v332 = vpop.f32.mrb[0].mxu0
  %v333 = vadd.f32 0.0, %v332
  %v334 = vpop.f32.mrb[0].mxu0
  %v335 = vadd.f32 0.0, %v334
  %336 = vmatprep.mubr.bf16.mxu0 0
  %337 = vmatmul.mubr.bf16.gmra.mrb[0].mxu0 %v199
  %v338 = vpop.f32.mrb[0].mxu0
  %v339 = vadd.f32 0.0, %v338
  %v340 = vpop.f32.mrb[0].mxu0
  %v341 = vadd.f32 0.0, %v340
  %v342 = vpop.f32.mrb[0].mxu0
  %v343 = vadd.f32 0.0, %v342
  %v344 = vpop.f32.mrb[0].mxu0
  %v345 = vadd.f32 0.0, %v344
  %346 = vmatprep.mubr.bf16.mxu0 0
  %347 = vmatmul.mubr.bf16.gmra.mrb[0].mxu0 %v202
  %v348 = vpop.f32.mrb[0].mxu0
  %v349 = vadd.f32 0.0, %v348
  %v350 = vpop.f32.mrb[0].mxu0
  %v351 = vadd.f32 0.0, %v350
  %v352 = vpop.f32.mrb[0].mxu0
  %v353 = vadd.f32 0.0, %v352
  %v354 = vpop.f32.mrb[0].mxu0
  %v355 = vadd.f32 0.0, %v354
  %356 = vmatprep.mubr.bf16.mxu0 0
  %357 = vmatmul.mubr.bf16.gmra.mrb[0].mxu0 %v205
  %v358 = vpop.f32.mrb[0].mxu0
  %v359 = vadd.f32 0.0, %v358
  %v360 = vpop.f32.mrb[0].mxu0
  %v361 = vadd.f32 0.0, %v360
  %v362 = vpop.f32.mrb[0].mxu0
  %v363 = vadd.f32 0.0, %v362
  %v364 = vpop.f32.mrb[0].mxu0
  %v365 = vadd.f32 0.0, %v364
  %366 = vdwg.mxu0
  %v391 = vunpack.c.l.b16 %v27
  %v392 = vunpack.c.l.b16 %v28
  %v393 = vunpack.c.l.b16 %v31
  %v394 = vunpack.c.l.b16 %v32
  %v395 = vunpack.c.l.b16 %v35
  %v396 = vunpack.c.l.b16 %v36
  %v397 = vunpack.c.l.b16 %v39
  %v398 = vunpack.c.l.b16 %v40
  %v399 = vunpack.c.l.b16 %v43
  %v400 = vunpack.c.l.b16 %v44
  %v401 = vunpack.c.l.b16 %v47
  %v402 = vunpack.c.l.b16 %v48
  %v403 = vunpack.c.l.b16 %v51
  %v404 = vunpack.c.l.b16 %v52
  %v405 = vunpack.c.l.b16 %v55
  %v406 = vunpack.c.l.b16 %v56
  %v407 = vunpack.c.l.b16 %v59
  %v408 = vunpack.c.l.b16 %v60
  %v409 = vunpack.c.l.b16 %v63
  %v410 = vunpack.c.l.b16 %v64
  %v411 = vunpack.c.l.b16 %v67
  %v412 = vunpack.c.l.b16 %v68
  %v413 = vunpack.c.l.b16 %v71
  %v414 = vunpack.c.l.b16 %v72
  %v415 = vpack.c.b16 %v392, %v391
  %v416 = vpack.c.b16 %v394, %v393
  %v417 = vpack.c.b16 %v396, %v395
  %v418 = vpack.c.b16 %v398, %v397
  %v419 = vpack.c.b16 %v400, %v399
  %v420 = vpack.c.b16 %v402, %v401
  %v421 = vpack.c.b16 %v404, %v403
  %v422 = vpack.c.b16 %v406, %v405
  %v423 = vpack.c.b16 %v408, %v407
  %v424 = vpack.c.b16 %v410, %v409
  %v425 = vpack.c.b16 %v412, %v411
  %v426 = vpack.c.b16 %v414, %v413
  %v431 = vunpack.c.l.b16 %v83
  %v432 = vunpack.c.h.b16 %v83
  %v433 = vunpack.c.l.b16 %v84
  %v434 = vunpack.c.h.b16 %v84
  %v435 = vunpack.c.l.b16 %v85
  %v436 = vunpack.c.h.b16 %v85
  %v437 = vunpack.c.l.b16 %v86
  %v438 = vunpack.c.h.b16 %v86
  %v439 = vpack.c.b16 %v433, %v431
  %v440 = vpack.c.b16 %v434, %v432
  %v441 = vpack.c.b16 %v437, %v435
  %v442 = vpack.c.b16 %v438, %v436
  %v446 = vsel %vm170, %v415, 0
  %v449 = vsel %vm170, %v416, 0
  %v452 = vsel %vm170, %v417, 0
  %v455 = vsel %vm170, %v418, 0
  %v458 = vsel %vm170, %v419, 0
  %v461 = vsel %vm170, %v420, 0
  %v464 = vsel %vm170, %v421, 0
  %v467 = vsel %vm170, %v422, 0
  %v470 = vsel %vm170, %v423, 0
  %v473 = vsel %vm170, %v424, 0
  %v476 = vsel %vm170, %v425, 0
  %v479 = vsel %vm170, %v426, 0
  %v482 = vsel %vm207, %v441, 0
  %v485 = vsel %vm207, %v442, 0
  %487 = vmatprep.subr.bf16.mxu0 %v440
  %488 = vmatpush1.bf16.msra.mxu0 %v439
  %489 = vmatprep.subr.bf16.mxu0 %v485
  %490 = vmatpush1.bf16.msra.mxu0 %v482
  %491 = vmatprep.subr.bf16.mxu0 0
  %492 = vmatpush1.bf16.msra.mxu0 0
  %493 = vmatprep.subr.bf16.mxu0 0
  %494 = vmatpush1.bf16.msra.mxu0 0
  %495 = vmatprep.subr.bf16.mxu0 0
  %496 = vmatpush1.bf16.msra.mxu0 0
  %497 = vmatprep.subr.bf16.mxu0 0
  %498 = vmatpush1.bf16.msra.mxu0 0
  %499 = vmatprep.subr.bf16.mxu0 0
  %500 = vmatpush1.bf16.msra.mxu0 0
  %501 = vmatprep.subr.bf16.mxu0 0
  %502 = vmatpush1.bf16.msra.mxu0 0
  %503 = vmatprep.subr.bf16.mxu0 0
  %504 = vmatpush1.bf16.msra.mxu0 0
  %505 = vmatprep.subr.bf16.mxu0 0
  %506 = vmatpush1.bf16.msra.mxu0 0
  %507 = vmatprep.subr.bf16.mxu0 0
  %508 = vmatpush1.bf16.msra.mxu0 0
  %509 = vmatprep.subr.bf16.mxu0 0
  %510 = vmatpush1.bf16.msra.mxu0 0
  %511 = vmatprep.subr.bf16.mxu0 0
  %512 = vmatpush1.bf16.msra.mxu0 0
  %513 = vmatprep.subr.bf16.mxu0 0
  %514 = vmatpush1.bf16.msra.mxu0 0
  %515 = vmatprep.subr.bf16.mxu0 0
  %516 = vmatpush1.bf16.msra.mxu0 0
  %517 = vmatprep.subr.bf16.mxu0 0
  %518 = vmatpush1.bf16.msra.mxu0 0
  %519 = vmatprep.mubr.bf16.mxu0 0
  %520 = vmatmul.mubr.bf16.gmra.mrb[0].mxu0 %v446
  %v521 = vpop.f32.mrb[0].mxu0
  %v522 = vadd.f32 %v249, %v521
  %v523 = vpop.f32.mrb[0].mxu0
  %v524 = vadd.f32 %v251, %v523
  %v525 = vpop.f32.mrb[0].mxu0
  %v526 = vadd.f32 %v253, %v525
  %v527 = vpop.f32.mrb[0].mxu0
  %v528 = vadd.f32 %v255, %v527
  %529 = vmatprep.mubr.bf16.mxu0 0
  %530 = vmatmul.mubr.bf16.gmra.mrb[0].mxu0 %v449
  %v531 = vpop.f32.mrb[0].mxu0
  %v532 = vadd.f32 %v259, %v531
  %v533 = vpop.f32.mrb[0].mxu0
  %v534 = vadd.f32 %v261, %v533
  %v535 = vpop.f32.mrb[0].mxu0
  %v536 = vadd.f32 %v263, %v535
  %v537 = vpop.f32.mrb[0].mxu0
  %v538 = vadd.f32 %v265, %v537
  %539 = vmatprep.mubr.bf16.mxu0 0
  %540 = vmatmul.mubr.bf16.gmra.mrb[0].mxu0 %v452
  %v541 = vpop.f32.mrb[0].mxu0
  %v542 = vadd.f32 %v269, %v541
  %v543 = vpop.f32.mrb[0].mxu0
  %v544 = vadd.f32 %v271, %v543
  %v545 = vpop.f32.mrb[0].mxu0
  %v546 = vadd.f32 %v273, %v545
  %v547 = vpop.f32.mrb[0].mxu0
  %v548 = vadd.f32 %v275, %v547
  %549 = vmatprep.mubr.bf16.mxu0 0
  %550 = vmatmul.mubr.bf16.gmra.mrb[0].mxu0 %v455
  %v551 = vpop.f32.mrb[0].mxu0
  %v552 = vadd.f32 %v279, %v551
  %v553 = vpop.f32.mrb[0].mxu0
  %v554 = vadd.f32 %v281, %v553
  %v555 = vpop.f32.mrb[0].mxu0
  %v556 = vadd.f32 %v283, %v555
  %v557 = vpop.f32.mrb[0].mxu0
  %v558 = vadd.f32 %v285, %v557
  %559 = vmatprep.mubr.bf16.mxu0 0
  %560 = vmatmul.mubr.bf16.gmra.mrb[0].mxu0 %v458
  %v561 = vpop.f32.mrb[0].mxu0
  %v562 = vadd.f32 %v289, %v561
  %v563 = vpop.f32.mrb[0].mxu0
  %v564 = vadd.f32 %v291, %v563
  %v565 = vpop.f32.mrb[0].mxu0
  %v566 = vadd.f32 %v293, %v565
  %v567 = vpop.f32.mrb[0].mxu0
  %v568 = vadd.f32 %v295, %v567
  %569 = vmatprep.mubr.bf16.mxu0 0
  %570 = vmatmul.mubr.bf16.gmra.mrb[0].mxu0 %v461
  %v571 = vpop.f32.mrb[0].mxu0
  %v572 = vadd.f32 %v299, %v571
  %v573 = vpop.f32.mrb[0].mxu0
  %v574 = vadd.f32 %v301, %v573
  %v575 = vpop.f32.mrb[0].mxu0
  %v576 = vadd.f32 %v303, %v575
  %v577 = vpop.f32.mrb[0].mxu0
  %v578 = vadd.f32 %v305, %v577
  %579 = vmatprep.mubr.bf16.mxu0 0
  %580 = vmatmul.mubr.bf16.gmra.mrb[0].mxu0 %v464
  %v581 = vpop.f32.mrb[0].mxu0
  %v582 = vadd.f32 %v309, %v581
  %v583 = vpop.f32.mrb[0].mxu0
  %v584 = vadd.f32 %v311, %v583
  %v585 = vpop.f32.mrb[0].mxu0
  %v586 = vadd.f32 %v313, %v585
  %v587 = vpop.f32.mrb[0].mxu0
  %v588 = vadd.f32 %v315, %v587
  %589 = vmatprep.mubr.bf16.mxu0 0
  %590 = vmatmul.mubr.bf16.gmra.mrb[0].mxu0 %v467
  %v591 = vpop.f32.mrb[0].mxu0
  %v592 = vadd.f32 %v319, %v591
  %v593 = vpop.f32.mrb[0].mxu0
  %v594 = vadd.f32 %v321, %v593
  %v595 = vpop.f32.mrb[0].mxu0
  %v596 = vadd.f32 %v323, %v595
  %v597 = vpop.f32.mrb[0].mxu0
  %v598 = vadd.f32 %v325, %v597
  %599 = vmatprep.mubr.bf16.mxu0 0
  %600 = vmatmul.mubr.bf16.gmra.mrb[0].mxu0 %v470
  %v601 = vpop.f32.mrb[0].mxu0
  %v602 = vadd.f32 %v329, %v601
  %v603 = vpop.f32.mrb[0].mxu0
  %v604 = vadd.f32 %v331, %v603
  %v605 = vpop.f32.mrb[0].mxu0
  %v606 = vadd.f32 %v333, %v605
  %v607 = vpop.f32.mrb[0].mxu0
  %v608 = vadd.f32 %v335, %v607
  %609 = vmatprep.mubr.bf16.mxu0 0
  %610 = vmatmul.mubr.bf16.gmra.mrb[0].mxu0 %v473
  %v611 = vpop.f32.mrb[0].mxu0
  %v612 = vadd.f32 %v339, %v611
  %v613 = vpop.f32.mrb[0].mxu0
  %v614 = vadd.f32 %v341, %v613
  %v615 = vpop.f32.mrb[0].mxu0
  %v616 = vadd.f32 %v343, %v615
  %v617 = vpop.f32.mrb[0].mxu0
  %v618 = vadd.f32 %v345, %v617
  %619 = vmatprep.mubr.bf16.mxu0 0
  %620 = vmatmul.mubr.bf16.gmra.mrb[0].mxu0 %v476
  %v621 = vpop.f32.mrb[0].mxu0
  %v622 = vadd.f32 %v349, %v621
  %v623 = vpop.f32.mrb[0].mxu0
  %v624 = vadd.f32 %v351, %v623
  %v625 = vpop.f32.mrb[0].mxu0
  %v626 = vadd.f32 %v353, %v625
  %v627 = vpop.f32.mrb[0].mxu0
  %v628 = vadd.f32 %v355, %v627
  %629 = vmatprep.mubr.bf16.mxu0 0
  %630 = vmatmul.mubr.bf16.gmra.mrb[0].mxu0 %v479
  %v631 = vpop.f32.mrb[0].mxu0
  %v632 = vadd.f32 %v359, %v631
  %v633 = vpop.f32.mrb[0].mxu0
  %v634 = vadd.f32 %v361, %v633
  %v635 = vpop.f32.mrb[0].mxu0
  %v636 = vadd.f32 %v363, %v635
  %v637 = vpop.f32.mrb[0].mxu0
  %v638 = vadd.f32 %v365, %v637
  %639 = vdwg.mxu0
  %s640 = scalar_lea.vmem %s1, 64
  %v641 = vld [vmem:[%s640] sm:$0xff]
  %v642 = vld [vmem:[%s640 + $0x8] sm:$0xff]
  %v643 = vld [vmem:[%s640 + $0x10] sm:$0xff]
  %v644 = vld [vmem:[%s640 + $0x18] sm:$0x33]
  %v647 = vunpack.c.l.b16 %v75
  %v648 = vunpack.c.l.b16 %v76
  %v649 = vpack.c.b16 %v648, %v647
  %v654 = vunpack.c.l.b16 %v641
  %v655 = vunpack.c.h.b16 %v641
  %v656 = vunpack.c.l.b16 %v642
  %v657 = vunpack.c.h.b16 %v642
  %v658 = vunpack.c.l.b16 %v643
  %v659 = vunpack.c.h.b16 %v643
  %v660 = vunpack.c.l.b16 %v644
  %v661 = vunpack.c.h.b16 %v644
  %v662 = vpack.c.b16 %v656, %v654
  %v663 = vpack.c.b16 %v657, %v655
  %v664 = vpack.c.b16 %v660, %v658
  %v665 = vpack.c.b16 %v661, %v659
  %v669 = vsel %vm170, %v649, 0
  %v672 = vsel %vm207, %v664, 0
  %v675 = vsel %vm207, %v665, 0
  %677 = vmatprep.subr.bf16.mxu0 %v663
  %678 = vmatpush1.bf16.msra.mxu0 %v662
  %679 = vmatprep.subr.bf16.mxu0 %v675
  %680 = vmatpush1.bf16.msra.mxu0 %v672
  %681 = vmatprep.subr.bf16.mxu0 0
  %682 = vmatpush1.bf16.msra.mxu0 0
  %683 = vmatprep.subr.bf16.mxu0 0
  %684 = vmatpush1.bf16.msra.mxu0 0
  %685 = vmatprep.subr.bf16.mxu0 0
  %686 = vmatpush1.bf16.msra.mxu0 0
  %687 = vmatprep.subr.bf16.mxu0 0
  %688 = vmatpush1.bf16.msra.mxu0 0
  %689 = vmatprep.subr.bf16.mxu0 0
  %690 = vmatpush1.bf16.msra.mxu0 0
  %691 = vmatprep.subr.bf16.mxu0 0
  %692 = vmatpush1.bf16.msra.mxu0 0
  %693 = vmatprep.subr.bf16.mxu0 0
  %694 = vmatpush1.bf16.msra.mxu0 0
  %695 = vmatprep.subr.bf16.mxu0 0
  %696 = vmatpush1.bf16.msra.mxu0 0
  %697 = vmatprep.subr.bf16.mxu0 0
  %698 = vmatpush1.bf16.msra.mxu0 0
  %699 = vmatprep.subr.bf16.mxu0 0
  %700 = vmatpush1.bf16.msra.mxu0 0
  %701 = vmatprep.subr.bf16.mxu0 0
  %702 = vmatpush1.bf16.msra.mxu0 0
  %703 = vmatprep.subr.bf16.mxu0 0
  %704 = vmatpush1.bf16.msra.mxu0 0
  %705 = vmatprep.subr.bf16.mxu0 0
  %706 = vmatpush1.bf16.msra.mxu0 0
  %707 = vmatprep.subr.bf16.mxu0 0
  %708 = vmatpush1.bf16.msra.mxu0 0
  %709 = vmatprep.mubr.bf16.mxu0 0
  %710 = vmatmul.mubr.bf16.gmra.mrb[0].mxu0 %v449
  %v711 = vpop.f32.mrb[0].mxu0
  %v712 = vadd.f32 0.0, %v711
  %v713 = vpop.f32.mrb[0].mxu0
  %v714 = vadd.f32 0.0, %v713
  %v715 = vpop.f32.mrb[0].mxu0
  %v716 = vadd.f32 0.0, %v715
  %v717 = vpop.f32.mrb[0].mxu0
  %v718 = vadd.f32 0.0, %v717
  %719 = vmatprep.mubr.bf16.mxu0 0
  %720 = vmatmul.mubr.bf16.gmra.mrb[0].mxu0 %v452
  %v721 = vpop.f32.mrb[0].mxu0
  %v722 = vadd.f32 0.0, %v721
  %v723 = vpop.f32.mrb[0].mxu0
  %v724 = vadd.f32 0.0, %v723
  %v725 = vpop.f32.mrb[0].mxu0
  %v726 = vadd.f32 0.0, %v725
  %v727 = vpop.f32.mrb[0].mxu0
  %v728 = vadd.f32 0.0, %v727
  %729 = vmatprep.mubr.bf16.mxu0 0
  %730 = vmatmul.mubr.bf16.gmra.mrb[0].mxu0 %v455
  %v731 = vpop.f32.mrb[0].mxu0
  %v732 = vadd.f32 0.0, %v731
  %v733 = vpop.f32.mrb[0].mxu0
  %v734 = vadd.f32 0.0, %v733
  %v735 = vpop.f32.mrb[0].mxu0
  %v736 = vadd.f32 0.0, %v735
  %v737 = vpop.f32.mrb[0].mxu0
  %v738 = vadd.f32 0.0, %v737
  %739 = vmatprep.mubr.bf16.mxu0 0
  %740 = vmatmul.mubr.bf16.gmra.mrb[0].mxu0 %v458
  %v741 = vpop.f32.mrb[0].mxu0
  %v742 = vadd.f32 0.0, %v741
  %v743 = vpop.f32.mrb[0].mxu0
  %v744 = vadd.f32 0.0, %v743
  %v745 = vpop.f32.mrb[0].mxu0
  %v746 = vadd.f32 0.0, %v745
  %v747 = vpop.f32.mrb[0].mxu0
  %v748 = vadd.f32 0.0, %v747
  %749 = vmatprep.mubr.bf16.mxu0 0
  %750 = vmatmul.mubr.bf16.gmra.mrb[0].mxu0 %v461
  %v751 = vpop.f32.mrb[0].mxu0
  %v752 = vadd.f32 0.0, %v751
  %v753 = vpop.f32.mrb[0].mxu0
  %v754 = vadd.f32 0.0, %v753
  %v755 = vpop.f32.mrb[0].mxu0
  %v756 = vadd.f32 0.0, %v755
  %v757 = vpop.f32.mrb[0].mxu0
  %v758 = vadd.f32 0.0, %v757
  %759 = vmatprep.mubr.bf16.mxu0 0
  %760 = vmatmul.mubr.bf16.gmra.mrb[0].mxu0 %v464
  %v761 = vpop.f32.mrb[0].mxu0
  %v762 = vadd.f32 0.0, %v761
  %v763 = vpop.f32.mrb[0].mxu0
  %v764 = vadd.f32 0.0, %v763
  %v765 = vpop.f32.mrb[0].mxu0
  %v766 = vadd.f32 0.0, %v765
  %v767 = vpop.f32.mrb[0].mxu0
  %v768 = vadd.f32 0.0, %v767
  %769 = vmatprep.mubr.bf16.mxu0 0
  %770 = vmatmul.mubr.bf16.gmra.mrb[0].mxu0 %v467
  %v771 = vpop.f32.mrb[0].mxu0
  %v772 = vadd.f32 0.0, %v771
  %v773 = vpop.f32.mrb[0].mxu0
  %v774 = vadd.f32 0.0, %v773
  %v775 = vpop.f32.mrb[0].mxu0
  %v776 = vadd.f32 0.0, %v775
  %v777 = vpop.f32.mrb[0].mxu0
  %v778 = vadd.f32 0.0, %v777
  %779 = vmatprep.mubr.bf16.mxu0 0
  %780 = vmatmul.mubr.bf16.gmra.mrb[0].mxu0 %v470
  %v781 = vpop.f32.mrb[0].mxu0
  %v782 = vadd.f32 0.0, %v781
  %v783 = vpop.f32.mrb[0].mxu0
  %v784 = vadd.f32 0.0, %v783
  %v785 = vpop.f32.mrb[0].mxu0
  %v786 = vadd.f32 0.0, %v785
  %v787 = vpop.f32.mrb[0].mxu0
  %v788 = vadd.f32 0.0, %v787
  %789 = vmatprep.mubr.bf16.mxu0 0
  %790 = vmatmul.mubr.bf16.gmra.mrb[0].mxu0 %v473
  %v791 = vpop.f32.mrb[0].mxu0
  %v792 = vadd.f32 0.0, %v791
  %v793 = vpop.f32.mrb[0].mxu0
  %v794 = vadd.f32 0.0, %v793
  %v795 = vpop.f32.mrb[0].mxu0
  %v796 = vadd.f32 0.0, %v795
  %v797 = vpop.f32.mrb[0].mxu0
  %v798 = vadd.f32 0.0, %v797
  %799 = vmatprep.mubr.bf16.mxu0 0
  %800 = vmatmul.mubr.bf16.gmra.mrb[0].mxu0 %v476
  %v801 = vpop.f32.mrb[0].mxu0
  %v802 = vadd.f32 0.0, %v801
  %v803 = vpop.f32.mrb[0].mxu0
  %v804 = vadd.f32 0.0, %v803
  %v805 = vpop.f32.mrb[0].mxu0
  %v806 = vadd.f32 0.0, %v805
  %v807 = vpop.f32.mrb[0].mxu0
  %v808 = vadd.f32 0.0, %v807
  %809 = vmatprep.mubr.bf16.mxu0 0
  %810 = vmatmul.mubr.bf16.gmra.mrb[0].mxu0 %v479
  %v811 = vpop.f32.mrb[0].mxu0
  %v812 = vadd.f32 0.0, %v811
  %v813 = vpop.f32.mrb[0].mxu0
  %v814 = vadd.f32 0.0, %v813
  %v815 = vpop.f32.mrb[0].mxu0
  %v816 = vadd.f32 0.0, %v815
  %v817 = vpop.f32.mrb[0].mxu0
  %v818 = vadd.f32 0.0, %v817
  %819 = vmatprep.mubr.bf16.mxu0 0
  %820 = vmatmul.mubr.bf16.gmra.mrb[0].mxu0 %v669
  %v821 = vpop.f32.mrb[0].mxu0
  %v822 = vadd.f32 0.0, %v821
  %v823 = vpop.f32.mrb[0].mxu0
  %v824 = vadd.f32 0.0, %v823
  %v825 = vpop.f32.mrb[0].mxu0
  %v826 = vadd.f32 0.0, %v825
  %v827 = vpop.f32.mrb[0].mxu0
  %v828 = vadd.f32 0.0, %v827
  %829 = vdwg.mxu0
  %v830 = vadd.f32 %v522, %v712
  %v831 = vadd.f32 %v524, %v714
  %v832 = vadd.f32 %v526, %v716
  %v833 = vadd.f32 %v528, %v718
  %v834 = vadd.f32 %v532, %v722
  %v835 = vadd.f32 %v534, %v724
  %v836 = vadd.f32 %v536, %v726
  %v837 = vadd.f32 %v538, %v728
  %v838 = vadd.f32 %v542, %v732
  %v839 = vadd.f32 %v544, %v734
  %v840 = vadd.f32 %v546, %v736
  %v841 = vadd.f32 %v548, %v738
  %v842 = vadd.f32 %v552, %v742
  %v843 = vadd.f32 %v554, %v744
  %v844 = vadd.f32 %v556, %v746
  %v845 = vadd.f32 %v558, %v748
  %v846 = vadd.f32 %v562, %v752
  %v847 = vadd.f32 %v564, %v754
  %v848 = vadd.f32 %v566, %v756
  %v849 = vadd.f32 %v568, %v758
  %v850 = vadd.f32 %v572, %v762
  %v851 = vadd.f32 %v574, %v764
  %v852 = vadd.f32 %v576, %v766
  %v853 = vadd.f32 %v578, %v768
  %v854 = vadd.f32 %v582, %v772
  %v855 = vadd.f32 %v584, %v774
  %v856 = vadd.f32 %v586, %v776
  %v857 = vadd.f32 %v588, %v778
  %v858 = vadd.f32 %v592, %v782
  %v859 = vadd.f32 %v594, %v784
  %v860 = vadd.f32 %v596, %v786
  %v861 = vadd.f32 %v598, %v788
  %v862 = vadd.f32 %v602, %v792
  %v863 = vadd.f32 %v604, %v794
  %v864 = vadd.f32 %v606, %v796
  %v865 = vadd.f32 %v608, %v798
  %v866 = vadd.f32 %v612, %v802
  %v867 = vadd.f32 %v614, %v804
  %v868 = vadd.f32 %v616, %v806
  %v869 = vadd.f32 %v618, %v808
  %v870 = vadd.f32 %v622, %v812
  %v871 = vadd.f32 %v624, %v814
  %v872 = vadd.f32 %v626, %v816
  %v873 = vadd.f32 %v628, %v818
  %v874 = vadd.f32 %v632, %v822
  %v875 = vadd.f32 %v634, %v824
  %v876 = vadd.f32 %v636, %v826
  %v877 = vadd.f32 %v638, %v828
  %s878 = scalar_lea.vmem %s1, 96
  %v879 = vld [vmem:[%s878] sm:$0xff]
  %v880 = vld [vmem:[%s878 + $0x8] sm:$0xff]
  %v881 = vld [vmem:[%s878 + $0x10] sm:$0xff]
  %v882 = vld [vmem:[%s878 + $0x18] sm:$0x33]
  %v885 = vunpack.c.l.b16 %v77
  %v886 = vunpack.c.l.b16 %v78
  %v887 = vpack.c.b16 %v886, %v885
  %v892 = vunpack.c.l.b16 %v879
  %v893 = vunpack.c.h.b16 %v879
  %v894 = vunpack.c.l.b16 %v880
  %v895 = vunpack.c.h.b16 %v880
  %v896 = vunpack.c.l.b16 %v881
  %v897 = vunpack.c.h.b16 %v881
  %v898 = vunpack.c.l.b16 %v882
  %v899 = vunpack.c.h.b16 %v882
  %v900 = vpack.c.b16 %v894, %v892
  %v901 = vpack.c.b16 %v895, %v893
  %v902 = vpack.c.b16 %v898, %v896
  %v903 = vpack.c.b16 %v899, %v897
  %v907 = vsel %vm170, %v887, 0
  %v910 = vsel %vm207, %v902, 0
  %v913 = vsel %vm207, %v903, 0
  %915 = vmatprep.subr.bf16.mxu0 %v901
  %916 = vmatpush1.bf16.msra.mxu0 %v900
  %917 = vmatprep.subr.bf16.mxu0 %v913
  %918 = vmatpush1.bf16.msra.mxu0 %v910
  %919 = vmatprep.subr.bf16.mxu0 0
  %920 = vmatpush1.bf16.msra.mxu0 0
  %921 = vmatprep.subr.bf16.mxu0 0
  %922 = vmatpush1.bf16.msra.mxu0 0
  %923 = vmatprep.subr.bf16.mxu0 0
  %924 = vmatpush1.bf16.msra.mxu0 0
  %925 = vmatprep.subr.bf16.mxu0 0
  %926 = vmatpush1.bf16.msra.mxu0 0
  %927 = vmatprep.subr.bf16.mxu0 0
  %928 = vmatpush1.bf16.msra.mxu0 0
  %929 = vmatprep.subr.bf16.mxu0 0
  %930 = vmatpush1.bf16.msra.mxu0 0
  %931 = vmatprep.subr.bf16.mxu0 0
  %932 = vmatpush1.bf16.msra.mxu0 0
  %933 = vmatprep.subr.bf16.mxu0 0
  %934 = vmatpush1.bf16.msra.mxu0 0
  %935 = vmatprep.subr.bf16.mxu0 0
  %936 = vmatpush1.bf16.msra.mxu0 0
  %937 = vmatprep.subr.bf16.mxu0 0
  %938 = vmatpush1.bf16.msra.mxu0 0
  %939 = vmatprep.subr.bf16.mxu0 0
  %940 = vmatpush1.bf16.msra.mxu0 0
  %941 = vmatprep.subr.bf16.mxu0 0
  %942 = vmatpush1.bf16.msra.mxu0 0
  %943 = vmatprep.subr.bf16.mxu0 0
  %944 = vmatpush1.bf16.msra.mxu0 0
  %945 = vmatprep.subr.bf16.mxu0 0
  %946 = vmatpush1.bf16.msra.mxu0 0
  %947 = vmatprep.mubr.bf16.mxu0 0
  %948 = vmatmul.mubr.bf16.gmra.mrb[0].mxu0 %v175
  %v949 = vpop.f32.mrb[0].mxu0
  %v950 = vadd.f32 0.0, %v949
  %v951 = vpop.f32.mrb[0].mxu0
  %v952 = vadd.f32 0.0, %v951
  %v953 = vpop.f32.mrb[0].mxu0
  %v954 = vadd.f32 0.0, %v953
  %v955 = vpop.f32.mrb[0].mxu0
  %v956 = vadd.f32 0.0, %v955
  %957 = vmatprep.mubr.bf16.mxu0 0
  %958 = vmatmul.mubr.bf16.gmra.mrb[0].mxu0 %v178
  %v959 = vpop.f32.mrb[0].mxu0
  %v960 = vadd.f32 0.0, %v959
  %v961 = vpop.f32.mrb[0].mxu0
  %v962 = vadd.f32 0.0, %v961
  %v963 = vpop.f32.mrb[0].mxu0
  %v964 = vadd.f32 0.0, %v963
  %v965 = vpop.f32.mrb[0].mxu0
  %v966 = vadd.f32 0.0, %v965
  %967 = vmatprep.mubr.bf16.mxu0 0
  %968 = vmatmul.mubr.bf16.gmra.mrb[0].mxu0 %v181
  %v969 = vpop.f32.mrb[0].mxu0
  %v970 = vadd.f32 0.0, %v969
  %v971 = vpop.f32.mrb[0].mxu0
  %v972 = vadd.f32 0.0, %v971
  %v973 = vpop.f32.mrb[0].mxu0
  %v974 = vadd.f32 0.0, %v973
  %v975 = vpop.f32.mrb[0].mxu0
  %v976 = vadd.f32 0.0, %v975
  %977 = vmatprep.mubr.bf16.mxu0 0
  %978 = vmatmul.mubr.bf16.gmra.mrb[0].mxu0 %v184
  %v979 = vpop.f32.mrb[0].mxu0
  %v980 = vadd.f32 0.0, %v979
  %v981 = vpop.f32.mrb[0].mxu0
  %v982 = vadd.f32 0.0, %v981
  %v983 = vpop.f32.mrb[0].mxu0
  %v984 = vadd.f32 0.0, %v983
  %v985 = vpop.f32.mrb[0].mxu0
  %v986 = vadd.f32 0.0, %v985
  %987 = vmatprep.mubr.bf16.mxu0 0
  %988 = vmatmul.mubr.bf16.gmra.mrb[0].mxu0 %v187
  %v989 = vpop.f32.mrb[0].mxu0
  %v990 = vadd.f32 0.0, %v989
  %v991 = vpop.f32.mrb[0].mxu0
  %v992 = vadd.f32 0.0, %v991
  %v993 = vpop.f32.mrb[0].mxu0
  %v994 = vadd.f32 0.0, %v993
  %v995 = vpop.f32.mrb[0].mxu0
  %v996 = vadd.f32 0.0, %v995
  %997 = vmatprep.mubr.bf16.mxu0 0
  %998 = vmatmul.mubr.bf16.gmra.mrb[0].mxu0 %v190
  %v999 = vpop.f32.mrb[0].mxu0
  %v1000 = vadd.f32 0.0, %v999
  %v1001 = vpop.f32.mrb[0].mxu0
  %v1002 = vadd.f32 0.0, %v1001
  %v1003 = vpop.f32.mrb[0].mxu0
  %v1004 = vadd.f32 0.0, %v1003
  %v1005 = vpop.f32.mrb[0].mxu0
  %v1006 = vadd.f32 0.0, %v1005
  %1007 = vmatprep.mubr.bf16.mxu0 0
  %1008 = vmatmul.mubr.bf16.gmra.mrb[0].mxu0 %v193
  %v1009 = vpop.f32.mrb[0].mxu0
  %v1010 = vadd.f32 0.0, %v1009
  %v1011 = vpop.f32.mrb[0].mxu0
  %v1012 = vadd.f32 0.0, %v1011
  %v1013 = vpop.f32.mrb[0].mxu0
  %v1014 = vadd.f32 0.0, %v1013
  %v1015 = vpop.f32.mrb[0].mxu0
  %v1016 = vadd.f32 0.0, %v1015
  %1017 = vmatprep.mubr.bf16.mxu0 0
  %1018 = vmatmul.mubr.bf16.gmra.mrb[0].mxu0 %v196
  %v1019 = vpop.f32.mrb[0].mxu0
  %v1020 = vadd.f32 0.0, %v1019
  %v1021 = vpop.f32.mrb[0].mxu0
  %v1022 = vadd.f32 0.0, %v1021
  %v1023 = vpop.f32.mrb[0].mxu0
  %v1024 = vadd.f32 0.0, %v1023
  %v1025 = vpop.f32.mrb[0].mxu0
  %v1026 = vadd.f32 0.0, %v1025
  %1027 = vmatprep.mubr.bf16.mxu0 0
  %1028 = vmatmul.mubr.bf16.gmra.mrb[0].mxu0 %v199
  %v1029 = vpop.f32.mrb[0].mxu0
  %v1030 = vadd.f32 0.0, %v1029
  %v1031 = vpop.f32.mrb[0].mxu0
  %v1032 = vadd.f32 0.0, %v1031
  %v1033 = vpop.f32.mrb[0].mxu0
  %v1034 = vadd.f32 0.0, %v1033
  %v1035 = vpop.f32.mrb[0].mxu0
  %v1036 = vadd.f32 0.0, %v1035
  %1037 = vmatprep.mubr.bf16.mxu0 0
  %1038 = vmatmul.mubr.bf16.gmra.mrb[0].mxu0 %v202
  %v1039 = vpop.f32.mrb[0].mxu0
  %v1040 = vadd.f32 0.0, %v1039
  %v1041 = vpop.f32.mrb[0].mxu0
  %v1042 = vadd.f32 0.0, %v1041
  %v1043 = vpop.f32.mrb[0].mxu0
  %v1044 = vadd.f32 0.0, %v1043
  %v1045 = vpop.f32.mrb[0].mxu0
  %v1046 = vadd.f32 0.0, %v1045
  %1047 = vmatprep.mubr.bf16.mxu0 0
  %1048 = vmatmul.mubr.bf16.gmra.mrb[0].mxu0 %v205
  %v1049 = vpop.f32.mrb[0].mxu0
  %v1050 = vadd.f32 0.0, %v1049
  %v1051 = vpop.f32.mrb[0].mxu0
  %v1052 = vadd.f32 0.0, %v1051
  %v1053 = vpop.f32.mrb[0].mxu0
  %v1054 = vadd.f32 0.0, %v1053
  %v1055 = vpop.f32.mrb[0].mxu0
  %v1056 = vadd.f32 0.0, %v1055
  %1057 = vmatprep.mubr.bf16.mxu0 0
  %1058 = vmatmul.mubr.bf16.gmra.mrb[0].mxu0 %v907
  %v1059 = vpop.f32.mrb[0].mxu0
  %v1060 = vadd.f32 0.0, %v1059
  %v1061 = vpop.f32.mrb[0].mxu0
  %v1062 = vadd.f32 0.0, %v1061
  %v1063 = vpop.f32.mrb[0].mxu0
  %v1064 = vadd.f32 0.0, %v1063
  %v1065 = vpop.f32.mrb[0].mxu0
  %v1066 = vadd.f32 0.0, %v1065
  %1067 = vdwg.mxu0
  %v1068 = vadd.f32 %v830, %v950
  %v1069 = vadd.f32 %v831, %v952
  %v1070 = vadd.f32 %v832, %v954
  %v1071 = vadd.f32 %v833, %v956
  %v1072 = vadd.f32 %v834, %v960
  %v1073 = vadd.f32 %v835, %v962
  %v1074 = vadd.f32 %v836, %v964
  %v1075 = vadd.f32 %v837, %v966
  %v1076 = vadd.f32 %v838, %v970
  %v1077 = vadd.f32 %v839, %v972
  %v1078 = vadd.f32 %v840, %v974
  %v1079 = vadd.f32 %v841, %v976
  %v1080 = vadd.f32 %v842, %v980
  %v1081 = vadd.f32 %v843, %v982
  %v1082 = vadd.f32 %v844, %v984
  %v1083 = vadd.f32 %v845, %v986
  %v1084 = vadd.f32 %v846, %v990
  %v1085 = vadd.f32 %v847, %v992
  %v1086 = vadd.f32 %v848, %v994
  %v1087 = vadd.f32 %v849, %v996
  %v1088 = vadd.f32 %v850, %v1000
  %v1089 = vadd.f32 %v851, %v1002
  %v1090 = vadd.f32 %v852, %v1004
  %v1091 = vadd.f32 %v853, %v1006
  %v1092 = vadd.f32 %v854, %v1010
  %v1093 = vadd.f32 %v855, %v1012
  %v1094 = vadd.f32 %v856, %v1014
  %v1095 = vadd.f32 %v857, %v1016
  %v1096 = vadd.f32 %v858, %v1020
  %v1097 = vadd.f32 %v859, %v1022
  %v1098 = vadd.f32 %v860, %v1024
  %v1099 = vadd.f32 %v861, %v1026
  %v1100 = vadd.f32 %v862, %v1030
  %v1101 = vadd.f32 %v863, %v1032
  %v1102 = vadd.f32 %v864, %v1034
  %v1103 = vadd.f32 %v865, %v1036
  %v1104 = vadd.f32 %v866, %v1040
  %v1105 = vadd.f32 %v867, %v1042
  %v1106 = vadd.f32 %v868, %v1044
  %v1107 = vadd.f32 %v869, %v1046
  %v1108 = vadd.f32 %v870, %v1050
  %v1109 = vadd.f32 %v871, %v1052
  %v1110 = vadd.f32 %v872, %v1054
  %v1111 = vadd.f32 %v873, %v1056
  %v1112 = vadd.f32 %v874, %v1060
  %v1113 = vadd.f32 %v875, %v1062
  %v1114 = vadd.f32 %v876, %v1064
  %v1115 = vadd.f32 %v877, %v1066
  %s1116 = scalar_lea.vmem %s1, 128
  %v1117 = vld [vmem:[%s1116] sm:$0xff]
  %v1118 = vld [vmem:[%s1116 + $0x8] sm:$0xff]
  %v1119 = vld [vmem:[%s1116 + $0x10] sm:$0xff]
  %v1120 = vld [vmem:[%s1116 + $0x18] sm:$0x33]
  %v1123 = vunpack.c.l.b16 %v79
  %v1124 = vunpack.c.l.b16 %v80
  %v1125 = vpack.c.b16 %v1124, %v1123
  %v1130 = vunpack.c.l.b16 %v1117
  %v1131 = vunpack.c.h.b16 %v1117
  %v1132 = vunpack.c.l.b16 %v1118
  %v1133 = vunpack.c.h.b16 %v1118
  %v1134 = vunpack.c.l.b16 %v1119
  %v1135 = vunpack.c.h.b16 %v1119
  %v1136 = vunpack.c.l.b16 %v1120
  %v1137 = vunpack.c.h.b16 %v1120
  %v1138 = vpack.c.b16 %v1132, %v1130
  %v1139 = vpack.c.b16 %v1133, %v1131
  %v1140 = vpack.c.b16 %v1136, %v1134
  %v1141 = vpack.c.b16 %v1137, %v1135
  %v1145 = vsel %vm170, %v1125, 0
  %v1148 = vsel %vm207, %v1140, 0
  %v1151 = vsel %vm207, %v1141, 0
  %1153 = vmatprep.subr.bf16.mxu0 %v1139
  %1154 = vmatpush1.bf16.msra.mxu0 %v1138
  %1155 = vmatprep.subr.bf16.mxu0 %v1151
  %1156 = vmatpush1.bf16.msra.mxu0 %v1148
  %1157 = vmatprep.subr.bf16.mxu0 0
  %1158 = vmatpush1.bf16.msra.mxu0 0
  %1159 = vmatprep.subr.bf16.mxu0 0
  %1160 = vmatpush1.bf16.msra.mxu0 0
  %1161 = vmatprep.subr.bf16.mxu0 0
  %1162 = vmatpush1.bf16.msra.mxu0 0
  %1163 = vmatprep.subr.bf16.mxu0 0
  %1164 = vmatpush1.bf16.msra.mxu0 0
  %1165 = vmatprep.subr.bf16.mxu0 0
  %1166 = vmatpush1.bf16.msra.mxu0 0
  %1167 = vmatprep.subr.bf16.mxu0 0
  %1168 = vmatpush1.bf16.msra.mxu0 0
  %1169 = vmatprep.subr.bf16.mxu0 0
  %1170 = vmatpush1.bf16.msra.mxu0 0
  %1171 = vmatprep.subr.bf16.mxu0 0
  %1172 = vmatpush1.bf16.msra.mxu0 0
  %1173 = vmatprep.subr.bf16.mxu0 0
  %1174 = vmatpush1.bf16.msra.mxu0 0
  %1175 = vmatprep.subr.bf16.mxu0 0
  %1176 = vmatpush1.bf16.msra.mxu0 0
  %1177 = vmatprep.subr.bf16.mxu0 0
  %1178 = vmatpush1.bf16.msra.mxu0 0
  %1179 = vmatprep.subr.bf16.mxu0 0
  %1180 = vmatpush1.bf16.msra.mxu0 0
  %1181 = vmatprep.subr.bf16.mxu0 0
  %1182 = vmatpush1.bf16.msra.mxu0 0
  %1183 = vmatprep.subr.bf16.mxu0 0
  %1184 = vmatpush1.bf16.msra.mxu0 0
  %1185 = vmatprep.mubr.bf16.mxu0 0
  %1186 = vmatmul.mubr.bf16.gmra.mrb[0].mxu0 %v452
  %v1187 = vpop.f32.mrb[0].mxu0
  %v1188 = vadd.f32 0.0, %v1187
  %v1189 = vpop.f32.mrb[0].mxu0
  %v1190 = vadd.f32 0.0, %v1189
  %v1191 = vpop.f32.mrb[0].mxu0
  %v1192 = vadd.f32 0.0, %v1191
  %v1193 = vpop.f32.mrb[0].mxu0
  %v1194 = vadd.f32 0.0, %v1193
  %1195 = vmatprep.mubr.bf16.mxu0 0
  %1196 = vmatmul.mubr.bf16.gmra.mrb[0].mxu0 %v455
  %v1197 = vpop.f32.mrb[0].mxu0
  %v1198 = vadd.f32 0.0, %v1197
  %v1199 = vpop.f32.mrb[0].mxu0
  %v1200 = vadd.f32 0.0, %v1199
  %v1201 = vpop.f32.mrb[0].mxu0
  %v1202 = vadd.f32 0.0, %v1201
  %v1203 = vpop.f32.mrb[0].mxu0
  %v1204 = vadd.f32 0.0, %v1203
  %1205 = vmatprep.mubr.bf16.mxu0 0
  %1206 = vmatmul.mubr.bf16.gmra.mrb[0].mxu0 %v458
  %v1207 = vpop.f32.mrb[0].mxu0
  %v1208 = vadd.f32 0.0, %v1207
  %v1209 = vpop.f32.mrb[0].mxu0
  %v1210 = vadd.f32 0.0, %v1209
  %v1211 = vpop.f32.mrb[0].mxu0
  %v1212 = vadd.f32 0.0, %v1211
  %v1213 = vpop.f32.mrb[0].mxu0
  %v1214 = vadd.f32 0.0, %v1213
  %1215 = vmatprep.mubr.bf16.mxu0 0
  %1216 = vmatmul.mubr.bf16.gmra.mrb[0].mxu0 %v461
  %v1217 = vpop.f32.mrb[0].mxu0
  %v1218 = vadd.f32 0.0, %v1217
  %v1219 = vpop.f32.mrb[0].mxu0
  %v1220 = vadd.f32 0.0, %v1219
  %v1221 = vpop.f32.mrb[0].mxu0
  %v1222 = vadd.f32 0.0, %v1221
  %v1223 = vpop.f32.mrb[0].mxu0
  %v1224 = vadd.f32 0.0, %v1223
  %1225 = vmatprep.mubr.bf16.mxu0 0
  %1226 = vmatmul.mubr.bf16.gmra.mrb[0].mxu0 %v464
  %v1227 = vpop.f32.mrb[0].mxu0
  %v1228 = vadd.f32 0.0, %v1227
  %v1229 = vpop.f32.mrb[0].mxu0
  %v1230 = vadd.f32 0.0, %v1229
  %v1231 = vpop.f32.mrb[0].mxu0
  %v1232 = vadd.f32 0.0, %v1231
  %v1233 = vpop.f32.mrb[0].mxu0
  %v1234 = vadd.f32 0.0, %v1233
  %1235 = vmatprep.mubr.bf16.mxu0 0
  %1236 = vmatmul.mubr.bf16.gmra.mrb[0].mxu0 %v467
  %v1237 = vpop.f32.mrb[0].mxu0
  %v1238 = vadd.f32 0.0, %v1237
  %v1239 = vpop.f32.mrb[0].mxu0
  %v1240 = vadd.f32 0.0, %v1239
  %v1241 = vpop.f32.mrb[0].mxu0
  %v1242 = vadd.f32 0.0, %v1241
  %v1243 = vpop.f32.mrb[0].mxu0
  %v1244 = vadd.f32 0.0, %v1243
  %1245 = vmatprep.mubr.bf16.mxu0 0
  %1246 = vmatmul.mubr.bf16.gmra.mrb[0].mxu0 %v470
  %v1247 = vpop.f32.mrb[0].mxu0
  %v1248 = vadd.f32 0.0, %v1247
  %v1249 = vpop.f32.mrb[0].mxu0
  %v1250 = vadd.f32 0.0, %v1249
  %v1251 = vpop.f32.mrb[0].mxu0
  %v1252 = vadd.f32 0.0, %v1251
  %v1253 = vpop.f32.mrb[0].mxu0
  %v1254 = vadd.f32 0.0, %v1253
  %1255 = vmatprep.mubr.bf16.mxu0 0
  %1256 = vmatmul.mubr.bf16.gmra.mrb[0].mxu0 %v473
  %v1257 = vpop.f32.mrb[0].mxu0
  %v1258 = vadd.f32 0.0, %v1257
  %v1259 = vpop.f32.mrb[0].mxu0
  %v1260 = vadd.f32 0.0, %v1259
  %v1261 = vpop.f32.mrb[0].mxu0
  %v1262 = vadd.f32 0.0, %v1261
  %v1263 = vpop.f32.mrb[0].mxu0
  %v1264 = vadd.f32 0.0, %v1263
  %1265 = vmatprep.mubr.bf16.mxu0 0
  %1266 = vmatmul.mubr.bf16.gmra.mrb[0].mxu0 %v476
  %v1267 = vpop.f32.mrb[0].mxu0
  %v1268 = vadd.f32 0.0, %v1267
  %v1269 = vpop.f32.mrb[0].mxu0
  %v1270 = vadd.f32 0.0, %v1269
  %v1271 = vpop.f32.mrb[0].mxu0
  %v1272 = vadd.f32 0.0, %v1271
  %v1273 = vpop.f32.mrb[0].mxu0
  %v1274 = vadd.f32 0.0, %v1273
  %1275 = vmatprep.mubr.bf16.mxu0 0
  %1276 = vmatmul.mubr.bf16.gmra.mrb[0].mxu0 %v479
  %v1277 = vpop.f32.mrb[0].mxu0
  %v1278 = vadd.f32 0.0, %v1277
  %v1279 = vpop.f32.mrb[0].mxu0
  %v1280 = vadd.f32 0.0, %v1279
  %v1281 = vpop.f32.mrb[0].mxu0
  %v1282 = vadd.f32 0.0, %v1281
  %v1283 = vpop.f32.mrb[0].mxu0
  %v1284 = vadd.f32 0.0, %v1283
  %1285 = vmatprep.mubr.bf16.mxu0 0
  %1286 = vmatmul.mubr.bf16.gmra.mrb[0].mxu0 %v669
  %v1287 = vpop.f32.mrb[0].mxu0
  %v1288 = vadd.f32 0.0, %v1287
  %v1289 = vpop.f32.mrb[0].mxu0
  %v1290 = vadd.f32 0.0, %v1289
  %v1291 = vpop.f32.mrb[0].mxu0
  %v1292 = vadd.f32 0.0, %v1291
  %v1293 = vpop.f32.mrb[0].mxu0
  %v1294 = vadd.f32 0.0, %v1293
  %1295 = vmatprep.mubr.bf16.mxu0 0
  %1296 = vmatmul.mubr.bf16.gmra.mrb[0].mxu0 %v1145
  %v1297 = vpop.f32.mrb[0].mxu0
  %v1298 = vadd.f32 0.0, %v1297
  %v1299 = vpop.f32.mrb[0].mxu0
  %v1300 = vadd.f32 0.0, %v1299
  %v1301 = vpop.f32.mrb[0].mxu0
  %v1302 = vadd.f32 0.0, %v1301
  %v1303 = vpop.f32.mrb[0].mxu0
  %v1304 = vadd.f32 0.0, %v1303
  %1305 = vdwg.mxu0
  %v1306 = vadd.f32 %v1068, %v1188
  %v1307 = vadd.f32 %v1069, %v1190
  %v1308 = vadd.f32 %v1070, %v1192
  %v1309 = vadd.f32 %v1071, %v1194
  %v1310 = vadd.f32 %v1072, %v1198
  %v1311 = vadd.f32 %v1073, %v1200
  %v1312 = vadd.f32 %v1074, %v1202
  %v1313 = vadd.f32 %v1075, %v1204
  %v1314 = vadd.f32 %v1076, %v1208
  %v1315 = vadd.f32 %v1077, %v1210
  %v1316 = vadd.f32 %v1078, %v1212
  %v1317 = vadd.f32 %v1079, %v1214
  %v1318 = vadd.f32 %v1080, %v1218
  %v1319 = vadd.f32 %v1081, %v1220
  %v1320 = vadd.f32 %v1082, %v1222
  %v1321 = vadd.f32 %v1083, %v1224
  %v1322 = vadd.f32 %v1084, %v1228
  %v1323 = vadd.f32 %v1085, %v1230
  %v1324 = vadd.f32 %v1086, %v1232
  %v1325 = vadd.f32 %v1087, %v1234
  %v1326 = vadd.f32 %v1088, %v1238
  %v1327 = vadd.f32 %v1089, %v1240
  %v1328 = vadd.f32 %v1090, %v1242
  %v1329 = vadd.f32 %v1091, %v1244
  %v1330 = vadd.f32 %v1092, %v1248
  %v1331 = vadd.f32 %v1093, %v1250
  %v1332 = vadd.f32 %v1094, %v1252
  %v1333 = vadd.f32 %v1095, %v1254
  %v1334 = vadd.f32 %v1096, %v1258
  %v1335 = vadd.f32 %v1097, %v1260
  %v1336 = vadd.f32 %v1098, %v1262
  %v1337 = vadd.f32 %v1099, %v1264
  %v1338 = vadd.f32 %v1100, %v1268
  %v1339 = vadd.f32 %v1101, %v1270
  %v1340 = vadd.f32 %v1102, %v1272
  %v1341 = vadd.f32 %v1103, %v1274
  %v1342 = vadd.f32 %v1104, %v1278
  %v1343 = vadd.f32 %v1105, %v1280
  %v1344 = vadd.f32 %v1106, %v1282
  %v1345 = vadd.f32 %v1107, %v1284
  %v1346 = vadd.f32 %v1108, %v1288
  %v1347 = vadd.f32 %v1109, %v1290
  %v1348 = vadd.f32 %v1110, %v1292
  %v1349 = vadd.f32 %v1111, %v1294
  %v1350 = vadd.f32 %v1112, %v1298
  %v1351 = vadd.f32 %v1113, %v1300
  %v1352 = vadd.f32 %v1114, %v1302
  %v1353 = vadd.f32 %v1115, %v1304
  %s1354 = scalar_lea.vmem %s1, 160
  %v1355 = vld [vmem:[%s1354] sm:$0xff]
  %v1356 = vld [vmem:[%s1354 + $0x8] sm:$0xff]
  %v1357 = vld [vmem:[%s1354 + $0x10] sm:$0xff]
  %v1358 = vld [vmem:[%s1354 + $0x18] sm:$0x33]
  %s1359 = scalar_lea.vmem %s1, 192
  %v1360 = vld [vmem:[%s1359] sm:$0xff]
  %v1361 = vld [vmem:[%s1359 + $0x8] sm:$0xff]
  %v1362 = vld [vmem:[%s1359 + $0x10] sm:$0xff]
  %v1363 = vld [vmem:[%s1359 + $0x18] sm:$0x33]
  %v1368 = vunpack.c.l.b16 %v1360
  %v1369 = vunpack.c.h.b16 %v1360
  %v1370 = vunpack.c.l.b16 %v1361
  %v1371 = vunpack.c.h.b16 %v1361
  %v1372 = vunpack.c.l.b16 %v1362
  %v1373 = vunpack.c.h.b16 %v1362
  %v1374 = vunpack.c.l.b16 %v1363
  %v1375 = vunpack.c.h.b16 %v1363
  %v1376 = vpack.c.b16 %v1370, %v1368
  %v1377 = vpack.c.b16 %v1371, %v1369
  %v1378 = vpack.c.b16 %v1374, %v1372
  %v1379 = vpack.c.b16 %v1375, %v1373
  %v1383 = vsel %vm207, %v1378, 0
  %v1386 = vsel %vm207, %v1379, 0
  %1388 = vmatprep.subr.bf16.mxu0 %v1377
  %1389 = vmatpush1.bf16.msra.mxu0 %v1376
  %1390 = vmatprep.subr.bf16.mxu0 %v1386
  %1391 = vmatpush1.bf16.msra.mxu0 %v1383
  %1392 = vmatprep.subr.bf16.mxu0 0
  %1393 = vmatpush1.bf16.msra.mxu0 0
  %1394 = vmatprep.subr.bf16.mxu0 0
  %1395 = vmatpush1.bf16.msra.mxu0 0
  %1396 = vmatprep.subr.bf16.mxu0 0
  %1397 = vmatpush1.bf16.msra.mxu0 0
  %1398 = vmatprep.subr.bf16.mxu0 0
  %1399 = vmatpush1.bf16.msra.mxu0 0
  %1400 = vmatprep.subr.bf16.mxu0 0
  %1401 = vmatpush1.bf16.msra.mxu0 0
  %1402 = vmatprep.subr.bf16.mxu0 0
  %1403 = vmatpush1.bf16.msra.mxu0 0
  %1404 = vmatprep.subr.bf16.mxu0 0
  %1405 = vmatpush1.bf16.msra.mxu0 0
  %1406 = vmatprep.subr.bf16.mxu0 0
  %1407 = vmatpush1.bf16.msra.mxu0 0
  %1408 = vmatprep.subr.bf16.mxu0 0
  %1409 = vmatpush1.bf16.msra.mxu0 0
  %1410 = vmatprep.subr.bf16.mxu0 0
  %1411 = vmatpush1.bf16.msra.mxu0 0
  %1412 = vmatprep.subr.bf16.mxu0 0
  %1413 = vmatpush1.bf16.msra.mxu0 0
  %1414 = vmatprep.subr.bf16.mxu0 0
  %1415 = vmatpush1.bf16.msra.mxu0 0
  %1416 = vmatprep.subr.bf16.mxu0 0
  %1417 = vmatpush1.bf16.msra.mxu0 0
  %1418 = vmatprep.subr.bf16.mxu0 0
  %1419 = vmatpush1.bf16.msra.mxu0 0
  %1420 = vmatprep.mubr.bf16.mxu0 0
  %1421 = vmatmul.mubr.bf16.gmra.mrb[0].mxu0 %v172
  %v1422 = vpop.f32.mrb[0].mxu0
  %v1423 = vadd.f32 0.0, %v1422
  %v1424 = vpop.f32.mrb[0].mxu0
  %v1425 = vadd.f32 0.0, %v1424
  %v1426 = vpop.f32.mrb[0].mxu0
  %v1427 = vadd.f32 0.0, %v1426
  %v1428 = vpop.f32.mrb[0].mxu0
  %v1429 = vadd.f32 0.0, %v1428
  %1430 = vmatprep.mubr.bf16.mxu0 0
  %1431 = vmatmul.mubr.bf16.gmra.mrb[0].mxu0 %v175
  %v1432 = vpop.f32.mrb[0].mxu0
  %v1433 = vadd.f32 0.0, %v1432
  %v1434 = vpop.f32.mrb[0].mxu0
  %v1435 = vadd.f32 0.0, %v1434
  %v1436 = vpop.f32.mrb[0].mxu0
  %v1437 = vadd.f32 0.0, %v1436
  %v1438 = vpop.f32.mrb[0].mxu0
  %v1439 = vadd.f32 0.0, %v1438
  %1440 = vmatprep.mubr.bf16.mxu0 0
  %1441 = vmatmul.mubr.bf16.gmra.mrb[0].mxu0 %v178
  %v1442 = vpop.f32.mrb[0].mxu0
  %v1443 = vadd.f32 0.0, %v1442
  %v1444 = vpop.f32.mrb[0].mxu0
  %v1445 = vadd.f32 0.0, %v1444
  %v1446 = vpop.f32.mrb[0].mxu0
  %v1447 = vadd.f32 0.0, %v1446
  %v1448 = vpop.f32.mrb[0].mxu0
  %v1449 = vadd.f32 0.0, %v1448
  %1450 = vmatprep.mubr.bf16.mxu0 0
  %1451 = vmatmul.mubr.bf16.gmra.mrb[0].mxu0 %v181
  %v1452 = vpop.f32.mrb[0].mxu0
  %v1453 = vadd.f32 0.0, %v1452
  %v1454 = vpop.f32.mrb[0].mxu0
  %v1455 = vadd.f32 0.0, %v1454
  %v1456 = vpop.f32.mrb[0].mxu0
  %v1457 = vadd.f32 0.0, %v1456
  %v1458 = vpop.f32.mrb[0].mxu0
  %v1459 = vadd.f32 0.0, %v1458
  %1460 = vmatprep.mubr.bf16.mxu0 0
  %1461 = vmatmul.mubr.bf16.gmra.mrb[0].mxu0 %v184
  %v1462 = vpop.f32.mrb[0].mxu0
  %v1463 = vadd.f32 0.0, %v1462
  %v1464 = vpop.f32.mrb[0].mxu0
  %v1465 = vadd.f32 0.0, %v1464
  %v1466 = vpop.f32.mrb[0].mxu0
  %v1467 = vadd.f32 0.0, %v1466
  %v1468 = vpop.f32.mrb[0].mxu0
  %v1469 = vadd.f32 0.0, %v1468
  %1470 = vmatprep.mubr.bf16.mxu0 0
  %1471 = vmatmul.mubr.bf16.gmra.mrb[0].mxu0 %v187
  %v1472 = vpop.f32.mrb[0].mxu0
  %v1473 = vadd.f32 0.0, %v1472
  %v1474 = vpop.f32.mrb[0].mxu0
  %v1475 = vadd.f32 0.0, %v1474
  %v1476 = vpop.f32.mrb[0].mxu0
  %v1477 = vadd.f32 0.0, %v1476
  %v1478 = vpop.f32.mrb[0].mxu0
  %v1479 = vadd.f32 0.0, %v1478
  %1480 = vmatprep.mubr.bf16.mxu0 0
  %1481 = vmatmul.mubr.bf16.gmra.mrb[0].mxu0 %v190
  %v1482 = vpop.f32.mrb[0].mxu0
  %v1483 = vadd.f32 0.0, %v1482
  %v1484 = vpop.f32.mrb[0].mxu0
  %v1485 = vadd.f32 0.0, %v1484
  %v1486 = vpop.f32.mrb[0].mxu0
  %v1487 = vadd.f32 0.0, %v1486
  %v1488 = vpop.f32.mrb[0].mxu0
  %v1489 = vadd.f32 0.0, %v1488
  %1490 = vmatprep.mubr.bf16.mxu0 0
  %1491 = vmatmul.mubr.bf16.gmra.mrb[0].mxu0 %v193
  %v1492 = vpop.f32.mrb[0].mxu0
  %v1493 = vadd.f32 0.0, %v1492
  %v1494 = vpop.f32.mrb[0].mxu0
  %v1495 = vadd.f32 0.0, %v1494
  %v1496 = vpop.f32.mrb[0].mxu0
  %v1497 = vadd.f32 0.0, %v1496
  %v1498 = vpop.f32.mrb[0].mxu0
  %v1499 = vadd.f32 0.0, %v1498
  %1500 = vmatprep.mubr.bf16.mxu0 0
  %1501 = vmatmul.mubr.bf16.gmra.mrb[0].mxu0 %v196
  %v1502 = vpop.f32.mrb[0].mxu0
  %v1503 = vadd.f32 0.0, %v1502
  %v1504 = vpop.f32.mrb[0].mxu0
  %v1505 = vadd.f32 0.0, %v1504
  %v1506 = vpop.f32.mrb[0].mxu0
  %v1507 = vadd.f32 0.0, %v1506
  %v1508 = vpop.f32.mrb[0].mxu0
  %v1509 = vadd.f32 0.0, %v1508
  %1510 = vmatprep.mubr.bf16.mxu0 0
  %1511 = vmatmul.mubr.bf16.gmra.mrb[0].mxu0 %v199
  %v1512 = vpop.f32.mrb[0].mxu0
  %v1513 = vadd.f32 0.0, %v1512
  %v1514 = vpop.f32.mrb[0].mxu0
  %v1515 = vadd.f32 0.0, %v1514
  %v1516 = vpop.f32.mrb[0].mxu0
  %v1517 = vadd.f32 0.0, %v1516
  %v1518 = vpop.f32.mrb[0].mxu0
  %v1519 = vadd.f32 0.0, %v1518
  %1520 = vmatprep.mubr.bf16.mxu0 0
  %1521 = vmatmul.mubr.bf16.gmra.mrb[0].mxu0 %v202
  %v1522 = vpop.f32.mrb[0].mxu0
  %v1523 = vadd.f32 0.0, %v1522
  %v1524 = vpop.f32.mrb[0].mxu0
  %v1525 = vadd.f32 0.0, %v1524
  %v1526 = vpop.f32.mrb[0].mxu0
  %v1527 = vadd.f32 0.0, %v1526
  %v1528 = vpop.f32.mrb[0].mxu0
  %v1529 = vadd.f32 0.0, %v1528
  %1530 = vmatprep.mubr.bf16.mxu0 0
  %1531 = vmatmul.mubr.bf16.gmra.mrb[0].mxu0 %v205
  %v1532 = vpop.f32.mrb[0].mxu0
  %v1533 = vadd.f32 0.0, %v1532
  %v1534 = vpop.f32.mrb[0].mxu0
  %v1535 = vadd.f32 0.0, %v1534
  %v1536 = vpop.f32.mrb[0].mxu0
  %v1537 = vadd.f32 0.0, %v1536
  %v1538 = vpop.f32.mrb[0].mxu0
  %v1539 = vadd.f32 0.0, %v1538
  %1540 = vdwg.mxu0
  %v1545 = vunpack.c.l.b16 %v1355
  %v1546 = vunpack.c.h.b16 %v1355
  %v1547 = vunpack.c.l.b16 %v1356
  %v1548 = vunpack.c.h.b16 %v1356
  %v1549 = vunpack.c.l.b16 %v1357
  %v1550 = vunpack.c.h.b16 %v1357
  %v1551 = vunpack.c.l.b16 %v1358
  %v1552 = vunpack.c.h.b16 %v1358
  %v1553 = vpack.c.b16 %v1547, %v1545
  %v1554 = vpack.c.b16 %v1548, %v1546
  %v1555 = vpack.c.b16 %v1551, %v1549
  %v1556 = vpack.c.b16 %v1552, %v1550
  %v1560 = vsel %vm207, %v1555, 0
  %v1563 = vsel %vm207, %v1556, 0
  %1565 = vmatprep.subr.bf16.mxu0 %v1554
  %1566 = vmatpush1.bf16.msra.mxu0 %v1553
  %1567 = vmatprep.subr.bf16.mxu0 %v1563
  %1568 = vmatpush1.bf16.msra.mxu0 %v1560
  %1569 = vmatprep.subr.bf16.mxu0 0
  %1570 = vmatpush1.bf16.msra.mxu0 0
  %1571 = vmatprep.subr.bf16.mxu0 0
  %1572 = vmatpush1.bf16.msra.mxu0 0
  %1573 = vmatprep.subr.bf16.mxu0 0
  %1574 = vmatpush1.bf16.msra.mxu0 0
  %1575 = vmatprep.subr.bf16.mxu0 0
  %1576 = vmatpush1.bf16.msra.mxu0 0
  %1577 = vmatprep.subr.bf16.mxu0 0
  %1578 = vmatpush1.bf16.msra.mxu0 0
  %1579 = vmatprep.subr.bf16.mxu0 0
  %1580 = vmatpush1.bf16.msra.mxu0 0
  %1581 = vmatprep.subr.bf16.mxu0 0
  %1582 = vmatpush1.bf16.msra.mxu0 0
  %1583 = vmatprep.subr.bf16.mxu0 0
  %1584 = vmatpush1.bf16.msra.mxu0 0
  %1585 = vmatprep.subr.bf16.mxu0 0
  %1586 = vmatpush1.bf16.msra.mxu0 0
  %1587 = vmatprep.subr.bf16.mxu0 0
  %1588 = vmatpush1.bf16.msra.mxu0 0
  %1589 = vmatprep.subr.bf16.mxu0 0
  %1590 = vmatpush1.bf16.msra.mxu0 0
  %1591 = vmatprep.subr.bf16.mxu0 0
  %1592 = vmatpush1.bf16.msra.mxu0 0
  %1593 = vmatprep.subr.bf16.mxu0 0
  %1594 = vmatpush1.bf16.msra.mxu0 0
  %1595 = vmatprep.subr.bf16.mxu0 0
  %1596 = vmatpush1.bf16.msra.mxu0 0
  %1597 = vmatprep.mubr.bf16.mxu0 0
  %1598 = vmatmul.mubr.bf16.gmra.mrb[0].mxu0 %v446
  %v1599 = vpop.f32.mrb[0].mxu0
  %v1600 = vadd.f32 %v1423, %v1599
  %v1601 = vpop.f32.mrb[0].mxu0
  %v1602 = vadd.f32 %v1425, %v1601
  %v1603 = vpop.f32.mrb[0].mxu0
  %v1604 = vadd.f32 %v1427, %v1603
  %v1605 = vpop.f32.mrb[0].mxu0
  %v1606 = vadd.f32 %v1429, %v1605
  %1607 = vmatprep.mubr.bf16.mxu0 0
  %1608 = vmatmul.mubr.bf16.gmra.mrb[0].mxu0 %v449
  %v1609 = vpop.f32.mrb[0].mxu0
  %v1610 = vadd.f32 %v1433, %v1609
  %v1611 = vpop.f32.mrb[0].mxu0
  %v1612 = vadd.f32 %v1435, %v1611
  %v1613 = vpop.f32.mrb[0].mxu0
  %v1614 = vadd.f32 %v1437, %v1613
  %v1615 = vpop.f32.mrb[0].mxu0
  %v1616 = vadd.f32 %v1439, %v1615
  %1617 = vmatprep.mubr.bf16.mxu0 0
  %1618 = vmatmul.mubr.bf16.gmra.mrb[0].mxu0 %v452
  %v1619 = vpop.f32.mrb[0].mxu0
  %v1620 = vadd.f32 %v1443, %v1619
  %v1621 = vpop.f32.mrb[0].mxu0
  %v1622 = vadd.f32 %v1445, %v1621
  %v1623 = vpop.f32.mrb[0].mxu0
  %v1624 = vadd.f32 %v1447, %v1623
  %v1625 = vpop.f32.mrb[0].mxu0
  %v1626 = vadd.f32 %v1449, %v1625
  %1627 = vmatprep.mubr.bf16.mxu0 0
  %1628 = vmatmul.mubr.bf16.gmra.mrb[0].mxu0 %v455
  %v1629 = vpop.f32.mrb[0].mxu0
  %v1630 = vadd.f32 %v1453, %v1629
  %v1631 = vpop.f32.mrb[0].mxu0
  %v1632 = vadd.f32 %v1455, %v1631
  %v1633 = vpop.f32.mrb[0].mxu0
  %v1634 = vadd.f32 %v1457, %v1633
  %v1635 = vpop.f32.mrb[0].mxu0
  %v1636 = vadd.f32 %v1459, %v1635
  %1637 = vmatprep.mubr.bf16.mxu0 0
  %1638 = vmatmul.mubr.bf16.gmra.mrb[0].mxu0 %v458
  %v1639 = vpop.f32.mrb[0].mxu0
  %v1640 = vadd.f32 %v1463, %v1639
  %v1641 = vpop.f32.mrb[0].mxu0
  %v1642 = vadd.f32 %v1465, %v1641
  %v1643 = vpop.f32.mrb[0].mxu0
  %v1644 = vadd.f32 %v1467, %v1643
  %v1645 = vpop.f32.mrb[0].mxu0
  %v1646 = vadd.f32 %v1469, %v1645
  %1647 = vmatprep.mubr.bf16.mxu0 0
  %1648 = vmatmul.mubr.bf16.gmra.mrb[0].mxu0 %v461
  %v1649 = vpop.f32.mrb[0].mxu0
  %v1650 = vadd.f32 %v1473, %v1649
  %v1651 = vpop.f32.mrb[0].mxu0
  %v1652 = vadd.f32 %v1475, %v1651
  %v1653 = vpop.f32.mrb[0].mxu0
  %v1654 = vadd.f32 %v1477, %v1653
  %v1655 = vpop.f32.mrb[0].mxu0
  %v1656 = vadd.f32 %v1479, %v1655
  %1657 = vmatprep.mubr.bf16.mxu0 0
  %1658 = vmatmul.mubr.bf16.gmra.mrb[0].mxu0 %v464
  %v1659 = vpop.f32.mrb[0].mxu0
  %v1660 = vadd.f32 %v1483, %v1659
  %v1661 = vpop.f32.mrb[0].mxu0
  %v1662 = vadd.f32 %v1485, %v1661
  %v1663 = vpop.f32.mrb[0].mxu0
  %v1664 = vadd.f32 %v1487, %v1663
  %v1665 = vpop.f32.mrb[0].mxu0
  %v1666 = vadd.f32 %v1489, %v1665
  %1667 = vmatprep.mubr.bf16.mxu0 0
  %1668 = vmatmul.mubr.bf16.gmra.mrb[0].mxu0 %v467
  %v1669 = vpop.f32.mrb[0].mxu0
  %v1670 = vadd.f32 %v1493, %v1669
  %v1671 = vpop.f32.mrb[0].mxu0
  %v1672 = vadd.f32 %v1495, %v1671
  %v1673 = vpop.f32.mrb[0].mxu0
  %v1674 = vadd.f32 %v1497, %v1673
  %v1675 = vpop.f32.mrb[0].mxu0
  %v1676 = vadd.f32 %v1499, %v1675
  %1677 = vmatprep.mubr.bf16.mxu0 0
  %1678 = vmatmul.mubr.bf16.gmra.mrb[0].mxu0 %v470
  %v1679 = vpop.f32.mrb[0].mxu0
  %v1680 = vadd.f32 %v1503, %v1679
  %v1681 = vpop.f32.mrb[0].mxu0
  %v1682 = vadd.f32 %v1505, %v1681
  %v1683 = vpop.f32.mrb[0].mxu0
  %v1684 = vadd.f32 %v1507, %v1683
  %v1685 = vpop.f32.mrb[0].mxu0
  %v1686 = vadd.f32 %v1509, %v1685
  %1687 = vmatprep.mubr.bf16.mxu0 0
  %1688 = vmatmul.mubr.bf16.gmra.mrb[0].mxu0 %v473
  %v1689 = vpop.f32.mrb[0].mxu0
  %v1690 = vadd.f32 %v1513, %v1689
  %v1691 = vpop.f32.mrb[0].mxu0
  %v1692 = vadd.f32 %v1515, %v1691
  %v1693 = vpop.f32.mrb[0].mxu0
  %v1694 = vadd.f32 %v1517, %v1693
  %v1695 = vpop.f32.mrb[0].mxu0
  %v1696 = vadd.f32 %v1519, %v1695
  %1697 = vmatprep.mubr.bf16.mxu0 0
  %1698 = vmatmul.mubr.bf16.gmra.mrb[0].mxu0 %v476
  %v1699 = vpop.f32.mrb[0].mxu0
  %v1700 = vadd.f32 %v1523, %v1699
  %v1701 = vpop.f32.mrb[0].mxu0
  %v1702 = vadd.f32 %v1525, %v1701
  %v1703 = vpop.f32.mrb[0].mxu0
  %v1704 = vadd.f32 %v1527, %v1703
  %v1705 = vpop.f32.mrb[0].mxu0
  %v1706 = vadd.f32 %v1529, %v1705
  %1707 = vmatprep.mubr.bf16.mxu0 0
  %1708 = vmatmul.mubr.bf16.gmra.mrb[0].mxu0 %v479
  %v1709 = vpop.f32.mrb[0].mxu0
  %v1710 = vadd.f32 %v1533, %v1709
  %v1711 = vpop.f32.mrb[0].mxu0
  %v1712 = vadd.f32 %v1535, %v1711
  %v1713 = vpop.f32.mrb[0].mxu0
  %v1714 = vadd.f32 %v1537, %v1713
  %v1715 = vpop.f32.mrb[0].mxu0
  %v1716 = vadd.f32 %v1539, %v1715
  %1717 = vdwg.mxu0
  %s1718 = scalar_lea.vmem %s1, 224
  %v1719 = vld [vmem:[%s1718] sm:$0xff]
  %v1720 = vld [vmem:[%s1718 + $0x8] sm:$0xff]
  %v1721 = vld [vmem:[%s1718 + $0x10] sm:$0xff]
  %v1722 = vld [vmem:[%s1718 + $0x18] sm:$0x33]
  %v1727 = vunpack.c.l.b16 %v1719
  %v1728 = vunpack.c.h.b16 %v1719
  %v1729 = vunpack.c.l.b16 %v1720
  %v1730 = vunpack.c.h.b16 %v1720
  %v1731 = vunpack.c.l.b16 %v1721
  %v1732 = vunpack.c.h.b16 %v1721
  %v1733 = vunpack.c.l.b16 %v1722
  %v1734 = vunpack.c.h.b16 %v1722
  %v1735 = vpack.c.b16 %v1729, %v1727
  %v1736 = vpack.c.b16 %v1730, %v1728
  %v1737 = vpack.c.b16 %v1733, %v1731
  %v1738 = vpack.c.b16 %v1734, %v1732
  %v1742 = vsel %vm207, %v1737, 0
  %v1745 = vsel %vm207, %v1738, 0
  %1747 = vmatprep.subr.bf16.mxu0 %v1736
  %1748 = vmatpush1.bf16.msra.mxu0 %v1735
  %1749 = vmatprep.subr.bf16.mxu0 %v1745
  %1750 = vmatpush1.bf16.msra.mxu0 %v1742
  %1751 = vmatprep.subr.bf16.mxu0 0
  %1752 = vmatpush1.bf16.msra.mxu0 0
  %1753 = vmatprep.subr.bf16.mxu0 0
  %1754 = vmatpush1.bf16.msra.mxu0 0
  %1755 = vmatprep.subr.bf16.mxu0 0
  %1756 = vmatpush1.bf16.msra.mxu0 0
  %1757 = vmatprep.subr.bf16.mxu0 0
  %1758 = vmatpush1.bf16.msra.mxu0 0
  %1759 = vmatprep.subr.bf16.mxu0 0
  %1760 = vmatpush1.bf16.msra.mxu0 0
  %1761 = vmatprep.subr.bf16.mxu0 0
  %1762 = vmatpush1.bf16.msra.mxu0 0
  %1763 = vmatprep.subr.bf16.mxu0 0
  %1764 = vmatpush1.bf16.msra.mxu0 0
  %1765 = vmatprep.subr.bf16.mxu0 0
  %1766 = vmatpush1.bf16.msra.mxu0 0
  %1767 = vmatprep.subr.bf16.mxu0 0
  %1768 = vmatpush1.bf16.msra.mxu0 0
  %1769 = vmatprep.subr.bf16.mxu0 0
  %1770 = vmatpush1.bf16.msra.mxu0 0
  %1771 = vmatprep.subr.bf16.mxu0 0
  %1772 = vmatpush1.bf16.msra.mxu0 0
  %1773 = vmatprep.subr.bf16.mxu0 0
  %1774 = vmatpush1.bf16.msra.mxu0 0
  %1775 = vmatprep.subr.bf16.mxu0 0
  %1776 = vmatpush1.bf16.msra.mxu0 0
  %1777 = vmatprep.subr.bf16.mxu0 0
  %1778 = vmatpush1.bf16.msra.mxu0 0
  %1779 = vmatprep.mubr.bf16.mxu0 0
  %1780 = vmatmul.mubr.bf16.gmra.mrb[0].mxu0 %v449
  %v1781 = vpop.f32.mrb[0].mxu0
  %v1782 = vadd.f32 0.0, %v1781
  %v1783 = vpop.f32.mrb[0].mxu0
  %v1784 = vadd.f32 0.0, %v1783
  %v1785 = vpop.f32.mrb[0].mxu0
  %v1786 = vadd.f32 0.0, %v1785
  %v1787 = vpop.f32.mrb[0].mxu0
  %v1788 = vadd.f32 0.0, %v1787
  %1789 = vmatprep.mubr.bf16.mxu0 0
  %1790 = vmatmul.mubr.bf16.gmra.mrb[0].mxu0 %v452
  %v1791 = vpop.f32.mrb[0].mxu0
  %v1792 = vadd.f32 0.0, %v1791
  %v1793 = vpop.f32.mrb[0].mxu0
  %v1794 = vadd.f32 0.0, %v1793
  %v1795 = vpop.f32.mrb[0].mxu0
  %v1796 = vadd.f32 0.0, %v1795
  %v1797 = vpop.f32.mrb[0].mxu0
  %v1798 = vadd.f32 0.0, %v1797
  %1799 = vmatprep.mubr.bf16.mxu0 0
  %1800 = vmatmul.mubr.bf16.gmra.mrb[0].mxu0 %v455
  %v1801 = vpop.f32.mrb[0].mxu0
  %v1802 = vadd.f32 0.0, %v1801
  %v1803 = vpop.f32.mrb[0].mxu0
  %v1804 = vadd.f32 0.0, %v1803
  %v1805 = vpop.f32.mrb[0].mxu0
  %v1806 = vadd.f32 0.0, %v1805
  %v1807 = vpop.f32.mrb[0].mxu0
  %v1808 = vadd.f32 0.0, %v1807
  %1809 = vmatprep.mubr.bf16.mxu0 0
  %1810 = vmatmul.mubr.bf16.gmra.mrb[0].mxu0 %v458
  %v1811 = vpop.f32.mrb[0].mxu0
  %v1812 = vadd.f32 0.0, %v1811
  %v1813 = vpop.f32.mrb[0].mxu0
  %v1814 = vadd.f32 0.0, %v1813
  %v1815 = vpop.f32.mrb[0].mxu0
  %v1816 = vadd.f32 0.0, %v1815
  %v1817 = vpop.f32.mrb[0].mxu0
  %v1818 = vadd.f32 0.0, %v1817
  %1819 = vmatprep.mubr.bf16.mxu0 0
  %1820 = vmatmul.mubr.bf16.gmra.mrb[0].mxu0 %v461
  %v1821 = vpop.f32.mrb[0].mxu0
  %v1822 = vadd.f32 0.0, %v1821
  %v1823 = vpop.f32.mrb[0].mxu0
  %v1824 = vadd.f32 0.0, %v1823
  %v1825 = vpop.f32.mrb[0].mxu0
  %v1826 = vadd.f32 0.0, %v1825
  %v1827 = vpop.f32.mrb[0].mxu0
  %v1828 = vadd.f32 0.0, %v1827
  %1829 = vmatprep.mubr.bf16.mxu0 0
  %1830 = vmatmul.mubr.bf16.gmra.mrb[0].mxu0 %v464
  %v1831 = vpop.f32.mrb[0].mxu0
  %v1832 = vadd.f32 0.0, %v1831
  %v1833 = vpop.f32.mrb[0].mxu0
  %v1834 = vadd.f32 0.0, %v1833
  %v1835 = vpop.f32.mrb[0].mxu0
  %v1836 = vadd.f32 0.0, %v1835
  %v1837 = vpop.f32.mrb[0].mxu0
  %v1838 = vadd.f32 0.0, %v1837
  %1839 = vmatprep.mubr.bf16.mxu0 0
  %1840 = vmatmul.mubr.bf16.gmra.mrb[0].mxu0 %v467
  %v1841 = vpop.f32.mrb[0].mxu0
  %v1842 = vadd.f32 0.0, %v1841
  %v1843 = vpop.f32.mrb[0].mxu0
  %v1844 = vadd.f32 0.0, %v1843
  %v1845 = vpop.f32.mrb[0].mxu0
  %v1846 = vadd.f32 0.0, %v1845
  %v1847 = vpop.f32.mrb[0].mxu0
  %v1848 = vadd.f32 0.0, %v1847
  %1849 = vmatprep.mubr.bf16.mxu0 0
  %1850 = vmatmul.mubr.bf16.gmra.mrb[0].mxu0 %v470
  %v1851 = vpop.f32.mrb[0].mxu0
  %v1852 = vadd.f32 0.0, %v1851
  %v1853 = vpop.f32.mrb[0].mxu0
  %v1854 = vadd.f32 0.0, %v1853
  %v1855 = vpop.f32.mrb[0].mxu0
  %v1856 = vadd.f32 0.0, %v1855
  %v1857 = vpop.f32.mrb[0].mxu0
  %v1858 = vadd.f32 0.0, %v1857
  %1859 = vmatprep.mubr.bf16.mxu0 0
  %1860 = vmatmul.mubr.bf16.gmra.mrb[0].mxu0 %v473
  %v1861 = vpop.f32.mrb[0].mxu0
  %v1862 = vadd.f32 0.0, %v1861
  %v1863 = vpop.f32.mrb[0].mxu0
  %v1864 = vadd.f32 0.0, %v1863
  %v1865 = vpop.f32.mrb[0].mxu0
  %v1866 = vadd.f32 0.0, %v1865
  %v1867 = vpop.f32.mrb[0].mxu0
  %v1868 = vadd.f32 0.0, %v1867
  %1869 = vmatprep.mubr.bf16.mxu0 0
  %1870 = vmatmul.mubr.bf16.gmra.mrb[0].mxu0 %v476
  %v1871 = vpop.f32.mrb[0].mxu0
  %v1872 = vadd.f32 0.0, %v1871
  %v1873 = vpop.f32.mrb[0].mxu0
  %v1874 = vadd.f32 0.0, %v1873
  %v1875 = vpop.f32.mrb[0].mxu0
  %v1876 = vadd.f32 0.0, %v1875
  %v1877 = vpop.f32.mrb[0].mxu0
  %v1878 = vadd.f32 0.0, %v1877
  %1879 = vmatprep.mubr.bf16.mxu0 0
  %1880 = vmatmul.mubr.bf16.gmra.mrb[0].mxu0 %v479
  %v1881 = vpop.f32.mrb[0].mxu0
  %v1882 = vadd.f32 0.0, %v1881
  %v1883 = vpop.f32.mrb[0].mxu0
  %v1884 = vadd.f32 0.0, %v1883
  %v1885 = vpop.f32.mrb[0].mxu0
  %v1886 = vadd.f32 0.0, %v1885
  %v1887 = vpop.f32.mrb[0].mxu0
  %v1888 = vadd.f32 0.0, %v1887
  %1889 = vmatprep.mubr.bf16.mxu0 0
  %1890 = vmatmul.mubr.bf16.gmra.mrb[0].mxu0 %v669
  %v1891 = vpop.f32.mrb[0].mxu0
  %v1892 = vadd.f32 0.0, %v1891
  %v1893 = vpop.f32.mrb[0].mxu0
  %v1894 = vadd.f32 0.0, %v1893
  %v1895 = vpop.f32.mrb[0].mxu0
  %v1896 = vadd.f32 0.0, %v1895
  %v1897 = vpop.f32.mrb[0].mxu0
  %v1898 = vadd.f32 0.0, %v1897
  %1899 = vdwg.mxu0
  %v1900 = vadd.f32 %v1600, %v1782
  %v1901 = vadd.f32 %v1602, %v1784
  %v1902 = vadd.f32 %v1604, %v1786
  %v1903 = vadd.f32 %v1606, %v1788
  %v1904 = vadd.f32 %v1610, %v1792
  %v1905 = vadd.f32 %v1612, %v1794
  %v1906 = vadd.f32 %v1614, %v1796
  %v1907 = vadd.f32 %v1616, %v1798
  %v1908 = vadd.f32 %v1620, %v1802
  %v1909 = vadd.f32 %v1622, %v1804
  %v1910 = vadd.f32 %v1624, %v1806
  %v1911 = vadd.f32 %v1626, %v1808
  %v1912 = vadd.f32 %v1630, %v1812
  %v1913 = vadd.f32 %v1632, %v1814
  %v1914 = vadd.f32 %v1634, %v1816
  %v1915 = vadd.f32 %v1636, %v1818
  %v1916 = vadd.f32 %v1640, %v1822
  %v1917 = vadd.f32 %v1642, %v1824
  %v1918 = vadd.f32 %v1644, %v1826
  %v1919 = vadd.f32 %v1646, %v1828
  %v1920 = vadd.f32 %v1650, %v1832
  %v1921 = vadd.f32 %v1652, %v1834
  %v1922 = vadd.f32 %v1654, %v1836
  %v1923 = vadd.f32 %v1656, %v1838
  %v1924 = vadd.f32 %v1660, %v1842
  %v1925 = vadd.f32 %v1662, %v1844
  %v1926 = vadd.f32 %v1664, %v1846
  %v1927 = vadd.f32 %v1666, %v1848
  %v1928 = vadd.f32 %v1670, %v1852
  %v1929 = vadd.f32 %v1672, %v1854
  %v1930 = vadd.f32 %v1674, %v1856
  %v1931 = vadd.f32 %v1676, %v1858
  %v1932 = vadd.f32 %v1680, %v1862
  %v1933 = vadd.f32 %v1682, %v1864
  %v1934 = vadd.f32 %v1684, %v1866
  %v1935 = vadd.f32 %v1686, %v1868
  %v1936 = vadd.f32 %v1690, %v1872
  %v1937 = vadd.f32 %v1692, %v1874
  %v1938 = vadd.f32 %v1694, %v1876
  %v1939 = vadd.f32 %v1696, %v1878
  %v1940 = vadd.f32 %v1700, %v1882
  %v1941 = vadd.f32 %v1702, %v1884
  %v1942 = vadd.f32 %v1704, %v1886
  %v1943 = vadd.f32 %v1706, %v1888
  %v1944 = vadd.f32 %v1710, %v1892
  %v1945 = vadd.f32 %v1712, %v1894
  %v1946 = vadd.f32 %v1714, %v1896
  %v1947 = vadd.f32 %v1716, %v1898
  %s1948 = scalar_lea.vmem %s1, 256
  %v1949 = vld [vmem:[%s1948] sm:$0xff]
  %v1950 = vld [vmem:[%s1948 + $0x8] sm:$0xff]
  %v1951 = vld [vmem:[%s1948 + $0x10] sm:$0xff]
  %v1952 = vld [vmem:[%s1948 + $0x18] sm:$0x33]
  %v1957 = vunpack.c.l.b16 %v1949
  %v1958 = vunpack.c.h.b16 %v1949
  %v1959 = vunpack.c.l.b16 %v1950
  %v1960 = vunpack.c.h.b16 %v1950
  %v1961 = vunpack.c.l.b16 %v1951
  %v1962 = vunpack.c.h.b16 %v1951
  %v1963 = vunpack.c.l.b16 %v1952
  %v1964 = vunpack.c.h.b16 %v1952
  %v1965 = vpack.c.b16 %v1959, %v1957
  %v1966 = vpack.c.b16 %v1960, %v1958
  %v1967 = vpack.c.b16 %v1963, %v1961
  %v1968 = vpack.c.b16 %v1964, %v1962
  %v1972 = vsel %vm207, %v1967, 0
  %v1975 = vsel %vm207, %v1968, 0
  %1977 = vmatprep.subr.bf16.mxu0 %v1966
  %1978 = vmatpush1.bf16.msra.mxu0 %v1965
  %1979 = vmatprep.subr.bf16.mxu0 %v1975
  %1980 = vmatpush1.bf16.msra.mxu0 %v1972
  %1981 = vmatprep.subr.bf16.mxu0 0
  %1982 = vmatpush1.bf16.msra.mxu0 0
  %1983 = vmatprep.subr.bf16.mxu0 0
  %1984 = vmatpush1.bf16.msra.mxu0 0
  %1985 = vmatprep.subr.bf16.mxu0 0
  %1986 = vmatpush1.bf16.msra.mxu0 0
  %1987 = vmatprep.subr.bf16.mxu0 0
  %1988 = vmatpush1.bf16.msra.mxu0 0
  %1989 = vmatprep.subr.bf16.mxu0 0
  %1990 = vmatpush1.bf16.msra.mxu0 0
  %1991 = vmatprep.subr.bf16.mxu0 0
  %1992 = vmatpush1.bf16.msra.mxu0 0
  %1993 = vmatprep.subr.bf16.mxu0 0
  %1994 = vmatpush1.bf16.msra.mxu0 0
  %1995 = vmatprep.subr.bf16.mxu0 0
  %1996 = vmatpush1.bf16.msra.mxu0 0
  %1997 = vmatprep.subr.bf16.mxu0 0
  %1998 = vmatpush1.bf16.msra.mxu0 0
  %1999 = vmatprep.subr.bf16.mxu0 0
  %2000 = vmatpush1.bf16.msra.mxu0 0
  %2001 = vmatprep.subr.bf16.mxu0 0
  %2002 = vmatpush1.bf16.msra.mxu0 0
  %2003 = vmatprep.subr.bf16.mxu0 0
  %2004 = vmatpush1.bf16.msra.mxu0 0
  %2005 = vmatprep.subr.bf16.mxu0 0
  %2006 = vmatpush1.bf16.msra.mxu0 0
  %2007 = vmatprep.subr.bf16.mxu0 0
  %2008 = vmatpush1.bf16.msra.mxu0 0
  %2009 = vmatprep.mubr.bf16.mxu0 0
  %2010 = vmatmul.mubr.bf16.gmra.mrb[0].mxu0 %v175
  %v2011 = vpop.f32.mrb[0].mxu0
  %v2012 = vadd.f32 0.0, %v2011
  %v2013 = vpop.f32.mrb[0].mxu0
  %v2014 = vadd.f32 0.0, %v2013
  %v2015 = vpop.f32.mrb[0].mxu0
  %v2016 = vadd.f32 0.0, %v2015
  %v2017 = vpop.f32.mrb[0].mxu0
  %v2018 = vadd.f32 0.0, %v2017
  %2019 = vmatprep.mubr.bf16.mxu0 0
  %2020 = vmatmul.mubr.bf16.gmra.mrb[0].mxu0 %v178
  %v2021 = vpop.f32.mrb[0].mxu0
  %v2022 = vadd.f32 0.0, %v2021
  %v2023 = vpop.f32.mrb[0].mxu0
  %v2024 = vadd.f32 0.0, %v2023
  %v2025 = vpop.f32.mrb[0].mxu0
  %v2026 = vadd.f32 0.0, %v2025
  %v2027 = vpop.f32.mrb[0].mxu0
  %v2028 = vadd.f32 0.0, %v2027
  %2029 = vmatprep.mubr.bf16.mxu0 0
  %2030 = vmatmul.mubr.bf16.gmra.mrb[0].mxu0 %v181
  %v2031 = vpop.f32.mrb[0].mxu0
  %v2032 = vadd.f32 0.0, %v2031
  %v2033 = vpop.f32.mrb[0].mxu0
  %v2034 = vadd.f32 0.0, %v2033
  %v2035 = vpop.f32.mrb[0].mxu0
  %v2036 = vadd.f32 0.0, %v2035
  %v2037 = vpop.f32.mrb[0].mxu0
  %v2038 = vadd.f32 0.0, %v2037
  %2039 = vmatprep.mubr.bf16.mxu0 0
  %2040 = vmatmul.mubr.bf16.gmra.mrb[0].mxu0 %v184
  %v2041 = vpop.f32.mrb[0].mxu0
  %v2042 = vadd.f32 0.0, %v2041
  %v2043 = vpop.f32.mrb[0].mxu0
  %v2044 = vadd.f32 0.0, %v2043
  %v2045 = vpop.f32.mrb[0].mxu0
  %v2046 = vadd.f32 0.0, %v2045
  %v2047 = vpop.f32.mrb[0].mxu0
  %v2048 = vadd.f32 0.0, %v2047
  %2049 = vmatprep.mubr.bf16.mxu0 0
  %2050 = vmatmul.mubr.bf16.gmra.mrb[0].mxu0 %v187
  %v2051 = vpop.f32.mrb[0].mxu0
  %v2052 = vadd.f32 0.0, %v2051
  %v2053 = vpop.f32.mrb[0].mxu0
  %v2054 = vadd.f32 0.0, %v2053
  %v2055 = vpop.f32.mrb[0].mxu0
  %v2056 = vadd.f32 0.0, %v2055
  %v2057 = vpop.f32.mrb[0].mxu0
  %v2058 = vadd.f32 0.0, %v2057
  %2059 = vmatprep.mubr.bf16.mxu0 0
  %2060 = vmatmul.mubr.bf16.gmra.mrb[0].mxu0 %v190
  %v2061 = vpop.f32.mrb[0].mxu0
  %v2062 = vadd.f32 0.0, %v2061
  %v2063 = vpop.f32.mrb[0].mxu0
  %v2064 = vadd.f32 0.0, %v2063
  %v2065 = vpop.f32.mrb[0].mxu0
  %v2066 = vadd.f32 0.0, %v2065
  %v2067 = vpop.f32.mrb[0].mxu0
  %v2068 = vadd.f32 0.0, %v2067
  %2069 = vmatprep.mubr.bf16.mxu0 0
  %2070 = vmatmul.mubr.bf16.gmra.mrb[0].mxu0 %v193
  %v2071 = vpop.f32.mrb[0].mxu0
  %v2072 = vadd.f32 0.0, %v2071
  %v2073 = vpop.f32.mrb[0].mxu0
  %v2074 = vadd.f32 0.0, %v2073
  %v2075 = vpop.f32.mrb[0].mxu0
  %v2076 = vadd.f32 0.0, %v2075
  %v2077 = vpop.f32.mrb[0].mxu0
  %v2078 = vadd.f32 0.0, %v2077
  %2079 = vmatprep.mubr.bf16.mxu0 0
  %2080 = vmatmul.mubr.bf16.gmra.mrb[0].mxu0 %v196
  %v2081 = vpop.f32.mrb[0].mxu0
  %v2082 = vadd.f32 0.0, %v2081
  %v2083 = vpop.f32.mrb[0].mxu0
  %v2084 = vadd.f32 0.0, %v2083
  %v2085 = vpop.f32.mrb[0].mxu0
  %v2086 = vadd.f32 0.0, %v2085
  %v2087 = vpop.f32.mrb[0].mxu0
  %v2088 = vadd.f32 0.0, %v2087
  %2089 = vmatprep.mubr.bf16.mxu0 0
  %2090 = vmatmul.mubr.bf16.gmra.mrb[0].mxu0 %v199
  %v2091 = vpop.f32.mrb[0].mxu0
  %v2092 = vadd.f32 0.0, %v2091
  %v2093 = vpop.f32.mrb[0].mxu0
  %v2094 = vadd.f32 0.0, %v2093
  %v2095 = vpop.f32.mrb[0].mxu0
  %v2096 = vadd.f32 0.0, %v2095
  %v2097 = vpop.f32.mrb[0].mxu0
  %v2098 = vadd.f32 0.0, %v2097
  %2099 = vmatprep.mubr.bf16.mxu0 0
  %2100 = vmatmul.mubr.bf16.gmra.mrb[0].mxu0 %v202
  %v2101 = vpop.f32.mrb[0].mxu0
  %v2102 = vadd.f32 0.0, %v2101
  %v2103 = vpop.f32.mrb[0].mxu0
  %v2104 = vadd.f32 0.0, %v2103
  %v2105 = vpop.f32.mrb[0].mxu0
  %v2106 = vadd.f32 0.0, %v2105
  %v2107 = vpop.f32.mrb[0].mxu0
  %v2108 = vadd.f32 0.0, %v2107
  %2109 = vmatprep.mubr.bf16.mxu0 0
  %2110 = vmatmul.mubr.bf16.gmra.mrb[0].mxu0 %v205
  %v2111 = vpop.f32.mrb[0].mxu0
  %v2112 = vadd.f32 0.0, %v2111
  %v2113 = vpop.f32.mrb[0].mxu0
  %v2114 = vadd.f32 0.0, %v2113
  %v2115 = vpop.f32.mrb[0].mxu0
  %v2116 = vadd.f32 0.0, %v2115
  %v2117 = vpop.f32.mrb[0].mxu0
  %v2118 = vadd.f32 0.0, %v2117
  %2119 = vmatprep.mubr.bf16.mxu0 0
  %2120 = vmatmul.mubr.bf16.gmra.mrb[0].mxu0 %v907
  %v2121 = vpop.f32.mrb[0].mxu0
  %v2122 = vadd.f32 0.0, %v2121
  %v2123 = vpop.f32.mrb[0].mxu0
  %v2124 = vadd.f32 0.0, %v2123
  %v2125 = vpop.f32.mrb[0].mxu0
  %v2126 = vadd.f32 0.0, %v2125
  %v2127 = vpop.f32.mrb[0].mxu0
  %v2128 = vadd.f32 0.0, %v2127
  %2129 = vdwg.mxu0
  %v2130 = vadd.f32 %v1900, %v2012
  %v2131 = vadd.f32 %v1901, %v2014
  %v2132 = vadd.f32 %v1902, %v2016
  %v2133 = vadd.f32 %v1903, %v2018
  %v2134 = vadd.f32 %v1904, %v2022
  %v2135 = vadd.f32 %v1905, %v2024
  %v2136 = vadd.f32 %v1906, %v2026
  %v2137 = vadd.f32 %v1907, %v2028
  %v2138 = vadd.f32 %v1908, %v2032
  %v2139 = vadd.f32 %v1909, %v2034
  %v2140 = vadd.f32 %v1910, %v2036
  %v2141 = vadd.f32 %v1911, %v2038
  %v2142 = vadd.f32 %v1912, %v2042
  %v2143 = vadd.f32 %v1913, %v2044
  %v2144 = vadd.f32 %v1914, %v2046
  %v2145 = vadd.f32 %v1915, %v2048
  %v2146 = vadd.f32 %v1916, %v2052
  %v2147 = vadd.f32 %v1917, %v2054
  %v2148 = vadd.f32 %v1918, %v2056
  %v2149 = vadd.f32 %v1919, %v2058
  %v2150 = vadd.f32 %v1920, %v2062
  %v2151 = vadd.f32 %v1921, %v2064
  %v2152 = vadd.f32 %v1922, %v2066
  %v2153 = vadd.f32 %v1923, %v2068
  %v2154 = vadd.f32 %v1924, %v2072
  %v2155 = vadd.f32 %v1925, %v2074
  %v2156 = vadd.f32 %v1926, %v2076
  %v2157 = vadd.f32 %v1927, %v2078
  %v2158 = vadd.f32 %v1928, %v2082
  %v2159 = vadd.f32 %v1929, %v2084
  %v2160 = vadd.f32 %v1930, %v2086
  %v2161 = vadd.f32 %v1931, %v2088
  %v2162 = vadd.f32 %v1932, %v2092
  %v2163 = vadd.f32 %v1933, %v2094
  %v2164 = vadd.f32 %v1934, %v2096
  %v2165 = vadd.f32 %v1935, %v2098
  %v2166 = vadd.f32 %v1936, %v2102
  %v2167 = vadd.f32 %v1937, %v2104
  %v2168 = vadd.f32 %v1938, %v2106
  %v2169 = vadd.f32 %v1939, %v2108
  %v2170 = vadd.f32 %v1940, %v2112
  %v2171 = vadd.f32 %v1941, %v2114
  %v2172 = vadd.f32 %v1942, %v2116
  %v2173 = vadd.f32 %v1943, %v2118
  %v2174 = vadd.f32 %v1944, %v2122
  %v2175 = vadd.f32 %v1945, %v2124
  %v2176 = vadd.f32 %v1946, %v2126
  %v2177 = vadd.f32 %v1947, %v2128
  %s2178 = scalar_lea.vmem %s1, 288
  %v2179 = vld [vmem:[%s2178] sm:$0xff]
  %v2180 = vld [vmem:[%s2178 + $0x8] sm:$0xff]
  %v2181 = vld [vmem:[%s2178 + $0x10] sm:$0xff]
  %v2182 = vld [vmem:[%s2178 + $0x18] sm:$0x33]
  %v2187 = vunpack.c.l.b16 %v2179
  %v2188 = vunpack.c.h.b16 %v2179
  %v2189 = vunpack.c.l.b16 %v2180
  %v2190 = vunpack.c.h.b16 %v2180
  %v2191 = vunpack.c.l.b16 %v2181
  %v2192 = vunpack.c.h.b16 %v2181
  %v2193 = vunpack.c.l.b16 %v2182
  %v2194 = vunpack.c.h.b16 %v2182
  %v2195 = vpack.c.b16 %v2189, %v2187
  %v2196 = vpack.c.b16 %v2190, %v2188
  %v2197 = vpack.c.b16 %v2193, %v2191
  %v2198 = vpack.c.b16 %v2194, %v2192
  %v2202 = vsel %vm207, %v2197, 0
  %v2205 = vsel %vm207, %v2198, 0
  %2207 = vmatprep.subr.bf16.mxu0 %v2196
  %2208 = vmatpush1.bf16.msra.mxu0 %v2195
  %2209 = vmatprep.subr.bf16.mxu0 %v2205
  %2210 = vmatpush1.bf16.msra.mxu0 %v2202
  %2211 = vmatprep.subr.bf16.mxu0 0
  %2212 = vmatpush1.bf16.msra.mxu0 0
  %2213 = vmatprep.subr.bf16.mxu0 0
  %2214 = vmatpush1.bf16.msra.mxu0 0
  %2215 = vmatprep.subr.bf16.mxu0 0
  %2216 = vmatpush1.bf16.msra.mxu0 0
  %2217 = vmatprep.subr.bf16.mxu0 0
  %2218 = vmatpush1.bf16.msra.mxu0 0
  %2219 = vmatprep.subr.bf16.mxu0 0
  %2220 = vmatpush1.bf16.msra.mxu0 0
  %2221 = vmatprep.subr.bf16.mxu0 0
  %2222 = vmatpush1.bf16.msra.mxu0 0
  %2223 = vmatprep.subr.bf16.mxu0 0
  %2224 = vmatpush1.bf16.msra.mxu0 0
  %2225 = vmatprep.subr.bf16.mxu0 0
  %2226 = vmatpush1.bf16.msra.mxu0 0
  %2227 = vmatprep.subr.bf16.mxu0 0
  %2228 = vmatpush1.bf16.msra.mxu0 0
  %2229 = vmatprep.subr.bf16.mxu0 0
  %2230 = vmatpush1.bf16.msra.mxu0 0
  %2231 = vmatprep.subr.bf16.mxu0 0
  %2232 = vmatpush1.bf16.msra.mxu0 0
  %2233 = vmatprep.subr.bf16.mxu0 0
  %2234 = vmatpush1.bf16.msra.mxu0 0
  %2235 = vmatprep.subr.bf16.mxu0 0
  %2236 = vmatpush1.bf16.msra.mxu0 0
  %2237 = vmatprep.subr.bf16.mxu0 0
  %2238 = vmatpush1.bf16.msra.mxu0 0
  %2239 = vmatprep.mubr.bf16.mxu0 0
  %2240 = vmatmul.mubr.bf16.gmra.mrb[0].mxu0 %v452
  %v2241 = vpop.f32.mrb[0].mxu0
  %v2242 = vadd.f32 0.0, %v2241
  %v2243 = vpop.f32.mrb[0].mxu0
  %v2244 = vadd.f32 0.0, %v2243
  %v2245 = vpop.f32.mrb[0].mxu0
  %v2246 = vadd.f32 0.0, %v2245
  %v2247 = vpop.f32.mrb[0].mxu0
  %v2248 = vadd.f32 0.0, %v2247
  %2249 = vmatprep.mubr.bf16.mxu0 0
  %2250 = vmatmul.mubr.bf16.gmra.mrb[0].mxu0 %v455
  %v2251 = vpop.f32.mrb[0].mxu0
  %v2252 = vadd.f32 0.0, %v2251
  %v2253 = vpop.f32.mrb[0].mxu0
  %v2254 = vadd.f32 0.0, %v2253
  %v2255 = vpop.f32.mrb[0].mxu0
  %v2256 = vadd.f32 0.0, %v2255
  %v2257 = vpop.f32.mrb[0].mxu0
  %v2258 = vadd.f32 0.0, %v2257
  %2259 = vmatprep.mubr.bf16.mxu0 0
  %2260 = vmatmul.mubr.bf16.gmra.mrb[0].mxu0 %v458
  %v2261 = vpop.f32.mrb[0].mxu0
  %v2262 = vadd.f32 0.0, %v2261
  %v2263 = vpop.f32.mrb[0].mxu0
  %v2264 = vadd.f32 0.0, %v2263
  %v2265 = vpop.f32.mrb[0].mxu0
  %v2266 = vadd.f32 0.0, %v2265
  %v2267 = vpop.f32.mrb[0].mxu0
  %v2268 = vadd.f32 0.0, %v2267
  %2269 = vmatprep.mubr.bf16.mxu0 0
  %2270 = vmatmul.mubr.bf16.gmra.mrb[0].mxu0 %v461
  %v2271 = vpop.f32.mrb[0].mxu0
  %v2272 = vadd.f32 0.0, %v2271
  %v2273 = vpop.f32.mrb[0].mxu0
  %v2274 = vadd.f32 0.0, %v2273
  %v2275 = vpop.f32.mrb[0].mxu0
  %v2276 = vadd.f32 0.0, %v2275
  %v2277 = vpop.f32.mrb[0].mxu0
  %v2278 = vadd.f32 0.0, %v2277
  %2279 = vmatprep.mubr.bf16.mxu0 0
  %2280 = vmatmul.mubr.bf16.gmra.mrb[0].mxu0 %v464
  %v2281 = vpop.f32.mrb[0].mxu0
  %v2282 = vadd.f32 0.0, %v2281
  %v2283 = vpop.f32.mrb[0].mxu0
  %v2284 = vadd.f32 0.0, %v2283
  %v2285 = vpop.f32.mrb[0].mxu0
  %v2286 = vadd.f32 0.0, %v2285
  %v2287 = vpop.f32.mrb[0].mxu0
  %v2288 = vadd.f32 0.0, %v2287
  %2289 = vmatprep.mubr.bf16.mxu0 0
  %2290 = vmatmul.mubr.bf16.gmra.mrb[0].mxu0 %v467
  %v2291 = vpop.f32.mrb[0].mxu0
  %v2292 = vadd.f32 0.0, %v2291
  %v2293 = vpop.f32.mrb[0].mxu0
  %v2294 = vadd.f32 0.0, %v2293
  %v2295 = vpop.f32.mrb[0].mxu0
  %v2296 = vadd.f32 0.0, %v2295
  %v2297 = vpop.f32.mrb[0].mxu0
  %v2298 = vadd.f32 0.0, %v2297
  %2299 = vmatprep.mubr.bf16.mxu0 0
  %2300 = vmatmul.mubr.bf16.gmra.mrb[0].mxu0 %v470
  %v2301 = vpop.f32.mrb[0].mxu0
  %v2302 = vadd.f32 0.0, %v2301
  %v2303 = vpop.f32.mrb[0].mxu0
  %v2304 = vadd.f32 0.0, %v2303
  %v2305 = vpop.f32.mrb[0].mxu0
  %v2306 = vadd.f32 0.0, %v2305
  %v2307 = vpop.f32.mrb[0].mxu0
  %v2308 = vadd.f32 0.0, %v2307
  %2309 = vmatprep.mubr.bf16.mxu0 0
  %2310 = vmatmul.mubr.bf16.gmra.mrb[0].mxu0 %v473
  %v2311 = vpop.f32.mrb[0].mxu0
  %v2312 = vadd.f32 0.0, %v2311
  %v2313 = vpop.f32.mrb[0].mxu0
  %v2314 = vadd.f32 0.0, %v2313
  %v2315 = vpop.f32.mrb[0].mxu0
  %v2316 = vadd.f32 0.0, %v2315
  %v2317 = vpop.f32.mrb[0].mxu0
  %v2318 = vadd.f32 0.0, %v2317
  %2319 = vmatprep.mubr.bf16.mxu0 0
  %2320 = vmatmul.mubr.bf16.gmra.mrb[0].mxu0 %v476
  %v2321 = vpop.f32.mrb[0].mxu0
  %v2322 = vadd.f32 0.0, %v2321
  %v2323 = vpop.f32.mrb[0].mxu0
  %v2324 = vadd.f32 0.0, %v2323
  %v2325 = vpop.f32.mrb[0].mxu0
  %v2326 = vadd.f32 0.0, %v2325
  %v2327 = vpop.f32.mrb[0].mxu0
  %v2328 = vadd.f32 0.0, %v2327
  %2329 = vmatprep.mubr.bf16.mxu0 0
  %2330 = vmatmul.mubr.bf16.gmra.mrb[0].mxu0 %v479
  %v2331 = vpop.f32.mrb[0].mxu0
  %v2332 = vadd.f32 0.0, %v2331
  %v2333 = vpop.f32.mrb[0].mxu0
  %v2334 = vadd.f32 0.0, %v2333
  %v2335 = vpop.f32.mrb[0].mxu0
  %v2336 = vadd.f32 0.0, %v2335
  %v2337 = vpop.f32.mrb[0].mxu0
  %v2338 = vadd.f32 0.0, %v2337
  %2339 = vmatprep.mubr.bf16.mxu0 0
  %2340 = vmatmul.mubr.bf16.gmra.mrb[0].mxu0 %v669
  %v2341 = vpop.f32.mrb[0].mxu0
  %v2342 = vadd.f32 0.0, %v2341
  %v2343 = vpop.f32.mrb[0].mxu0
  %v2344 = vadd.f32 0.0, %v2343
  %v2345 = vpop.f32.mrb[0].mxu0
  %v2346 = vadd.f32 0.0, %v2345
  %v2347 = vpop.f32.mrb[0].mxu0
  %v2348 = vadd.f32 0.0, %v2347
  %2349 = vmatprep.mubr.bf16.mxu0 0
  %2350 = vmatmul.mubr.bf16.gmra.mrb[0].mxu0 %v1145
  %v2351 = vpop.f32.mrb[0].mxu0
  %v2352 = vadd.f32 0.0, %v2351
  %v2353 = vpop.f32.mrb[0].mxu0
  %v2354 = vadd.f32 0.0, %v2353
  %v2355 = vpop.f32.mrb[0].mxu0
  %v2356 = vadd.f32 0.0, %v2355
  %v2357 = vpop.f32.mrb[0].mxu0
  %v2358 = vadd.f32 0.0, %v2357
  %2359 = vdwg.mxu0
  %v2360 = vadd.f32 %v2130, %v2242
  %v2361 = vadd.f32 %v2131, %v2244
  %v2362 = vadd.f32 %v2132, %v2246
  %v2363 = vadd.f32 %v2133, %v2248
  %v2364 = vadd.f32 %v2134, %v2252
  %v2365 = vadd.f32 %v2135, %v2254
  %v2366 = vadd.f32 %v2136, %v2256
  %v2367 = vadd.f32 %v2137, %v2258
  %v2368 = vadd.f32 %v2138, %v2262
  %v2369 = vadd.f32 %v2139, %v2264
  %v2370 = vadd.f32 %v2140, %v2266
  %v2371 = vadd.f32 %v2141, %v2268
  %v2372 = vadd.f32 %v2142, %v2272
  %v2373 = vadd.f32 %v2143, %v2274
  %v2374 = vadd.f32 %v2144, %v2276
  %v2375 = vadd.f32 %v2145, %v2278
  %v2376 = vadd.f32 %v2146, %v2282
  %v2377 = vadd.f32 %v2147, %v2284
  %v2378 = vadd.f32 %v2148, %v2286
  %v2379 = vadd.f32 %v2149, %v2288
  %v2380 = vadd.f32 %v2150, %v2292
  %v2381 = vadd.f32 %v2151, %v2294
  %v2382 = vadd.f32 %v2152, %v2296
  %v2383 = vadd.f32 %v2153, %v2298
  %v2384 = vadd.f32 %v2154, %v2302
  %v2385 = vadd.f32 %v2155, %v2304
  %v2386 = vadd.f32 %v2156, %v2306
  %v2387 = vadd.f32 %v2157, %v2308
  %v2388 = vadd.f32 %v2158, %v2312
  %v2389 = vadd.f32 %v2159, %v2314
  %v2390 = vadd.f32 %v2160, %v2316
  %v2391 = vadd.f32 %v2161, %v2318
  %v2392 = vadd.f32 %v2162, %v2322
  %v2393 = vadd.f32 %v2163, %v2324
  %v2394 = vadd.f32 %v2164, %v2326
  %v2395 = vadd.f32 %v2165, %v2328
  %v2396 = vadd.f32 %v2166, %v2332
  %v2397 = vadd.f32 %v2167, %v2334
  %v2398 = vadd.f32 %v2168, %v2336
  %v2399 = vadd.f32 %v2169, %v2338
  %v2400 = vadd.f32 %v2170, %v2342
  %v2401 = vadd.f32 %v2171, %v2344
  %v2402 = vadd.f32 %v2172, %v2346
  %v2403 = vadd.f32 %v2173, %v2348
  %v2404 = vadd.f32 %v2174, %v2352
  %v2405 = vadd.f32 %v2175, %v2354
  %v2406 = vadd.f32 %v2176, %v2356
  %v2407 = vadd.f32 %v2177, %v2358
  %2408 = vmatprep.subr.bf16.mxu0 %v165
  %2409 = vmatpush1.bf16.msra.mxu0 %v164
  %2410 = vmatprep.subr.bf16.mxu0 %v212
  %2411 = vmatpush1.bf16.msra.mxu0 %v209
  %2412 = vmatprep.subr.bf16.mxu0 0
  %2413 = vmatpush1.bf16.msra.mxu0 0
  %2414 = vmatprep.subr.bf16.mxu0 0
  %2415 = vmatpush1.bf16.msra.mxu0 0
  %2416 = vmatprep.subr.bf16.mxu0 0
  %2417 = vmatpush1.bf16.msra.mxu0 0
  %2418 = vmatprep.subr.bf16.mxu0 0
  %2419 = vmatpush1.bf16.msra.mxu0 0
  %2420 = vmatprep.subr.bf16.mxu0 0
  %2421 = vmatpush1.bf16.msra.mxu0 0
  %2422 = vmatprep.subr.bf16.mxu0 0
  %2423 = vmatpush1.bf16.msra.mxu0 0
  %2424 = vmatprep.subr.bf16.mxu0 0
  %2425 = vmatpush1.bf16.msra.mxu0 0
  %2426 = vmatprep.subr.bf16.mxu0 0
  %2427 = vmatpush1.bf16.msra.mxu0 0
  %2428 = vmatprep.subr.bf16.mxu0 0
  %2429 = vmatpush1.bf16.msra.mxu0 0
  %2430 = vmatprep.subr.bf16.mxu0 0
  %2431 = vmatpush1.bf16.msra.mxu0 0
  %2432 = vmatprep.subr.bf16.mxu0 0
  %2433 = vmatpush1.bf16.msra.mxu0 0
  %2434 = vmatprep.subr.bf16.mxu0 0
  %2435 = vmatpush1.bf16.msra.mxu0 0
  %2436 = vmatprep.subr.bf16.mxu0 0
  %2437 = vmatpush1.bf16.msra.mxu0 0
  %2438 = vmatprep.subr.bf16.mxu0 0
  %2439 = vmatpush1.bf16.msra.mxu0 0
  %2440 = vmatprep.mubr.bf16.mxu0 0
  %2441 = vmatmul.mubr.bf16.gmra.mrb[0].mxu0 %v449
  %v2442 = vpop.f32.mrb[0].mxu0
  %v2443 = vadd.f32 0.0, %v2442
  %v2444 = vpop.f32.mrb[0].mxu0
  %v2445 = vadd.f32 0.0, %v2444
  %v2446 = vpop.f32.mrb[0].mxu0
  %v2447 = vadd.f32 0.0, %v2446
  %v2448 = vpop.f32.mrb[0].mxu0
  %v2449 = vadd.f32 0.0, %v2448
  %2450 = vmatprep.mubr.bf16.mxu0 0
  %2451 = vmatmul.mubr.bf16.gmra.mrb[0].mxu0 %v452
  %v2452 = vpop.f32.mrb[0].mxu0
  %v2453 = vadd.f32 0.0, %v2452
  %v2454 = vpop.f32.mrb[0].mxu0
  %v2455 = vadd.f32 0.0, %v2454
  %v2456 = vpop.f32.mrb[0].mxu0
  %v2457 = vadd.f32 0.0, %v2456
  %v2458 = vpop.f32.mrb[0].mxu0
  %v2459 = vadd.f32 0.0, %v2458
  %2460 = vmatprep.mubr.bf16.mxu0 0
  %2461 = vmatmul.mubr.bf16.gmra.mrb[0].mxu0 %v455
  %v2462 = vpop.f32.mrb[0].mxu0
  %v2463 = vadd.f32 0.0, %v2462
  %v2464 = vpop.f32.mrb[0].mxu0
  %v2465 = vadd.f32 0.0, %v2464
  %v2466 = vpop.f32.mrb[0].mxu0
  %v2467 = vadd.f32 0.0, %v2466
  %v2468 = vpop.f32.mrb[0].mxu0
  %v2469 = vadd.f32 0.0, %v2468
  %2470 = vmatprep.mubr.bf16.mxu0 0
  %2471 = vmatmul.mubr.bf16.gmra.mrb[0].mxu0 %v458
  %v2472 = vpop.f32.mrb[0].mxu0
  %v2473 = vadd.f32 0.0, %v2472
  %v2474 = vpop.f32.mrb[0].mxu0
  %v2475 = vadd.f32 0.0, %v2474
  %v2476 = vpop.f32.mrb[0].mxu0
  %v2477 = vadd.f32 0.0, %v2476
  %v2478 = vpop.f32.mrb[0].mxu0
  %v2479 = vadd.f32 0.0, %v2478
  %2480 = vmatprep.mubr.bf16.mxu0 0
  %2481 = vmatmul.mubr.bf16.gmra.mrb[0].mxu0 %v461
  %v2482 = vpop.f32.mrb[0].mxu0
  %v2483 = vadd.f32 0.0, %v2482
  %v2484 = vpop.f32.mrb[0].mxu0
  %v2485 = vadd.f32 0.0, %v2484
  %v2486 = vpop.f32.mrb[0].mxu0
  %v2487 = vadd.f32 0.0, %v2486
  %v2488 = vpop.f32.mrb[0].mxu0
  %v2489 = vadd.f32 0.0, %v2488
  %2490 = vmatprep.mubr.bf16.mxu0 0
  %2491 = vmatmul.mubr.bf16.gmra.mrb[0].mxu0 %v464
  %v2492 = vpop.f32.mrb[0].mxu0
  %v2493 = vadd.f32 0.0, %v2492
  %v2494 = vpop.f32.mrb[0].mxu0
  %v2495 = vadd.f32 0.0, %v2494
  %v2496 = vpop.f32.mrb[0].mxu0
  %v2497 = vadd.f32 0.0, %v2496
  %v2498 = vpop.f32.mrb[0].mxu0
  %v2499 = vadd.f32 0.0, %v2498
  %2500 = vmatprep.mubr.bf16.mxu0 0
  %2501 = vmatmul.mubr.bf16.gmra.mrb[0].mxu0 %v467
  %v2502 = vpop.f32.mrb[0].mxu0
  %v2503 = vadd.f32 0.0, %v2502
  %v2504 = vpop.f32.mrb[0].mxu0
  %v2505 = vadd.f32 0.0, %v2504
  %v2506 = vpop.f32.mrb[0].mxu0
  %v2507 = vadd.f32 0.0, %v2506
  %v2508 = vpop.f32.mrb[0].mxu0
  %v2509 = vadd.f32 0.0, %v2508
  %2510 = vmatprep.mubr.bf16.mxu0 0
  %2511 = vmatmul.mubr.bf16.gmra.mrb[0].mxu0 %v470
  %v2512 = vpop.f32.mrb[0].mxu0
  %v2513 = vadd.f32 0.0, %v2512
  %v2514 = vpop.f32.mrb[0].mxu0
  %v2515 = vadd.f32 0.0, %v2514
  %v2516 = vpop.f32.mrb[0].mxu0
  %v2517 = vadd.f32 0.0, %v2516
  %v2518 = vpop.f32.mrb[0].mxu0
  %v2519 = vadd.f32 0.0, %v2518
  %2520 = vmatprep.mubr.bf16.mxu0 0
  %2521 = vmatmul.mubr.bf16.gmra.mrb[0].mxu0 %v473
  %v2522 = vpop.f32.mrb[0].mxu0
  %v2523 = vadd.f32 0.0, %v2522
  %v2524 = vpop.f32.mrb[0].mxu0
  %v2525 = vadd.f32 0.0, %v2524
  %v2526 = vpop.f32.mrb[0].mxu0
  %v2527 = vadd.f32 0.0, %v2526
  %v2528 = vpop.f32.mrb[0].mxu0
  %v2529 = vadd.f32 0.0, %v2528
  %2530 = vmatprep.mubr.bf16.mxu0 0
  %2531 = vmatmul.mubr.bf16.gmra.mrb[0].mxu0 %v476
  %v2532 = vpop.f32.mrb[0].mxu0
  %v2533 = vadd.f32 0.0, %v2532
  %v2534 = vpop.f32.mrb[0].mxu0
  %v2535 = vadd.f32 0.0, %v2534
  %v2536 = vpop.f32.mrb[0].mxu0
  %v2537 = vadd.f32 0.0, %v2536
  %v2538 = vpop.f32.mrb[0].mxu0
  %v2539 = vadd.f32 0.0, %v2538
  %2540 = vmatprep.mubr.bf16.mxu0 0
  %2541 = vmatmul.mubr.bf16.gmra.mrb[0].mxu0 %v479
  %v2542 = vpop.f32.mrb[0].mxu0
  %v2543 = vadd.f32 0.0, %v2542
  %v2544 = vpop.f32.mrb[0].mxu0
  %v2545 = vadd.f32 0.0, %v2544
  %v2546 = vpop.f32.mrb[0].mxu0
  %v2547 = vadd.f32 0.0, %v2546
  %v2548 = vpop.f32.mrb[0].mxu0
  %v2549 = vadd.f32 0.0, %v2548
  %2550 = vmatprep.mubr.bf16.mxu0 0
  %2551 = vmatmul.mubr.bf16.gmra.mrb[0].mxu0 %v669
  %v2552 = vpop.f32.mrb[0].mxu0
  %v2553 = vadd.f32 0.0, %v2552
  %v2554 = vpop.f32.mrb[0].mxu0
  %v2555 = vadd.f32 0.0, %v2554
  %v2556 = vpop.f32.mrb[0].mxu0
  %v2557 = vadd.f32 0.0, %v2556
  %v2558 = vpop.f32.mrb[0].mxu0
  %v2559 = vadd.f32 0.0, %v2558
  %2560 = vdwg.mxu0
  %2561 = vmatprep.subr.bf16.mxu0 %v440
  %2562 = vmatpush1.bf16.msra.mxu0 %v439
  %2563 = vmatprep.subr.bf16.mxu0 %v485
  %2564 = vmatpush1.bf16.msra.mxu0 %v482
  %2565 = vmatprep.subr.bf16.mxu0 0
  %2566 = vmatpush1.bf16.msra.mxu0 0
  %2567 = vmatprep.subr.bf16.mxu0 0
  %2568 = vmatpush1.bf16.msra.mxu0 0
  %2569 = vmatprep.subr.bf16.mxu0 0
  %2570 = vmatpush1.bf16.msra.mxu0 0
  %2571 = vmatprep.subr.bf16.mxu0 0
  %2572 = vmatpush1.bf16.msra.mxu0 0
  %2573 = vmatprep.subr.bf16.mxu0 0
  %2574 = vmatpush1.bf16.msra.mxu0 0
  %2575 = vmatprep.subr.bf16.mxu0 0
  %2576 = vmatpush1.bf16.msra.mxu0 0
  %2577 = vmatprep.subr.bf16.mxu0 0
  %2578 = vmatpush1.bf16.msra.mxu0 0
  %2579 = vmatprep.subr.bf16.mxu0 0
  %2580 = vmatpush1.bf16.msra.mxu0 0
  %2581 = vmatprep.subr.bf16.mxu0 0
  %2582 = vmatpush1.bf16.msra.mxu0 0
  %2583 = vmatprep.subr.bf16.mxu0 0
  %2584 = vmatpush1.bf16.msra.mxu0 0
  %2585 = vmatprep.subr.bf16.mxu0 0
  %2586 = vmatpush1.bf16.msra.mxu0 0
  %2587 = vmatprep.subr.bf16.mxu0 0
  %2588 = vmatpush1.bf16.msra.mxu0 0
  %2589 = vmatprep.subr.bf16.mxu0 0
  %2590 = vmatpush1.bf16.msra.mxu0 0
  %2591 = vmatprep.subr.bf16.mxu0 0
  %2592 = vmatpush1.bf16.msra.mxu0 0
  %2593 = vmatprep.mubr.bf16.mxu0 0
  %2594 = vmatmul.mubr.bf16.gmra.mrb[0].mxu0 %v172
  %v2595 = vpop.f32.mrb[0].mxu0
  %v2596 = vadd.f32 %v2443, %v2595
  %v2597 = vpop.f32.mrb[0].mxu0
  %v2598 = vadd.f32 %v2445, %v2597
  %v2599 = vpop.f32.mrb[0].mxu0
  %v2600 = vadd.f32 %v2447, %v2599
  %v2601 = vpop.f32.mrb[0].mxu0
  %v2602 = vadd.f32 %v2449, %v2601
  %2603 = vmatprep.mubr.bf16.mxu0 0
  %2604 = vmatmul.mubr.bf16.gmra.mrb[0].mxu0 %v175
  %v2605 = vpop.f32.mrb[0].mxu0
  %v2606 = vadd.f32 %v2453, %v2605
  %v2607 = vpop.f32.mrb[0].mxu0
  %v2608 = vadd.f32 %v2455, %v2607
  %v2609 = vpop.f32.mrb[0].mxu0
  %v2610 = vadd.f32 %v2457, %v2609
  %v2611 = vpop.f32.mrb[0].mxu0
  %v2612 = vadd.f32 %v2459, %v2611
  %2613 = vmatprep.mubr.bf16.mxu0 0
  %2614 = vmatmul.mubr.bf16.gmra.mrb[0].mxu0 %v178
  %v2615 = vpop.f32.mrb[0].mxu0
  %v2616 = vadd.f32 %v2463, %v2615
  %v2617 = vpop.f32.mrb[0].mxu0
  %v2618 = vadd.f32 %v2465, %v2617
  %v2619 = vpop.f32.mrb[0].mxu0
  %v2620 = vadd.f32 %v2467, %v2619
  %v2621 = vpop.f32.mrb[0].mxu0
  %v2622 = vadd.f32 %v2469, %v2621
  %2623 = vmatprep.mubr.bf16.mxu0 0
  %2624 = vmatmul.mubr.bf16.gmra.mrb[0].mxu0 %v181
  %v2625 = vpop.f32.mrb[0].mxu0
  %v2626 = vadd.f32 %v2473, %v2625
  %v2627 = vpop.f32.mrb[0].mxu0
  %v2628 = vadd.f32 %v2475, %v2627
  %v2629 = vpop.f32.mrb[0].mxu0
  %v2630 = vadd.f32 %v2477, %v2629
  %v2631 = vpop.f32.mrb[0].mxu0
  %v2632 = vadd.f32 %v2479, %v2631
  %2633 = vmatprep.mubr.bf16.mxu0 0
  %2634 = vmatmul.mubr.bf16.gmra.mrb[0].mxu0 %v184
  %v2635 = vpop.f32.mrb[0].mxu0
  %v2636 = vadd.f32 %v2483, %v2635
  %v2637 = vpop.f32.mrb[0].mxu0
  %v2638 = vadd.f32 %v2485, %v2637
  %v2639 = vpop.f32.mrb[0].mxu0
  %v2640 = vadd.f32 %v2487, %v2639
  %v2641 = vpop.f32.mrb[0].mxu0
  %v2642 = vadd.f32 %v2489, %v2641
  %2643 = vmatprep.mubr.bf16.mxu0 0
  %2644 = vmatmul.mubr.bf16.gmra.mrb[0].mxu0 %v187
  %v2645 = vpop.f32.mrb[0].mxu0
  %v2646 = vadd.f32 %v2493, %v2645
  %v2647 = vpop.f32.mrb[0].mxu0
  %v2648 = vadd.f32 %v2495, %v2647
  %v2649 = vpop.f32.mrb[0].mxu0
  %v2650 = vadd.f32 %v2497, %v2649
  %v2651 = vpop.f32.mrb[0].mxu0
  %v2652 = vadd.f32 %v2499, %v2651
  %2653 = vmatprep.mubr.bf16.mxu0 0
  %2654 = vmatmul.mubr.bf16.gmra.mrb[0].mxu0 %v190
  %v2655 = vpop.f32.mrb[0].mxu0
  %v2656 = vadd.f32 %v2503, %v2655
  %v2657 = vpop.f32.mrb[0].mxu0
  %v2658 = vadd.f32 %v2505, %v2657
  %v2659 = vpop.f32.mrb[0].mxu0
  %v2660 = vadd.f32 %v2507, %v2659
  %v2661 = vpop.f32.mrb[0].mxu0
  %v2662 = vadd.f32 %v2509, %v2661
  %2663 = vmatprep.mubr.bf16.mxu0 0
  %2664 = vmatmul.mubr.bf16.gmra.mrb[0].mxu0 %v193
  %v2665 = vpop.f32.mrb[0].mxu0
  %v2666 = vadd.f32 %v2513, %v2665
  %v2667 = vpop.f32.mrb[0].mxu0
  %v2668 = vadd.f32 %v2515, %v2667
  %v2669 = vpop.f32.mrb[0].mxu0
  %v2670 = vadd.f32 %v2517, %v2669
  %v2671 = vpop.f32.mrb[0].mxu0
  %v2672 = vadd.f32 %v2519, %v2671
  %2673 = vmatprep.mubr.bf16.mxu0 0
  %2674 = vmatmul.mubr.bf16.gmra.mrb[0].mxu0 %v196
  %v2675 = vpop.f32.mrb[0].mxu0
  %v2676 = vadd.f32 %v2523, %v2675
  %v2677 = vpop.f32.mrb[0].mxu0
  %v2678 = vadd.f32 %v2525, %v2677
  %v2679 = vpop.f32.mrb[0].mxu0
  %v2680 = vadd.f32 %v2527, %v2679
  %v2681 = vpop.f32.mrb[0].mxu0
  %v2682 = vadd.f32 %v2529, %v2681
  %2683 = vmatprep.mubr.bf16.mxu0 0
  %2684 = vmatmul.mubr.bf16.gmra.mrb[0].mxu0 %v199
  %v2685 = vpop.f32.mrb[0].mxu0
  %v2686 = vadd.f32 %v2533, %v2685
  %v2687 = vpop.f32.mrb[0].mxu0
  %v2688 = vadd.f32 %v2535, %v2687
  %v2689 = vpop.f32.mrb[0].mxu0
  %v2690 = vadd.f32 %v2537, %v2689
  %v2691 = vpop.f32.mrb[0].mxu0
  %v2692 = vadd.f32 %v2539, %v2691
  %2693 = vmatprep.mubr.bf16.mxu0 0
  %2694 = vmatmul.mubr.bf16.gmra.mrb[0].mxu0 %v202
  %v2695 = vpop.f32.mrb[0].mxu0
  %v2696 = vadd.f32 %v2543, %v2695
  %v2697 = vpop.f32.mrb[0].mxu0
  %v2698 = vadd.f32 %v2545, %v2697
  %v2699 = vpop.f32.mrb[0].mxu0
  %v2700 = vadd.f32 %v2547, %v2699
  %v2701 = vpop.f32.mrb[0].mxu0
  %v2702 = vadd.f32 %v2549, %v2701
  %2703 = vmatprep.mubr.bf16.mxu0 0
  %2704 = vmatmul.mubr.bf16.gmra.mrb[0].mxu0 %v205
  %v2705 = vpop.f32.mrb[0].mxu0
  %v2706 = vadd.f32 %v2553, %v2705
  %v2707 = vpop.f32.mrb[0].mxu0
  %v2708 = vadd.f32 %v2555, %v2707
  %v2709 = vpop.f32.mrb[0].mxu0
  %v2710 = vadd.f32 %v2557, %v2709
  %v2711 = vpop.f32.mrb[0].mxu0
  %v2712 = vadd.f32 %v2559, %v2711
  %2713 = vdwg.mxu0
  %2714 = vmatprep.subr.bf16.mxu0 %v663
  %2715 = vmatpush1.bf16.msra.mxu0 %v662
  %2716 = vmatprep.subr.bf16.mxu0 %v675
  %2717 = vmatpush1.bf16.msra.mxu0 %v672
  %2718 = vmatprep.subr.bf16.mxu0 0
  %2719 = vmatpush1.bf16.msra.mxu0 0
  %2720 = vmatprep.subr.bf16.mxu0 0
  %2721 = vmatpush1.bf16.msra.mxu0 0
  %2722 = vmatprep.subr.bf16.mxu0 0
  %2723 = vmatpush1.bf16.msra.mxu0 0
  %2724 = vmatprep.subr.bf16.mxu0 0
  %2725 = vmatpush1.bf16.msra.mxu0 0
  %2726 = vmatprep.subr.bf16.mxu0 0
  %2727 = vmatpush1.bf16.msra.mxu0 0
  %2728 = vmatprep.subr.bf16.mxu0 0
  %2729 = vmatpush1.bf16.msra.mxu0 0
  %2730 = vmatprep.subr.bf16.mxu0 0
  %2731 = vmatpush1.bf16.msra.mxu0 0
  %2732 = vmatprep.subr.bf16.mxu0 0
  %2733 = vmatpush1.bf16.msra.mxu0 0
  %2734 = vmatprep.subr.bf16.mxu0 0
  %2735 = vmatpush1.bf16.msra.mxu0 0
  %2736 = vmatprep.subr.bf16.mxu0 0
  %2737 = vmatpush1.bf16.msra.mxu0 0
  %2738 = vmatprep.subr.bf16.mxu0 0
  %2739 = vmatpush1.bf16.msra.mxu0 0
  %2740 = vmatprep.subr.bf16.mxu0 0
  %2741 = vmatpush1.bf16.msra.mxu0 0
  %2742 = vmatprep.subr.bf16.mxu0 0
  %2743 = vmatpush1.bf16.msra.mxu0 0
  %2744 = vmatprep.subr.bf16.mxu0 0
  %2745 = vmatpush1.bf16.msra.mxu0 0
  %2746 = vmatprep.mubr.bf16.mxu0 0
  %2747 = vmatmul.mubr.bf16.gmra.mrb[0].mxu0 %v175
  %v2748 = vpop.f32.mrb[0].mxu0
  %v2749 = vadd.f32 0.0, %v2748
  %v2750 = vpop.f32.mrb[0].mxu0
  %v2751 = vadd.f32 0.0, %v2750
  %v2752 = vpop.f32.mrb[0].mxu0
  %v2753 = vadd.f32 0.0, %v2752
  %v2754 = vpop.f32.mrb[0].mxu0
  %v2755 = vadd.f32 0.0, %v2754
  %2756 = vmatprep.mubr.bf16.mxu0 0
  %2757 = vmatmul.mubr.bf16.gmra.mrb[0].mxu0 %v178
  %v2758 = vpop.f32.mrb[0].mxu0
  %v2759 = vadd.f32 0.0, %v2758
  %v2760 = vpop.f32.mrb[0].mxu0
  %v2761 = vadd.f32 0.0, %v2760
  %v2762 = vpop.f32.mrb[0].mxu0
  %v2763 = vadd.f32 0.0, %v2762
  %v2764 = vpop.f32.mrb[0].mxu0
  %v2765 = vadd.f32 0.0, %v2764
  %2766 = vmatprep.mubr.bf16.mxu0 0
  %2767 = vmatmul.mubr.bf16.gmra.mrb[0].mxu0 %v181
  %v2768 = vpop.f32.mrb[0].mxu0
  %v2769 = vadd.f32 0.0, %v2768
  %v2770 = vpop.f32.mrb[0].mxu0
  %v2771 = vadd.f32 0.0, %v2770
  %v2772 = vpop.f32.mrb[0].mxu0
  %v2773 = vadd.f32 0.0, %v2772
  %v2774 = vpop.f32.mrb[0].mxu0
  %v2775 = vadd.f32 0.0, %v2774
  %2776 = vmatprep.mubr.bf16.mxu0 0
  %2777 = vmatmul.mubr.bf16.gmra.mrb[0].mxu0 %v184
  %v2778 = vpop.f32.mrb[0].mxu0
  %v2779 = vadd.f32 0.0, %v2778
  %v2780 = vpop.f32.mrb[0].mxu0
  %v2781 = vadd.f32 0.0, %v2780
  %v2782 = vpop.f32.mrb[0].mxu0
  %v2783 = vadd.f32 0.0, %v2782
  %v2784 = vpop.f32.mrb[0].mxu0
  %v2785 = vadd.f32 0.0, %v2784
  %2786 = vmatprep.mubr.bf16.mxu0 0
  %2787 = vmatmul.mubr.bf16.gmra.mrb[0].mxu0 %v187
  %v2788 = vpop.f32.mrb[0].mxu0
  %v2789 = vadd.f32 0.0, %v2788
  %v2790 = vpop.f32.mrb[0].mxu0
  %v2791 = vadd.f32 0.0, %v2790
  %v2792 = vpop.f32.mrb[0].mxu0
  %v2793 = vadd.f32 0.0, %v2792
  %v2794 = vpop.f32.mrb[0].mxu0
  %v2795 = vadd.f32 0.0, %v2794
  %2796 = vmatprep.mubr.bf16.mxu0 0
  %2797 = vmatmul.mubr.bf16.gmra.mrb[0].mxu0 %v190
  %v2798 = vpop.f32.mrb[0].mxu0
  %v2799 = vadd.f32 0.0, %v2798
  %v2800 = vpop.f32.mrb[0].mxu0
  %v2801 = vadd.f32 0.0, %v2800
  %v2802 = vpop.f32.mrb[0].mxu0
  %v2803 = vadd.f32 0.0, %v2802
  %v2804 = vpop.f32.mrb[0].mxu0
  %v2805 = vadd.f32 0.0, %v2804
  %2806 = vmatprep.mubr.bf16.mxu0 0
  %2807 = vmatmul.mubr.bf16.gmra.mrb[0].mxu0 %v193
  %v2808 = vpop.f32.mrb[0].mxu0
  %v2809 = vadd.f32 0.0, %v2808
  %v2810 = vpop.f32.mrb[0].mxu0
  %v2811 = vadd.f32 0.0, %v2810
  %v2812 = vpop.f32.mrb[0].mxu0
  %v2813 = vadd.f32 0.0, %v2812
  %v2814 = vpop.f32.mrb[0].mxu0
  %v2815 = vadd.f32 0.0, %v2814
  %2816 = vmatprep.mubr.bf16.mxu0 0
  %2817 = vmatmul.mubr.bf16.gmra.mrb[0].mxu0 %v196
  %v2818 = vpop.f32.mrb[0].mxu0
  %v2819 = vadd.f32 0.0, %v2818
  %v2820 = vpop.f32.mrb[0].mxu0
  %v2821 = vadd.f32 0.0, %v2820
  %v2822 = vpop.f32.mrb[0].mxu0
  %v2823 = vadd.f32 0.0, %v2822
  %v2824 = vpop.f32.mrb[0].mxu0
  %v2825 = vadd.f32 0.0, %v2824
  %2826 = vmatprep.mubr.bf16.mxu0 0
  %2827 = vmatmul.mubr.bf16.gmra.mrb[0].mxu0 %v199
  %v2828 = vpop.f32.mrb[0].mxu0
  %v2829 = vadd.f32 0.0, %v2828
  %v2830 = vpop.f32.mrb[0].mxu0
  %v2831 = vadd.f32 0.0, %v2830
  %v2832 = vpop.f32.mrb[0].mxu0
  %v2833 = vadd.f32 0.0, %v2832
  %v2834 = vpop.f32.mrb[0].mxu0
  %v2835 = vadd.f32 0.0, %v2834
  %2836 = vmatprep.mubr.bf16.mxu0 0
  %2837 = vmatmul.mubr.bf16.gmra.mrb[0].mxu0 %v202
  %v2838 = vpop.f32.mrb[0].mxu0
  %v2839 = vadd.f32 0.0, %v2838
  %v2840 = vpop.f32.mrb[0].mxu0
  %v2841 = vadd.f32 0.0, %v2840
  %v2842 = vpop.f32.mrb[0].mxu0
  %v2843 = vadd.f32 0.0, %v2842
  %v2844 = vpop.f32.mrb[0].mxu0
  %v2845 = vadd.f32 0.0, %v2844
  %2846 = vmatprep.mubr.bf16.mxu0 0
  %2847 = vmatmul.mubr.bf16.gmra.mrb[0].mxu0 %v205
  %v2848 = vpop.f32.mrb[0].mxu0
  %v2849 = vadd.f32 0.0, %v2848
  %v2850 = vpop.f32.mrb[0].mxu0
  %v2851 = vadd.f32 0.0, %v2850
  %v2852 = vpop.f32.mrb[0].mxu0
  %v2853 = vadd.f32 0.0, %v2852
  %v2854 = vpop.f32.mrb[0].mxu0
  %v2855 = vadd.f32 0.0, %v2854
  %2856 = vmatprep.mubr.bf16.mxu0 0
  %2857 = vmatmul.mubr.bf16.gmra.mrb[0].mxu0 %v907
  %v2858 = vpop.f32.mrb[0].mxu0
  %v2859 = vadd.f32 0.0, %v2858
  %v2860 = vpop.f32.mrb[0].mxu0
  %v2861 = vadd.f32 0.0, %v2860
  %v2862 = vpop.f32.mrb[0].mxu0
  %v2863 = vadd.f32 0.0, %v2862
  %v2864 = vpop.f32.mrb[0].mxu0
  %v2865 = vadd.f32 0.0, %v2864
  %2866 = vdwg.mxu0
  %v2867 = vadd.f32 %v2596, %v2749
  %v2868 = vadd.f32 %v2598, %v2751
  %v2869 = vadd.f32 %v2600, %v2753
  %v2870 = vadd.f32 %v2602, %v2755
  %v2871 = vadd.f32 %v2606, %v2759
  %v2872 = vadd.f32 %v2608, %v2761
  %v2873 = vadd.f32 %v2610, %v2763
  %v2874 = vadd.f32 %v2612, %v2765
  %v2875 = vadd.f32 %v2616, %v2769
  %v2876 = vadd.f32 %v2618, %v2771
  %v2877 = vadd.f32 %v2620, %v2773
  %v2878 = vadd.f32 %v2622, %v2775
  %v2879 = vadd.f32 %v2626, %v2779
  %v2880 = vadd.f32 %v2628, %v2781
  %v2881 = vadd.f32 %v2630, %v2783
  %v2882 = vadd.f32 %v2632, %v2785
  %v2883 = vadd.f32 %v2636, %v2789
  %v2884 = vadd.f32 %v2638, %v2791
  %v2885 = vadd.f32 %v2640, %v2793
  %v2886 = vadd.f32 %v2642, %v2795
  %v2887 = vadd.f32 %v2646, %v2799
  %v2888 = vadd.f32 %v2648, %v2801
  %v2889 = vadd.f32 %v2650, %v2803
  %v2890 = vadd.f32 %v2652, %v2805
  %v2891 = vadd.f32 %v2656, %v2809
  %v2892 = vadd.f32 %v2658, %v2811
  %v2893 = vadd.f32 %v2660, %v2813
  %v2894 = vadd.f32 %v2662, %v2815
  %v2895 = vadd.f32 %v2666, %v2819
  %v2896 = vadd.f32 %v2668, %v2821
  %v2897 = vadd.f32 %v2670, %v2823
  %v2898 = vadd.f32 %v2672, %v2825
  %v2899 = vadd.f32 %v2676, %v2829
  %v2900 = vadd.f32 %v2678, %v2831
  %v2901 = vadd.f32 %v2680, %v2833
  %v2902 = vadd.f32 %v2682, %v2835
  %v2903 = vadd.f32 %v2686, %v2839
  %v2904 = vadd.f32 %v2688, %v2841
  %v2905 = vadd.f32 %v2690, %v2843
  %v2906 = vadd.f32 %v2692, %v2845
  %v2907 = vadd.f32 %v2696, %v2849
  %v2908 = vadd.f32 %v2698, %v2851
  %v2909 = vadd.f32 %v2700, %v2853
  %v2910 = vadd.f32 %v2702, %v2855
  %v2911 = vadd.f32 %v2706, %v2859
  %v2912 = vadd.f32 %v2708, %v2861
  %v2913 = vadd.f32 %v2710, %v2863
  %v2914 = vadd.f32 %v2712, %v2865
  %2915 = vmatprep.subr.bf16.mxu0 %v901
  %2916 = vmatpush1.bf16.msra.mxu0 %v900
  %2917 = vmatprep.subr.bf16.mxu0 %v913
  %2918 = vmatpush1.bf16.msra.mxu0 %v910
  %2919 = vmatprep.subr.bf16.mxu0 0
  %2920 = vmatpush1.bf16.msra.mxu0 0
  %2921 = vmatprep.subr.bf16.mxu0 0
  %2922 = vmatpush1.bf16.msra.mxu0 0
  %2923 = vmatprep.subr.bf16.mxu0 0
  %2924 = vmatpush1.bf16.msra.mxu0 0
  %2925 = vmatprep.subr.bf16.mxu0 0
  %2926 = vmatpush1.bf16.msra.mxu0 0
  %2927 = vmatprep.subr.bf16.mxu0 0
  %2928 = vmatpush1.bf16.msra.mxu0 0
  %2929 = vmatprep.subr.bf16.mxu0 0
  %2930 = vmatpush1.bf16.msra.mxu0 0
  %2931 = vmatprep.subr.bf16.mxu0 0
  %2932 = vmatpush1.bf16.msra.mxu0 0
  %2933 = vmatprep.subr.bf16.mxu0 0
  %2934 = vmatpush1.bf16.msra.mxu0 0
  %2935 = vmatprep.subr.bf16.mxu0 0
  %2936 = vmatpush1.bf16.msra.mxu0 0
  %2937 = vmatprep.subr.bf16.mxu0 0
  %2938 = vmatpush1.bf16.msra.mxu0 0
  %2939 = vmatprep.subr.bf16.mxu0 0
  %2940 = vmatpush1.bf16.msra.mxu0 0
  %2941 = vmatprep.subr.bf16.mxu0 0
  %2942 = vmatpush1.bf16.msra.mxu0 0
  %2943 = vmatprep.subr.bf16.mxu0 0
  %2944 = vmatpush1.bf16.msra.mxu0 0
  %2945 = vmatprep.subr.bf16.mxu0 0
  %2946 = vmatpush1.bf16.msra.mxu0 0
  %2947 = vmatprep.mubr.bf16.mxu0 0
  %2948 = vmatmul.mubr.bf16.gmra.mrb[0].mxu0 %v452
  %v2949 = vpop.f32.mrb[0].mxu0
  %v2950 = vadd.f32 0.0, %v2949
  %v2951 = vpop.f32.mrb[0].mxu0
  %v2952 = vadd.f32 0.0, %v2951
  %v2953 = vpop.f32.mrb[0].mxu0
  %v2954 = vadd.f32 0.0, %v2953
  %v2955 = vpop.f32.mrb[0].mxu0
  %v2956 = vadd.f32 0.0, %v2955
  %2957 = vmatprep.mubr.bf16.mxu0 0
  %2958 = vmatmul.mubr.bf16.gmra.mrb[0].mxu0 %v455
  %v2959 = vpop.f32.mrb[0].mxu0
  %v2960 = vadd.f32 0.0, %v2959
  %v2961 = vpop.f32.mrb[0].mxu0
  %v2962 = vadd.f32 0.0, %v2961
  %v2963 = vpop.f32.mrb[0].mxu0
  %v2964 = vadd.f32 0.0, %v2963
  %v2965 = vpop.f32.mrb[0].mxu0
  %v2966 = vadd.f32 0.0, %v2965
  %2967 = vmatprep.mubr.bf16.mxu0 0
  %2968 = vmatmul.mubr.bf16.gmra.mrb[0].mxu0 %v458
  %v2969 = vpop.f32.mrb[0].mxu0
  %v2970 = vadd.f32 0.0, %v2969
  %v2971 = vpop.f32.mrb[0].mxu0
  %v2972 = vadd.f32 0.0, %v2971
  %v2973 = vpop.f32.mrb[0].mxu0
  %v2974 = vadd.f32 0.0, %v2973
  %v2975 = vpop.f32.mrb[0].mxu0
  %v2976 = vadd.f32 0.0, %v2975
  %2977 = vmatprep.mubr.bf16.mxu0 0
  %2978 = vmatmul.mubr.bf16.gmra.mrb[0].mxu0 %v461
  %v2979 = vpop.f32.mrb[0].mxu0
  %v2980 = vadd.f32 0.0, %v2979
  %v2981 = vpop.f32.mrb[0].mxu0
  %v2982 = vadd.f32 0.0, %v2981
  %v2983 = vpop.f32.mrb[0].mxu0
  %v2984 = vadd.f32 0.0, %v2983
  %v2985 = vpop.f32.mrb[0].mxu0
  %v2986 = vadd.f32 0.0, %v2985
  %2987 = vmatprep.mubr.bf16.mxu0 0
  %2988 = vmatmul.mubr.bf16.gmra.mrb[0].mxu0 %v464
  %v2989 = vpop.f32.mrb[0].mxu0
  %v2990 = vadd.f32 0.0, %v2989
  %v2991 = vpop.f32.mrb[0].mxu0
  %v2992 = vadd.f32 0.0, %v2991
  %v2993 = vpop.f32.mrb[0].mxu0
  %v2994 = vadd.f32 0.0, %v2993
  %v2995 = vpop.f32.mrb[0].mxu0
  %v2996 = vadd.f32 0.0, %v2995
  %2997 = vmatprep.mubr.bf16.mxu0 0
  %2998 = vmatmul.mubr.bf16.gmra.mrb[0].mxu0 %v467
  %v2999 = vpop.f32.mrb[0].mxu0
  %v3000 = vadd.f32 0.0, %v2999
  %v3001 = vpop.f32.mrb[0].mxu0
  %v3002 = vadd.f32 0.0, %v3001
  %v3003 = vpop.f32.mrb[0].mxu0
  %v3004 = vadd.f32 0.0, %v3003
  %v3005 = vpop.f32.mrb[0].mxu0
  %v3006 = vadd.f32 0.0, %v3005
  %3007 = vmatprep.mubr.bf16.mxu0 0
  %3008 = vmatmul.mubr.bf16.gmra.mrb[0].mxu0 %v470
  %v3009 = vpop.f32.mrb[0].mxu0
  %v3010 = vadd.f32 0.0, %v3009
  %v3011 = vpop.f32.mrb[0].mxu0
  %v3012 = vadd.f32 0.0, %v3011
  %v3013 = vpop.f32.mrb[0].mxu0
  %v3014 = vadd.f32 0.0, %v3013
  %v3015 = vpop.f32.mrb[0].mxu0
  %v3016 = vadd.f32 0.0, %v3015
  %3017 = vmatprep.mubr.bf16.mxu0 0
  %3018 = vmatmul.mubr.bf16.gmra.mrb[0].mxu0 %v473
  %v3019 = vpop.f32.mrb[0].mxu0
  %v3020 = vadd.f32 0.0, %v3019
  %v3021 = vpop.f32.mrb[0].mxu0
  %v3022 = vadd.f32 0.0, %v3021
  %v3023 = vpop.f32.mrb[0].mxu0
  %v3024 = vadd.f32 0.0, %v3023
  %v3025 = vpop.f32.mrb[0].mxu0
  %v3026 = vadd.f32 0.0, %v3025
  %3027 = vmatprep.mubr.bf16.mxu0 0
  %3028 = vmatmul.mubr.bf16.gmra.mrb[0].mxu0 %v476
  %v3029 = vpop.f32.mrb[0].mxu0
  %v3030 = vadd.f32 0.0, %v3029
  %v3031 = vpop.f32.mrb[0].mxu0
  %v3032 = vadd.f32 0.0, %v3031
  %v3033 = vpop.f32.mrb[0].mxu0
  %v3034 = vadd.f32 0.0, %v3033
  %v3035 = vpop.f32.mrb[0].mxu0
  %v3036 = vadd.f32 0.0, %v3035
  %3037 = vmatprep.mubr.bf16.mxu0 0
  %3038 = vmatmul.mubr.bf16.gmra.mrb[0].mxu0 %v479
  %v3039 = vpop.f32.mrb[0].mxu0
  %v3040 = vadd.f32 0.0, %v3039
  %v3041 = vpop.f32.mrb[0].mxu0
  %v3042 = vadd.f32 0.0, %v3041
  %v3043 = vpop.f32.mrb[0].mxu0
  %v3044 = vadd.f32 0.0, %v3043
  %v3045 = vpop.f32.mrb[0].mxu0
  %v3046 = vadd.f32 0.0, %v3045
  %3047 = vmatprep.mubr.bf16.mxu0 0
  %3048 = vmatmul.mubr.bf16.gmra.mrb[0].mxu0 %v669
  %v3049 = vpop.f32.mrb[0].mxu0
  %v3050 = vadd.f32 0.0, %v3049
  %v3051 = vpop.f32.mrb[0].mxu0
  %v3052 = vadd.f32 0.0, %v3051
  %v3053 = vpop.f32.mrb[0].mxu0
  %v3054 = vadd.f32 0.0, %v3053
  %v3055 = vpop.f32.mrb[0].mxu0
  %v3056 = vadd.f32 0.0, %v3055
  %3057 = vmatprep.mubr.bf16.mxu0 0
  %3058 = vmatmul.mubr.bf16.gmra.mrb[0].mxu0 %v1145
  %v3059 = vpop.f32.mrb[0].mxu0
  %v3060 = vadd.f32 0.0, %v3059
  %v3061 = vpop.f32.mrb[0].mxu0
  %v3062 = vadd.f32 0.0, %v3061
  %v3063 = vpop.f32.mrb[0].mxu0
  %v3064 = vadd.f32 0.0, %v3063
  %v3065 = vpop.f32.mrb[0].mxu0
  %v3066 = vadd.f32 0.0, %v3065
  %3067 = vdwg.mxu0
  %v3068 = vadd.f32 %v2867, %v2950
  %v3069 = vadd.f32 %v2868, %v2952
  %v3070 = vadd.f32 %v2869, %v2954
  %v3071 = vadd.f32 %v2870, %v2956
  %v3072 = vadd.f32 %v2871, %v2960
  %v3073 = vadd.f32 %v2872, %v2962
  %v3074 = vadd.f32 %v2873, %v2964
  %v3075 = vadd.f32 %v2874, %v2966
  %v3076 = vadd.f32 %v2875, %v2970
  %v3077 = vadd.f32 %v2876, %v2972
  %v3078 = vadd.f32 %v2877, %v2974
  %v3079 = vadd.f32 %v2878, %v2976
  %v3080 = vadd.f32 %v2879, %v2980
  %v3081 = vadd.f32 %v2880, %v2982
  %v3082 = vadd.f32 %v2881, %v2984
  %v3083 = vadd.f32 %v2882, %v2986
  %v3084 = vadd.f32 %v2883, %v2990
  %v3085 = vadd.f32 %v2884, %v2992
  %v3086 = vadd.f32 %v2885, %v2994
  %v3087 = vadd.f32 %v2886, %v2996
  %v3088 = vadd.f32 %v2887, %v3000
  %v3089 = vadd.f32 %v2888, %v3002
  %v3090 = vadd.f32 %v2889, %v3004
  %v3091 = vadd.f32 %v2890, %v3006
  %v3092 = vadd.f32 %v2891, %v3010
  %v3093 = vadd.f32 %v2892, %v3012
  %v3094 = vadd.f32 %v2893, %v3014
  %v3095 = vadd.f32 %v2894, %v3016
  %v3096 = vadd.f32 %v2895, %v3020
  %v3097 = vadd.f32 %v2896, %v3022
  %v3098 = vadd.f32 %v2897, %v3024
  %v3099 = vadd.f32 %v2898, %v3026
  %v3100 = vadd.f32 %v2899, %v3030
  %v3101 = vadd.f32 %v2900, %v3032
  %v3102 = vadd.f32 %v2901, %v3034
  %v3103 = vadd.f32 %v2902, %v3036
  %v3104 = vadd.f32 %v2903, %v3040
  %v3105 = vadd.f32 %v2904, %v3042
  %v3106 = vadd.f32 %v2905, %v3044
  %v3107 = vadd.f32 %v2906, %v3046
  %v3108 = vadd.f32 %v2907, %v3050
  %v3109 = vadd.f32 %v2908, %v3052
  %v3110 = vadd.f32 %v2909, %v3054
  %v3111 = vadd.f32 %v2910, %v3056
  %v3112 = vadd.f32 %v2911, %v3060
  %v3113 = vadd.f32 %v2912, %v3062
  %v3114 = vadd.f32 %v2913, %v3064
  %v3115 = vadd.f32 %v2914, %v3066
  %v3118 = vunpack.c.l.b16 %v81
  %v3119 = vunpack.c.l.b16 %v82
  %v3120 = vpack.c.b16 %v3119, %v3118
  %v3122 = vsel %vm170, %v3120, 0
  %3124 = vmatprep.subr.bf16.mxu0 %v1139
  %3125 = vmatpush1.bf16.msra.mxu0 %v1138
  %3126 = vmatprep.subr.bf16.mxu0 %v1151
  %3127 = vmatpush1.bf16.msra.mxu0 %v1148
  %3128 = vmatprep.subr.bf16.mxu0 0
  %3129 = vmatpush1.bf16.msra.mxu0 0
  %3130 = vmatprep.subr.bf16.mxu0 0
  %3131 = vmatpush1.bf16.msra.mxu0 0
  %3132 = vmatprep.subr.bf16.mxu0 0
  %3133 = vmatpush1.bf16.msra.mxu0 0
  %3134 = vmatprep.subr.bf16.mxu0 0
  %3135 = vmatpush1.bf16.msra.mxu0 0
  %3136 = vmatprep.subr.bf16.mxu0 0
  %3137 = vmatpush1.bf16.msra.mxu0 0
  %3138 = vmatprep.subr.bf16.mxu0 0
  %3139 = vmatpush1.bf16.msra.mxu0 0
  %3140 = vmatprep.subr.bf16.mxu0 0
  %3141 = vmatpush1.bf16.msra.mxu0 0
  %3142 = vmatprep.subr.bf16.mxu0 0
  %3143 = vmatpush1.bf16.msra.mxu0 0
  %3144 = vmatprep.subr.bf16.mxu0 0
  %3145 = vmatpush1.bf16.msra.mxu0 0
  %3146 = vmatprep.subr.bf16.mxu0 0
  %3147 = vmatpush1.bf16.msra.mxu0 0
  %3148 = vmatprep.subr.bf16.mxu0 0
  %3149 = vmatpush1.bf16.msra.mxu0 0
  %3150 = vmatprep.subr.bf16.mxu0 0
  %3151 = vmatpush1.bf16.msra.mxu0 0
  %3152 = vmatprep.subr.bf16.mxu0 0
  %3153 = vmatpush1.bf16.msra.mxu0 0
  %3154 = vmatprep.subr.bf16.mxu0 0
  %3155 = vmatpush1.bf16.msra.mxu0 0
  %3156 = vmatprep.mubr.bf16.mxu0 0
  %3157 = vmatmul.mubr.bf16.gmra.mrb[0].mxu0 %v178
  %v3158 = vpop.f32.mrb[0].mxu0
  %v3159 = vadd.f32 0.0, %v3158
  %v3160 = vpop.f32.mrb[0].mxu0
  %v3161 = vadd.f32 0.0, %v3160
  %v3162 = vpop.f32.mrb[0].mxu0
  %v3163 = vadd.f32 0.0, %v3162
  %v3164 = vpop.f32.mrb[0].mxu0
  %v3165 = vadd.f32 0.0, %v3164
  %3166 = vmatprep.mubr.bf16.mxu0 0
  %3167 = vmatmul.mubr.bf16.gmra.mrb[0].mxu0 %v181
  %v3168 = vpop.f32.mrb[0].mxu0
  %v3169 = vadd.f32 0.0, %v3168
  %v3170 = vpop.f32.mrb[0].mxu0
  %v3171 = vadd.f32 0.0, %v3170
  %v3172 = vpop.f32.mrb[0].mxu0
  %v3173 = vadd.f32 0.0, %v3172
  %v3174 = vpop.f32.mrb[0].mxu0
  %v3175 = vadd.f32 0.0, %v3174
  %3176 = vmatprep.mubr.bf16.mxu0 0
  %3177 = vmatmul.mubr.bf16.gmra.mrb[0].mxu0 %v184
  %v3178 = vpop.f32.mrb[0].mxu0
  %v3179 = vadd.f32 0.0, %v3178
  %v3180 = vpop.f32.mrb[0].mxu0
  %v3181 = vadd.f32 0.0, %v3180
  %v3182 = vpop.f32.mrb[0].mxu0
  %v3183 = vadd.f32 0.0, %v3182
  %v3184 = vpop.f32.mrb[0].mxu0
  %v3185 = vadd.f32 0.0, %v3184
  %3186 = vmatprep.mubr.bf16.mxu0 0
  %3187 = vmatmul.mubr.bf16.gmra.mrb[0].mxu0 %v187
  %v3188 = vpop.f32.mrb[0].mxu0
  %v3189 = vadd.f32 0.0, %v3188
  %v3190 = vpop.f32.mrb[0].mxu0
  %v3191 = vadd.f32 0.0, %v3190
  %v3192 = vpop.f32.mrb[0].mxu0
  %v3193 = vadd.f32 0.0, %v3192
  %v3194 = vpop.f32.mrb[0].mxu0
  %v3195 = vadd.f32 0.0, %v3194
  %3196 = vmatprep.mubr.bf16.mxu0 0
  %3197 = vmatmul.mubr.bf16.gmra.mrb[0].mxu0 %v190
  %v3198 = vpop.f32.mrb[0].mxu0
  %v3199 = vadd.f32 0.0, %v3198
  %v3200 = vpop.f32.mrb[0].mxu0
  %v3201 = vadd.f32 0.0, %v3200
  %v3202 = vpop.f32.mrb[0].mxu0
  %v3203 = vadd.f32 0.0, %v3202
  %v3204 = vpop.f32.mrb[0].mxu0
  %v3205 = vadd.f32 0.0, %v3204
  %3206 = vmatprep.mubr.bf16.mxu0 0
  %3207 = vmatmul.mubr.bf16.gmra.mrb[0].mxu0 %v193
  %v3208 = vpop.f32.mrb[0].mxu0
  %v3209 = vadd.f32 0.0, %v3208
  %v3210 = vpop.f32.mrb[0].mxu0
  %v3211 = vadd.f32 0.0, %v3210
  %v3212 = vpop.f32.mrb[0].mxu0
  %v3213 = vadd.f32 0.0, %v3212
  %v3214 = vpop.f32.mrb[0].mxu0
  %v3215 = vadd.f32 0.0, %v3214
  %3216 = vmatprep.mubr.bf16.mxu0 0
  %3217 = vmatmul.mubr.bf16.gmra.mrb[0].mxu0 %v196
  %v3218 = vpop.f32.mrb[0].mxu0
  %v3219 = vadd.f32 0.0, %v3218
  %v3220 = vpop.f32.mrb[0].mxu0
  %v3221 = vadd.f32 0.0, %v3220
  %v3222 = vpop.f32.mrb[0].mxu0
  %v3223 = vadd.f32 0.0, %v3222
  %v3224 = vpop.f32.mrb[0].mxu0
  %v3225 = vadd.f32 0.0, %v3224
  %3226 = vmatprep.mubr.bf16.mxu0 0
  %3227 = vmatmul.mubr.bf16.gmra.mrb[0].mxu0 %v199
  %v3228 = vpop.f32.mrb[0].mxu0
  %v3229 = vadd.f32 0.0, %v3228
  %v3230 = vpop.f32.mrb[0].mxu0
  %v3231 = vadd.f32 0.0, %v3230
  %v3232 = vpop.f32.mrb[0].mxu0
  %v3233 = vadd.f32 0.0, %v3232
  %v3234 = vpop.f32.mrb[0].mxu0
  %v3235 = vadd.f32 0.0, %v3234
  %3236 = vmatprep.mubr.bf16.mxu0 0
  %3237 = vmatmul.mubr.bf16.gmra.mrb[0].mxu0 %v202
  %v3238 = vpop.f32.mrb[0].mxu0
  %v3239 = vadd.f32 0.0, %v3238
  %v3240 = vpop.f32.mrb[0].mxu0
  %v3241 = vadd.f32 0.0, %v3240
  %v3242 = vpop.f32.mrb[0].mxu0
  %v3243 = vadd.f32 0.0, %v3242
  %v3244 = vpop.f32.mrb[0].mxu0
  %v3245 = vadd.f32 0.0, %v3244
  %3246 = vmatprep.mubr.bf16.mxu0 0
  %3247 = vmatmul.mubr.bf16.gmra.mrb[0].mxu0 %v205
  %v3248 = vpop.f32.mrb[0].mxu0
  %v3249 = vadd.f32 0.0, %v3248
  %v3250 = vpop.f32.mrb[0].mxu0
  %v3251 = vadd.f32 0.0, %v3250
  %v3252 = vpop.f32.mrb[0].mxu0
  %v3253 = vadd.f32 0.0, %v3252
  %v3254 = vpop.f32.mrb[0].mxu0
  %v3255 = vadd.f32 0.0, %v3254
  %3256 = vmatprep.mubr.bf16.mxu0 0
  %3257 = vmatmul.mubr.bf16.gmra.mrb[0].mxu0 %v907
  %v3258 = vpop.f32.mrb[0].mxu0
  %v3259 = vadd.f32 0.0, %v3258
  %v3260 = vpop.f32.mrb[0].mxu0
  %v3261 = vadd.f32 0.0, %v3260
  %v3262 = vpop.f32.mrb[0].mxu0
  %v3263 = vadd.f32 0.0, %v3262
  %v3264 = vpop.f32.mrb[0].mxu0
  %v3265 = vadd.f32 0.0, %v3264
  %3266 = vmatprep.mubr.bf16.mxu0 0
  %3267 = vmatmul.mubr.bf16.gmra.mrb[0].mxu0 %v3122
  %v3268 = vpop.f32.mrb[0].mxu0
  %v3269 = vadd.f32 0.0, %v3268
  %v3270 = vpop.f32.mrb[0].mxu0
  %v3271 = vadd.f32 0.0, %v3270
  %v3272 = vpop.f32.mrb[0].mxu0
  %v3273 = vadd.f32 0.0, %v3272
  %v3274 = vpop.f32.mrb[0].mxu0
  %v3275 = vadd.f32 0.0, %v3274
  %3276 = vdwg.mxu0
  %v3277 = vadd.f32 %v3068, %v3159
  %v3278 = vadd.f32 %v3069, %v3161
  %v3279 = vadd.f32 %v3070, %v3163
  %v3280 = vadd.f32 %v3071, %v3165
  %v3281 = vadd.f32 %v3072, %v3169
  %v3282 = vadd.f32 %v3073, %v3171
  %v3283 = vadd.f32 %v3074, %v3173
  %v3284 = vadd.f32 %v3075, %v3175
  %v3285 = vadd.f32 %v3076, %v3179
  %v3286 = vadd.f32 %v3077, %v3181
  %v3287 = vadd.f32 %v3078, %v3183
  %v3288 = vadd.f32 %v3079, %v3185
  %v3289 = vadd.f32 %v3080, %v3189
  %v3290 = vadd.f32 %v3081, %v3191
  %v3291 = vadd.f32 %v3082, %v3193
  %v3292 = vadd.f32 %v3083, %v3195
  %v3293 = vadd.f32 %v3084, %v3199
  %v3294 = vadd.f32 %v3085, %v3201
  %v3295 = vadd.f32 %v3086, %v3203
  %v3296 = vadd.f32 %v3087, %v3205
  %v3297 = vadd.f32 %v3088, %v3209
  %v3298 = vadd.f32 %v3089, %v3211
  %v3299 = vadd.f32 %v3090, %v3213
  %v3300 = vadd.f32 %v3091, %v3215
  %v3301 = vadd.f32 %v3092, %v3219
  %v3302 = vadd.f32 %v3093, %v3221
  %v3303 = vadd.f32 %v3094, %v3223
  %v3304 = vadd.f32 %v3095, %v3225
  %v3305 = vadd.f32 %v3096, %v3229
  %v3306 = vadd.f32 %v3097, %v3231
  %v3307 = vadd.f32 %v3098, %v3233
  %v3308 = vadd.f32 %v3099, %v3235
  %v3309 = vadd.f32 %v3100, %v3239
  %v3310 = vadd.f32 %v3101, %v3241
  %v3311 = vadd.f32 %v3102, %v3243
  %v3312 = vadd.f32 %v3103, %v3245
  %v3313 = vadd.f32 %v3104, %v3249
  %v3314 = vadd.f32 %v3105, %v3251
  %v3315 = vadd.f32 %v3106, %v3253
  %v3316 = vadd.f32 %v3107, %v3255
  %v3317 = vadd.f32 %v3108, %v3259
  %v3318 = vadd.f32 %v3109, %v3261
  %v3319 = vadd.f32 %v3110, %v3263
  %v3320 = vadd.f32 %v3111, %v3265
  %v3321 = vadd.f32 %v3112, %v3269
  %v3322 = vadd.f32 %v3113, %v3271
  %v3323 = vadd.f32 %v3114, %v3273
  %v3324 = vadd.f32 %v3115, %v3275
  %3325 = vmatprep.subr.bf16.mxu0 %v1377
  %3326 = vmatpush1.bf16.msra.mxu0 %v1376
  %3327 = vmatprep.subr.bf16.mxu0 %v1386
  %3328 = vmatpush1.bf16.msra.mxu0 %v1383
  %3329 = vmatprep.subr.bf16.mxu0 0
  %3330 = vmatpush1.bf16.msra.mxu0 0
  %3331 = vmatprep.subr.bf16.mxu0 0
  %3332 = vmatpush1.bf16.msra.mxu0 0
  %3333 = vmatprep.subr.bf16.mxu0 0
  %3334 = vmatpush1.bf16.msra.mxu0 0
  %3335 = vmatprep.subr.bf16.mxu0 0
  %3336 = vmatpush1.bf16.msra.mxu0 0
  %3337 = vmatprep.subr.bf16.mxu0 0
  %3338 = vmatpush1.bf16.msra.mxu0 0
  %3339 = vmatprep.subr.bf16.mxu0 0
  %3340 = vmatpush1.bf16.msra.mxu0 0
  %3341 = vmatprep.subr.bf16.mxu0 0
  %3342 = vmatpush1.bf16.msra.mxu0 0
  %3343 = vmatprep.subr.bf16.mxu0 0
  %3344 = vmatpush1.bf16.msra.mxu0 0
  %3345 = vmatprep.subr.bf16.mxu0 0
  %3346 = vmatpush1.bf16.msra.mxu0 0
  %3347 = vmatprep.subr.bf16.mxu0 0
  %3348 = vmatpush1.bf16.msra.mxu0 0
  %3349 = vmatprep.subr.bf16.mxu0 0
  %3350 = vmatpush1.bf16.msra.mxu0 0
  %3351 = vmatprep.subr.bf16.mxu0 0
  %3352 = vmatpush1.bf16.msra.mxu0 0
  %3353 = vmatprep.subr.bf16.mxu0 0
  %3354 = vmatpush1.bf16.msra.mxu0 0
  %3355 = vmatprep.subr.bf16.mxu0 0
  %3356 = vmatpush1.bf16.msra.mxu0 0
  %3357 = vmatprep.mubr.bf16.mxu0 0
  %3358 = vmatmul.mubr.bf16.gmra.mrb[0].mxu0 %v449
  %v3359 = vpop.f32.mrb[0].mxu0
  %v3360 = vadd.f32 0.0, %v3359
  %v3361 = vpop.f32.mrb[0].mxu0
  %v3362 = vadd.f32 0.0, %v3361
  %v3363 = vpop.f32.mrb[0].mxu0
  %v3364 = vadd.f32 0.0, %v3363
  %v3365 = vpop.f32.mrb[0].mxu0
  %v3366 = vadd.f32 0.0, %v3365
  %3367 = vmatprep.mubr.bf16.mxu0 0
  %3368 = vmatmul.mubr.bf16.gmra.mrb[0].mxu0 %v452
  %v3369 = vpop.f32.mrb[0].mxu0
  %v3370 = vadd.f32 0.0, %v3369
  %v3371 = vpop.f32.mrb[0].mxu0
  %v3372 = vadd.f32 0.0, %v3371
  %v3373 = vpop.f32.mrb[0].mxu0
  %v3374 = vadd.f32 0.0, %v3373
  %v3375 = vpop.f32.mrb[0].mxu0
  %v3376 = vadd.f32 0.0, %v3375
  %3377 = vmatprep.mubr.bf16.mxu0 0
  %3378 = vmatmul.mubr.bf16.gmra.mrb[0].mxu0 %v455
  %v3379 = vpop.f32.mrb[0].mxu0
  %v3380 = vadd.f32 0.0, %v3379
  %v3381 = vpop.f32.mrb[0].mxu0
  %v3382 = vadd.f32 0.0, %v3381
  %v3383 = vpop.f32.mrb[0].mxu0
  %v3384 = vadd.f32 0.0, %v3383
  %v3385 = vpop.f32.mrb[0].mxu0
  %v3386 = vadd.f32 0.0, %v3385
  %3387 = vmatprep.mubr.bf16.mxu0 0
  %3388 = vmatmul.mubr.bf16.gmra.mrb[0].mxu0 %v458
  %v3389 = vpop.f32.mrb[0].mxu0
  %v3390 = vadd.f32 0.0, %v3389
  %v3391 = vpop.f32.mrb[0].mxu0
  %v3392 = vadd.f32 0.0, %v3391
  %v3393 = vpop.f32.mrb[0].mxu0
  %v3394 = vadd.f32 0.0, %v3393
  %v3395 = vpop.f32.mrb[0].mxu0
  %v3396 = vadd.f32 0.0, %v3395
  %3397 = vmatprep.mubr.bf16.mxu0 0
  %3398 = vmatmul.mubr.bf16.gmra.mrb[0].mxu0 %v461
  %v3399 = vpop.f32.mrb[0].mxu0
  %v3400 = vadd.f32 0.0, %v3399
  %v3401 = vpop.f32.mrb[0].mxu0
  %v3402 = vadd.f32 0.0, %v3401
  %v3403 = vpop.f32.mrb[0].mxu0
  %v3404 = vadd.f32 0.0, %v3403
  %v3405 = vpop.f32.mrb[0].mxu0
  %v3406 = vadd.f32 0.0, %v3405
  %3407 = vmatprep.mubr.bf16.mxu0 0
  %3408 = vmatmul.mubr.bf16.gmra.mrb[0].mxu0 %v464
  %v3409 = vpop.f32.mrb[0].mxu0
  %v3410 = vadd.f32 0.0, %v3409
  %v3411 = vpop.f32.mrb[0].mxu0
  %v3412 = vadd.f32 0.0, %v3411
  %v3413 = vpop.f32.mrb[0].mxu0
  %v3414 = vadd.f32 0.0, %v3413
  %v3415 = vpop.f32.mrb[0].mxu0
  %v3416 = vadd.f32 0.0, %v3415
  %3417 = vmatprep.mubr.bf16.mxu0 0
  %3418 = vmatmul.mubr.bf16.gmra.mrb[0].mxu0 %v467
  %v3419 = vpop.f32.mrb[0].mxu0
  %v3420 = vadd.f32 0.0, %v3419
  %v3421 = vpop.f32.mrb[0].mxu0
  %v3422 = vadd.f32 0.0, %v3421
  %v3423 = vpop.f32.mrb[0].mxu0
  %v3424 = vadd.f32 0.0, %v3423
  %v3425 = vpop.f32.mrb[0].mxu0
  %v3426 = vadd.f32 0.0, %v3425
  %3427 = vmatprep.mubr.bf16.mxu0 0
  %3428 = vmatmul.mubr.bf16.gmra.mrb[0].mxu0 %v470
  %v3429 = vpop.f32.mrb[0].mxu0
  %v3430 = vadd.f32 0.0, %v3429
  %v3431 = vpop.f32.mrb[0].mxu0
  %v3432 = vadd.f32 0.0, %v3431
  %v3433 = vpop.f32.mrb[0].mxu0
  %v3434 = vadd.f32 0.0, %v3433
  %v3435 = vpop.f32.mrb[0].mxu0
  %v3436 = vadd.f32 0.0, %v3435
  %3437 = vmatprep.mubr.bf16.mxu0 0
  %3438 = vmatmul.mubr.bf16.gmra.mrb[0].mxu0 %v473
  %v3439 = vpop.f32.mrb[0].mxu0
  %v3440 = vadd.f32 0.0, %v3439
  %v3441 = vpop.f32.mrb[0].mxu0
  %v3442 = vadd.f32 0.0, %v3441
  %v3443 = vpop.f32.mrb[0].mxu0
  %v3444 = vadd.f32 0.0, %v3443
  %v3445 = vpop.f32.mrb[0].mxu0
  %v3446 = vadd.f32 0.0, %v3445
  %3447 = vmatprep.mubr.bf16.mxu0 0
  %3448 = vmatmul.mubr.bf16.gmra.mrb[0].mxu0 %v476
  %v3449 = vpop.f32.mrb[0].mxu0
  %v3450 = vadd.f32 0.0, %v3449
  %v3451 = vpop.f32.mrb[0].mxu0
  %v3452 = vadd.f32 0.0, %v3451
  %v3453 = vpop.f32.mrb[0].mxu0
  %v3454 = vadd.f32 0.0, %v3453
  %v3455 = vpop.f32.mrb[0].mxu0
  %v3456 = vadd.f32 0.0, %v3455
  %3457 = vmatprep.mubr.bf16.mxu0 0
  %3458 = vmatmul.mubr.bf16.gmra.mrb[0].mxu0 %v479
  %v3459 = vpop.f32.mrb[0].mxu0
  %v3460 = vadd.f32 0.0, %v3459
  %v3461 = vpop.f32.mrb[0].mxu0
  %v3462 = vadd.f32 0.0, %v3461
  %v3463 = vpop.f32.mrb[0].mxu0
  %v3464 = vadd.f32 0.0, %v3463
  %v3465 = vpop.f32.mrb[0].mxu0
  %v3466 = vadd.f32 0.0, %v3465
  %3467 = vmatprep.mubr.bf16.mxu0 0
  %3468 = vmatmul.mubr.bf16.gmra.mrb[0].mxu0 %v669
  %v3469 = vpop.f32.mrb[0].mxu0
  %v3470 = vadd.f32 0.0, %v3469
  %v3471 = vpop.f32.mrb[0].mxu0
  %v3472 = vadd.f32 0.0, %v3471
  %v3473 = vpop.f32.mrb[0].mxu0
  %v3474 = vadd.f32 0.0, %v3473
  %v3475 = vpop.f32.mrb[0].mxu0
  %v3476 = vadd.f32 0.0, %v3475
  %3477 = vdwg.mxu0
  %3478 = vmatprep.subr.bf16.mxu0 %v1554
  %3479 = vmatpush1.bf16.msra.mxu0 %v1553
  %3480 = vmatprep.subr.bf16.mxu0 %v1563
  %3481 = vmatpush1.bf16.msra.mxu0 %v1560
  %3482 = vmatprep.subr.bf16.mxu0 0
  %3483 = vmatpush1.bf16.msra.mxu0 0
  %3484 = vmatprep.subr.bf16.mxu0 0
  %3485 = vmatpush1.bf16.msra.mxu0 0
  %3486 = vmatprep.subr.bf16.mxu0 0
  %3487 = vmatpush1.bf16.msra.mxu0 0
  %3488 = vmatprep.subr.bf16.mxu0 0
  %3489 = vmatpush1.bf16.msra.mxu0 0
  %3490 = vmatprep.subr.bf16.mxu0 0
  %3491 = vmatpush1.bf16.msra.mxu0 0
  %3492 = vmatprep.subr.bf16.mxu0 0
  %3493 = vmatpush1.bf16.msra.mxu0 0
  %3494 = vmatprep.subr.bf16.mxu0 0
  %3495 = vmatpush1.bf16.msra.mxu0 0
  %3496 = vmatprep.subr.bf16.mxu0 0
  %3497 = vmatpush1.bf16.msra.mxu0 0
  %3498 = vmatprep.subr.bf16.mxu0 0
  %3499 = vmatpush1.bf16.msra.mxu0 0
  %3500 = vmatprep.subr.bf16.mxu0 0
  %3501 = vmatpush1.bf16.msra.mxu0 0
  %3502 = vmatprep.subr.bf16.mxu0 0
  %3503 = vmatpush1.bf16.msra.mxu0 0
  %3504 = vmatprep.subr.bf16.mxu0 0
  %3505 = vmatpush1.bf16.msra.mxu0 0
  %3506 = vmatprep.subr.bf16.mxu0 0
  %3507 = vmatpush1.bf16.msra.mxu0 0
  %3508 = vmatprep.subr.bf16.mxu0 0
  %3509 = vmatpush1.bf16.msra.mxu0 0
  %3510 = vmatprep.mubr.bf16.mxu0 0
  %3511 = vmatmul.mubr.bf16.gmra.mrb[0].mxu0 %v172
  %v3512 = vpop.f32.mrb[0].mxu0
  %v3513 = vadd.f32 %v3360, %v3512
  %v3514 = vpop.f32.mrb[0].mxu0
  %v3515 = vadd.f32 %v3362, %v3514
  %v3516 = vpop.f32.mrb[0].mxu0
  %v3517 = vadd.f32 %v3364, %v3516
  %v3518 = vpop.f32.mrb[0].mxu0
  %v3519 = vadd.f32 %v3366, %v3518
  %3520 = vmatprep.mubr.bf16.mxu0 0
  %3521 = vmatmul.mubr.bf16.gmra.mrb[0].mxu0 %v175
  %v3522 = vpop.f32.mrb[0].mxu0
  %v3523 = vadd.f32 %v3370, %v3522
  %v3524 = vpop.f32.mrb[0].mxu0
  %v3525 = vadd.f32 %v3372, %v3524
  %v3526 = vpop.f32.mrb[0].mxu0
  %v3527 = vadd.f32 %v3374, %v3526
  %v3528 = vpop.f32.mrb[0].mxu0
  %v3529 = vadd.f32 %v3376, %v3528
  %3530 = vmatprep.mubr.bf16.mxu0 0
  %3531 = vmatmul.mubr.bf16.gmra.mrb[0].mxu0 %v178
  %v3532 = vpop.f32.mrb[0].mxu0
  %v3533 = vadd.f32 %v3380, %v3532
  %v3534 = vpop.f32.mrb[0].mxu0
  %v3535 = vadd.f32 %v3382, %v3534
  %v3536 = vpop.f32.mrb[0].mxu0
  %v3537 = vadd.f32 %v3384, %v3536
  %v3538 = vpop.f32.mrb[0].mxu0
  %v3539 = vadd.f32 %v3386, %v3538
  %3540 = vmatprep.mubr.bf16.mxu0 0
  %3541 = vmatmul.mubr.bf16.gmra.mrb[0].mxu0 %v181
  %v3542 = vpop.f32.mrb[0].mxu0
  %v3543 = vadd.f32 %v3390, %v3542
  %v3544 = vpop.f32.mrb[0].mxu0
  %v3545 = vadd.f32 %v3392, %v3544
  %v3546 = vpop.f32.mrb[0].mxu0
  %v3547 = vadd.f32 %v3394, %v3546
  %v3548 = vpop.f32.mrb[0].mxu0
  %v3549 = vadd.f32 %v3396, %v3548
  %3550 = vmatprep.mubr.bf16.mxu0 0
  %3551 = vmatmul.mubr.bf16.gmra.mrb[0].mxu0 %v184
  %v3552 = vpop.f32.mrb[0].mxu0
  %v3553 = vadd.f32 %v3400, %v3552
  %v3554 = vpop.f32.mrb[0].mxu0
  %v3555 = vadd.f32 %v3402, %v3554
  %v3556 = vpop.f32.mrb[0].mxu0
  %v3557 = vadd.f32 %v3404, %v3556
  %v3558 = vpop.f32.mrb[0].mxu0
  %v3559 = vadd.f32 %v3406, %v3558
  %3560 = vmatprep.mubr.bf16.mxu0 0
  %3561 = vmatmul.mubr.bf16.gmra.mrb[0].mxu0 %v187
  %v3562 = vpop.f32.mrb[0].mxu0
  %v3563 = vadd.f32 %v3410, %v3562
  %v3564 = vpop.f32.mrb[0].mxu0
  %v3565 = vadd.f32 %v3412, %v3564
  %v3566 = vpop.f32.mrb[0].mxu0
  %v3567 = vadd.f32 %v3414, %v3566
  %v3568 = vpop.f32.mrb[0].mxu0
  %v3569 = vadd.f32 %v3416, %v3568
  %3570 = vmatprep.mubr.bf16.mxu0 0
  %3571 = vmatmul.mubr.bf16.gmra.mrb[0].mxu0 %v190
  %v3572 = vpop.f32.mrb[0].mxu0
  %v3573 = vadd.f32 %v3420, %v3572
  %v3574 = vpop.f32.mrb[0].mxu0
  %v3575 = vadd.f32 %v3422, %v3574
  %v3576 = vpop.f32.mrb[0].mxu0
  %v3577 = vadd.f32 %v3424, %v3576
  %v3578 = vpop.f32.mrb[0].mxu0
  %v3579 = vadd.f32 %v3426, %v3578
  %3580 = vmatprep.mubr.bf16.mxu0 0
  %3581 = vmatmul.mubr.bf16.gmra.mrb[0].mxu0 %v193
  %v3582 = vpop.f32.mrb[0].mxu0
  %v3583 = vadd.f32 %v3430, %v3582
  %v3584 = vpop.f32.mrb[0].mxu0
  %v3585 = vadd.f32 %v3432, %v3584
  %v3586 = vpop.f32.mrb[0].mxu0
  %v3587 = vadd.f32 %v3434, %v3586
  %v3588 = vpop.f32.mrb[0].mxu0
  %v3589 = vadd.f32 %v3436, %v3588
  %3590 = vmatprep.mubr.bf16.mxu0 0
  %3591 = vmatmul.mubr.bf16.gmra.mrb[0].mxu0 %v196
  %v3592 = vpop.f32.mrb[0].mxu0
  %v3593 = vadd.f32 %v3440, %v3592
  %v3594 = vpop.f32.mrb[0].mxu0
  %v3595 = vadd.f32 %v3442, %v3594
  %v3596 = vpop.f32.mrb[0].mxu0
  %v3597 = vadd.f32 %v3444, %v3596
  %v3598 = vpop.f32.mrb[0].mxu0
  %v3599 = vadd.f32 %v3446, %v3598
  %3600 = vmatprep.mubr.bf16.mxu0 0
  %3601 = vmatmul.mubr.bf16.gmra.mrb[0].mxu0 %v199
  %v3602 = vpop.f32.mrb[0].mxu0
  %v3603 = vadd.f32 %v3450, %v3602
  %v3604 = vpop.f32.mrb[0].mxu0
  %v3605 = vadd.f32 %v3452, %v3604
  %v3606 = vpop.f32.mrb[0].mxu0
  %v3607 = vadd.f32 %v3454, %v3606
  %v3608 = vpop.f32.mrb[0].mxu0
  %v3609 = vadd.f32 %v3456, %v3608
  %3610 = vmatprep.mubr.bf16.mxu0 0
  %3611 = vmatmul.mubr.bf16.gmra.mrb[0].mxu0 %v202
  %v3612 = vpop.f32.mrb[0].mxu0
  %v3613 = vadd.f32 %v3460, %v3612
  %v3614 = vpop.f32.mrb[0].mxu0
  %v3615 = vadd.f32 %v3462, %v3614
  %v3616 = vpop.f32.mrb[0].mxu0
  %v3617 = vadd.f32 %v3464, %v3616
  %v3618 = vpop.f32.mrb[0].mxu0
  %v3619 = vadd.f32 %v3466, %v3618
  %3620 = vmatprep.mubr.bf16.mxu0 0
  %3621 = vmatmul.mubr.bf16.gmra.mrb[0].mxu0 %v205
  %v3622 = vpop.f32.mrb[0].mxu0
  %v3623 = vadd.f32 %v3470, %v3622
  %v3624 = vpop.f32.mrb[0].mxu0
  %v3625 = vadd.f32 %v3472, %v3624
  %v3626 = vpop.f32.mrb[0].mxu0
  %v3627 = vadd.f32 %v3474, %v3626
  %v3628 = vpop.f32.mrb[0].mxu0
  %v3629 = vadd.f32 %v3476, %v3628
  %3630 = vdwg.mxu0
  %3631 = vmatprep.subr.bf16.mxu0 %v1736
  %3632 = vmatpush1.bf16.msra.mxu0 %v1735
  %3633 = vmatprep.subr.bf16.mxu0 %v1745
  %3634 = vmatpush1.bf16.msra.mxu0 %v1742
  %3635 = vmatprep.subr.bf16.mxu0 0
  %3636 = vmatpush1.bf16.msra.mxu0 0
  %3637 = vmatprep.subr.bf16.mxu0 0
  %3638 = vmatpush1.bf16.msra.mxu0 0
  %3639 = vmatprep.subr.bf16.mxu0 0
  %3640 = vmatpush1.bf16.msra.mxu0 0
  %3641 = vmatprep.subr.bf16.mxu0 0
  %3642 = vmatpush1.bf16.msra.mxu0 0
  %3643 = vmatprep.subr.bf16.mxu0 0
  %3644 = vmatpush1.bf16.msra.mxu0 0
  %3645 = vmatprep.subr.bf16.mxu0 0
  %3646 = vmatpush1.bf16.msra.mxu0 0
  %3647 = vmatprep.subr.bf16.mxu0 0
  %3648 = vmatpush1.bf16.msra.mxu0 0
  %3649 = vmatprep.subr.bf16.mxu0 0
  %3650 = vmatpush1.bf16.msra.mxu0 0
  %3651 = vmatprep.subr.bf16.mxu0 0
  %3652 = vmatpush1.bf16.msra.mxu0 0
  %3653 = vmatprep.subr.bf16.mxu0 0
  %3654 = vmatpush1.bf16.msra.mxu0 0
  %3655 = vmatprep.subr.bf16.mxu0 0
  %3656 = vmatpush1.bf16.msra.mxu0 0
  %3657 = vmatprep.subr.bf16.mxu0 0
  %3658 = vmatpush1.bf16.msra.mxu0 0
  %3659 = vmatprep.subr.bf16.mxu0 0
  %3660 = vmatpush1.bf16.msra.mxu0 0
  %3661 = vmatprep.subr.bf16.mxu0 0
  %3662 = vmatpush1.bf16.msra.mxu0 0
  %3663 = vmatprep.mubr.bf16.mxu0 0
  %3664 = vmatmul.mubr.bf16.gmra.mrb[0].mxu0 %v175
  %v3665 = vpop.f32.mrb[0].mxu0
  %v3666 = vadd.f32 0.0, %v3665
  %v3667 = vpop.f32.mrb[0].mxu0
  %v3668 = vadd.f32 0.0, %v3667
  %v3669 = vpop.f32.mrb[0].mxu0
  %v3670 = vadd.f32 0.0, %v3669
  %v3671 = vpop.f32.mrb[0].mxu0
  %v3672 = vadd.f32 0.0, %v3671
  %3673 = vmatprep.mubr.bf16.mxu0 0
  %3674 = vmatmul.mubr.bf16.gmra.mrb[0].mxu0 %v178
  %v3675 = vpop.f32.mrb[0].mxu0
  %v3676 = vadd.f32 0.0, %v3675
  %v3677 = vpop.f32.mrb[0].mxu0
  %v3678 = vadd.f32 0.0, %v3677
  %v3679 = vpop.f32.mrb[0].mxu0
  %v3680 = vadd.f32 0.0, %v3679
  %v3681 = vpop.f32.mrb[0].mxu0
  %v3682 = vadd.f32 0.0, %v3681
  %3683 = vmatprep.mubr.bf16.mxu0 0
  %3684 = vmatmul.mubr.bf16.gmra.mrb[0].mxu0 %v181
  %v3685 = vpop.f32.mrb[0].mxu0
  %v3686 = vadd.f32 0.0, %v3685
  %v3687 = vpop.f32.mrb[0].mxu0
  %v3688 = vadd.f32 0.0, %v3687
  %v3689 = vpop.f32.mrb[0].mxu0
  %v3690 = vadd.f32 0.0, %v3689
  %v3691 = vpop.f32.mrb[0].mxu0
  %v3692 = vadd.f32 0.0, %v3691
  %3693 = vmatprep.mubr.bf16.mxu0 0
  %3694 = vmatmul.mubr.bf16.gmra.mrb[0].mxu0 %v184
  %v3695 = vpop.f32.mrb[0].mxu0
  %v3696 = vadd.f32 0.0, %v3695
  %v3697 = vpop.f32.mrb[0].mxu0
  %v3698 = vadd.f32 0.0, %v3697
  %v3699 = vpop.f32.mrb[0].mxu0
  %v3700 = vadd.f32 0.0, %v3699
  %v3701 = vpop.f32.mrb[0].mxu0
  %v3702 = vadd.f32 0.0, %v3701
  %3703 = vmatprep.mubr.bf16.mxu0 0
  %3704 = vmatmul.mubr.bf16.gmra.mrb[0].mxu0 %v187
  %v3705 = vpop.f32.mrb[0].mxu0
  %v3706 = vadd.f32 0.0, %v3705
  %v3707 = vpop.f32.mrb[0].mxu0
  %v3708 = vadd.f32 0.0, %v3707
  %v3709 = vpop.f32.mrb[0].mxu0
  %v3710 = vadd.f32 0.0, %v3709
  %v3711 = vpop.f32.mrb[0].mxu0
  %v3712 = vadd.f32 0.0, %v3711
  %3713 = vmatprep.mubr.bf16.mxu0 0
  %3714 = vmatmul.mubr.bf16.gmra.mrb[0].mxu0 %v190
  %v3715 = vpop.f32.mrb[0].mxu0
  %v3716 = vadd.f32 0.0, %v3715
  %v3717 = vpop.f32.mrb[0].mxu0
  %v3718 = vadd.f32 0.0, %v3717
  %v3719 = vpop.f32.mrb[0].mxu0
  %v3720 = vadd.f32 0.0, %v3719
  %v3721 = vpop.f32.mrb[0].mxu0
  %v3722 = vadd.f32 0.0, %v3721
  %3723 = vmatprep.mubr.bf16.mxu0 0
  %3724 = vmatmul.mubr.bf16.gmra.mrb[0].mxu0 %v193
  %v3725 = vpop.f32.mrb[0].mxu0
  %v3726 = vadd.f32 0.0, %v3725
  %v3727 = vpop.f32.mrb[0].mxu0
  %v3728 = vadd.f32 0.0, %v3727
  %v3729 = vpop.f32.mrb[0].mxu0
  %v3730 = vadd.f32 0.0, %v3729
  %v3731 = vpop.f32.mrb[0].mxu0
  %v3732 = vadd.f32 0.0, %v3731
  %3733 = vmatprep.mubr.bf16.mxu0 0
  %3734 = vmatmul.mubr.bf16.gmra.mrb[0].mxu0 %v196
  %v3735 = vpop.f32.mrb[0].mxu0
  %v3736 = vadd.f32 0.0, %v3735
  %v3737 = vpop.f32.mrb[0].mxu0
  %v3738 = vadd.f32 0.0, %v3737
  %v3739 = vpop.f32.mrb[0].mxu0
  %v3740 = vadd.f32 0.0, %v3739
  %v3741 = vpop.f32.mrb[0].mxu0
  %v3742 = vadd.f32 0.0, %v3741
  %3743 = vmatprep.mubr.bf16.mxu0 0
  %3744 = vmatmul.mubr.bf16.gmra.mrb[0].mxu0 %v199
  %v3745 = vpop.f32.mrb[0].mxu0
  %v3746 = vadd.f32 0.0, %v3745
  %v3747 = vpop.f32.mrb[0].mxu0
  %v3748 = vadd.f32 0.0, %v3747
  %v3749 = vpop.f32.mrb[0].mxu0
  %v3750 = vadd.f32 0.0, %v3749
  %v3751 = vpop.f32.mrb[0].mxu0
  %v3752 = vadd.f32 0.0, %v3751
  %3753 = vmatprep.mubr.bf16.mxu0 0
  %3754 = vmatmul.mubr.bf16.gmra.mrb[0].mxu0 %v202
  %v3755 = vpop.f32.mrb[0].mxu0
  %v3756 = vadd.f32 0.0, %v3755
  %v3757 = vpop.f32.mrb[0].mxu0
  %v3758 = vadd.f32 0.0, %v3757
  %v3759 = vpop.f32.mrb[0].mxu0
  %v3760 = vadd.f32 0.0, %v3759
  %v3761 = vpop.f32.mrb[0].mxu0
  %v3762 = vadd.f32 0.0, %v3761
  %3763 = vmatprep.mubr.bf16.mxu0 0
  %3764 = vmatmul.mubr.bf16.gmra.mrb[0].mxu0 %v205
  %v3765 = vpop.f32.mrb[0].mxu0
  %v3766 = vadd.f32 0.0, %v3765
  %v3767 = vpop.f32.mrb[0].mxu0
  %v3768 = vadd.f32 0.0, %v3767
  %v3769 = vpop.f32.mrb[0].mxu0
  %v3770 = vadd.f32 0.0, %v3769
  %v3771 = vpop.f32.mrb[0].mxu0
  %v3772 = vadd.f32 0.0, %v3771
  %3773 = vmatprep.mubr.bf16.mxu0 0
  %3774 = vmatmul.mubr.bf16.gmra.mrb[0].mxu0 %v907
  %v3775 = vpop.f32.mrb[0].mxu0
  %v3776 = vadd.f32 0.0, %v3775
  %v3777 = vpop.f32.mrb[0].mxu0
  %v3778 = vadd.f32 0.0, %v3777
  %v3779 = vpop.f32.mrb[0].mxu0
  %v3780 = vadd.f32 0.0, %v3779
  %v3781 = vpop.f32.mrb[0].mxu0
  %v3782 = vadd.f32 0.0, %v3781
  %3783 = vdwg.mxu0
  %v3784 = vadd.f32 %v3513, %v3666
  %v3785 = vadd.f32 %v3515, %v3668
  %v3786 = vadd.f32 %v3517, %v3670
  %v3787 = vadd.f32 %v3519, %v3672
  %v3788 = vadd.f32 %v3523, %v3676
  %v3789 = vadd.f32 %v3525, %v3678
  %v3790 = vadd.f32 %v3527, %v3680
  %v3791 = vadd.f32 %v3529, %v3682
  %v3792 = vadd.f32 %v3533, %v3686
  %v3793 = vadd.f32 %v3535, %v3688
  %v3794 = vadd.f32 %v3537, %v3690
  %v3795 = vadd.f32 %v3539, %v3692
  %v3796 = vadd.f32 %v3543, %v3696
  %v3797 = vadd.f32 %v3545, %v3698
  %v3798 = vadd.f32 %v3547, %v3700
  %v3799 = vadd.f32 %v3549, %v3702
  %v3800 = vadd.f32 %v3553, %v3706
  %v3801 = vadd.f32 %v3555, %v3708
  %v3802 = vadd.f32 %v3557, %v3710
  %v3803 = vadd.f32 %v3559, %v3712
  %v3804 = vadd.f32 %v3563, %v3716
  %v3805 = vadd.f32 %v3565, %v3718
  %v3806 = vadd.f32 %v3567, %v3720
  %v3807 = vadd.f32 %v3569, %v3722
  %v3808 = vadd.f32 %v3573, %v3726
  %v3809 = vadd.f32 %v3575, %v3728
  %v3810 = vadd.f32 %v3577, %v3730
  %v3811 = vadd.f32 %v3579, %v3732
  %v3812 = vadd.f32 %v3583, %v3736
  %v3813 = vadd.f32 %v3585, %v3738
  %v3814 = vadd.f32 %v3587, %v3740
  %v3815 = vadd.f32 %v3589, %v3742
  %v3816 = vadd.f32 %v3593, %v3746
  %v3817 = vadd.f32 %v3595, %v3748
  %v3818 = vadd.f32 %v3597, %v3750
  %v3819 = vadd.f32 %v3599, %v3752
  %v3820 = vadd.f32 %v3603, %v3756
  %v3821 = vadd.f32 %v3605, %v3758
  %v3822 = vadd.f32 %v3607, %v3760
  %v3823 = vadd.f32 %v3609, %v3762
  %v3824 = vadd.f32 %v3613, %v3766
  %v3825 = vadd.f32 %v3615, %v3768
  %v3826 = vadd.f32 %v3617, %v3770
  %v3827 = vadd.f32 %v3619, %v3772
  %v3828 = vadd.f32 %v3623, %v3776
  %v3829 = vadd.f32 %v3625, %v3778
  %v3830 = vadd.f32 %v3627, %v3780
  %v3831 = vadd.f32 %v3629, %v3782
  %3832 = vmatprep.subr.bf16.mxu0 %v1966
  %3833 = vmatpush1.bf16.msra.mxu0 %v1965
  %3834 = vmatprep.subr.bf16.mxu0 %v1975
  %3835 = vmatpush1.bf16.msra.mxu0 %v1972
  %3836 = vmatprep.subr.bf16.mxu0 0
  %3837 = vmatpush1.bf16.msra.mxu0 0
  %3838 = vmatprep.subr.bf16.mxu0 0
  %3839 = vmatpush1.bf16.msra.mxu0 0
  %3840 = vmatprep.subr.bf16.mxu0 0
  %3841 = vmatpush1.bf16.msra.mxu0 0
  %3842 = vmatprep.subr.bf16.mxu0 0
  %3843 = vmatpush1.bf16.msra.mxu0 0
  %3844 = vmatprep.subr.bf16.mxu0 0
  %3845 = vmatpush1.bf16.msra.mxu0 0
  %3846 = vmatprep.subr.bf16.mxu0 0
  %3847 = vmatpush1.bf16.msra.mxu0 0
  %3848 = vmatprep.subr.bf16.mxu0 0
  %3849 = vmatpush1.bf16.msra.mxu0 0
  %3850 = vmatprep.subr.bf16.mxu0 0
  %3851 = vmatpush1.bf16.msra.mxu0 0
  %3852 = vmatprep.subr.bf16.mxu0 0
  %3853 = vmatpush1.bf16.msra.mxu0 0
  %3854 = vmatprep.subr.bf16.mxu0 0
  %3855 = vmatpush1.bf16.msra.mxu0 0
  %3856 = vmatprep.subr.bf16.mxu0 0
  %3857 = vmatpush1.bf16.msra.mxu0 0
  %3858 = vmatprep.subr.bf16.mxu0 0
  %3859 = vmatpush1.bf16.msra.mxu0 0
  %3860 = vmatprep.subr.bf16.mxu0 0
  %3861 = vmatpush1.bf16.msra.mxu0 0
  %3862 = vmatprep.subr.bf16.mxu0 0
  %3863 = vmatpush1.bf16.msra.mxu0 0
  %3864 = vmatprep.mubr.bf16.mxu0 0
  %3865 = vmatmul.mubr.bf16.gmra.mrb[0].mxu0 %v452
  %v3866 = vpop.f32.mrb[0].mxu0
  %v3867 = vadd.f32 0.0, %v3866
  %v3868 = vpop.f32.mrb[0].mxu0
  %v3869 = vadd.f32 0.0, %v3868
  %v3870 = vpop.f32.mrb[0].mxu0
  %v3871 = vadd.f32 0.0, %v3870
  %v3872 = vpop.f32.mrb[0].mxu0
  %v3873 = vadd.f32 0.0, %v3872
  %3874 = vmatprep.mubr.bf16.mxu0 0
  %3875 = vmatmul.mubr.bf16.gmra.mrb[0].mxu0 %v455
  %v3876 = vpop.f32.mrb[0].mxu0
  %v3877 = vadd.f32 0.0, %v3876
  %v3878 = vpop.f32.mrb[0].mxu0
  %v3879 = vadd.f32 0.0, %v3878
  %v3880 = vpop.f32.mrb[0].mxu0
  %v3881 = vadd.f32 0.0, %v3880
  %v3882 = vpop.f32.mrb[0].mxu0
  %v3883 = vadd.f32 0.0, %v3882
  %3884 = vmatprep.mubr.bf16.mxu0 0
  %3885 = vmatmul.mubr.bf16.gmra.mrb[0].mxu0 %v458
  %v3886 = vpop.f32.mrb[0].mxu0
  %v3887 = vadd.f32 0.0, %v3886
  %v3888 = vpop.f32.mrb[0].mxu0
  %v3889 = vadd.f32 0.0, %v3888
  %v3890 = vpop.f32.mrb[0].mxu0
  %v3891 = vadd.f32 0.0, %v3890
  %v3892 = vpop.f32.mrb[0].mxu0
  %v3893 = vadd.f32 0.0, %v3892
  %3894 = vmatprep.mubr.bf16.mxu0 0
  %3895 = vmatmul.mubr.bf16.gmra.mrb[0].mxu0 %v461
  %v3896 = vpop.f32.mrb[0].mxu0
  %v3897 = vadd.f32 0.0, %v3896
  %v3898 = vpop.f32.mrb[0].mxu0
  %v3899 = vadd.f32 0.0, %v3898
  %v3900 = vpop.f32.mrb[0].mxu0
  %v3901 = vadd.f32 0.0, %v3900
  %v3902 = vpop.f32.mrb[0].mxu0
  %v3903 = vadd.f32 0.0, %v3902
  %3904 = vmatprep.mubr.bf16.mxu0 0
  %3905 = vmatmul.mubr.bf16.gmra.mrb[0].mxu0 %v464
  %v3906 = vpop.f32.mrb[0].mxu0
  %v3907 = vadd.f32 0.0, %v3906
  %v3908 = vpop.f32.mrb[0].mxu0
  %v3909 = vadd.f32 0.0, %v3908
  %v3910 = vpop.f32.mrb[0].mxu0
  %v3911 = vadd.f32 0.0, %v3910
  %v3912 = vpop.f32.mrb[0].mxu0
  %v3913 = vadd.f32 0.0, %v3912
  %3914 = vmatprep.mubr.bf16.mxu0 0
  %3915 = vmatmul.mubr.bf16.gmra.mrb[0].mxu0 %v467
  %v3916 = vpop.f32.mrb[0].mxu0
  %v3917 = vadd.f32 0.0, %v3916
  %v3918 = vpop.f32.mrb[0].mxu0
  %v3919 = vadd.f32 0.0, %v3918
  %v3920 = vpop.f32.mrb[0].mxu0
  %v3921 = vadd.f32 0.0, %v3920
  %v3922 = vpop.f32.mrb[0].mxu0
  %v3923 = vadd.f32 0.0, %v3922
  %3924 = vmatprep.mubr.bf16.mxu0 0
  %3925 = vmatmul.mubr.bf16.gmra.mrb[0].mxu0 %v470
  %v3926 = vpop.f32.mrb[0].mxu0
  %v3927 = vadd.f32 0.0, %v3926
  %v3928 = vpop.f32.mrb[0].mxu0
  %v3929 = vadd.f32 0.0, %v3928
  %v3930 = vpop.f32.mrb[0].mxu0
  %v3931 = vadd.f32 0.0, %v3930
  %v3932 = vpop.f32.mrb[0].mxu0
  %v3933 = vadd.f32 0.0, %v3932
  %3934 = vmatprep.mubr.bf16.mxu0 0
  %3935 = vmatmul.mubr.bf16.gmra.mrb[0].mxu0 %v473
  %v3936 = vpop.f32.mrb[0].mxu0
  %v3937 = vadd.f32 0.0, %v3936
  %v3938 = vpop.f32.mrb[0].mxu0
  %v3939 = vadd.f32 0.0, %v3938
  %v3940 = vpop.f32.mrb[0].mxu0
  %v3941 = vadd.f32 0.0, %v3940
  %v3942 = vpop.f32.mrb[0].mxu0
  %v3943 = vadd.f32 0.0, %v3942
  %3944 = vmatprep.mubr.bf16.mxu0 0
  %3945 = vmatmul.mubr.bf16.gmra.mrb[0].mxu0 %v476
  %v3946 = vpop.f32.mrb[0].mxu0
  %v3947 = vadd.f32 0.0, %v3946
  %v3948 = vpop.f32.mrb[0].mxu0
  %v3949 = vadd.f32 0.0, %v3948
  %v3950 = vpop.f32.mrb[0].mxu0
  %v3951 = vadd.f32 0.0, %v3950
  %v3952 = vpop.f32.mrb[0].mxu0
  %v3953 = vadd.f32 0.0, %v3952
  %3954 = vmatprep.mubr.bf16.mxu0 0
  %3955 = vmatmul.mubr.bf16.gmra.mrb[0].mxu0 %v479
  %v3956 = vpop.f32.mrb[0].mxu0
  %v3957 = vadd.f32 0.0, %v3956
  %v3958 = vpop.f32.mrb[0].mxu0
  %v3959 = vadd.f32 0.0, %v3958
  %v3960 = vpop.f32.mrb[0].mxu0
  %v3961 = vadd.f32 0.0, %v3960
  %v3962 = vpop.f32.mrb[0].mxu0
  %v3963 = vadd.f32 0.0, %v3962
  %3964 = vmatprep.mubr.bf16.mxu0 0
  %3965 = vmatmul.mubr.bf16.gmra.mrb[0].mxu0 %v669
  %v3966 = vpop.f32.mrb[0].mxu0
  %v3967 = vadd.f32 0.0, %v3966
  %v3968 = vpop.f32.mrb[0].mxu0
  %v3969 = vadd.f32 0.0, %v3968
  %v3970 = vpop.f32.mrb[0].mxu0
  %v3971 = vadd.f32 0.0, %v3970
  %v3972 = vpop.f32.mrb[0].mxu0
  %v3973 = vadd.f32 0.0, %v3972
  %3974 = vmatprep.mubr.bf16.mxu0 0
  %3975 = vmatmul.mubr.bf16.gmra.mrb[0].mxu0 %v1145
  %v3976 = vpop.f32.mrb[0].mxu0
  %v3977 = vadd.f32 0.0, %v3976
  %v3978 = vpop.f32.mrb[0].mxu0
  %v3979 = vadd.f32 0.0, %v3978
  %v3980 = vpop.f32.mrb[0].mxu0
  %v3981 = vadd.f32 0.0, %v3980
  %v3982 = vpop.f32.mrb[0].mxu0
  %v3983 = vadd.f32 0.0, %v3982
  %3984 = vdwg.mxu0
  %v3985 = vadd.f32 %v3784, %v3867
  %v3986 = vadd.f32 %v3785, %v3869
  %v3987 = vadd.f32 %v3786, %v3871
  %v3988 = vadd.f32 %v3787, %v3873
  %v3989 = vadd.f32 %v3788, %v3877
  %v3990 = vadd.f32 %v3789, %v3879
  %v3991 = vadd.f32 %v3790, %v3881
  %v3992 = vadd.f32 %v3791, %v3883
  %v3993 = vadd.f32 %v3792, %v3887
  %v3994 = vadd.f32 %v3793, %v3889
  %v3995 = vadd.f32 %v3794, %v3891
  %v3996 = vadd.f32 %v3795, %v3893
  %v3997 = vadd.f32 %v3796, %v3897
  %v3998 = vadd.f32 %v3797, %v3899
  %v3999 = vadd.f32 %v3798, %v3901
  %v4000 = vadd.f32 %v3799, %v3903
  %v4001 = vadd.f32 %v3800, %v3907
  %v4002 = vadd.f32 %v3801, %v3909
  %v4003 = vadd.f32 %v3802, %v3911
  %v4004 = vadd.f32 %v3803, %v3913
  %v4005 = vadd.f32 %v3804, %v3917
  %v4006 = vadd.f32 %v3805, %v3919
  %v4007 = vadd.f32 %v3806, %v3921
  %v4008 = vadd.f32 %v3807, %v3923
  %v4009 = vadd.f32 %v3808, %v3927
  %v4010 = vadd.f32 %v3809, %v3929
  %v4011 = vadd.f32 %v3810, %v3931
  %v4012 = vadd.f32 %v3811, %v3933
  %v4013 = vadd.f32 %v3812, %v3937
  %v4014 = vadd.f32 %v3813, %v3939
  %v4015 = vadd.f32 %v3814, %v3941
  %v4016 = vadd.f32 %v3815, %v3943
  %v4017 = vadd.f32 %v3816, %v3947
  %v4018 = vadd.f32 %v3817, %v3949
  %v4019 = vadd.f32 %v3818, %v3951
  %v4020 = vadd.f32 %v3819, %v3953
  %v4021 = vadd.f32 %v3820, %v3957
  %v4022 = vadd.f32 %v3821, %v3959
  %v4023 = vadd.f32 %v3822, %v3961
  %v4024 = vadd.f32 %v3823, %v3963
  %v4025 = vadd.f32 %v3824, %v3967
  %v4026 = vadd.f32 %v3825, %v3969
  %v4027 = vadd.f32 %v3826, %v3971
  %v4028 = vadd.f32 %v3827, %v3973
  %v4029 = vadd.f32 %v3828, %v3977
  %v4030 = vadd.f32 %v3829, %v3979
  %v4031 = vadd.f32 %v3830, %v3981
  %v4032 = vadd.f32 %v3831, %v3983
  %4033 = vmatprep.subr.bf16.mxu0 %v2196
  %4034 = vmatpush1.bf16.msra.mxu0 %v2195
  %4035 = vmatprep.subr.bf16.mxu0 %v2205
  %4036 = vmatpush1.bf16.msra.mxu0 %v2202
  %4037 = vmatprep.subr.bf16.mxu0 0
  %4038 = vmatpush1.bf16.msra.mxu0 0
  %4039 = vmatprep.subr.bf16.mxu0 0
  %4040 = vmatpush1.bf16.msra.mxu0 0
  %4041 = vmatprep.subr.bf16.mxu0 0
  %4042 = vmatpush1.bf16.msra.mxu0 0
  %4043 = vmatprep.subr.bf16.mxu0 0
  %4044 = vmatpush1.bf16.msra.mxu0 0
  %4045 = vmatprep.subr.bf16.mxu0 0
  %4046 = vmatpush1.bf16.msra.mxu0 0
  %4047 = vmatprep.subr.bf16.mxu0 0
  %4048 = vmatpush1.bf16.msra.mxu0 0
  %4049 = vmatprep.subr.bf16.mxu0 0
  %4050 = vmatpush1.bf16.msra.mxu0 0
  %4051 = vmatprep.subr.bf16.mxu0 0
  %4052 = vmatpush1.bf16.msra.mxu0 0
  %4053 = vmatprep.subr.bf16.mxu0 0
  %4054 = vmatpush1.bf16.msra.mxu0 0
  %4055 = vmatprep.subr.bf16.mxu0 0
  %4056 = vmatpush1.bf16.msra.mxu0 0
  %4057 = vmatprep.subr.bf16.mxu0 0
  %4058 = vmatpush1.bf16.msra.mxu0 0
  %4059 = vmatprep.subr.bf16.mxu0 0
  %4060 = vmatpush1.bf16.msra.mxu0 0
  %4061 = vmatprep.subr.bf16.mxu0 0
  %4062 = vmatpush1.bf16.msra.mxu0 0
  %4063 = vmatprep.subr.bf16.mxu0 0
  %4064 = vmatpush1.bf16.msra.mxu0 0
  %4065 = vmatprep.mubr.bf16.mxu0 0
  %4066 = vmatmul.mubr.bf16.gmra.mrb[0].mxu0 %v178
  %v4067 = vpop.f32.mrb[0].mxu0
  %v4068 = vadd.f32 0.0, %v4067
  %v4069 = vpop.f32.mrb[0].mxu0
  %v4070 = vadd.f32 0.0, %v4069
  %v4071 = vpop.f32.mrb[0].mxu0
  %v4072 = vadd.f32 0.0, %v4071
  %v4073 = vpop.f32.mrb[0].mxu0
  %v4074 = vadd.f32 0.0, %v4073
  %4075 = vmatprep.mubr.bf16.mxu0 0
  %4076 = vmatmul.mubr.bf16.gmra.mrb[0].mxu0 %v181
  %v4077 = vpop.f32.mrb[0].mxu0
  %v4078 = vadd.f32 0.0, %v4077
  %v4079 = vpop.f32.mrb[0].mxu0
  %v4080 = vadd.f32 0.0, %v4079
  %v4081 = vpop.f32.mrb[0].mxu0
  %v4082 = vadd.f32 0.0, %v4081
  %v4083 = vpop.f32.mrb[0].mxu0
  %v4084 = vadd.f32 0.0, %v4083
  %4085 = vmatprep.mubr.bf16.mxu0 0
  %4086 = vmatmul.mubr.bf16.gmra.mrb[0].mxu0 %v184
  %v4087 = vpop.f32.mrb[0].mxu0
  %v4088 = vadd.f32 0.0, %v4087
  %v4089 = vpop.f32.mrb[0].mxu0
  %v4090 = vadd.f32 0.0, %v4089
  %v4091 = vpop.f32.mrb[0].mxu0
  %v4092 = vadd.f32 0.0, %v4091
  %v4093 = vpop.f32.mrb[0].mxu0
  %v4094 = vadd.f32 0.0, %v4093
  %4095 = vmatprep.mubr.bf16.mxu0 0
  %4096 = vmatmul.mubr.bf16.gmra.mrb[0].mxu0 %v187
  %v4097 = vpop.f32.mrb[0].mxu0
  %v4098 = vadd.f32 0.0, %v4097
  %v4099 = vpop.f32.mrb[0].mxu0
  %v4100 = vadd.f32 0.0, %v4099
  %v4101 = vpop.f32.mrb[0].mxu0
  %v4102 = vadd.f32 0.0, %v4101
  %v4103 = vpop.f32.mrb[0].mxu0
  %v4104 = vadd.f32 0.0, %v4103
  %4105 = vmatprep.mubr.bf16.mxu0 0
  %4106 = vmatmul.mubr.bf16.gmra.mrb[0].mxu0 %v190
  %v4107 = vpop.f32.mrb[0].mxu0
  %v4108 = vadd.f32 0.0, %v4107
  %v4109 = vpop.f32.mrb[0].mxu0
  %v4110 = vadd.f32 0.0, %v4109
  %v4111 = vpop.f32.mrb[0].mxu0
  %v4112 = vadd.f32 0.0, %v4111
  %v4113 = vpop.f32.mrb[0].mxu0
  %v4114 = vadd.f32 0.0, %v4113
  %4115 = vmatprep.mubr.bf16.mxu0 0
  %4116 = vmatmul.mubr.bf16.gmra.mrb[0].mxu0 %v193
  %v4117 = vpop.f32.mrb[0].mxu0
  %v4118 = vadd.f32 0.0, %v4117
  %v4119 = vpop.f32.mrb[0].mxu0
  %v4120 = vadd.f32 0.0, %v4119
  %v4121 = vpop.f32.mrb[0].mxu0
  %v4122 = vadd.f32 0.0, %v4121
  %v4123 = vpop.f32.mrb[0].mxu0
  %v4124 = vadd.f32 0.0, %v4123
  %4125 = vmatprep.mubr.bf16.mxu0 0
  %4126 = vmatmul.mubr.bf16.gmra.mrb[0].mxu0 %v196
  %v4127 = vpop.f32.mrb[0].mxu0
  %v4128 = vadd.f32 0.0, %v4127
  %v4129 = vpop.f32.mrb[0].mxu0
  %v4130 = vadd.f32 0.0, %v4129
  %v4131 = vpop.f32.mrb[0].mxu0
  %v4132 = vadd.f32 0.0, %v4131
  %v4133 = vpop.f32.mrb[0].mxu0
  %v4134 = vadd.f32 0.0, %v4133
  %4135 = vmatprep.mubr.bf16.mxu0 0
  %4136 = vmatmul.mubr.bf16.gmra.mrb[0].mxu0 %v199
  %v4137 = vpop.f32.mrb[0].mxu0
  %v4138 = vadd.f32 0.0, %v4137
  %v4139 = vpop.f32.mrb[0].mxu0
  %v4140 = vadd.f32 0.0, %v4139
  %v4141 = vpop.f32.mrb[0].mxu0
  %v4142 = vadd.f32 0.0, %v4141
  %v4143 = vpop.f32.mrb[0].mxu0
  %v4144 = vadd.f32 0.0, %v4143
  %4145 = vmatprep.mubr.bf16.mxu0 0
  %4146 = vmatmul.mubr.bf16.gmra.mrb[0].mxu0 %v202
  %v4147 = vpop.f32.mrb[0].mxu0
  %v4148 = vadd.f32 0.0, %v4147
  %v4149 = vpop.f32.mrb[0].mxu0
  %v4150 = vadd.f32 0.0, %v4149
  %v4151 = vpop.f32.mrb[0].mxu0
  %v4152 = vadd.f32 0.0, %v4151
  %v4153 = vpop.f32.mrb[0].mxu0
  %v4154 = vadd.f32 0.0, %v4153
  %4155 = vmatprep.mubr.bf16.mxu0 0
  %4156 = vmatmul.mubr.bf16.gmra.mrb[0].mxu0 %v205
  %v4157 = vpop.f32.mrb[0].mxu0
  %v4158 = vadd.f32 0.0, %v4157
  %v4159 = vpop.f32.mrb[0].mxu0
  %v4160 = vadd.f32 0.0, %v4159
  %v4161 = vpop.f32.mrb[0].mxu0
  %v4162 = vadd.f32 0.0, %v4161
  %v4163 = vpop.f32.mrb[0].mxu0
  %v4164 = vadd.f32 0.0, %v4163
  %4165 = vmatprep.mubr.bf16.mxu0 0
  %4166 = vmatmul.mubr.bf16.gmra.mrb[0].mxu0 %v907
  %v4167 = vpop.f32.mrb[0].mxu0
  %v4168 = vadd.f32 0.0, %v4167
  %v4169 = vpop.f32.mrb[0].mxu0
  %v4170 = vadd.f32 0.0, %v4169
  %v4171 = vpop.f32.mrb[0].mxu0
  %v4172 = vadd.f32 0.0, %v4171
  %v4173 = vpop.f32.mrb[0].mxu0
  %v4174 = vadd.f32 0.0, %v4173
  %4175 = vmatprep.mubr.bf16.mxu0 0
  %4176 = vmatmul.mubr.bf16.gmra.mrb[0].mxu0 %v3122
  %v4177 = vpop.f32.mrb[0].mxu0
  %v4178 = vadd.f32 0.0, %v4177
  %v4179 = vpop.f32.mrb[0].mxu0
  %v4180 = vadd.f32 0.0, %v4179
  %v4181 = vpop.f32.mrb[0].mxu0
  %v4182 = vadd.f32 0.0, %v4181
  %v4183 = vpop.f32.mrb[0].mxu0
  %v4184 = vadd.f32 0.0, %v4183
  %4185 = vdwg.mxu0
  %v4186 = vadd.f32 %v3985, %v4068
  %v4187 = vadd.f32 %v3986, %v4070
  %v4188 = vadd.f32 %v3987, %v4072
  %v4189 = vadd.f32 %v3988, %v4074
  %v4190 = vadd.f32 %v3989, %v4078
  %v4191 = vadd.f32 %v3990, %v4080
  %v4192 = vadd.f32 %v3991, %v4082
  %v4193 = vadd.f32 %v3992, %v4084
  %v4194 = vadd.f32 %v3993, %v4088
  %v4195 = vadd.f32 %v3994, %v4090
  %v4196 = vadd.f32 %v3995, %v4092
  %v4197 = vadd.f32 %v3996, %v4094
  %v4198 = vadd.f32 %v3997, %v4098
  %v4199 = vadd.f32 %v3998, %v4100
  %v4200 = vadd.f32 %v3999, %v4102
  %v4201 = vadd.f32 %v4000, %v4104
  %v4202 = vadd.f32 %v4001, %v4108
  %v4203 = vadd.f32 %v4002, %v4110
  %v4204 = vadd.f32 %v4003, %v4112
  %v4205 = vadd.f32 %v4004, %v4114
  %v4206 = vadd.f32 %v4005, %v4118
  %v4207 = vadd.f32 %v4006, %v4120
  %v4208 = vadd.f32 %v4007, %v4122
  %v4209 = vadd.f32 %v4008, %v4124
  %v4210 = vadd.f32 %v4009, %v4128
  %v4211 = vadd.f32 %v4010, %v4130
  %v4212 = vadd.f32 %v4011, %v4132
  %v4213 = vadd.f32 %v4012, %v4134
  %v4214 = vadd.f32 %v4013, %v4138
  %v4215 = vadd.f32 %v4014, %v4140
  %v4216 = vadd.f32 %v4015, %v4142
  %v4217 = vadd.f32 %v4016, %v4144
  %v4218 = vadd.f32 %v4017, %v4148
  %v4219 = vadd.f32 %v4018, %v4150
  %v4220 = vadd.f32 %v4019, %v4152
  %v4221 = vadd.f32 %v4020, %v4154
  %v4222 = vadd.f32 %v4021, %v4158
  %v4223 = vadd.f32 %v4022, %v4160
  %v4224 = vadd.f32 %v4023, %v4162
  %v4225 = vadd.f32 %v4024, %v4164
  %v4226 = vadd.f32 %v4025, %v4168
  %v4227 = vadd.f32 %v4026, %v4170
  %v4228 = vadd.f32 %v4027, %v4172
  %v4229 = vadd.f32 %v4028, %v4174
  %v4230 = vadd.f32 %v4029, %v4178
  %v4231 = vadd.f32 %v4030, %v4180
  %v4232 = vadd.f32 %v4031, %v4182
  %v4233 = vadd.f32 %v4032, %v4184
  %v4234 = vmax.f32 %v1306, %v2360
  %v4235 = vmax.f32 %v1307, %v2361
  %v4236 = vmax.f32 %v1308, %v2362
  %v4237 = vmax.f32 %v1309, %v2363
  %v4238 = vmax.f32 %v1310, %v2364
  %v4239 = vmax.f32 %v1311, %v2365
  %v4240 = vmax.f32 %v1312, %v2366
  %v4241 = vmax.f32 %v1313, %v2367
  %v4242 = vmax.f32 %v1314, %v2368
  %v4243 = vmax.f32 %v1315, %v2369
  %v4244 = vmax.f32 %v1316, %v2370
  %v4245 = vmax.f32 %v1317, %v2371
  %v4246 = vmax.f32 %v1318, %v2372
  %v4247 = vmax.f32 %v1319, %v2373
  %v4248 = vmax.f32 %v1320, %v2374
  %v4249 = vmax.f32 %v1321, %v2375
  %v4250 = vmax.f32 %v1322, %v2376
  %v4251 = vmax.f32 %v1323, %v2377
  %v4252 = vmax.f32 %v1324, %v2378
  %v4253 = vmax.f32 %v1325, %v2379
  %v4254 = vmax.f32 %v1326, %v2380
  %v4255 = vmax.f32 %v1327, %v2381
  %v4256 = vmax.f32 %v1328, %v2382
  %v4257 = vmax.f32 %v1329, %v2383
  %v4258 = vmax.f32 %v1330, %v2384
  %v4259 = vmax.f32 %v1331, %v2385
  %v4260 = vmax.f32 %v1332, %v2386
  %v4261 = vmax.f32 %v1333, %v2387
  %v4262 = vmax.f32 %v1334, %v2388
  %v4263 = vmax.f32 %v1335, %v2389
  %v4264 = vmax.f32 %v1336, %v2390
  %v4265 = vmax.f32 %v1337, %v2391
  %v4266 = vmax.f32 %v1338, %v2392
  %v4267 = vmax.f32 %v1339, %v2393
  %v4268 = vmax.f32 %v1340, %v2394
  %v4269 = vmax.f32 %v1341, %v2395
  %v4270 = vmax.f32 %v1342, %v2396
  %v4271 = vmax.f32 %v1343, %v2397
  %v4272 = vmax.f32 %v1344, %v2398
  %v4273 = vmax.f32 %v1345, %v2399
  %v4274 = vmax.f32 %v1346, %v2400
  %v4275 = vmax.f32 %v1347, %v2401
  %v4276 = vmax.f32 %v1348, %v2402
  %v4277 = vmax.f32 %v1349, %v2403
  %v4278 = vmax.f32 %v1350, %v2404
  %v4279 = vmax.f32 %v1351, %v2405
  %v4280 = vmax.f32 %v1352, %v2406
  %v4281 = vmax.f32 %v1353, %v2407
  %v4282 = vmax.f32 %v3277, %v4186
  %v4283 = vmax.f32 %v3278, %v4187
  %v4284 = vmax.f32 %v3279, %v4188
  %v4285 = vmax.f32 %v3280, %v4189
  %v4286 = vmax.f32 %v3281, %v4190
  %v4287 = vmax.f32 %v3282, %v4191
  %v4288 = vmax.f32 %v3283, %v4192
  %v4289 = vmax.f32 %v3284, %v4193
  %v4290 = vmax.f32 %v3285, %v4194
  %v4291 = vmax.f32 %v3286, %v4195
  %v4292 = vmax.f32 %v3287, %v4196
  %v4293 = vmax.f32 %v3288, %v4197
  %v4294 = vmax.f32 %v3289, %v4198
  %v4295 = vmax.f32 %v3290, %v4199
  %v4296 = vmax.f32 %v3291, %v4200
  %v4297 = vmax.f32 %v3292, %v4201
  %v4298 = vmax.f32 %v3293, %v4202
  %v4299 = vmax.f32 %v3294, %v4203
  %v4300 = vmax.f32 %v3295, %v4204
  %v4301 = vmax.f32 %v3296, %v4205
  %v4302 = vmax.f32 %v3297, %v4206
  %v4303 = vmax.f32 %v3298, %v4207
  %v4304 = vmax.f32 %v3299, %v4208
  %v4305 = vmax.f32 %v3300, %v4209
  %v4306 = vmax.f32 %v3301, %v4210
  %v4307 = vmax.f32 %v3302, %v4211
  %v4308 = vmax.f32 %v3303, %v4212
  %v4309 = vmax.f32 %v3304, %v4213
  %v4310 = vmax.f32 %v3305, %v4214
  %v4311 = vmax.f32 %v3306, %v4215
  %v4312 = vmax.f32 %v3307, %v4216
  %v4313 = vmax.f32 %v3308, %v4217
  %v4314 = vmax.f32 %v3309, %v4218
  %v4315 = vmax.f32 %v3310, %v4219
  %v4316 = vmax.f32 %v3311, %v4220
  %v4317 = vmax.f32 %v3312, %v4221
  %v4318 = vmax.f32 %v3313, %v4222
  %v4319 = vmax.f32 %v3314, %v4223
  %v4320 = vmax.f32 %v3315, %v4224
  %v4321 = vmax.f32 %v3316, %v4225
  %v4322 = vmax.f32 %v3317, %v4226
  %v4323 = vmax.f32 %v3318, %v4227
  %v4324 = vmax.f32 %v3319, %v4228
  %v4325 = vmax.f32 %v3320, %v4229
  %v4326 = vmax.f32 %v3321, %v4230
  %v4327 = vmax.f32 %v3322, %v4231
  %v4328 = vmax.f32 %v3323, %v4232
  %v4329 = vmax.f32 %v3324, %v4233
  %v4330 = vmax.f32 %v4234, %v4282
  %v4331 = vmax.f32 %v4235, %v4283
  %v4332 = vmax.f32 %v4236, %v4284
  %v4333 = vmax.f32 %v4237, %v4285
  %v4334 = vmax.f32 %v4238, %v4286
  %v4335 = vmax.f32 %v4239, %v4287
  %v4336 = vmax.f32 %v4240, %v4288
  %v4337 = vmax.f32 %v4241, %v4289
  %v4338 = vmax.f32 %v4242, %v4290
  %v4339 = vmax.f32 %v4243, %v4291
  %v4340 = vmax.f32 %v4244, %v4292
  %v4341 = vmax.f32 %v4245, %v4293
  %v4342 = vmax.f32 %v4246, %v4294
  %v4343 = vmax.f32 %v4247, %v4295
  %v4344 = vmax.f32 %v4248, %v4296
  %v4345 = vmax.f32 %v4249, %v4297
  %v4346 = vmax.f32 %v4250, %v4298
  %v4347 = vmax.f32 %v4251, %v4299
  %v4348 = vmax.f32 %v4252, %v4300
  %v4349 = vmax.f32 %v4253, %v4301
  %v4350 = vmax.f32 %v4254, %v4302
  %v4351 = vmax.f32 %v4255, %v4303
  %v4352 = vmax.f32 %v4256, %v4304
  %v4353 = vmax.f32 %v4257, %v4305
  %v4354 = vmax.f32 %v4258, %v4306
  %v4355 = vmax.f32 %v4259, %v4307
  %v4356 = vmax.f32 %v4260, %v4308
  %v4357 = vmax.f32 %v4261, %v4309
  %v4358 = vmax.f32 %v4262, %v4310
  %v4359 = vmax.f32 %v4263, %v4311
  %v4360 = vmax.f32 %v4264, %v4312
  %v4361 = vmax.f32 %v4265, %v4313
  %v4362 = vmax.f32 %v4266, %v4314
  %v4363 = vmax.f32 %v4267, %v4315
  %v4364 = vmax.f32 %v4268, %v4316
  %v4365 = vmax.f32 %v4269, %v4317
  %v4366 = vmax.f32 %v4270, %v4318
  %v4367 = vmax.f32 %v4271, %v4319
  %v4368 = vmax.f32 %v4272, %v4320
  %v4369 = vmax.f32 %v4273, %v4321
  %v4370 = vmax.f32 %v4274, %v4322
  %v4371 = vmax.f32 %v4275, %v4323
  %v4372 = vmax.f32 %v4276, %v4324
  %v4373 = vmax.f32 %v4277, %v4325
  %v4374 = vmax.f32 %v4278, %v4326
  %v4375 = vmax.f32 %v4279, %v4327
  %v4376 = vmax.f32 %v4280, %v4328
  %v4377 = vmax.f32 %v4281, %v4329
  %v4378 = vld [vmem:[%s2] sm:$0x3]
  %v4380 = vlaneseq
  %v4381 = vshrl.u32 %v4380, 7
  %v4382 = vsub.s32 0, %v4381
  %v4383 = vrot.slane %v4378, %v4382
  %v4384 = vlaneseq
  %v4385 = vshrl.u32 %v4384, 7
  %v4386 = vsub.s32 1, %v4385
  %v4387 = vrot.slane %v4378, %v4386
  %v4390 = vadd.f32 %v4330, %v4383
  %v4391 = vadd.f32 %v4331, %v4387
  %v4392 = vadd.f32 %v4332, %v4383
  %v4393 = vadd.f32 %v4333, %v4387
  %v4394 = vadd.f32 %v4334, %v4383
  %v4395 = vadd.f32 %v4335, %v4387
  %v4396 = vadd.f32 %v4336, %v4383
  %v4397 = vadd.f32 %v4337, %v4387
  %v4398 = vadd.f32 %v4338, %v4383
  %v4399 = vadd.f32 %v4339, %v4387
  %v4400 = vadd.f32 %v4340, %v4383
  %v4401 = vadd.f32 %v4341, %v4387
  %v4402 = vadd.f32 %v4342, %v4383
  %v4403 = vadd.f32 %v4343, %v4387
  %v4404 = vadd.f32 %v4344, %v4383
  %v4405 = vadd.f32 %v4345, %v4387
  %v4406 = vadd.f32 %v4346, %v4383
  %v4407 = vadd.f32 %v4347, %v4387
  %v4408 = vadd.f32 %v4348, %v4383
  %v4409 = vadd.f32 %v4349, %v4387
  %v4410 = vadd.f32 %v4350, %v4383
  %v4411 = vadd.f32 %v4351, %v4387
  %v4412 = vadd.f32 %v4352, %v4383
  %v4413 = vadd.f32 %v4353, %v4387
  %v4414 = vadd.f32 %v4354, %v4383
  %v4415 = vadd.f32 %v4355, %v4387
  %v4416 = vadd.f32 %v4356, %v4383
  %v4417 = vadd.f32 %v4357, %v4387
  %v4418 = vadd.f32 %v4358, %v4383
  %v4419 = vadd.f32 %v4359, %v4387
  %v4420 = vadd.f32 %v4360, %v4383
  %v4421 = vadd.f32 %v4361, %v4387
  %v4422 = vadd.f32 %v4362, %v4383
  %v4423 = vadd.f32 %v4363, %v4387
  %v4424 = vadd.f32 %v4364, %v4383
  %v4425 = vadd.f32 %v4365, %v4387
  %v4426 = vadd.f32 %v4366, %v4383
  %v4427 = vadd.f32 %v4367, %v4387
  %v4428 = vadd.f32 %v4368, %v4383
  %v4429 = vadd.f32 %v4369, %v4387
  %v4430 = vadd.f32 %v4370, %v4383
  %v4431 = vadd.f32 %v4371, %v4387
  %v4432 = vadd.f32 %v4372, %v4383
  %v4433 = vadd.f32 %v4373, %v4387
  %v4434 = vadd.f32 %v4374, %v4383
  %v4435 = vadd.f32 %v4375, %v4387
  %v4436 = vadd.f32 %v4376, %v4383
  %v4437 = vadd.f32 %v4377, %v4387
  %v4438 = vmax.f32 %v4390, 0.0
  %v4439 = vmax.f32 %v4391, 0.0
  %v4440 = vmax.f32 %v4392, 0.0
  %v4441 = vmax.f32 %v4393, 0.0
  %v4442 = vmax.f32 %v4394, 0.0
  %v4443 = vmax.f32 %v4395, 0.0
  %v4444 = vmax.f32 %v4396, 0.0
  %v4445 = vmax.f32 %v4397, 0.0
  %v4446 = vmax.f32 %v4398, 0.0
  %v4447 = vmax.f32 %v4399, 0.0
  %v4448 = vmax.f32 %v4400, 0.0
  %v4449 = vmax.f32 %v4401, 0.0
  %v4450 = vmax.f32 %v4402, 0.0
  %v4451 = vmax.f32 %v4403, 0.0
  %v4452 = vmax.f32 %v4404, 0.0
  %v4453 = vmax.f32 %v4405, 0.0
  %v4454 = vmax.f32 %v4406, 0.0
  %v4455 = vmax.f32 %v4407, 0.0
  %v4456 = vmax.f32 %v4408, 0.0
  %v4457 = vmax.f32 %v4409, 0.0
  %v4458 = vmax.f32 %v4410, 0.0
  %v4459 = vmax.f32 %v4411, 0.0
  %v4460 = vmax.f32 %v4412, 0.0
  %v4461 = vmax.f32 %v4413, 0.0
  %v4462 = vmax.f32 %v4414, 0.0
  %v4463 = vmax.f32 %v4415, 0.0
  %v4464 = vmax.f32 %v4416, 0.0
  %v4465 = vmax.f32 %v4417, 0.0
  %v4466 = vmax.f32 %v4418, 0.0
  %v4467 = vmax.f32 %v4419, 0.0
  %v4468 = vmax.f32 %v4420, 0.0
  %v4469 = vmax.f32 %v4421, 0.0
  %v4470 = vmax.f32 %v4422, 0.0
  %v4471 = vmax.f32 %v4423, 0.0
  %v4472 = vmax.f32 %v4424, 0.0
  %v4473 = vmax.f32 %v4425, 0.0
  %v4474 = vmax.f32 %v4426, 0.0
  %v4475 = vmax.f32 %v4427, 0.0
  %v4476 = vmax.f32 %v4428, 0.0
  %v4477 = vmax.f32 %v4429, 0.0
  %v4478 = vmax.f32 %v4430, 0.0
  %v4479 = vmax.f32 %v4431, 0.0
  %v4480 = vmax.f32 %v4432, 0.0
  %v4481 = vmax.f32 %v4433, 0.0
  %v4482 = vmax.f32 %v4434, 0.0
  %v4483 = vmax.f32 %v4435, 0.0
  %v4484 = vmax.f32 %v4436, 0.0
  %v4485 = vmax.f32 %v4437, 0.0
  %v4486 = vpack.c.bf16 %v4440, %v4438
  %v4487 = vpack.c.bf16 %v4441, %v4439
  %v4488 = vpack.c.bf16 %v4444, %v4442
  %v4489 = vpack.c.bf16 %v4445, %v4443
  %v4490 = vpack.c.bf16 %v4448, %v4446
  %v4491 = vpack.c.bf16 %v4449, %v4447
  %v4492 = vpack.c.bf16 %v4452, %v4450
  %v4493 = vpack.c.bf16 %v4453, %v4451
  %v4494 = vpack.c.bf16 %v4456, %v4454
  %v4495 = vpack.c.bf16 %v4457, %v4455
  %v4496 = vpack.c.bf16 %v4460, %v4458
  %v4497 = vpack.c.bf16 %v4461, %v4459
  %v4498 = vpack.c.bf16 %v4464, %v4462
  %v4499 = vpack.c.bf16 %v4465, %v4463
  %v4500 = vpack.c.bf16 %v4468, %v4466
  %v4501 = vpack.c.bf16 %v4469, %v4467
  %v4502 = vpack.c.bf16 %v4472, %v4470
  %v4503 = vpack.c.bf16 %v4473, %v4471
  %v4504 = vpack.c.bf16 %v4476, %v4474
  %v4505 = vpack.c.bf16 %v4477, %v4475
  %v4506 = vpack.c.bf16 %v4480, %v4478
  %v4507 = vpack.c.bf16 %v4481, %v4479
  %v4508 = vpack.c.bf16 %v4484, %v4482
  %v4509 = vpack.c.bf16 %v4485, %v4483
  %v4510 = vld [vmem:[%s3] sm:$0xf]
  %v4511 = vld [vmem:[%s3 + $0x4] sm:$0xf]
  %v4512 = vld [vmem:[%s3 + $0x8] sm:$0xf]
  %v4513 = vld [vmem:[%s3 + $0xc] sm:$0xf]
  %v4514 = vld [vmem:[%s3 + $0x10] sm:$0xf]
  %v4515 = vld [vmem:[%s3 + $0x14] sm:$0xf]
  %v4516 = vld [vmem:[%s3 + $0x18] sm:$0xf]
  %v4517 = vld [vmem:[%s3 + $0x1c] sm:$0xf]
  %v4518 = vld [vmem:[%s3 + $0x20] sm:$0xf]
  %v4519 = vld [vmem:[%s3 + $0x24] sm:$0xf]
  %v4520 = vld [vmem:[%s3 + $0x28] sm:$0xf]
  %v4521 = vld [vmem:[%s3 + $0x2c] sm:$0xf]
  %v4522 = vld [vmem:[%s3 + $0x30] sm:$0xf]
  %v4523 = vld [vmem:[%s3 + $0x34] sm:$0xf]
  %v4524 = vld [vmem:[%s3 + $0x38] sm:$0xf]
  %v4525 = vld [vmem:[%s3 + $0x3c] sm:$0xf]
  %v4526 = vld [vmem:[%s3 + $0x40] sm:$0xf]
  %v4527 = vld [vmem:[%s3 + $0x44] sm:$0xf]
  %v4528 = vld [vmem:[%s3 + $0x48] sm:$0xf]
  %v4529 = vld [vmem:[%s3 + $0x4c] sm:$0xf]
  %v4530 = vld [vmem:[%s3 + $0x50] sm:$0xf]
  %v4531 = vld [vmem:[%s3 + $0x54] sm:$0xf]
  %v4532 = vld [vmem:[%s3 + $0x58] sm:$0xf]
  %v4533 = vld [vmem:[%s3 + $0x5c] sm:$0xf]
  %s4534 = scalar_lea.vmem %s3, 96
  %v4535 = vld [vmem:[%s4534] sm:$0xf]
  %v4536 = vld [vmem:[%s4534 + $0x4] sm:$0xf]
  %v4537 = vld [vmem:[%s4534 + $0x8] sm:$0xf]
  %v4538 = vld [vmem:[%s4534 + $0xc] sm:$0xf]
  %v4539 = vld [vmem:[%s4534 + $0x10] sm:$0xf]
  %v4540 = vld [vmem:[%s4534 + $0x14] sm:$0xf]
  %v4541 = vld [vmem:[%s4534 + $0x18] sm:$0xf]
  %v4542 = vld [vmem:[%s4534 + $0x1c] sm:$0xf]
  %v4543 = vld [vmem:[%s4534 + $0x20] sm:$0xf]
  %v4544 = vld [vmem:[%s4534 + $0x24] sm:$0xf]
  %v4545 = vld [vmem:[%s4534 + $0x28] sm:$0xf]
  %v4546 = vld [vmem:[%s4534 + $0x2c] sm:$0xf]
  %v4547 = vld [vmem:[%s4534 + $0x30] sm:$0xf]
  %v4548 = vld [vmem:[%s4534 + $0x34] sm:$0xf]
  %v4549 = vld [vmem:[%s4534 + $0x38] sm:$0xf]
  %v4550 = vld [vmem:[%s4534 + $0x3c] sm:$0xf]
  %v4551 = vld [vmem:[%s4534 + $0x40] sm:$0xf]
  %v4552 = vld [vmem:[%s4534 + $0x44] sm:$0xf]
  %v4553 = vld [vmem:[%s4534 + $0x48] sm:$0xf]
  %v4554 = vld [vmem:[%s4534 + $0x4c] sm:$0xf]
  %v4555 = vld [vmem:[%s4534 + $0x50] sm:$0xf]
  %v4556 = vld [vmem:[%s4534 + $0x54] sm:$0xf]
  %v4557 = vld [vmem:[%s4534 + $0x58] sm:$0xf]
  %v4558 = vld [vmem:[%s4534 + $0x5c] sm:$0xf]
  %v4583 = vunpack.c.l.b16 %v4535
  %v4584 = vunpack.c.l.b16 %v4536
  %v4585 = vunpack.c.l.b16 %v4537
  %v4586 = vunpack.c.l.b16 %v4538
  %v4587 = vunpack.c.l.b16 %v4539
  %v4588 = vunpack.c.l.b16 %v4540
  %v4589 = vunpack.c.l.b16 %v4541
  %v4590 = vunpack.c.l.b16 %v4542
  %v4591 = vunpack.c.l.b16 %v4543
  %v4592 = vunpack.c.l.b16 %v4544
  %v4593 = vunpack.c.l.b16 %v4545
  %v4594 = vunpack.c.l.b16 %v4546
  %v4595 = vunpack.c.l.b16 %v4547
  %v4596 = vunpack.c.l.b16 %v4548
  %v4597 = vunpack.c.l.b16 %v4549
  %v4598 = vunpack.c.l.b16 %v4550
  %v4599 = vunpack.c.l.b16 %v4551
  %v4600 = vunpack.c.l.b16 %v4552
  %v4601 = vunpack.c.l.b16 %v4553
  %v4602 = vunpack.c.l.b16 %v4554
  %v4603 = vunpack.c.l.b16 %v4555
  %v4604 = vunpack.c.l.b16 %v4556
  %v4605 = vunpack.c.l.b16 %v4557
  %v4606 = vunpack.c.l.b16 %v4558
  %v4607 = vpack.c.b16 %v4584, %v4583
  %v4608 = vpack.c.b16 %v4586, %v4585
  %v4609 = vpack.c.b16 %v4588, %v4587
  %v4610 = vpack.c.b16 %v4590, %v4589
  %v4611 = vpack.c.b16 %v4592, %v4591
  %v4612 = vpack.c.b16 %v4594, %v4593
  %v4613 = vpack.c.b16 %v4596, %v4595
  %v4614 = vpack.c.b16 %v4598, %v4597
  %v4615 = vpack.c.b16 %v4600, %v4599
  %v4616 = vpack.c.b16 %v4602, %v4601
  %v4617 = vpack.c.b16 %v4604, %v4603
  %v4618 = vpack.c.b16 %v4606, %v4605
  %vm4631 = vcmask 523264
  %v4633 = vsel %vm4631, %v4489, 0
  %v4636 = vsel %vm4631, %v4493, 0
  %v4639 = vsel %vm4631, %v4497, 0
  %v4642 = vsel %vm4631, %v4501, 0
  %v4645 = vsel %vm4631, %v4505, 0
  %4647 = vmatprep.subr.bf16.mxu0 0
  %4648 = vmatpush1.bf16.msra.mxu0 %v4607
  %4649 = vmatprep.subr.bf16.mxu0 0
  %4650 = vmatpush1.bf16.msra.mxu0 %v4608
  %4651 = vmatprep.subr.bf16.mxu0 0
  %4652 = vmatpush1.bf16.msra.mxu0 %v4609
  %4653 = vmatprep.subr.bf16.mxu0 0
  %4654 = vmatpush1.bf16.msra.mxu0 %v4610
  %4655 = vmatprep.subr.bf16.mxu0 0
  %4656 = vmatpush1.bf16.msra.mxu0 %v4611
  %4657 = vmatprep.subr.bf16.mxu0 0
  %4658 = vmatpush1.bf16.msra.mxu0 %v4612
  %4659 = vmatprep.subr.bf16.mxu0 0
  %4660 = vmatpush1.bf16.msra.mxu0 %v4613
  %4661 = vmatprep.subr.bf16.mxu0 0
  %4662 = vmatpush1.bf16.msra.mxu0 %v4614
  %4663 = vmatprep.subr.bf16.mxu0 0
  %4664 = vmatpush1.bf16.msra.mxu0 %v4615
  %4665 = vmatprep.subr.bf16.mxu0 0
  %4666 = vmatpush1.bf16.msra.mxu0 %v4616
  %4667 = vmatprep.subr.bf16.mxu0 0
  %4668 = vmatpush1.bf16.msra.mxu0 %v4617
  %4669 = vmatprep.subr.bf16.mxu0 0
  %4670 = vmatpush1.bf16.msra.mxu0 %v4618
  %4671 = vmatprep.subr.bf16.mxu0 0
  %4672 = vmatpush1.bf16.msra.mxu0 0
  %4673 = vmatprep.subr.bf16.mxu0 0
  %4674 = vmatpush1.bf16.msra.mxu0 0
  %4675 = vmatprep.subr.bf16.mxu0 0
  %4676 = vmatpush1.bf16.msra.mxu0 0
  %4677 = vmatprep.subr.bf16.mxu0 0
  %4678 = vmatpush1.bf16.msra.mxu0 0
  %4679 = vmatprep.mubr.bf16.mxu0 %v4633
  %4680 = vmatmul.mubr.bf16.gmra.mrb[0].mxu0 %v4488
  %v4681 = vpop.f32.mrb[0].mxu0
  %v4682 = vadd.f32 0.0, %v4681
  %v4683 = vpop.f32.mrb[0].mxu0
  %v4684 = vpop.f32.mrb[0].mxu0
  %v4685 = vadd.f32 0.0, %v4684
  %v4686 = vpop.f32.mrb[0].mxu0
  %4687 = vmatprep.mubr.bf16.mxu0 %v4636
  %4688 = vmatmul.mubr.bf16.gmra.mrb[0].mxu0 %v4492
  %v4689 = vpop.f32.mrb[0].mxu0
  %v4690 = vadd.f32 0.0, %v4689
  %v4691 = vpop.f32.mrb[0].mxu0
  %v4692 = vpop.f32.mrb[0].mxu0
  %v4693 = vadd.f32 0.0, %v4692
  %v4694 = vpop.f32.mrb[0].mxu0
  %4695 = vmatprep.mubr.bf16.mxu0 %v4639
  %4696 = vmatmul.mubr.bf16.gmra.mrb[0].mxu0 %v4496
  %v4697 = vpop.f32.mrb[0].mxu0
  %v4698 = vadd.f32 0.0, %v4697
  %v4699 = vpop.f32.mrb[0].mxu0
  %v4700 = vpop.f32.mrb[0].mxu0
  %v4701 = vadd.f32 0.0, %v4700
  %v4702 = vpop.f32.mrb[0].mxu0
  %4703 = vmatprep.mubr.bf16.mxu0 %v4642
  %4704 = vmatmul.mubr.bf16.gmra.mrb[0].mxu0 %v4500
  %v4705 = vpop.f32.mrb[0].mxu0
  %v4706 = vadd.f32 0.0, %v4705
  %v4707 = vpop.f32.mrb[0].mxu0
  %v4708 = vpop.f32.mrb[0].mxu0
  %v4709 = vadd.f32 0.0, %v4708
  %v4710 = vpop.f32.mrb[0].mxu0
  %4711 = vmatprep.mubr.bf16.mxu0 %v4645
  %4712 = vmatmul.mubr.bf16.gmra.mrb[0].mxu0 %v4504
  %v4713 = vpop.f32.mrb[0].mxu0
  %v4714 = vadd.f32 0.0, %v4713
  %v4715 = vpop.f32.mrb[0].mxu0
  %v4716 = vpop.f32.mrb[0].mxu0
  %v4717 = vadd.f32 0.0, %v4716
  %v4718 = vpop.f32.mrb[0].mxu0
  %4719 = vdwg.mxu0
  %v4744 = vunpack.c.l.b16 %v4510
  %v4745 = vunpack.c.l.b16 %v4511
  %v4746 = vunpack.c.l.b16 %v4512
  %v4747 = vunpack.c.l.b16 %v4513
  %v4748 = vunpack.c.l.b16 %v4514
  %v4749 = vunpack.c.l.b16 %v4515
  %v4750 = vunpack.c.l.b16 %v4516
  %v4751 = vunpack.c.l.b16 %v4517
  %v4752 = vunpack.c.l.b16 %v4518
  %v4753 = vunpack.c.l.b16 %v4519
  %v4754 = vunpack.c.l.b16 %v4520
  %v4755 = vunpack.c.l.b16 %v4521
  %v4756 = vunpack.c.l.b16 %v4522
  %v4757 = vunpack.c.l.b16 %v4523
  %v4758 = vunpack.c.l.b16 %v4524
  %v4759 = vunpack.c.l.b16 %v4525
  %v4760 = vunpack.c.l.b16 %v4526
  %v4761 = vunpack.c.l.b16 %v4527
  %v4762 = vunpack.c.l.b16 %v4528
  %v4763 = vunpack.c.l.b16 %v4529
  %v4764 = vunpack.c.l.b16 %v4530
  %v4765 = vunpack.c.l.b16 %v4531
  %v4766 = vunpack.c.l.b16 %v4532
  %v4767 = vunpack.c.l.b16 %v4533
  %v4768 = vpack.c.b16 %v4745, %v4744
  %v4769 = vpack.c.b16 %v4747, %v4746
  %v4770 = vpack.c.b16 %v4749, %v4748
  %v4771 = vpack.c.b16 %v4751, %v4750
  %v4772 = vpack.c.b16 %v4753, %v4752
  %v4773 = vpack.c.b16 %v4755, %v4754
  %v4774 = vpack.c.b16 %v4757, %v4756
  %v4775 = vpack.c.b16 %v4759, %v4758
  %v4776 = vpack.c.b16 %v4761, %v4760
  %v4777 = vpack.c.b16 %v4763, %v4762
  %v4778 = vpack.c.b16 %v4765, %v4764
  %v4779 = vpack.c.b16 %v4767, %v4766
  %v4793 = vsel %vm4631, %v4487, 0
  %v4796 = vsel %vm4631, %v4491, 0
  %v4799 = vsel %vm4631, %v4495, 0
  %v4802 = vsel %vm4631, %v4499, 0
  %v4805 = vsel %vm4631, %v4503, 0
  %4807 = vmatprep.subr.bf16.mxu0 0
  %4808 = vmatpush1.bf16.msra.mxu0 %v4768
  %4809 = vmatprep.subr.bf16.mxu0 0
  %4810 = vmatpush1.bf16.msra.mxu0 %v4769
  %4811 = vmatprep.subr.bf16.mxu0 0
  %4812 = vmatpush1.bf16.msra.mxu0 %v4770
  %4813 = vmatprep.subr.bf16.mxu0 0
  %4814 = vmatpush1.bf16.msra.mxu0 %v4771
  %4815 = vmatprep.subr.bf16.mxu0 0
  %4816 = vmatpush1.bf16.msra.mxu0 %v4772
  %4817 = vmatprep.subr.bf16.mxu0 0
  %4818 = vmatpush1.bf16.msra.mxu0 %v4773
  %4819 = vmatprep.subr.bf16.mxu0 0
  %4820 = vmatpush1.bf16.msra.mxu0 %v4774
  %4821 = vmatprep.subr.bf16.mxu0 0
  %4822 = vmatpush1.bf16.msra.mxu0 %v4775
  %4823 = vmatprep.subr.bf16.mxu0 0
  %4824 = vmatpush1.bf16.msra.mxu0 %v4776
  %4825 = vmatprep.subr.bf16.mxu0 0
  %4826 = vmatpush1.bf16.msra.mxu0 %v4777
  %4827 = vmatprep.subr.bf16.mxu0 0
  %4828 = vmatpush1.bf16.msra.mxu0 %v4778
  %4829 = vmatprep.subr.bf16.mxu0 0
  %4830 = vmatpush1.bf16.msra.mxu0 %v4779
  %4831 = vmatprep.subr.bf16.mxu0 0
  %4832 = vmatpush1.bf16.msra.mxu0 0
  %4833 = vmatprep.subr.bf16.mxu0 0
  %4834 = vmatpush1.bf16.msra.mxu0 0
  %4835 = vmatprep.subr.bf16.mxu0 0
  %4836 = vmatpush1.bf16.msra.mxu0 0
  %4837 = vmatprep.subr.bf16.mxu0 0
  %4838 = vmatpush1.bf16.msra.mxu0 0
  %4839 = vmatprep.mubr.bf16.mxu0 %v4793
  %4840 = vmatmul.mubr.bf16.gmra.mrb[0].mxu0 %v4486
  %v4841 = vpop.f32.mrb[0].mxu0
  %v4842 = vadd.f32 %v4682, %v4841
  %v4843 = vpop.f32.mrb[0].mxu0
  %v4844 = vpop.f32.mrb[0].mxu0
  %v4845 = vadd.f32 %v4685, %v4844
  %v4846 = vpop.f32.mrb[0].mxu0
  %4847 = vmatprep.mubr.bf16.mxu0 %v4796
  %4848 = vmatmul.mubr.bf16.gmra.mrb[0].mxu0 %v4490
  %v4849 = vpop.f32.mrb[0].mxu0
  %v4850 = vadd.f32 %v4690, %v4849
  %v4851 = vpop.f32.mrb[0].mxu0
  %v4852 = vpop.f32.mrb[0].mxu0
  %v4853 = vadd.f32 %v4693, %v4852
  %v4854 = vpop.f32.mrb[0].mxu0
  %4855 = vmatprep.mubr.bf16.mxu0 %v4799
  %4856 = vmatmul.mubr.bf16.gmra.mrb[0].mxu0 %v4494
  %v4857 = vpop.f32.mrb[0].mxu0
  %v4858 = vadd.f32 %v4698, %v4857
  %v4859 = vpop.f32.mrb[0].mxu0
  %v4860 = vpop.f32.mrb[0].mxu0
  %v4861 = vadd.f32 %v4701, %v4860
  %v4862 = vpop.f32.mrb[0].mxu0
  %4863 = vmatprep.mubr.bf16.mxu0 %v4802
  %4864 = vmatmul.mubr.bf16.gmra.mrb[0].mxu0 %v4498
  %v4865 = vpop.f32.mrb[0].mxu0
  %v4866 = vadd.f32 %v4706, %v4865
  %v4867 = vpop.f32.mrb[0].mxu0
  %v4868 = vpop.f32.mrb[0].mxu0
  %v4869 = vadd.f32 %v4709, %v4868
  %v4870 = vpop.f32.mrb[0].mxu0
  %4871 = vmatprep.mubr.bf16.mxu0 %v4805
  %4872 = vmatmul.mubr.bf16.gmra.mrb[0].mxu0 %v4502
  %v4873 = vpop.f32.mrb[0].mxu0
  %v4874 = vadd.f32 %v4714, %v4873
  %v4875 = vpop.f32.mrb[0].mxu0
  %v4876 = vpop.f32.mrb[0].mxu0
  %v4877 = vadd.f32 %v4717, %v4876
  %v4878 = vpop.f32.mrb[0].mxu0
  %4879 = vdwg.mxu0
  %s4880 = scalar_lea.vmem %s3, 192
  %v4881 = vld [vmem:[%s4880] sm:$0xf]
  %v4882 = vld [vmem:[%s4880 + $0x4] sm:$0xf]
  %v4883 = vld [vmem:[%s4880 + $0x8] sm:$0xf]
  %v4884 = vld [vmem:[%s4880 + $0xc] sm:$0xf]
  %v4885 = vld [vmem:[%s4880 + $0x10] sm:$0xf]
  %v4886 = vld [vmem:[%s4880 + $0x14] sm:$0xf]
  %v4887 = vld [vmem:[%s4880 + $0x18] sm:$0xf]
  %v4888 = vld [vmem:[%s4880 + $0x1c] sm:$0xf]
  %v4889 = vld [vmem:[%s4880 + $0x20] sm:$0xf]
  %v4890 = vld [vmem:[%s4880 + $0x24] sm:$0xf]
  %v4891 = vld [vmem:[%s4880 + $0x28] sm:$0xf]
  %v4892 = vld [vmem:[%s4880 + $0x2c] sm:$0xf]
  %v4893 = vld [vmem:[%s4880 + $0x30] sm:$0xf]
  %v4894 = vld [vmem:[%s4880 + $0x34] sm:$0xf]
  %v4895 = vld [vmem:[%s4880 + $0x38] sm:$0xf]
  %v4896 = vld [vmem:[%s4880 + $0x3c] sm:$0xf]
  %v4897 = vld [vmem:[%s4880 + $0x40] sm:$0xf]
  %v4898 = vld [vmem:[%s4880 + $0x44] sm:$0xf]
  %v4899 = vld [vmem:[%s4880 + $0x48] sm:$0xf]
  %v4900 = vld [vmem:[%s4880 + $0x4c] sm:$0xf]
  %v4901 = vld [vmem:[%s4880 + $0x50] sm:$0xf]
  %v4902 = vld [vmem:[%s4880 + $0x54] sm:$0xf]
  %v4903 = vld [vmem:[%s4880 + $0x58] sm:$0xf]
  %v4904 = vld [vmem:[%s4880 + $0x5c] sm:$0xf]
  %v4929 = vunpack.c.l.b16 %v4881
  %v4930 = vunpack.c.l.b16 %v4882
  %v4931 = vunpack.c.l.b16 %v4883
  %v4932 = vunpack.c.l.b16 %v4884
  %v4933 = vunpack.c.l.b16 %v4885
  %v4934 = vunpack.c.l.b16 %v4886
  %v4935 = vunpack.c.l.b16 %v4887
  %v4936 = vunpack.c.l.b16 %v4888
  %v4937 = vunpack.c.l.b16 %v4889
  %v4938 = vunpack.c.l.b16 %v4890
  %v4939 = vunpack.c.l.b16 %v4891
  %v4940 = vunpack.c.l.b16 %v4892
  %v4941 = vunpack.c.l.b16 %v4893
  %v4942 = vunpack.c.l.b16 %v4894
  %v4943 = vunpack.c.l.b16 %v4895
  %v4944 = vunpack.c.l.b16 %v4896
  %v4945 = vunpack.c.l.b16 %v4897
  %v4946 = vunpack.c.l.b16 %v4898
  %v4947 = vunpack.c.l.b16 %v4899
  %v4948 = vunpack.c.l.b16 %v4900
  %v4949 = vunpack.c.l.b16 %v4901
  %v4950 = vunpack.c.l.b16 %v4902
  %v4951 = vunpack.c.l.b16 %v4903
  %v4952 = vunpack.c.l.b16 %v4904
  %v4953 = vpack.c.b16 %v4930, %v4929
  %v4954 = vpack.c.b16 %v4932, %v4931
  %v4955 = vpack.c.b16 %v4934, %v4933
  %v4956 = vpack.c.b16 %v4936, %v4935
  %v4957 = vpack.c.b16 %v4938, %v4937
  %v4958 = vpack.c.b16 %v4940, %v4939
  %v4959 = vpack.c.b16 %v4942, %v4941
  %v4960 = vpack.c.b16 %v4944, %v4943
  %v4961 = vpack.c.b16 %v4946, %v4945
  %v4962 = vpack.c.b16 %v4948, %v4947
  %v4963 = vpack.c.b16 %v4950, %v4949
  %v4964 = vpack.c.b16 %v4952, %v4951
  %v4978 = vsel %vm4631, %v4507, 0
  %4980 = vmatprep.subr.bf16.mxu0 0
  %4981 = vmatpush1.bf16.msra.mxu0 %v4953
  %4982 = vmatprep.subr.bf16.mxu0 0
  %4983 = vmatpush1.bf16.msra.mxu0 %v4954
  %4984 = vmatprep.subr.bf16.mxu0 0
  %4985 = vmatpush1.bf16.msra.mxu0 %v4955
  %4986 = vmatprep.subr.bf16.mxu0 0
  %4987 = vmatpush1.bf16.msra.mxu0 %v4956
  %4988 = vmatprep.subr.bf16.mxu0 0
  %4989 = vmatpush1.bf16.msra.mxu0 %v4957
  %4990 = vmatprep.subr.bf16.mxu0 0
  %4991 = vmatpush1.bf16.msra.mxu0 %v4958
  %4992 = vmatprep.subr.bf16.mxu0 0
  %4993 = vmatpush1.bf16.msra.mxu0 %v4959
  %4994 = vmatprep.subr.bf16.mxu0 0
  %4995 = vmatpush1.bf16.msra.mxu0 %v4960
  %4996 = vmatprep.subr.bf16.mxu0 0
  %4997 = vmatpush1.bf16.msra.mxu0 %v4961
  %4998 = vmatprep.subr.bf16.mxu0 0
  %4999 = vmatpush1.bf16.msra.mxu0 %v4962
  %5000 = vmatprep.subr.bf16.mxu0 0
  %5001 = vmatpush1.bf16.msra.mxu0 %v4963
  %5002 = vmatprep.subr.bf16.mxu0 0
  %5003 = vmatpush1.bf16.msra.mxu0 %v4964
  %5004 = vmatprep.subr.bf16.mxu0 0
  %5005 = vmatpush1.bf16.msra.mxu0 0
  %5006 = vmatprep.subr.bf16.mxu0 0
  %5007 = vmatpush1.bf16.msra.mxu0 0
  %5008 = vmatprep.subr.bf16.mxu0 0
  %5009 = vmatpush1.bf16.msra.mxu0 0
  %5010 = vmatprep.subr.bf16.mxu0 0
  %5011 = vmatpush1.bf16.msra.mxu0 0
  %5012 = vmatprep.mubr.bf16.mxu0 %v4796
  %5013 = vmatmul.mubr.bf16.gmra.mrb[0].mxu0 %v4490
  %v5014 = vpop.f32.mrb[0].mxu0
  %v5015 = vadd.f32 0.0, %v5014
  %v5016 = vpop.f32.mrb[0].mxu0
  %v5017 = vpop.f32.mrb[0].mxu0
  %v5018 = vadd.f32 0.0, %v5017
  %v5019 = vpop.f32.mrb[0].mxu0
  %5020 = vmatprep.mubr.bf16.mxu0 %v4799
  %5021 = vmatmul.mubr.bf16.gmra.mrb[0].mxu0 %v4494
  %v5022 = vpop.f32.mrb[0].mxu0
  %v5023 = vadd.f32 0.0, %v5022
  %v5024 = vpop.f32.mrb[0].mxu0
  %v5025 = vpop.f32.mrb[0].mxu0
  %v5026 = vadd.f32 0.0, %v5025
  %v5027 = vpop.f32.mrb[0].mxu0
  %5028 = vmatprep.mubr.bf16.mxu0 %v4802
  %5029 = vmatmul.mubr.bf16.gmra.mrb[0].mxu0 %v4498
  %v5030 = vpop.f32.mrb[0].mxu0
  %v5031 = vadd.f32 0.0, %v5030
  %v5032 = vpop.f32.mrb[0].mxu0
  %v5033 = vpop.f32.mrb[0].mxu0
  %v5034 = vadd.f32 0.0, %v5033
  %v5035 = vpop.f32.mrb[0].mxu0
  %5036 = vmatprep.mubr.bf16.mxu0 %v4805
  %5037 = vmatmul.mubr.bf16.gmra.mrb[0].mxu0 %v4502
  %v5038 = vpop.f32.mrb[0].mxu0
  %v5039 = vadd.f32 0.0, %v5038
  %v5040 = vpop.f32.mrb[0].mxu0
  %v5041 = vpop.f32.mrb[0].mxu0
  %v5042 = vadd.f32 0.0, %v5041
  %v5043 = vpop.f32.mrb[0].mxu0
  %5044 = vmatprep.mubr.bf16.mxu0 %v4978
  %5045 = vmatmul.mubr.bf16.gmra.mrb[0].mxu0 %v4506
  %v5046 = vpop.f32.mrb[0].mxu0
  %v5047 = vadd.f32 0.0, %v5046
  %v5048 = vpop.f32.mrb[0].mxu0
  %v5049 = vpop.f32.mrb[0].mxu0
  %v5050 = vadd.f32 0.0, %v5049
  %v5051 = vpop.f32.mrb[0].mxu0
  %5052 = vdwg.mxu0
  %v5053 = vadd.f32 %v4842, %v5015
  %v5054 = vadd.f32 %v4845, %v5018
  %v5055 = vadd.f32 %v4850, %v5023
  %v5056 = vadd.f32 %v4853, %v5026
  %v5057 = vadd.f32 %v4858, %v5031
  %v5058 = vadd.f32 %v4861, %v5034
  %v5059 = vadd.f32 %v4866, %v5039
  %v5060 = vadd.f32 %v4869, %v5042
  %v5061 = vadd.f32 %v4874, %v5047
  %v5062 = vadd.f32 %v4877, %v5050
  %s5063 = scalar_lea.vmem %s3, 288
  %v5064 = vld [vmem:[%s5063] sm:$0xf]
  %v5065 = vld [vmem:[%s5063 + $0x4] sm:$0xf]
  %v5066 = vld [vmem:[%s5063 + $0x8] sm:$0xf]
  %v5067 = vld [vmem:[%s5063 + $0xc] sm:$0xf]
  %v5068 = vld [vmem:[%s5063 + $0x10] sm:$0xf]
  %v5069 = vld [vmem:[%s5063 + $0x14] sm:$0xf]
  %v5070 = vld [vmem:[%s5063 + $0x18] sm:$0xf]
  %v5071 = vld [vmem:[%s5063 + $0x1c] sm:$0xf]
  %v5072 = vld [vmem:[%s5063 + $0x20] sm:$0xf]
  %v5073 = vld [vmem:[%s5063 + $0x24] sm:$0xf]
  %v5074 = vld [vmem:[%s5063 + $0x28] sm:$0xf]
  %v5075 = vld [vmem:[%s5063 + $0x2c] sm:$0xf]
  %v5076 = vld [vmem:[%s5063 + $0x30] sm:$0xf]
  %v5077 = vld [vmem:[%s5063 + $0x34] sm:$0xf]
  %v5078 = vld [vmem:[%s5063 + $0x38] sm:$0xf]
  %v5079 = vld [vmem:[%s5063 + $0x3c] sm:$0xf]
  %v5080 = vld [vmem:[%s5063 + $0x40] sm:$0xf]
  %v5081 = vld [vmem:[%s5063 + $0x44] sm:$0xf]
  %v5082 = vld [vmem:[%s5063 + $0x48] sm:$0xf]
  %v5083 = vld [vmem:[%s5063 + $0x4c] sm:$0xf]
  %v5084 = vld [vmem:[%s5063 + $0x50] sm:$0xf]
  %v5085 = vld [vmem:[%s5063 + $0x54] sm:$0xf]
  %v5086 = vld [vmem:[%s5063 + $0x58] sm:$0xf]
  %v5087 = vld [vmem:[%s5063 + $0x5c] sm:$0xf]
  %s5088 = scalar_lea.vmem %s3, 384
  %v5089 = vld [vmem:[%s5088] sm:$0xf]
  %v5090 = vld [vmem:[%s5088 + $0x4] sm:$0xf]
  %v5091 = vld [vmem:[%s5088 + $0x8] sm:$0xf]
  %v5092 = vld [vmem:[%s5088 + $0xc] sm:$0xf]
  %v5093 = vld [vmem:[%s5088 + $0x10] sm:$0xf]
  %v5094 = vld [vmem:[%s5088 + $0x14] sm:$0xf]
  %v5095 = vld [vmem:[%s5088 + $0x18] sm:$0xf]
  %v5096 = vld [vmem:[%s5088 + $0x1c] sm:$0xf]
  %v5097 = vld [vmem:[%s5088 + $0x20] sm:$0xf]
  %v5098 = vld [vmem:[%s5088 + $0x24] sm:$0xf]
  %v5099 = vld [vmem:[%s5088 + $0x28] sm:$0xf]
  %v5100 = vld [vmem:[%s5088 + $0x2c] sm:$0xf]
  %v5101 = vld [vmem:[%s5088 + $0x30] sm:$0xf]
  %v5102 = vld [vmem:[%s5088 + $0x34] sm:$0xf]
  %v5103 = vld [vmem:[%s5088 + $0x38] sm:$0xf]
  %v5104 = vld [vmem:[%s5088 + $0x3c] sm:$0xf]
  %v5105 = vld [vmem:[%s5088 + $0x40] sm:$0xf]
  %v5106 = vld [vmem:[%s5088 + $0x44] sm:$0xf]
  %v5107 = vld [vmem:[%s5088 + $0x48] sm:$0xf]
  %v5108 = vld [vmem:[%s5088 + $0x4c] sm:$0xf]
  %v5109 = vld [vmem:[%s5088 + $0x50] sm:$0xf]
  %v5110 = vld [vmem:[%s5088 + $0x54] sm:$0xf]
  %v5111 = vld [vmem:[%s5088 + $0x58] sm:$0xf]
  %v5112 = vld [vmem:[%s5088 + $0x5c] sm:$0xf]
  %v5137 = vunpack.c.l.b16 %v5089
  %v5138 = vunpack.c.l.b16 %v5090
  %v5139 = vunpack.c.l.b16 %v5091
  %v5140 = vunpack.c.l.b16 %v5092
  %v5141 = vunpack.c.l.b16 %v5093
  %v5142 = vunpack.c.l.b16 %v5094
  %v5143 = vunpack.c.l.b16 %v5095
  %v5144 = vunpack.c.l.b16 %v5096
  %v5145 = vunpack.c.l.b16 %v5097
  %v5146 = vunpack.c.l.b16 %v5098
  %v5147 = vunpack.c.l.b16 %v5099
  %v5148 = vunpack.c.l.b16 %v5100
  %v5149 = vunpack.c.l.b16 %v5101
  %v5150 = vunpack.c.l.b16 %v5102
  %v5151 = vunpack.c.l.b16 %v5103
  %v5152 = vunpack.c.l.b16 %v5104
  %v5153 = vunpack.c.l.b16 %v5105
  %v5154 = vunpack.c.l.b16 %v5106
  %v5155 = vunpack.c.l.b16 %v5107
  %v5156 = vunpack.c.l.b16 %v5108
  %v5157 = vunpack.c.l.b16 %v5109
  %v5158 = vunpack.c.l.b16 %v5110
  %v5159 = vunpack.c.l.b16 %v5111
  %v5160 = vunpack.c.l.b16 %v5112
  %v5161 = vpack.c.b16 %v5138, %v5137
  %v5162 = vpack.c.b16 %v5140, %v5139
  %v5163 = vpack.c.b16 %v5142, %v5141
  %v5164 = vpack.c.b16 %v5144, %v5143
  %v5165 = vpack.c.b16 %v5146, %v5145
  %v5166 = vpack.c.b16 %v5148, %v5147
  %v5167 = vpack.c.b16 %v5150, %v5149
  %v5168 = vpack.c.b16 %v5152, %v5151
  %v5169 = vpack.c.b16 %v5154, %v5153
  %v5170 = vpack.c.b16 %v5156, %v5155
  %v5171 = vpack.c.b16 %v5158, %v5157
  %v5172 = vpack.c.b16 %v5160, %v5159
  %5185 = vmatprep.subr.bf16.mxu0 0
  %5186 = vmatpush1.bf16.msra.mxu0 %v5161
  %5187 = vmatprep.subr.bf16.mxu0 0
  %5188 = vmatpush1.bf16.msra.mxu0 %v5162
  %5189 = vmatprep.subr.bf16.mxu0 0
  %5190 = vmatpush1.bf16.msra.mxu0 %v5163
  %5191 = vmatprep.subr.bf16.mxu0 0
  %5192 = vmatpush1.bf16.msra.mxu0 %v5164
  %5193 = vmatprep.subr.bf16.mxu0 0
  %5194 = vmatpush1.bf16.msra.mxu0 %v5165
  %5195 = vmatprep.subr.bf16.mxu0 0
  %5196 = vmatpush1.bf16.msra.mxu0 %v5166
  %5197 = vmatprep.subr.bf16.mxu0 0
  %5198 = vmatpush1.bf16.msra.mxu0 %v5167
  %5199 = vmatprep.subr.bf16.mxu0 0
  %5200 = vmatpush1.bf16.msra.mxu0 %v5168
  %5201 = vmatprep.subr.bf16.mxu0 0
  %5202 = vmatpush1.bf16.msra.mxu0 %v5169
  %5203 = vmatprep.subr.bf16.mxu0 0
  %5204 = vmatpush1.bf16.msra.mxu0 %v5170
  %5205 = vmatprep.subr.bf16.mxu0 0
  %5206 = vmatpush1.bf16.msra.mxu0 %v5171
  %5207 = vmatprep.subr.bf16.mxu0 0
  %5208 = vmatpush1.bf16.msra.mxu0 %v5172
  %5209 = vmatprep.subr.bf16.mxu0 0
  %5210 = vmatpush1.bf16.msra.mxu0 0
  %5211 = vmatprep.subr.bf16.mxu0 0
  %5212 = vmatpush1.bf16.msra.mxu0 0
  %5213 = vmatprep.subr.bf16.mxu0 0
  %5214 = vmatpush1.bf16.msra.mxu0 0
  %5215 = vmatprep.subr.bf16.mxu0 0
  %5216 = vmatpush1.bf16.msra.mxu0 0
  %5217 = vmatprep.mubr.bf16.mxu0 %v4633
  %5218 = vmatmul.mubr.bf16.gmra.mrb[0].mxu0 %v4488
  %v5219 = vpop.f32.mrb[0].mxu0
  %v5220 = vadd.f32 0.0, %v5219
  %v5221 = vpop.f32.mrb[0].mxu0
  %v5222 = vpop.f32.mrb[0].mxu0
  %v5223 = vadd.f32 0.0, %v5222
  %v5224 = vpop.f32.mrb[0].mxu0
  %5225 = vmatprep.mubr.bf16.mxu0 %v4636
  %5226 = vmatmul.mubr.bf16.gmra.mrb[0].mxu0 %v4492
  %v5227 = vpop.f32.mrb[0].mxu0
  %v5228 = vadd.f32 0.0, %v5227
  %v5229 = vpop.f32.mrb[0].mxu0
  %v5230 = vpop.f32.mrb[0].mxu0
  %v5231 = vadd.f32 0.0, %v5230
  %v5232 = vpop.f32.mrb[0].mxu0
  %5233 = vmatprep.mubr.bf16.mxu0 %v4639
  %5234 = vmatmul.mubr.bf16.gmra.mrb[0].mxu0 %v4496
  %v5235 = vpop.f32.mrb[0].mxu0
  %v5236 = vadd.f32 0.0, %v5235
  %v5237 = vpop.f32.mrb[0].mxu0
  %v5238 = vpop.f32.mrb[0].mxu0
  %v5239 = vadd.f32 0.0, %v5238
  %v5240 = vpop.f32.mrb[0].mxu0
  %5241 = vmatprep.mubr.bf16.mxu0 %v4642
  %5242 = vmatmul.mubr.bf16.gmra.mrb[0].mxu0 %v4500
  %v5243 = vpop.f32.mrb[0].mxu0
  %v5244 = vadd.f32 0.0, %v5243
  %v5245 = vpop.f32.mrb[0].mxu0
  %v5246 = vpop.f32.mrb[0].mxu0
  %v5247 = vadd.f32 0.0, %v5246
  %v5248 = vpop.f32.mrb[0].mxu0
  %5249 = vmatprep.mubr.bf16.mxu0 %v4645
  %5250 = vmatmul.mubr.bf16.gmra.mrb[0].mxu0 %v4504
  %v5251 = vpop.f32.mrb[0].mxu0
  %v5252 = vadd.f32 0.0, %v5251
  %v5253 = vpop.f32.mrb[0].mxu0
  %v5254 = vpop.f32.mrb[0].mxu0
  %v5255 = vadd.f32 0.0, %v5254
  %v5256 = vpop.f32.mrb[0].mxu0
  %5257 = vdwg.mxu0
  %v5282 = vunpack.c.l.b16 %v5064
  %v5283 = vunpack.c.l.b16 %v5065
  %v5284 = vunpack.c.l.b16 %v5066
  %v5285 = vunpack.c.l.b16 %v5067
  %v5286 = vunpack.c.l.b16 %v5068
  %v5287 = vunpack.c.l.b16 %v5069
  %v5288 = vunpack.c.l.b16 %v5070
  %v5289 = vunpack.c.l.b16 %v5071
  %v5290 = vunpack.c.l.b16 %v5072
  %v5291 = vunpack.c.l.b16 %v5073
  %v5292 = vunpack.c.l.b16 %v5074
  %v5293 = vunpack.c.l.b16 %v5075
  %v5294 = vunpack.c.l.b16 %v5076
  %v5295 = vunpack.c.l.b16 %v5077
  %v5296 = vunpack.c.l.b16 %v5078
  %v5297 = vunpack.c.l.b16 %v5079
  %v5298 = vunpack.c.l.b16 %v5080
  %v5299 = vunpack.c.l.b16 %v5081
  %v5300 = vunpack.c.l.b16 %v5082
  %v5301 = vunpack.c.l.b16 %v5083
  %v5302 = vunpack.c.l.b16 %v5084
  %v5303 = vunpack.c.l.b16 %v5085
  %v5304 = vunpack.c.l.b16 %v5086
  %v5305 = vunpack.c.l.b16 %v5087
  %v5306 = vpack.c.b16 %v5283, %v5282
  %v5307 = vpack.c.b16 %v5285, %v5284
  %v5308 = vpack.c.b16 %v5287, %v5286
  %v5309 = vpack.c.b16 %v5289, %v5288
  %v5310 = vpack.c.b16 %v5291, %v5290
  %v5311 = vpack.c.b16 %v5293, %v5292
  %v5312 = vpack.c.b16 %v5295, %v5294
  %v5313 = vpack.c.b16 %v5297, %v5296
  %v5314 = vpack.c.b16 %v5299, %v5298
  %v5315 = vpack.c.b16 %v5301, %v5300
  %v5316 = vpack.c.b16 %v5303, %v5302
  %v5317 = vpack.c.b16 %v5305, %v5304
  %5330 = vmatprep.subr.bf16.mxu0 0
  %5331 = vmatpush1.bf16.msra.mxu0 %v5306
  %5332 = vmatprep.subr.bf16.mxu0 0
  %5333 = vmatpush1.bf16.msra.mxu0 %v5307
  %5334 = vmatprep.subr.bf16.mxu0 0
  %5335 = vmatpush1.bf16.msra.mxu0 %v5308
  %5336 = vmatprep.subr.bf16.mxu0 0
  %5337 = vmatpush1.bf16.msra.mxu0 %v5309
  %5338 = vmatprep.subr.bf16.mxu0 0
  %5339 = vmatpush1.bf16.msra.mxu0 %v5310
  %5340 = vmatprep.subr.bf16.mxu0 0
  %5341 = vmatpush1.bf16.msra.mxu0 %v5311
  %5342 = vmatprep.subr.bf16.mxu0 0
  %5343 = vmatpush1.bf16.msra.mxu0 %v5312
  %5344 = vmatprep.subr.bf16.mxu0 0
  %5345 = vmatpush1.bf16.msra.mxu0 %v5313
  %5346 = vmatprep.subr.bf16.mxu0 0
  %5347 = vmatpush1.bf16.msra.mxu0 %v5314
  %5348 = vmatprep.subr.bf16.mxu0 0
  %5349 = vmatpush1.bf16.msra.mxu0 %v5315
  %5350 = vmatprep.subr.bf16.mxu0 0
  %5351 = vmatpush1.bf16.msra.mxu0 %v5316
  %5352 = vmatprep.subr.bf16.mxu0 0
  %5353 = vmatpush1.bf16.msra.mxu0 %v5317
  %5354 = vmatprep.subr.bf16.mxu0 0
  %5355 = vmatpush1.bf16.msra.mxu0 0
  %5356 = vmatprep.subr.bf16.mxu0 0
  %5357 = vmatpush1.bf16.msra.mxu0 0
  %5358 = vmatprep.subr.bf16.mxu0 0
  %5359 = vmatpush1.bf16.msra.mxu0 0
  %5360 = vmatprep.subr.bf16.mxu0 0
  %5361 = vmatpush1.bf16.msra.mxu0 0
  %5362 = vmatprep.mubr.bf16.mxu0 %v4793
  %5363 = vmatmul.mubr.bf16.gmra.mrb[0].mxu0 %v4486
  %v5364 = vpop.f32.mrb[0].mxu0
  %v5365 = vadd.f32 %v5220, %v5364
  %v5366 = vpop.f32.mrb[0].mxu0
  %v5367 = vpop.f32.mrb[0].mxu0
  %v5368 = vadd.f32 %v5223, %v5367
  %v5369 = vpop.f32.mrb[0].mxu0
  %5370 = vmatprep.mubr.bf16.mxu0 %v4796
  %5371 = vmatmul.mubr.bf16.gmra.mrb[0].mxu0 %v4490
  %v5372 = vpop.f32.mrb[0].mxu0
  %v5373 = vadd.f32 %v5228, %v5372
  %v5374 = vpop.f32.mrb[0].mxu0
  %v5375 = vpop.f32.mrb[0].mxu0
  %v5376 = vadd.f32 %v5231, %v5375
  %v5377 = vpop.f32.mrb[0].mxu0
  %5378 = vmatprep.mubr.bf16.mxu0 %v4799
  %5379 = vmatmul.mubr.bf16.gmra.mrb[0].mxu0 %v4494
  %v5380 = vpop.f32.mrb[0].mxu0
  %v5381 = vadd.f32 %v5236, %v5380
  %v5382 = vpop.f32.mrb[0].mxu0
  %v5383 = vpop.f32.mrb[0].mxu0
  %v5384 = vadd.f32 %v5239, %v5383
  %v5385 = vpop.f32.mrb[0].mxu0
  %5386 = vmatprep.mubr.bf16.mxu0 %v4802
  %5387 = vmatmul.mubr.bf16.gmra.mrb[0].mxu0 %v4498
  %v5388 = vpop.f32.mrb[0].mxu0
  %v5389 = vadd.f32 %v5244, %v5388
  %v5390 = vpop.f32.mrb[0].mxu0
  %v5391 = vpop.f32.mrb[0].mxu0
  %v5392 = vadd.f32 %v5247, %v5391
  %v5393 = vpop.f32.mrb[0].mxu0
  %5394 = vmatprep.mubr.bf16.mxu0 %v4805
  %5395 = vmatmul.mubr.bf16.gmra.mrb[0].mxu0 %v4502
  %v5396 = vpop.f32.mrb[0].mxu0
  %v5397 = vadd.f32 %v5252, %v5396
  %v5398 = vpop.f32.mrb[0].mxu0
  %v5399 = vpop.f32.mrb[0].mxu0
  %v5400 = vadd.f32 %v5255, %v5399
  %v5401 = vpop.f32.mrb[0].mxu0
  %5402 = vdwg.mxu0
  %s5403 = scalar_lea.vmem %s3, 480
  %v5404 = vld [vmem:[%s5403] sm:$0xf]
  %v5405 = vld [vmem:[%s5403 + $0x4] sm:$0xf]
  %v5406 = vld [vmem:[%s5403 + $0x8] sm:$0xf]
  %v5407 = vld [vmem:[%s5403 + $0xc] sm:$0xf]
  %v5408 = vld [vmem:[%s5403 + $0x10] sm:$0xf]
  %v5409 = vld [vmem:[%s5403 + $0x14] sm:$0xf]
  %v5410 = vld [vmem:[%s5403 + $0x18] sm:$0xf]
  %v5411 = vld [vmem:[%s5403 + $0x1c] sm:$0xf]
  %v5412 = vld [vmem:[%s5403 + $0x20] sm:$0xf]
  %v5413 = vld [vmem:[%s5403 + $0x24] sm:$0xf]
  %v5414 = vld [vmem:[%s5403 + $0x28] sm:$0xf]
  %v5415 = vld [vmem:[%s5403 + $0x2c] sm:$0xf]
  %v5416 = vld [vmem:[%s5403 + $0x30] sm:$0xf]
  %v5417 = vld [vmem:[%s5403 + $0x34] sm:$0xf]
  %v5418 = vld [vmem:[%s5403 + $0x38] sm:$0xf]
  %v5419 = vld [vmem:[%s5403 + $0x3c] sm:$0xf]
  %v5420 = vld [vmem:[%s5403 + $0x40] sm:$0xf]
  %v5421 = vld [vmem:[%s5403 + $0x44] sm:$0xf]
  %v5422 = vld [vmem:[%s5403 + $0x48] sm:$0xf]
  %v5423 = vld [vmem:[%s5403 + $0x4c] sm:$0xf]
  %v5424 = vld [vmem:[%s5403 + $0x50] sm:$0xf]
  %v5425 = vld [vmem:[%s5403 + $0x54] sm:$0xf]
  %v5426 = vld [vmem:[%s5403 + $0x58] sm:$0xf]
  %v5427 = vld [vmem:[%s5403 + $0x5c] sm:$0xf]
  %v5452 = vunpack.c.l.b16 %v5404
  %v5453 = vunpack.c.l.b16 %v5405
  %v5454 = vunpack.c.l.b16 %v5406
  %v5455 = vunpack.c.l.b16 %v5407
  %v5456 = vunpack.c.l.b16 %v5408
  %v5457 = vunpack.c.l.b16 %v5409
  %v5458 = vunpack.c.l.b16 %v5410
  %v5459 = vunpack.c.l.b16 %v5411
  %v5460 = vunpack.c.l.b16 %v5412
  %v5461 = vunpack.c.l.b16 %v5413
  %v5462 = vunpack.c.l.b16 %v5414
  %v5463 = vunpack.c.l.b16 %v5415
  %v5464 = vunpack.c.l.b16 %v5416
  %v5465 = vunpack.c.l.b16 %v5417
  %v5466 = vunpack.c.l.b16 %v5418
  %v5467 = vunpack.c.l.b16 %v5419
  %v5468 = vunpack.c.l.b16 %v5420
  %v5469 = vunpack.c.l.b16 %v5421
  %v5470 = vunpack.c.l.b16 %v5422
  %v5471 = vunpack.c.l.b16 %v5423
  %v5472 = vunpack.c.l.b16 %v5424
  %v5473 = vunpack.c.l.b16 %v5425
  %v5474 = vunpack.c.l.b16 %v5426
  %v5475 = vunpack.c.l.b16 %v5427
  %v5476 = vpack.c.b16 %v5453, %v5452
  %v5477 = vpack.c.b16 %v5455, %v5454
  %v5478 = vpack.c.b16 %v5457, %v5456
  %v5479 = vpack.c.b16 %v5459, %v5458
  %v5480 = vpack.c.b16 %v5461, %v5460
  %v5481 = vpack.c.b16 %v5463, %v5462
  %v5482 = vpack.c.b16 %v5465, %v5464
  %v5483 = vpack.c.b16 %v5467, %v5466
  %v5484 = vpack.c.b16 %v5469, %v5468
  %v5485 = vpack.c.b16 %v5471, %v5470
  %v5486 = vpack.c.b16 %v5473, %v5472
  %v5487 = vpack.c.b16 %v5475, %v5474
  %5500 = vmatprep.subr.bf16.mxu0 0
  %5501 = vmatpush1.bf16.msra.mxu0 %v5476
  %5502 = vmatprep.subr.bf16.mxu0 0
  %5503 = vmatpush1.bf16.msra.mxu0 %v5477
  %5504 = vmatprep.subr.bf16.mxu0 0
  %5505 = vmatpush1.bf16.msra.mxu0 %v5478
  %5506 = vmatprep.subr.bf16.mxu0 0
  %5507 = vmatpush1.bf16.msra.mxu0 %v5479
  %5508 = vmatprep.subr.bf16.mxu0 0
  %5509 = vmatpush1.bf16.msra.mxu0 %v5480
  %5510 = vmatprep.subr.bf16.mxu0 0
  %5511 = vmatpush1.bf16.msra.mxu0 %v5481
  %5512 = vmatprep.subr.bf16.mxu0 0
  %5513 = vmatpush1.bf16.msra.mxu0 %v5482
  %5514 = vmatprep.subr.bf16.mxu0 0
  %5515 = vmatpush1.bf16.msra.mxu0 %v5483
  %5516 = vmatprep.subr.bf16.mxu0 0
  %5517 = vmatpush1.bf16.msra.mxu0 %v5484
  %5518 = vmatprep.subr.bf16.mxu0 0
  %5519 = vmatpush1.bf16.msra.mxu0 %v5485
  %5520 = vmatprep.subr.bf16.mxu0 0
  %5521 = vmatpush1.bf16.msra.mxu0 %v5486
  %5522 = vmatprep.subr.bf16.mxu0 0
  %5523 = vmatpush1.bf16.msra.mxu0 %v5487
  %5524 = vmatprep.subr.bf16.mxu0 0
  %5525 = vmatpush1.bf16.msra.mxu0 0
  %5526 = vmatprep.subr.bf16.mxu0 0
  %5527 = vmatpush1.bf16.msra.mxu0 0
  %5528 = vmatprep.subr.bf16.mxu0 0
  %5529 = vmatpush1.bf16.msra.mxu0 0
  %5530 = vmatprep.subr.bf16.mxu0 0
  %5531 = vmatpush1.bf16.msra.mxu0 0
  %5532 = vmatprep.mubr.bf16.mxu0 %v4796
  %5533 = vmatmul.mubr.bf16.gmra.mrb[0].mxu0 %v4490
  %v5534 = vpop.f32.mrb[0].mxu0
  %v5535 = vadd.f32 0.0, %v5534
  %v5536 = vpop.f32.mrb[0].mxu0
  %v5537 = vpop.f32.mrb[0].mxu0
  %v5538 = vadd.f32 0.0, %v5537
  %v5539 = vpop.f32.mrb[0].mxu0
  %5540 = vmatprep.mubr.bf16.mxu0 %v4799
  %5541 = vmatmul.mubr.bf16.gmra.mrb[0].mxu0 %v4494
  %v5542 = vpop.f32.mrb[0].mxu0
  %v5543 = vadd.f32 0.0, %v5542
  %v5544 = vpop.f32.mrb[0].mxu0
  %v5545 = vpop.f32.mrb[0].mxu0
  %v5546 = vadd.f32 0.0, %v5545
  %v5547 = vpop.f32.mrb[0].mxu0
  %5548 = vmatprep.mubr.bf16.mxu0 %v4802
  %5549 = vmatmul.mubr.bf16.gmra.mrb[0].mxu0 %v4498
  %v5550 = vpop.f32.mrb[0].mxu0
  %v5551 = vadd.f32 0.0, %v5550
  %v5552 = vpop.f32.mrb[0].mxu0
  %v5553 = vpop.f32.mrb[0].mxu0
  %v5554 = vadd.f32 0.0, %v5553
  %v5555 = vpop.f32.mrb[0].mxu0
  %5556 = vmatprep.mubr.bf16.mxu0 %v4805
  %5557 = vmatmul.mubr.bf16.gmra.mrb[0].mxu0 %v4502
  %v5558 = vpop.f32.mrb[0].mxu0
  %v5559 = vadd.f32 0.0, %v5558
  %v5560 = vpop.f32.mrb[0].mxu0
  %v5561 = vpop.f32.mrb[0].mxu0
  %v5562 = vadd.f32 0.0, %v5561
  %v5563 = vpop.f32.mrb[0].mxu0
  %5564 = vmatprep.mubr.bf16.mxu0 %v4978
  %5565 = vmatmul.mubr.bf16.gmra.mrb[0].mxu0 %v4506
  %v5566 = vpop.f32.mrb[0].mxu0
  %v5567 = vadd.f32 0.0, %v5566
  %v5568 = vpop.f32.mrb[0].mxu0
  %v5569 = vpop.f32.mrb[0].mxu0
  %v5570 = vadd.f32 0.0, %v5569
  %v5571 = vpop.f32.mrb[0].mxu0
  %5572 = vdwg.mxu0
  %v5573 = vadd.f32 %v5365, %v5535
  %v5574 = vadd.f32 %v5368, %v5538
  %v5575 = vadd.f32 %v5373, %v5543
  %v5576 = vadd.f32 %v5376, %v5546
  %v5577 = vadd.f32 %v5381, %v5551
  %v5578 = vadd.f32 %v5384, %v5554
  %v5579 = vadd.f32 %v5389, %v5559
  %v5580 = vadd.f32 %v5392, %v5562
  %v5581 = vadd.f32 %v5397, %v5567
  %v5582 = vadd.f32 %v5400, %v5570
  %5583 = vmatprep.subr.bf16.mxu0 0
  %5584 = vmatpush1.bf16.msra.mxu0 %v4607
  %5585 = vmatprep.subr.bf16.mxu0 0
  %5586 = vmatpush1.bf16.msra.mxu0 %v4608
  %5587 = vmatprep.subr.bf16.mxu0 0
  %5588 = vmatpush1.bf16.msra.mxu0 %v4609
  %5589 = vmatprep.subr.bf16.mxu0 0
  %5590 = vmatpush1.bf16.msra.mxu0 %v4610
  %5591 = vmatprep.subr.bf16.mxu0 0
  %5592 = vmatpush1.bf16.msra.mxu0 %v4611
  %5593 = vmatprep.subr.bf16.mxu0 0
  %5594 = vmatpush1.bf16.msra.mxu0 %v4612
  %5595 = vmatprep.subr.bf16.mxu0 0
  %5596 = vmatpush1.bf16.msra.mxu0 %v4613
  %5597 = vmatprep.subr.bf16.mxu0 0
  %5598 = vmatpush1.bf16.msra.mxu0 %v4614
  %5599 = vmatprep.subr.bf16.mxu0 0
  %5600 = vmatpush1.bf16.msra.mxu0 %v4615
  %5601 = vmatprep.subr.bf16.mxu0 0
  %5602 = vmatpush1.bf16.msra.mxu0 %v4616
  %5603 = vmatprep.subr.bf16.mxu0 0
  %5604 = vmatpush1.bf16.msra.mxu0 %v4617
  %5605 = vmatprep.subr.bf16.mxu0 0
  %5606 = vmatpush1.bf16.msra.mxu0 %v4618
  %5607 = vmatprep.subr.bf16.mxu0 0
  %5608 = vmatpush1.bf16.msra.mxu0 0
  %5609 = vmatprep.subr.bf16.mxu0 0
  %5610 = vmatpush1.bf16.msra.mxu0 0
  %5611 = vmatprep.subr.bf16.mxu0 0
  %5612 = vmatpush1.bf16.msra.mxu0 0
  %5613 = vmatprep.subr.bf16.mxu0 0
  %5614 = vmatpush1.bf16.msra.mxu0 0
  %5615 = vmatprep.mubr.bf16.mxu0 %v4796
  %5616 = vmatmul.mubr.bf16.gmra.mrb[0].mxu0 %v4490
  %v5617 = vpop.f32.mrb[0].mxu0
  %v5618 = vadd.f32 0.0, %v5617
  %v5619 = vpop.f32.mrb[0].mxu0
  %v5620 = vpop.f32.mrb[0].mxu0
  %v5621 = vadd.f32 0.0, %v5620
  %v5622 = vpop.f32.mrb[0].mxu0
  %5623 = vmatprep.mubr.bf16.mxu0 %v4799
  %5624 = vmatmul.mubr.bf16.gmra.mrb[0].mxu0 %v4494
  %v5625 = vpop.f32.mrb[0].mxu0
  %v5626 = vadd.f32 0.0, %v5625
  %v5627 = vpop.f32.mrb[0].mxu0
  %v5628 = vpop.f32.mrb[0].mxu0
  %v5629 = vadd.f32 0.0, %v5628
  %v5630 = vpop.f32.mrb[0].mxu0
  %5631 = vmatprep.mubr.bf16.mxu0 %v4802
  %5632 = vmatmul.mubr.bf16.gmra.mrb[0].mxu0 %v4498
  %v5633 = vpop.f32.mrb[0].mxu0
  %v5634 = vadd.f32 0.0, %v5633
  %v5635 = vpop.f32.mrb[0].mxu0
  %v5636 = vpop.f32.mrb[0].mxu0
  %v5637 = vadd.f32 0.0, %v5636
  %v5638 = vpop.f32.mrb[0].mxu0
  %5639 = vmatprep.mubr.bf16.mxu0 %v4805
  %5640 = vmatmul.mubr.bf16.gmra.mrb[0].mxu0 %v4502
  %v5641 = vpop.f32.mrb[0].mxu0
  %v5642 = vadd.f32 0.0, %v5641
  %v5643 = vpop.f32.mrb[0].mxu0
  %v5644 = vpop.f32.mrb[0].mxu0
  %v5645 = vadd.f32 0.0, %v5644
  %v5646 = vpop.f32.mrb[0].mxu0
  %5647 = vmatprep.mubr.bf16.mxu0 %v4978
  %5648 = vmatmul.mubr.bf16.gmra.mrb[0].mxu0 %v4506
  %v5649 = vpop.f32.mrb[0].mxu0
  %v5650 = vadd.f32 0.0, %v5649
  %v5651 = vpop.f32.mrb[0].mxu0
  %v5652 = vpop.f32.mrb[0].mxu0
  %v5653 = vadd.f32 0.0, %v5652
  %v5654 = vpop.f32.mrb[0].mxu0
  %5655 = vdwg.mxu0
  %5656 = vmatprep.subr.bf16.mxu0 0
  %5657 = vmatpush1.bf16.msra.mxu0 %v4768
  %5658 = vmatprep.subr.bf16.mxu0 0
  %5659 = vmatpush1.bf16.msra.mxu0 %v4769
  %5660 = vmatprep.subr.bf16.mxu0 0
  %5661 = vmatpush1.bf16.msra.mxu0 %v4770
  %5662 = vmatprep.subr.bf16.mxu0 0
  %5663 = vmatpush1.bf16.msra.mxu0 %v4771
  %5664 = vmatprep.subr.bf16.mxu0 0
  %5665 = vmatpush1.bf16.msra.mxu0 %v4772
  %5666 = vmatprep.subr.bf16.mxu0 0
  %5667 = vmatpush1.bf16.msra.mxu0 %v4773
  %5668 = vmatprep.subr.bf16.mxu0 0
  %5669 = vmatpush1.bf16.msra.mxu0 %v4774
  %5670 = vmatprep.subr.bf16.mxu0 0
  %5671 = vmatpush1.bf16.msra.mxu0 %v4775
  %5672 = vmatprep.subr.bf16.mxu0 0
  %5673 = vmatpush1.bf16.msra.mxu0 %v4776
  %5674 = vmatprep.subr.bf16.mxu0 0
  %5675 = vmatpush1.bf16.msra.mxu0 %v4777
  %5676 = vmatprep.subr.bf16.mxu0 0
  %5677 = vmatpush1.bf16.msra.mxu0 %v4778
  %5678 = vmatprep.subr.bf16.mxu0 0
  %5679 = vmatpush1.bf16.msra.mxu0 %v4779
  %5680 = vmatprep.subr.bf16.mxu0 0
  %5681 = vmatpush1.bf16.msra.mxu0 0
  %5682 = vmatprep.subr.bf16.mxu0 0
  %5683 = vmatpush1.bf16.msra.mxu0 0
  %5684 = vmatprep.subr.bf16.mxu0 0
  %5685 = vmatpush1.bf16.msra.mxu0 0
  %5686 = vmatprep.subr.bf16.mxu0 0
  %5687 = vmatpush1.bf16.msra.mxu0 0
  %5688 = vmatprep.mubr.bf16.mxu0 %v4633
  %5689 = vmatmul.mubr.bf16.gmra.mrb[0].mxu0 %v4488
  %v5690 = vpop.f32.mrb[0].mxu0
  %v5691 = vadd.f32 %v5618, %v5690
  %v5692 = vpop.f32.mrb[0].mxu0
  %v5693 = vpop.f32.mrb[0].mxu0
  %v5694 = vadd.f32 %v5621, %v5693
  %v5695 = vpop.f32.mrb[0].mxu0
  %5696 = vmatprep.mubr.bf16.mxu0 %v4636
  %5697 = vmatmul.mubr.bf16.gmra.mrb[0].mxu0 %v4492
  %v5698 = vpop.f32.mrb[0].mxu0
  %v5699 = vadd.f32 %v5626, %v5698
  %v5700 = vpop.f32.mrb[0].mxu0
  %v5701 = vpop.f32.mrb[0].mxu0
  %v5702 = vadd.f32 %v5629, %v5701
  %v5703 = vpop.f32.mrb[0].mxu0
  %5704 = vmatprep.mubr.bf16.mxu0 %v4639
  %5705 = vmatmul.mubr.bf16.gmra.mrb[0].mxu0 %v4496
  %v5706 = vpop.f32.mrb[0].mxu0
  %v5707 = vadd.f32 %v5634, %v5706
  %v5708 = vpop.f32.mrb[0].mxu0
  %v5709 = vpop.f32.mrb[0].mxu0
  %v5710 = vadd.f32 %v5637, %v5709
  %v5711 = vpop.f32.mrb[0].mxu0
  %5712 = vmatprep.mubr.bf16.mxu0 %v4642
  %5713 = vmatmul.mubr.bf16.gmra.mrb[0].mxu0 %v4500
  %v5714 = vpop.f32.mrb[0].mxu0
  %v5715 = vadd.f32 %v5642, %v5714
  %v5716 = vpop.f32.mrb[0].mxu0
  %v5717 = vpop.f32.mrb[0].mxu0
  %v5718 = vadd.f32 %v5645, %v5717
  %v5719 = vpop.f32.mrb[0].mxu0
  %5720 = vmatprep.mubr.bf16.mxu0 %v4645
  %5721 = vmatmul.mubr.bf16.gmra.mrb[0].mxu0 %v4504
  %v5722 = vpop.f32.mrb[0].mxu0
  %v5723 = vadd.f32 %v5650, %v5722
  %v5724 = vpop.f32.mrb[0].mxu0
  %v5725 = vpop.f32.mrb[0].mxu0
  %v5726 = vadd.f32 %v5653, %v5725
  %v5727 = vpop.f32.mrb[0].mxu0
  %5728 = vdwg.mxu0
  %v5730 = vsel %vm4631, %v4509, 0
  %5732 = vmatprep.subr.bf16.mxu0 0
  %5733 = vmatpush1.bf16.msra.mxu0 %v4953
  %5734 = vmatprep.subr.bf16.mxu0 0
  %5735 = vmatpush1.bf16.msra.mxu0 %v4954
  %5736 = vmatprep.subr.bf16.mxu0 0
  %5737 = vmatpush1.bf16.msra.mxu0 %v4955
  %5738 = vmatprep.subr.bf16.mxu0 0
  %5739 = vmatpush1.bf16.msra.mxu0 %v4956
  %5740 = vmatprep.subr.bf16.mxu0 0
  %5741 = vmatpush1.bf16.msra.mxu0 %v4957
  %5742 = vmatprep.subr.bf16.mxu0 0
  %5743 = vmatpush1.bf16.msra.mxu0 %v4958
  %5744 = vmatprep.subr.bf16.mxu0 0
  %5745 = vmatpush1.bf16.msra.mxu0 %v4959
  %5746 = vmatprep.subr.bf16.mxu0 0
  %5747 = vmatpush1.bf16.msra.mxu0 %v4960
  %5748 = vmatprep.subr.bf16.mxu0 0
  %5749 = vmatpush1.bf16.msra.mxu0 %v4961
  %5750 = vmatprep.subr.bf16.mxu0 0
  %5751 = vmatpush1.bf16.msra.mxu0 %v4962
  %5752 = vmatprep.subr.bf16.mxu0 0
  %5753 = vmatpush1.bf16.msra.mxu0 %v4963
  %5754 = vmatprep.subr.bf16.mxu0 0
  %5755 = vmatpush1.bf16.msra.mxu0 %v4964
  %5756 = vmatprep.subr.bf16.mxu0 0
  %5757 = vmatpush1.bf16.msra.mxu0 0
  %5758 = vmatprep.subr.bf16.mxu0 0
  %5759 = vmatpush1.bf16.msra.mxu0 0
  %5760 = vmatprep.subr.bf16.mxu0 0
  %5761 = vmatpush1.bf16.msra.mxu0 0
  %5762 = vmatprep.subr.bf16.mxu0 0
  %5763 = vmatpush1.bf16.msra.mxu0 0
  %5764 = vmatprep.mubr.bf16.mxu0 %v4636
  %5765 = vmatmul.mubr.bf16.gmra.mrb[0].mxu0 %v4492
  %v5766 = vpop.f32.mrb[0].mxu0
  %v5767 = vadd.f32 0.0, %v5766
  %v5768 = vpop.f32.mrb[0].mxu0
  %v5769 = vpop.f32.mrb[0].mxu0
  %v5770 = vadd.f32 0.0, %v5769
  %v5771 = vpop.f32.mrb[0].mxu0
  %5772 = vmatprep.mubr.bf16.mxu0 %v4639
  %5773 = vmatmul.mubr.bf16.gmra.mrb[0].mxu0 %v4496
  %v5774 = vpop.f32.mrb[0].mxu0
  %v5775 = vadd.f32 0.0, %v5774
  %v5776 = vpop.f32.mrb[0].mxu0
  %v5777 = vpop.f32.mrb[0].mxu0
  %v5778 = vadd.f32 0.0, %v5777
  %v5779 = vpop.f32.mrb[0].mxu0
  %5780 = vmatprep.mubr.bf16.mxu0 %v4642
  %5781 = vmatmul.mubr.bf16.gmra.mrb[0].mxu0 %v4500
  %v5782 = vpop.f32.mrb[0].mxu0
  %v5783 = vadd.f32 0.0, %v5782
  %v5784 = vpop.f32.mrb[0].mxu0
  %v5785 = vpop.f32.mrb[0].mxu0
  %v5786 = vadd.f32 0.0, %v5785
  %v5787 = vpop.f32.mrb[0].mxu0
  %5788 = vmatprep.mubr.bf16.mxu0 %v4645
  %5789 = vmatmul.mubr.bf16.gmra.mrb[0].mxu0 %v4504
  %v5790 = vpop.f32.mrb[0].mxu0
  %v5791 = vadd.f32 0.0, %v5790
  %v5792 = vpop.f32.mrb[0].mxu0
  %v5793 = vpop.f32.mrb[0].mxu0
  %v5794 = vadd.f32 0.0, %v5793
  %v5795 = vpop.f32.mrb[0].mxu0
  %5796 = vmatprep.mubr.bf16.mxu0 %v5730
  %5797 = vmatmul.mubr.bf16.gmra.mrb[0].mxu0 %v4508
  %v5798 = vpop.f32.mrb[0].mxu0
  %v5799 = vadd.f32 0.0, %v5798
  %v5800 = vpop.f32.mrb[0].mxu0
  %v5801 = vpop.f32.mrb[0].mxu0
  %v5802 = vadd.f32 0.0, %v5801
  %v5803 = vpop.f32.mrb[0].mxu0
  %5804 = vdwg.mxu0
  %v5805 = vadd.f32 %v5691, %v5767
  %v5806 = vadd.f32 %v5694, %v5770
  %v5807 = vadd.f32 %v5699, %v5775
  %v5808 = vadd.f32 %v5702, %v5778
  %v5809 = vadd.f32 %v5707, %v5783
  %v5810 = vadd.f32 %v5710, %v5786
  %v5811 = vadd.f32 %v5715, %v5791
  %v5812 = vadd.f32 %v5718, %v5794
  %v5813 = vadd.f32 %v5723, %v5799
  %v5814 = vadd.f32 %v5726, %v5802
  %5815 = vmatprep.subr.bf16.mxu0 0
  %5816 = vmatpush1.bf16.msra.mxu0 %v5161
  %5817 = vmatprep.subr.bf16.mxu0 0
  %5818 = vmatpush1.bf16.msra.mxu0 %v5162
  %5819 = vmatprep.subr.bf16.mxu0 0
  %5820 = vmatpush1.bf16.msra.mxu0 %v5163
  %5821 = vmatprep.subr.bf16.mxu0 0
  %5822 = vmatpush1.bf16.msra.mxu0 %v5164
  %5823 = vmatprep.subr.bf16.mxu0 0
  %5824 = vmatpush1.bf16.msra.mxu0 %v5165
  %5825 = vmatprep.subr.bf16.mxu0 0
  %5826 = vmatpush1.bf16.msra.mxu0 %v5166
  %5827 = vmatprep.subr.bf16.mxu0 0
  %5828 = vmatpush1.bf16.msra.mxu0 %v5167
  %5829 = vmatprep.subr.bf16.mxu0 0
  %5830 = vmatpush1.bf16.msra.mxu0 %v5168
  %5831 = vmatprep.subr.bf16.mxu0 0
  %5832 = vmatpush1.bf16.msra.mxu0 %v5169
  %5833 = vmatprep.subr.bf16.mxu0 0
  %5834 = vmatpush1.bf16.msra.mxu0 %v5170
  %5835 = vmatprep.subr.bf16.mxu0 0
  %5836 = vmatpush1.bf16.msra.mxu0 %v5171
  %5837 = vmatprep.subr.bf16.mxu0 0
  %5838 = vmatpush1.bf16.msra.mxu0 %v5172
  %5839 = vmatprep.subr.bf16.mxu0 0
  %5840 = vmatpush1.bf16.msra.mxu0 0
  %5841 = vmatprep.subr.bf16.mxu0 0
  %5842 = vmatpush1.bf16.msra.mxu0 0
  %5843 = vmatprep.subr.bf16.mxu0 0
  %5844 = vmatpush1.bf16.msra.mxu0 0
  %5845 = vmatprep.subr.bf16.mxu0 0
  %5846 = vmatpush1.bf16.msra.mxu0 0
  %5847 = vmatprep.mubr.bf16.mxu0 %v4796
  %5848 = vmatmul.mubr.bf16.gmra.mrb[0].mxu0 %v4490
  %v5849 = vpop.f32.mrb[0].mxu0
  %v5850 = vadd.f32 0.0, %v5849
  %v5851 = vpop.f32.mrb[0].mxu0
  %v5852 = vpop.f32.mrb[0].mxu0
  %v5853 = vadd.f32 0.0, %v5852
  %v5854 = vpop.f32.mrb[0].mxu0
  %5855 = vmatprep.mubr.bf16.mxu0 %v4799
  %5856 = vmatmul.mubr.bf16.gmra.mrb[0].mxu0 %v4494
  %v5857 = vpop.f32.mrb[0].mxu0
  %v5858 = vadd.f32 0.0, %v5857
  %v5859 = vpop.f32.mrb[0].mxu0
  %v5860 = vpop.f32.mrb[0].mxu0
  %v5861 = vadd.f32 0.0, %v5860
  %v5862 = vpop.f32.mrb[0].mxu0
  %5863 = vmatprep.mubr.bf16.mxu0 %v4802
  %5864 = vmatmul.mubr.bf16.gmra.mrb[0].mxu0 %v4498
  %v5865 = vpop.f32.mrb[0].mxu0
  %v5866 = vadd.f32 0.0, %v5865
  %v5867 = vpop.f32.mrb[0].mxu0
  %v5868 = vpop.f32.mrb[0].mxu0
  %v5869 = vadd.f32 0.0, %v5868
  %v5870 = vpop.f32.mrb[0].mxu0
  %5871 = vmatprep.mubr.bf16.mxu0 %v4805
  %5872 = vmatmul.mubr.bf16.gmra.mrb[0].mxu0 %v4502
  %v5873 = vpop.f32.mrb[0].mxu0
  %v5874 = vadd.f32 0.0, %v5873
  %v5875 = vpop.f32.mrb[0].mxu0
  %v5876 = vpop.f32.mrb[0].mxu0
  %v5877 = vadd.f32 0.0, %v5876
  %v5878 = vpop.f32.mrb[0].mxu0
  %5879 = vmatprep.mubr.bf16.mxu0 %v4978
  %5880 = vmatmul.mubr.bf16.gmra.mrb[0].mxu0 %v4506
  %v5881 = vpop.f32.mrb[0].mxu0
  %v5882 = vadd.f32 0.0, %v5881
  %v5883 = vpop.f32.mrb[0].mxu0
  %v5884 = vpop.f32.mrb[0].mxu0
  %v5885 = vadd.f32 0.0, %v5884
  %v5886 = vpop.f32.mrb[0].mxu0
  %5887 = vdwg.mxu0
  %5888 = vmatprep.subr.bf16.mxu0 0
  %5889 = vmatpush1.bf16.msra.mxu0 %v5306
  %5890 = vmatprep.subr.bf16.mxu0 0
  %5891 = vmatpush1.bf16.msra.mxu0 %v5307
  %5892 = vmatprep.subr.bf16.mxu0 0
  %5893 = vmatpush1.bf16.msra.mxu0 %v5308
  %5894 = vmatprep.subr.bf16.mxu0 0
  %5895 = vmatpush1.bf16.msra.mxu0 %v5309
  %5896 = vmatprep.subr.bf16.mxu0 0
  %5897 = vmatpush1.bf16.msra.mxu0 %v5310
  %5898 = vmatprep.subr.bf16.mxu0 0
  %5899 = vmatpush1.bf16.msra.mxu0 %v5311
  %5900 = vmatprep.subr.bf16.mxu0 0
  %5901 = vmatpush1.bf16.msra.mxu0 %v5312
  %5902 = vmatprep.subr.bf16.mxu0 0
  %5903 = vmatpush1.bf16.msra.mxu0 %v5313
  %5904 = vmatprep.subr.bf16.mxu0 0
  %5905 = vmatpush1.bf16.msra.mxu0 %v5314
  %5906 = vmatprep.subr.bf16.mxu0 0
  %5907 = vmatpush1.bf16.msra.mxu0 %v5315
  %5908 = vmatprep.subr.bf16.mxu0 0
  %5909 = vmatpush1.bf16.msra.mxu0 %v5316
  %5910 = vmatprep.subr.bf16.mxu0 0
  %5911 = vmatpush1.bf16.msra.mxu0 %v5317
  %5912 = vmatprep.subr.bf16.mxu0 0
  %5913 = vmatpush1.bf16.msra.mxu0 0
  %5914 = vmatprep.subr.bf16.mxu0 0
  %5915 = vmatpush1.bf16.msra.mxu0 0
  %5916 = vmatprep.subr.bf16.mxu0 0
  %5917 = vmatpush1.bf16.msra.mxu0 0
  %5918 = vmatprep.subr.bf16.mxu0 0
  %5919 = vmatpush1.bf16.msra.mxu0 0
  %5920 = vmatprep.mubr.bf16.mxu0 %v4633
  %5921 = vmatmul.mubr.bf16.gmra.mrb[0].mxu0 %v4488
  %v5922 = vpop.f32.mrb[0].mxu0
  %v5923 = vadd.f32 %v5850, %v5922
  %v5924 = vpop.f32.mrb[0].mxu0
  %v5925 = vpop.f32.mrb[0].mxu0
  %v5926 = vadd.f32 %v5853, %v5925
  %v5927 = vpop.f32.mrb[0].mxu0
  %5928 = vmatprep.mubr.bf16.mxu0 %v4636
  %5929 = vmatmul.mubr.bf16.gmra.mrb[0].mxu0 %v4492
  %v5930 = vpop.f32.mrb[0].mxu0
  %v5931 = vadd.f32 %v5858, %v5930
  %v5932 = vpop.f32.mrb[0].mxu0
  %v5933 = vpop.f32.mrb[0].mxu0
  %v5934 = vadd.f32 %v5861, %v5933
  %v5935 = vpop.f32.mrb[0].mxu0
  %5936 = vmatprep.mubr.bf16.mxu0 %v4639
  %5937 = vmatmul.mubr.bf16.gmra.mrb[0].mxu0 %v4496
  %v5938 = vpop.f32.mrb[0].mxu0
  %v5939 = vadd.f32 %v5866, %v5938
  %v5940 = vpop.f32.mrb[0].mxu0
  %v5941 = vpop.f32.mrb[0].mxu0
  %v5942 = vadd.f32 %v5869, %v5941
  %v5943 = vpop.f32.mrb[0].mxu0
  %5944 = vmatprep.mubr.bf16.mxu0 %v4642
  %5945 = vmatmul.mubr.bf16.gmra.mrb[0].mxu0 %v4500
  %v5946 = vpop.f32.mrb[0].mxu0
  %v5947 = vadd.f32 %v5874, %v5946
  %v5948 = vpop.f32.mrb[0].mxu0
  %v5949 = vpop.f32.mrb[0].mxu0
  %v5950 = vadd.f32 %v5877, %v5949
  %v5951 = vpop.f32.mrb[0].mxu0
  %5952 = vmatprep.mubr.bf16.mxu0 %v4645
  %5953 = vmatmul.mubr.bf16.gmra.mrb[0].mxu0 %v4504
  %v5954 = vpop.f32.mrb[0].mxu0
  %v5955 = vadd.f32 %v5882, %v5954
  %v5956 = vpop.f32.mrb[0].mxu0
  %v5957 = vpop.f32.mrb[0].mxu0
  %v5958 = vadd.f32 %v5885, %v5957
  %v5959 = vpop.f32.mrb[0].mxu0
  %5960 = vdwg.mxu0
  %5961 = vmatprep.subr.bf16.mxu0 0
  %5962 = vmatpush1.bf16.msra.mxu0 %v5476
  %5963 = vmatprep.subr.bf16.mxu0 0
  %5964 = vmatpush1.bf16.msra.mxu0 %v5477
  %5965 = vmatprep.subr.bf16.mxu0 0
  %5966 = vmatpush1.bf16.msra.mxu0 %v5478
  %5967 = vmatprep.subr.bf16.mxu0 0
  %5968 = vmatpush1.bf16.msra.mxu0 %v5479
  %5969 = vmatprep.subr.bf16.mxu0 0
  %5970 = vmatpush1.bf16.msra.mxu0 %v5480
  %5971 = vmatprep.subr.bf16.mxu0 0
  %5972 = vmatpush1.bf16.msra.mxu0 %v5481
  %5973 = vmatprep.subr.bf16.mxu0 0
  %5974 = vmatpush1.bf16.msra.mxu0 %v5482
  %5975 = vmatprep.subr.bf16.mxu0 0
  %5976 = vmatpush1.bf16.msra.mxu0 %v5483
  %5977 = vmatprep.subr.bf16.mxu0 0
  %5978 = vmatpush1.bf16.msra.mxu0 %v5484
  %5979 = vmatprep.subr.bf16.mxu0 0
  %5980 = vmatpush1.bf16.msra.mxu0 %v5485
  %5981 = vmatprep.subr.bf16.mxu0 0
  %5982 = vmatpush1.bf16.msra.mxu0 %v5486
  %5983 = vmatprep.subr.bf16.mxu0 0
  %5984 = vmatpush1.bf16.msra.mxu0 %v5487
  %5985 = vmatprep.subr.bf16.mxu0 0
  %5986 = vmatpush1.bf16.msra.mxu0 0
  %5987 = vmatprep.subr.bf16.mxu0 0
  %5988 = vmatpush1.bf16.msra.mxu0 0
  %5989 = vmatprep.subr.bf16.mxu0 0
  %5990 = vmatpush1.bf16.msra.mxu0 0
  %5991 = vmatprep.subr.bf16.mxu0 0
  %5992 = vmatpush1.bf16.msra.mxu0 0
  %5993 = vmatprep.mubr.bf16.mxu0 %v4636
  %5994 = vmatmul.mubr.bf16.gmra.mrb[0].mxu0 %v4492
  %v5995 = vpop.f32.mrb[0].mxu0
  %v5996 = vadd.f32 0.0, %v5995
  %v5997 = vpop.f32.mrb[0].mxu0
  %v5998 = vpop.f32.mrb[0].mxu0
  %v5999 = vadd.f32 0.0, %v5998
  %v6000 = vpop.f32.mrb[0].mxu0
  %6001 = vmatprep.mubr.bf16.mxu0 %v4639
  %6002 = vmatmul.mubr.bf16.gmra.mrb[0].mxu0 %v4496
  %v6003 = vpop.f32.mrb[0].mxu0
  %v6004 = vadd.f32 0.0, %v6003
  %v6005 = vpop.f32.mrb[0].mxu0
  %v6006 = vpop.f32.mrb[0].mxu0
  %v6007 = vadd.f32 0.0, %v6006
  %v6008 = vpop.f32.mrb[0].mxu0
  %6009 = vmatprep.mubr.bf16.mxu0 %v4642
  %6010 = vmatmul.mubr.bf16.gmra.mrb[0].mxu0 %v4500
  %v6011 = vpop.f32.mrb[0].mxu0
  %v6012 = vadd.f32 0.0, %v6011
  %v6013 = vpop.f32.mrb[0].mxu0
  %v6014 = vpop.f32.mrb[0].mxu0
  %v6015 = vadd.f32 0.0, %v6014
  %v6016 = vpop.f32.mrb[0].mxu0
  %6017 = vmatprep.mubr.bf16.mxu0 %v4645
  %6018 = vmatmul.mubr.bf16.gmra.mrb[0].mxu0 %v4504
  %v6019 = vpop.f32.mrb[0].mxu0
  %v6020 = vadd.f32 0.0, %v6019
  %v6021 = vpop.f32.mrb[0].mxu0
  %v6022 = vpop.f32.mrb[0].mxu0
  %v6023 = vadd.f32 0.0, %v6022
  %v6024 = vpop.f32.mrb[0].mxu0
  %6025 = vmatprep.mubr.bf16.mxu0 %v5730
  %6026 = vmatmul.mubr.bf16.gmra.mrb[0].mxu0 %v4508
  %v6027 = vpop.f32.mrb[0].mxu0
  %v6028 = vadd.f32 0.0, %v6027
  %v6029 = vpop.f32.mrb[0].mxu0
  %v6030 = vpop.f32.mrb[0].mxu0
  %v6031 = vadd.f32 0.0, %v6030
  %v6032 = vpop.f32.mrb[0].mxu0
  %6033 = vdwg.mxu0
  %v6034 = vadd.f32 %v5923, %v5996
  %v6035 = vadd.f32 %v5926, %v5999
  %v6036 = vadd.f32 %v5931, %v6004
  %v6037 = vadd.f32 %v5934, %v6007
  %v6038 = vadd.f32 %v5939, %v6012
  %v6039 = vadd.f32 %v5942, %v6015
  %v6040 = vadd.f32 %v5947, %v6020
  %v6041 = vadd.f32 %v5950, %v6023
  %v6042 = vadd.f32 %v5955, %v6028
  %v6043 = vadd.f32 %v5958, %v6031
  %v6044 = vmax.f32 %v5053, %v5573
  %v6045 = vmax.f32 %v5054, %v5574
  %v6046 = vmax.f32 %v5055, %v5575
  %v6047 = vmax.f32 %v5056, %v5576
  %v6048 = vmax.f32 %v5057, %v5577
  %v6049 = vmax.f32 %v5058, %v5578
  %v6050 = vmax.f32 %v5059, %v5579
  %v6051 = vmax.f32 %v5060, %v5580
  %v6052 = vmax.f32 %v5061, %v5581
  %v6053 = vmax.f32 %v5062, %v5582
  %v6054 = vmax.f32 %v5805, %v6034
  %v6055 = vmax.f32 %v5806, %v6035
  %v6056 = vmax.f32 %v5807, %v6036
  %v6057 = vmax.f32 %v5808, %v6037
  %v6058 = vmax.f32 %v5809, %v6038
  %v6059 = vmax.f32 %v5810, %v6039
  %v6060 = vmax.f32 %v5811, %v6040
  %v6061 = vmax.f32 %v5812, %v6041
  %v6062 = vmax.f32 %v5813, %v6042
  %v6063 = vmax.f32 %v5814, %v6043
  %v6064 = vmax.f32 %v6044, %v6054
  %v6065 = vmax.f32 %v6045, %v6055
  %v6066 = vmax.f32 %v6046, %v6056
  %v6067 = vmax.f32 %v6047, %v6057
  %v6068 = vmax.f32 %v6048, %v6058
  %v6069 = vmax.f32 %v6049, %v6059
  %v6070 = vmax.f32 %v6050, %v6060
  %v6071 = vmax.f32 %v6051, %v6061
  %v6072 = vmax.f32 %v6052, %v6062
  %v6073 = vmax.f32 %v6053, %v6063
  %v6074 = vld [vmem:[%s4] sm:$0x1]
  %v6076 = vlaneseq
  %v6077 = vshrl.u32 %v6076, 7
  %v6078 = vsub.s32 0, %v6077
  %v6079 = vrot.slane %v6074, %v6078
  %v6081 = vadd.f32 %v6064, %v6079
  %v6082 = vadd.f32 %v6065, %v6079
  %v6083 = vadd.f32 %v6066, %v6079
  %v6084 = vadd.f32 %v6067, %v6079
  %v6085 = vadd.f32 %v6068, %v6079
  %v6086 = vadd.f32 %v6069, %v6079
  %v6087 = vadd.f32 %v6070, %v6079
  %v6088 = vadd.f32 %v6071, %v6079
  %v6089 = vadd.f32 %v6072, %v6079
  %v6090 = vadd.f32 %v6073, %v6079
  %v6091 = vmax.f32 %v6081, 0.0
  %v6092 = vmax.f32 %v6082, 0.0
  %v6093 = vmax.f32 %v6083, 0.0
  %v6094 = vmax.f32 %v6084, 0.0
  %v6095 = vmax.f32 %v6085, 0.0
  %v6096 = vmax.f32 %v6086, 0.0
  %v6097 = vmax.f32 %v6087, 0.0
  %v6098 = vmax.f32 %v6088, 0.0
  %v6099 = vmax.f32 %v6089, 0.0
  %v6100 = vmax.f32 %v6090, 0.0
  %v6101 = vpack.c.bf16 %v6092, %v6091
  %v6102 = vpack.c.bf16 %v6094, %v6093
  %v6103 = vpack.c.bf16 %v6096, %v6095
  %v6104 = vpack.c.bf16 %v6098, %v6097
  %v6105 = vpack.c.bf16 %v6100, %v6099
  %v6106 = vld [vmem:[%s5] sm:$0xf]
  %v6107 = vld [vmem:[%s5 + $0x4] sm:$0xf]
  %v6108 = vld [vmem:[%s5 + $0x8] sm:$0xf]
  %v6109 = vld [vmem:[%s5 + $0xc] sm:$0xf]
  %v6110 = vld [vmem:[%s5 + $0x10] sm:$0xf]
  %v6111 = vld [vmem:[%s5 + $0x14] sm:$0xf]
  %v6112 = vld [vmem:[%s5 + $0x18] sm:$0xf]
  %v6113 = vld [vmem:[%s5 + $0x1c] sm:$0xf]
  %v6114 = vld [vmem:[%s5 + $0x20] sm:$0xf]
  %v6115 = vld [vmem:[%s5 + $0x24] sm:$0xf]
  %s6116 = scalar_lea.vmem %s5, 40
  %v6117 = vld [vmem:[%s6116] sm:$0xf]
  %v6118 = vld [vmem:[%s6116 + $0x4] sm:$0xf]
  %v6119 = vld [vmem:[%s6116 + $0x8] sm:$0xf]
  %v6120 = vld [vmem:[%s6116 + $0xc] sm:$0xf]
  %v6121 = vld [vmem:[%s6116 + $0x10] sm:$0xf]
  %v6122 = vld [vmem:[%s6116 + $0x14] sm:$0xf]
  %v6123 = vld [vmem:[%s6116 + $0x18] sm:$0xf]
  %v6124 = vld [vmem:[%s6116 + $0x1c] sm:$0xf]
  %v6125 = vld [vmem:[%s6116 + $0x20] sm:$0xf]
  %v6126 = vld [vmem:[%s6116 + $0x24] sm:$0xf]
  %v6137 = vunpack.c.l.b16 %v6117
  %v6138 = vunpack.c.l.b16 %v6118
  %v6139 = vunpack.c.l.b16 %v6119
  %v6140 = vunpack.c.l.b16 %v6120
  %v6141 = vunpack.c.l.b16 %v6121
  %v6142 = vunpack.c.l.b16 %v6122
  %v6143 = vunpack.c.l.b16 %v6123
  %v6144 = vunpack.c.l.b16 %v6124
  %v6145 = vunpack.c.l.b16 %v6125
  %v6146 = vunpack.c.l.b16 %v6126
  %v6147 = vpack.c.b16 %v6138, %v6137
  %v6148 = vpack.c.b16 %v6140, %v6139
  %v6149 = vpack.c.b16 %v6142, %v6141
  %v6150 = vpack.c.b16 %v6144, %v6143
  %v6151 = vpack.c.b16 %v6146, %v6145
  %vm6157 = vcmask 654336
  %v6159 = vsel %vm6157, %v6102, 0
  %6161 = vmatprep.subr.bf16.mxu0 0
  %6162 = vmatpush1.bf16.msra.mxu0 %v6147
  %6163 = vmatprep.subr.bf16.mxu0 0
  %6164 = vmatpush1.bf16.msra.mxu0 %v6148
  %6165 = vmatprep.subr.bf16.mxu0 0
  %6166 = vmatpush1.bf16.msra.mxu0 %v6149
  %6167 = vmatprep.subr.bf16.mxu0 0
  %6168 = vmatpush1.bf16.msra.mxu0 %v6150
  %6169 = vmatprep.subr.bf16.mxu0 0
  %6170 = vmatpush1.bf16.msra.mxu0 %v6151
  %6171 = vmatprep.subr.bf16.mxu0 0
  %6172 = vmatpush1.bf16.msra.mxu0 0
  %6173 = vmatprep.subr.bf16.mxu0 0
  %6174 = vmatpush1.bf16.msra.mxu0 0
  %6175 = vmatprep.subr.bf16.mxu0 0
  %6176 = vmatpush1.bf16.msra.mxu0 0
  %6177 = vmatprep.subr.bf16.mxu0 0
  %6178 = vmatpush1.bf16.msra.mxu0 0
  %6179 = vmatprep.subr.bf16.mxu0 0
  %6180 = vmatpush1.bf16.msra.mxu0 0
  %6181 = vmatprep.subr.bf16.mxu0 0
  %6182 = vmatpush1.bf16.msra.mxu0 0
  %6183 = vmatprep.subr.bf16.mxu0 0
  %6184 = vmatpush1.bf16.msra.mxu0 0
  %6185 = vmatprep.subr.bf16.mxu0 0
  %6186 = vmatpush1.bf16.msra.mxu0 0
  %6187 = vmatprep.subr.bf16.mxu0 0
  %6188 = vmatpush1.bf16.msra.mxu0 0
  %6189 = vmatprep.subr.bf16.mxu0 0
  %6190 = vmatpush1.bf16.msra.mxu0 0
  %6191 = vmatprep.subr.bf16.mxu0 0
  %6192 = vmatpush1.bf16.msra.mxu0 0
  %6193 = vmatprep.mubr.bf16.mxu0 0
  %6194 = vmatmul.mubr.bf16.gmra.mrb[0].mxu0 %v6159
  %v6195 = vpop.f32.mrb[0].mxu0
  %v6196 = vadd.f32 0.0, %v6195
  %v6197 = vpop.f32.mrb[0].mxu0
  %v6198 = vpop.f32.mrb[0].mxu0
  %v6199 = vadd.f32 0.0, %v6198
  %v6200 = vpop.f32.mrb[0].mxu0
  %6201 = vdwg.mxu0
  %v6212 = vunpack.c.l.b16 %v6106
  %v6213 = vunpack.c.l.b16 %v6107
  %v6214 = vunpack.c.l.b16 %v6108
  %v6215 = vunpack.c.l.b16 %v6109
  %v6216 = vunpack.c.l.b16 %v6110
  %v6217 = vunpack.c.l.b16 %v6111
  %v6218 = vunpack.c.l.b16 %v6112
  %v6219 = vunpack.c.l.b16 %v6113
  %v6220 = vunpack.c.l.b16 %v6114
  %v6221 = vunpack.c.l.b16 %v6115
  %v6222 = vpack.c.b16 %v6213, %v6212
  %v6223 = vpack.c.b16 %v6215, %v6214
  %v6224 = vpack.c.b16 %v6217, %v6216
  %v6225 = vpack.c.b16 %v6219, %v6218
  %v6226 = vpack.c.b16 %v6221, %v6220
  %v6233 = vsel %vm6157, %v6101, 0
  %6235 = vmatprep.subr.bf16.mxu0 0
  %6236 = vmatpush1.bf16.msra.mxu0 %v6222
  %6237 = vmatprep.subr.bf16.mxu0 0
  %6238 = vmatpush1.bf16.msra.mxu0 %v6223
  %6239 = vmatprep.subr.bf16.mxu0 0
  %6240 = vmatpush1.bf16.msra.mxu0 %v6224
  %6241 = vmatprep.subr.bf16.mxu0 0
  %6242 = vmatpush1.bf16.msra.mxu0 %v6225
  %6243 = vmatprep.subr.bf16.mxu0 0
  %6244 = vmatpush1.bf16.msra.mxu0 %v6226
  %6245 = vmatprep.subr.bf16.mxu0 0
  %6246 = vmatpush1.bf16.msra.mxu0 0
  %6247 = vmatprep.subr.bf16.mxu0 0
  %6248 = vmatpush1.bf16.msra.mxu0 0
  %6249 = vmatprep.subr.bf16.mxu0 0
  %6250 = vmatpush1.bf16.msra.mxu0 0
  %6251 = vmatprep.subr.bf16.mxu0 0
  %6252 = vmatpush1.bf16.msra.mxu0 0
  %6253 = vmatprep.subr.bf16.mxu0 0
  %6254 = vmatpush1.bf16.msra.mxu0 0
  %6255 = vmatprep.subr.bf16.mxu0 0
  %6256 = vmatpush1.bf16.msra.mxu0 0
  %6257 = vmatprep.subr.bf16.mxu0 0
  %6258 = vmatpush1.bf16.msra.mxu0 0
  %6259 = vmatprep.subr.bf16.mxu0 0
  %6260 = vmatpush1.bf16.msra.mxu0 0
  %6261 = vmatprep.subr.bf16.mxu0 0
  %6262 = vmatpush1.bf16.msra.mxu0 0
  %6263 = vmatprep.subr.bf16.mxu0 0
  %6264 = vmatpush1.bf16.msra.mxu0 0
  %6265 = vmatprep.subr.bf16.mxu0 0
  %6266 = vmatpush1.bf16.msra.mxu0 0
  %6267 = vmatprep.mubr.bf16.mxu0 0
  %6268 = vmatmul.mubr.bf16.gmra.mrb[0].mxu0 %v6233
  %v6269 = vpop.f32.mrb[0].mxu0
  %v6270 = vadd.f32 %v6196, %v6269
  %v6271 = vpop.f32.mrb[0].mxu0
  %v6272 = vpop.f32.mrb[0].mxu0
  %v6273 = vadd.f32 %v6199, %v6272
  %v6274 = vpop.f32.mrb[0].mxu0
  %6275 = vdwg.mxu0
  %s6276 = scalar_lea.vmem %s5, 80
  %v6277 = vld [vmem:[%s6276] sm:$0xf]
  %v6278 = vld [vmem:[%s6276 + $0x4] sm:$0xf]
  %v6279 = vld [vmem:[%s6276 + $0x8] sm:$0xf]
  %v6280 = vld [vmem:[%s6276 + $0xc] sm:$0xf]
  %v6281 = vld [vmem:[%s6276 + $0x10] sm:$0xf]
  %v6282 = vld [vmem:[%s6276 + $0x14] sm:$0xf]
  %v6283 = vld [vmem:[%s6276 + $0x18] sm:$0xf]
  %v6284 = vld [vmem:[%s6276 + $0x1c] sm:$0xf]
  %v6285 = vld [vmem:[%s6276 + $0x20] sm:$0xf]
  %v6286 = vld [vmem:[%s6276 + $0x24] sm:$0xf]
  %v6297 = vunpack.c.l.b16 %v6277
  %v6298 = vunpack.c.l.b16 %v6278
  %v6299 = vunpack.c.l.b16 %v6279
  %v6300 = vunpack.c.l.b16 %v6280
  %v6301 = vunpack.c.l.b16 %v6281
  %v6302 = vunpack.c.l.b16 %v6282
  %v6303 = vunpack.c.l.b16 %v6283
  %v6304 = vunpack.c.l.b16 %v6284
  %v6305 = vunpack.c.l.b16 %v6285
  %v6306 = vunpack.c.l.b16 %v6286
  %v6307 = vpack.c.b16 %v6298, %v6297
  %v6308 = vpack.c.b16 %v6300, %v6299
  %v6309 = vpack.c.b16 %v6302, %v6301
  %v6310 = vpack.c.b16 %v6304, %v6303
  %v6311 = vpack.c.b16 %v6306, %v6305
  %v6318 = vsel %vm6157, %v6103, 0
  %6320 = vmatprep.subr.bf16.mxu0 0
  %6321 = vmatpush1.bf16.msra.mxu0 %v6307
  %6322 = vmatprep.subr.bf16.mxu0 0
  %6323 = vmatpush1.bf16.msra.mxu0 %v6308
  %6324 = vmatprep.subr.bf16.mxu0 0
  %6325 = vmatpush1.bf16.msra.mxu0 %v6309
  %6326 = vmatprep.subr.bf16.mxu0 0
  %6327 = vmatpush1.bf16.msra.mxu0 %v6310
  %6328 = vmatprep.subr.bf16.mxu0 0
  %6329 = vmatpush1.bf16.msra.mxu0 %v6311
  %6330 = vmatprep.subr.bf16.mxu0 0
  %6331 = vmatpush1.bf16.msra.mxu0 0
  %6332 = vmatprep.subr.bf16.mxu0 0
  %6333 = vmatpush1.bf16.msra.mxu0 0
  %6334 = vmatprep.subr.bf16.mxu0 0
  %6335 = vmatpush1.bf16.msra.mxu0 0
  %6336 = vmatprep.subr.bf16.mxu0 0
  %6337 = vmatpush1.bf16.msra.mxu0 0
  %6338 = vmatprep.subr.bf16.mxu0 0
  %6339 = vmatpush1.bf16.msra.mxu0 0
  %6340 = vmatprep.subr.bf16.mxu0 0
  %6341 = vmatpush1.bf16.msra.mxu0 0
  %6342 = vmatprep.subr.bf16.mxu0 0
  %6343 = vmatpush1.bf16.msra.mxu0 0
  %6344 = vmatprep.subr.bf16.mxu0 0
  %6345 = vmatpush1.bf16.msra.mxu0 0
  %6346 = vmatprep.subr.bf16.mxu0 0
  %6347 = vmatpush1.bf16.msra.mxu0 0
  %6348 = vmatprep.subr.bf16.mxu0 0
  %6349 = vmatpush1.bf16.msra.mxu0 0
  %6350 = vmatprep.subr.bf16.mxu0 0
  %6351 = vmatpush1.bf16.msra.mxu0 0
  %6352 = vmatprep.mubr.bf16.mxu0 0
  %6353 = vmatmul.mubr.bf16.gmra.mrb[0].mxu0 %v6318
  %v6354 = vpop.f32.mrb[0].mxu0
  %v6355 = vadd.f32 0.0, %v6354
  %v6356 = vpop.f32.mrb[0].mxu0
  %v6357 = vpop.f32.mrb[0].mxu0
  %v6358 = vadd.f32 0.0, %v6357
  %v6359 = vpop.f32.mrb[0].mxu0
  %6360 = vdwg.mxu0
  %v6361 = vadd.f32 %v6270, %v6355
  %v6362 = vadd.f32 %v6273, %v6358
  %s6363 = scalar_lea.vmem %s5, 120
  %v6364 = vld [vmem:[%s6363] sm:$0xf]
  %v6365 = vld [vmem:[%s6363 + $0x4] sm:$0xf]
  %v6366 = vld [vmem:[%s6363 + $0x8] sm:$0xf]
  %v6367 = vld [vmem:[%s6363 + $0xc] sm:$0xf]
  %v6368 = vld [vmem:[%s6363 + $0x10] sm:$0xf]
  %v6369 = vld [vmem:[%s6363 + $0x14] sm:$0xf]
  %v6370 = vld [vmem:[%s6363 + $0x18] sm:$0xf]
  %v6371 = vld [vmem:[%s6363 + $0x1c] sm:$0xf]
  %v6372 = vld [vmem:[%s6363 + $0x20] sm:$0xf]
  %v6373 = vld [vmem:[%s6363 + $0x24] sm:$0xf]
  %v6384 = vunpack.c.l.b16 %v6364
  %v6385 = vunpack.c.l.b16 %v6365
  %v6386 = vunpack.c.l.b16 %v6366
  %v6387 = vunpack.c.l.b16 %v6367
  %v6388 = vunpack.c.l.b16 %v6368
  %v6389 = vunpack.c.l.b16 %v6369
  %v6390 = vunpack.c.l.b16 %v6370
  %v6391 = vunpack.c.l.b16 %v6371
  %v6392 = vunpack.c.l.b16 %v6372
  %v6393 = vunpack.c.l.b16 %v6373
  %v6394 = vpack.c.b16 %v6385, %v6384
  %v6395 = vpack.c.b16 %v6387, %v6386
  %v6396 = vpack.c.b16 %v6389, %v6388
  %v6397 = vpack.c.b16 %v6391, %v6390
  %v6398 = vpack.c.b16 %v6393, %v6392
  %v6405 = vsel %vm6157, %v6104, 0
  %6407 = vmatprep.subr.bf16.mxu0 0
  %6408 = vmatpush1.bf16.msra.mxu0 %v6394
  %6409 = vmatprep.subr.bf16.mxu0 0
  %6410 = vmatpush1.bf16.msra.mxu0 %v6395
  %6411 = vmatprep.subr.bf16.mxu0 0
  %6412 = vmatpush1.bf16.msra.mxu0 %v6396
  %6413 = vmatprep.subr.bf16.mxu0 0
  %6414 = vmatpush1.bf16.msra.mxu0 %v6397
  %6415 = vmatprep.subr.bf16.mxu0 0
  %6416 = vmatpush1.bf16.msra.mxu0 %v6398
  %6417 = vmatprep.subr.bf16.mxu0 0
  %6418 = vmatpush1.bf16.msra.mxu0 0
  %6419 = vmatprep.subr.bf16.mxu0 0
  %6420 = vmatpush1.bf16.msra.mxu0 0
  %6421 = vmatprep.subr.bf16.mxu0 0
  %6422 = vmatpush1.bf16.msra.mxu0 0
  %6423 = vmatprep.subr.bf16.mxu0 0
  %6424 = vmatpush1.bf16.msra.mxu0 0
  %6425 = vmatprep.subr.bf16.mxu0 0
  %6426 = vmatpush1.bf16.msra.mxu0 0
  %6427 = vmatprep.subr.bf16.mxu0 0
  %6428 = vmatpush1.bf16.msra.mxu0 0
  %6429 = vmatprep.subr.bf16.mxu0 0
  %6430 = vmatpush1.bf16.msra.mxu0 0
  %6431 = vmatprep.subr.bf16.mxu0 0
  %6432 = vmatpush1.bf16.msra.mxu0 0
  %6433 = vmatprep.subr.bf16.mxu0 0
  %6434 = vmatpush1.bf16.msra.mxu0 0
  %6435 = vmatprep.subr.bf16.mxu0 0
  %6436 = vmatpush1.bf16.msra.mxu0 0
  %6437 = vmatprep.subr.bf16.mxu0 0
  %6438 = vmatpush1.bf16.msra.mxu0 0
  %6439 = vmatprep.mubr.bf16.mxu0 0
  %6440 = vmatmul.mubr.bf16.gmra.mrb[0].mxu0 %v6405
  %v6441 = vpop.f32.mrb[0].mxu0
  %v6442 = vadd.f32 0.0, %v6441
  %v6443 = vpop.f32.mrb[0].mxu0
  %v6444 = vpop.f32.mrb[0].mxu0
  %v6445 = vadd.f32 0.0, %v6444
  %v6446 = vpop.f32.mrb[0].mxu0
  %6447 = vdwg.mxu0
  %v6448 = vadd.f32 %v6361, %v6442
  %v6449 = vadd.f32 %v6362, %v6445
  %s6450 = scalar_lea.vmem %s5, 160
  %v6451 = vld [vmem:[%s6450] sm:$0xf]
  %v6452 = vld [vmem:[%s6450 + $0x4] sm:$0xf]
  %v6453 = vld [vmem:[%s6450 + $0x8] sm:$0xf]
  %v6454 = vld [vmem:[%s6450 + $0xc] sm:$0xf]
  %v6455 = vld [vmem:[%s6450 + $0x10] sm:$0xf]
  %v6456 = vld [vmem:[%s6450 + $0x14] sm:$0xf]
  %v6457 = vld [vmem:[%s6450 + $0x18] sm:$0xf]
  %v6458 = vld [vmem:[%s6450 + $0x1c] sm:$0xf]
  %v6459 = vld [vmem:[%s6450 + $0x20] sm:$0xf]
  %v6460 = vld [vmem:[%s6450 + $0x24] sm:$0xf]
  %v6471 = vunpack.c.l.b16 %v6451
  %v6472 = vunpack.c.l.b16 %v6452
  %v6473 = vunpack.c.l.b16 %v6453
  %v6474 = vunpack.c.l.b16 %v6454
  %v6475 = vunpack.c.l.b16 %v6455
  %v6476 = vunpack.c.l.b16 %v6456
  %v6477 = vunpack.c.l.b16 %v6457
  %v6478 = vunpack.c.l.b16 %v6458
  %v6479 = vunpack.c.l.b16 %v6459
  %v6480 = vunpack.c.l.b16 %v6460
  %v6481 = vpack.c.b16 %v6472, %v6471
  %v6482 = vpack.c.b16 %v6474, %v6473
  %v6483 = vpack.c.b16 %v6476, %v6475
  %v6484 = vpack.c.b16 %v6478, %v6477
  %v6485 = vpack.c.b16 %v6480, %v6479
  %v6492 = vsel %vm6157, %v6105, 0
  %6494 = vmatprep.subr.bf16.mxu0 0
  %6495 = vmatpush1.bf16.msra.mxu0 %v6481
  %6496 = vmatprep.subr.bf16.mxu0 0
  %6497 = vmatpush1.bf16.msra.mxu0 %v6482
  %6498 = vmatprep.subr.bf16.mxu0 0
  %6499 = vmatpush1.bf16.msra.mxu0 %v6483
  %6500 = vmatprep.subr.bf16.mxu0 0
  %6501 = vmatpush1.bf16.msra.mxu0 %v6484
  %6502 = vmatprep.subr.bf16.mxu0 0
  %6503 = vmatpush1.bf16.msra.mxu0 %v6485
  %6504 = vmatprep.subr.bf16.mxu0 0
  %6505 = vmatpush1.bf16.msra.mxu0 0
  %6506 = vmatprep.subr.bf16.mxu0 0
  %6507 = vmatpush1.bf16.msra.mxu0 0
  %6508 = vmatprep.subr.bf16.mxu0 0
  %6509 = vmatpush1.bf16.msra.mxu0 0
  %6510 = vmatprep.subr.bf16.mxu0 0
  %6511 = vmatpush1.bf16.msra.mxu0 0
  %6512 = vmatprep.subr.bf16.mxu0 0
  %6513 = vmatpush1.bf16.msra.mxu0 0
  %6514 = vmatprep.subr.bf16.mxu0 0
  %6515 = vmatpush1.bf16.msra.mxu0 0
  %6516 = vmatprep.subr.bf16.mxu0 0
  %6517 = vmatpush1.bf16.msra.mxu0 0
  %6518 = vmatprep.subr.bf16.mxu0 0
  %6519 = vmatpush1.bf16.msra.mxu0 0
  %6520 = vmatprep.subr.bf16.mxu0 0
  %6521 = vmatpush1.bf16.msra.mxu0 0
  %6522 = vmatprep.subr.bf16.mxu0 0
  %6523 = vmatpush1.bf16.msra.mxu0 0
  %6524 = vmatprep.subr.bf16.mxu0 0
  %6525 = vmatpush1.bf16.msra.mxu0 0
  %6526 = vmatprep.mubr.bf16.mxu0 0
  %6527 = vmatmul.mubr.bf16.gmra.mrb[0].mxu0 %v6492
  %v6528 = vpop.f32.mrb[0].mxu0
  %v6529 = vadd.f32 0.0, %v6528
  %v6530 = vpop.f32.mrb[0].mxu0
  %v6531 = vpop.f32.mrb[0].mxu0
  %v6532 = vadd.f32 0.0, %v6531
  %v6533 = vpop.f32.mrb[0].mxu0
  %6534 = vdwg.mxu0
  %v6535 = vadd.f32 %v6448, %v6529
  %v6536 = vadd.f32 %v6449, %v6532
  %v6537 = vld [vmem:[%s6] sm:$0x1]
  %v6539 = vlaneseq
  %v6540 = vshrl.u32 %v6539, 7
  %v6541 = vsub.s32 0, %v6540
  %v6542 = vrot.slane %v6537, %v6541
  %v6544 = vadd.f32 %v6535, %v6542
  %v6545 = vadd.f32 %v6536, %v6542
  %6546 = vst [vmem:[%s7] sm:$0xff] %v6544
  %6547 = vst [vmem:[%s7 + $0x8] sm:$0xff] %v6545
  // Predicated region
  $region30: #{digit_classifier_forward_fn.1} parent=0 // pred_check
    _
  $region31: #{digit_classifier_forward_fn.1} parent=0 // pred_check_branch
    %6549 = sbr.rel (0) target = $region33
  $region32: #{digit_classifier_forward_fn.1} parent=0 // pred_region
    _
  $region33: #{digit_classifier_forward_fn.1} parent=0 // pred_fallthru
    _
  // Predicated region
  $region34: #{digit_classifier_forward_fn.1} parent=0 // pred_check
    _
  $region35: #{digit_classifier_forward_fn.1} parent=0 // pred_check_branch
    %6551 = sbr.rel (0) target = $region37
  $region36: #{digit_classifier_forward_fn.1} parent=0 // pred_region
    _
  $region37: #{digit_classifier_forward_fn.1} parent=0 // pred_fallthru
    _

</llo_original>
